<compile_context>
chip_gen: v7x
topology: tpu7x:2x2x1
jax: 0.10.0
libtpu: 0.0.40
codegen_flags: <defaults>
</compile_context>

<pallas_src>
import jax
import jax.numpy as jnp
from jax.experimental import pallas as pl
from jax.experimental.pallas import tpu as pltpu

LATENT_DIM = 32
CHANNELS = 2
IMG_SIZE = 64
IMG_SHAPE = (CHANNELS, 1, IMG_SIZE)
OUT_DIM = CHANNELS * 1 * IMG_SIZE  # 128
HIDDEN = (128, 256, 512, 1024)
DIMS = (LATENT_DIM,) + HIDDEN + (OUT_DIM,)
BN_EPS = 0.8
LRELU_SLOPE = 0.1

BN_GROUP = 128            # training-mode BatchNorm group size (rows)
MAX_GROUPS_PER_STEP = 2   # 2 groups -> 256-row dots (fills 256-wide MXU)

# ---- packed small-vector layout (all segment sizes are multiples of 128,
# so every static slice below is lane-aligned) --------------------------------
_VEC_LAYOUT = (
    ("b1", HIDDEN[0]),
    ("b2", HIDDEN[1]), ("g2", HIDDEN[1]), ("be2", HIDDEN[1]),
    ("b3", HIDDEN[2]), ("g3", HIDDEN[2]), ("be3", HIDDEN[2]),
    ("b4", HIDDEN[3]), ("g4", HIDDEN[3]), ("be4", HIDDEN[3]),
    ("b5", OUT_DIM),
)
_VEC_OFFSETS = {}
_off = 0
for _name, _size in _VEC_LAYOUT:
    _VEC_OFFSETS[_name] = (_off, _size)
    _off += _size
VEC_TOTAL = _off  # 5632


def generator_kernel(z_ref, w1, w2, w3, w4, w5, vec_ref, out_ref):
    rows = z_ref.shape[0]                 # rows per grid step (static)
    n_groups = rows // BN_GROUP           # independent 128-row BN groups

    def seg(name):
        off, size = _VEC_OFFSETS[name]
        return vec_ref[:, off:off + size]  # (1, size) f32, static lane-aligned slice

    def dot_bf16(x, w_ref):
        # bf16 x bf16 -> f32 accumulate on the MXU, M = rows (256 fills v6e/v7x MXU).
        return jnp.dot(x.astype(jnp.bfloat16), w_ref[...],
                       preferred_element_type=jnp.float32)

    def lrelu(x):
        # 2 VALU ops (mul + max) instead of cmp + mul + select.
        return jnp.maximum(x, LRELU_SLOPE * x)

    def bn_lrelu(x, gamma, beta):
        # Training-mode BatchNorm1d per 128-row group, single-pass variance
        # (E[x^2] - mean^2 in f32; eps=0.8 dominates so this is numerically safe),
        # scale/shift form (one full-tile FMA for the apply).
        n = x.shape[-1]
        xg = x.reshape(n_groups, BN_GROUP, n)
        mean = jnp.mean(xg, axis=1, keepdims=True)                 # (G,1,N)
        mean_sq = jnp.mean(xg * xg, axis=1, keepdims=True)         # (G,1,N)
        var = mean_sq - mean * mean
        scale = gamma * jax.lax.rsqrt(var + BN_EPS)                # (G,1,N)
        shift = beta - mean * scale
        return lrelu(xg * scale + shift).reshape(rows, n)

    # block(latent_dim, 128, normalize=False)
    h = lrelu(dot_bf16(z_ref[...], w1) + seg("b1"))

    # block(128, 256)
    h = bn_lrelu(dot_bf16(h, w2) + seg("b2"), seg("g2"), seg("be2"))

    # block(256, 512)
    h = bn_lrelu(dot_bf16(h, w3) + seg("b3"), seg("g3"), seg("be3"))

    # block(512, 1024)
    h = bn_lrelu(dot_bf16(h, w4) + seg("b4"), seg("g4"), seg("be4"))

    # Linear(1024, prod(img_shape)) + Tanh
    out_ref[...] = jnp.tanh(dot_bf16(h, w5) + seg("b5"))


def init_params(key):
    """Mimics PyTorch nn.Linear default init (U(-1/sqrt(fan_in), +1/sqrt(fan_in)))
    and BatchNorm defaults (gamma=1, beta=0).  Weights are stored pre-transposed
    (in_features, out_features) and cast to bfloat16; the 11 small per-feature
    vectors are packed into one (1, VEC_TOTAL) float32 array."""
    weights = []
    segs = {}
    for i in range(len(DIMS) - 1):
        fan_in, fan_out = DIMS[i], DIMS[i + 1]
        key, kw, kb = jax.random.split(key, 3)
        bound = 1.0 / (fan_in ** 0.5)
        w = jax.random.uniform(kw, (fan_in, fan_out), jnp.float32, -bound, bound)
        b = jax.random.uniform(kb, (1, fan_out), jnp.float32, -bound, bound)
        weights.append(w.astype(jnp.bfloat16))
        segs[f"b{i + 1}"] = b
        if 1 <= i <= 3:  # hidden blocks with BatchNorm
            segs[f"g{i + 1}"] = jnp.ones((1, fan_out), jnp.float32)
            segs[f"be{i + 1}"] = jnp.zeros((1, fan_out), jnp.float32)
    vec = jnp.concatenate([segs[name] for name, _ in _VEC_LAYOUT], axis=1)
    return weights, vec


def generator_forward(z, weights, vec):
    B = z.shape[0]
    assert B % BN_GROUP == 0, f"batch must be a multiple of {BN_GROUP}, got {B}"

    # 256 rows (two 128-row BN groups) per grid step when possible, else 128.
    if B % (MAX_GROUPS_PER_STEP * BN_GROUP) == 0:
        rows_per_step = MAX_GROUPS_PER_STEP * BN_GROUP
    else:
        rows_per_step = BN_GROUP
    grid = (B // rows_per_step,)

    # Weights / packed vector: constant block index -> fetched once, VMEM-resident
    # across all grid steps.  z / out: indexed by the sub-batch grid step.
    in_specs = [pl.BlockSpec((rows_per_step, LATENT_DIM), lambda g: (g, 0))]
    in_specs += [pl.BlockSpec(tuple(w.shape), lambda g: (0, 0)) for w in weights]
    in_specs += [pl.BlockSpec((1, VEC_TOTAL), lambda g: (0, 0))]
    out_spec = pl.BlockSpec((rows_per_step, OUT_DIM), lambda g: (g, 0))

    flops = 2 * B * sum(d_in * d_out for d_in, d_out in zip(DIMS[:-1], DIMS[1:]))
    weight_bytes = sum(int(w.size) * w.dtype.itemsize for w in weights)
    bytes_accessed = (weight_bytes + int(vec.size) * 4
                      + B * (LATENT_DIM + OUT_DIM) * 4)
    cost = pl.CostEstimate(
        flops=flops,
        transcendentals=B * OUT_DIM + (B // BN_GROUP) * sum(HIDDEN[1:]),
        bytes_accessed=bytes_accessed)

    flat = pl.pallas_call(
        generator_kernel,
        out_shape=jax.ShapeDtypeStruct((B, OUT_DIM), jnp.float32),
        grid_spec=pltpu.PrefetchScalarGridSpec(
            num_scalar_prefetch=0,
            grid=grid,
            in_specs=in_specs,
            out_specs=out_spec,
        ),
        compiler_params=pltpu.CompilerParams(
            dimension_semantics=("parallel",)),  # v7x: shard sub-batches over 2 TCs
        cost_estimate=cost,
    )(z, *weights, vec)
    return flat.reshape(B, *IMG_SHAPE)


def _reference_forward(z, weights, vec):
    """Pure-JAX reference: same bf16 weights / f32 accumulation, canonical
    two-pass BatchNorm per 128-row group (cross-checks the single-pass
    variance used in the kernel)."""
    def seg(name):
        off, size = _VEC_OFFSETS[name]
        return vec[:, off:off + size]

    def lrelu(x):
        return jnp.where(x > 0, x, LRELU_SLOPE * x)

    def bn(x, gamma, beta):
        xg = x.reshape(-1, BN_GROUP, x.shape[-1])
        mean = jnp.mean(xg, axis=1, keepdims=True)
        var = jnp.mean((xg - mean) ** 2, axis=1, keepdims=True)
        y = gamma * (xg - mean) * jax.lax.rsqrt(var + BN_EPS) + beta
        return y.reshape(x.shape)

    def dot(x, w):
        return jnp.dot(x.astype(jnp.bfloat16), w,
                       preferred_element_type=jnp.float32)

    h = lrelu(dot(z, weights[0]) + seg("b1"))
    h = lrelu(bn(dot(h, weights[1]) + seg("b2"), seg("g2"), seg("be2")))
    h = lrelu(bn(dot(h, weights[2]) + seg("b3"), seg("g3"), seg("be3")))
    h = lrelu(bn(dot(h, weights[3]) + seg("b4"), seg("g4"), seg("be4")))
    h = jnp.tanh(dot(h, weights[4]) + seg("b5"))
    return h.reshape(z.shape[0], *IMG_SHAPE)


if __name__ == "__main__":
    key = jax.random.PRNGKey(0)
    key, kz, kp = jax.random.split(key, 3)

    # B = 512 -> grid of 2 steps x 256 rows; each step holds two independent
    # 128-row BatchNorm groups (exact training-mode stats per group) and the
    # bf16 weights stay VMEM-resident across steps.
    B = 512
    z = jax.random.normal(kz, (B, LATENT_DIM), jnp.float32)
    weights, vec = init_params(kp)

    img = generator_forward(z, weights, vec)
    img = jax.block_until_ready(img)

    assert img.shape == (B, CHANNELS, 1, IMG_SIZE), img.shape
    assert img.dtype == jnp.float32
    assert bool(jnp.all(jnp.isfinite(img)))
    # Tanh output range sanity check
    assert bool(jnp.all(jnp.abs(img) <= 1.0 + 1e-6))

    # Correctness vs pure-JAX reference (same bf16 weights, f32 accumulation,
    # canonical two-pass per-group BatchNorm).
    ref = jax.block_until_ready(_reference_forward(z, weights, vec))
    max_err = float(jnp.max(jnp.abs(img - ref)))
    assert max_err < 2e-2, f"max abs err vs reference: {max_err}"

    print("KERNEL_OK")
</pallas_src>

<mosaic_0001>
module attributes {stable_mosaic.version = 11 : i64} {
  func.func @generator_kernel(%arg0: i32, %arg1: memref<256x32xf32, #tpu.memory_space<vmem>>, %arg2: memref<32x128xbf16, #tpu.memory_space<vmem>>, %arg3: memref<128x256xbf16, #tpu.memory_space<vmem>>, %arg4: memref<256x512xbf16, #tpu.memory_space<vmem>>, %arg5: memref<512x1024xbf16, #tpu.memory_space<vmem>>, %arg6: memref<1024x128xbf16, #tpu.memory_space<vmem>>, %arg7: memref<1x5632xf32, #tpu.memory_space<vmem>>, %arg8: memref<256x128xf32, #tpu.memory_space<vmem>>) attributes {dimension_semantics = [#tpu.dimension_semantics<parallel>], iteration_bounds = array<i64: 2>, scalar_prefetch = 0 : i64, scratch_operands = 0 : i64, tpu.core_type = #tpu.core_type<tc>, window_params = [{transform_indices = @transform_0, window_bounds = array<i64: 256, 32>}, {pipeline_mode = #tpu.pipeline_mode<synchronous>, transform_indices = @transform_1, window_bounds = array<i64: 32, 128>}, {pipeline_mode = #tpu.pipeline_mode<synchronous>, transform_indices = @transform_2, window_bounds = array<i64: 128, 256>}, {pipeline_mode = #tpu.pipeline_mode<synchronous>, transform_indices = @transform_3, window_bounds = array<i64: 256, 512>}, {pipeline_mode = #tpu.pipeline_mode<synchronous>, transform_indices = @transform_4, window_bounds = array<i64: 512, 1024>}, {pipeline_mode = #tpu.pipeline_mode<synchronous>, transform_indices = @transform_5, window_bounds = array<i64: 1024, 128>}, {pipeline_mode = #tpu.pipeline_mode<synchronous>, transform_indices = @transform_6, window_bounds = array<i64: 1, 5632>}, {transform_indices = @transform_7, window_bounds = array<i64: 256, 128>}]} {
    %c0 = arith.constant 0 : index
    %c0_0 = arith.constant 0 : index
    %0 = vector.load %arg1[%c0, %c0_0] : memref<256x32xf32, #tpu.memory_space<vmem>>, vector<256x32xf32>
    %1 = arith.truncf %0 : vector<256x32xf32> to vector<256x32xbf16>
    %c0_1 = arith.constant 0 : index
    %c0_2 = arith.constant 0 : index
    %2 = vector.load %arg2[%c0_1, %c0_2] : memref<32x128xbf16, #tpu.memory_space<vmem>>, vector<32x128xbf16>
    %cst = arith.constant dense<0.000000e+00> : vector<256x128xf32>
    %3 = tpu.matmul %1, %2, %cst {dimension_numbers = #tpu.dot_dimension_numbers<[1], [0], [0], [1], [0, 0, 1, 1], [], []>} : vector<256x32xbf16>, vector<32x128xbf16>, vector<256x128xf32> -> vector<256x128xf32>
    %c0_3 = arith.constant 0 : index
    %c0_4 = arith.constant 0 : index
    %4 = vector.load %arg7[%c0_3, %c0_4] : memref<1x5632xf32, #tpu.memory_space<vmem>>, vector<1x128xf32>
    %5 = vector.broadcast %4 : vector<1x128xf32> to vector<256x128xf32>
    %6 = arith.addf %3, %5 : vector<256x128xf32>
    %cst_5 = arith.constant 1.000000e-01 : f32
    %7 = vector.broadcast %cst_5 : f32 to vector<256x128xf32>
    %8 = arith.mulf %7, %6 : vector<256x128xf32>
    %9 = arith.maximumf %6, %8 : vector<256x128xf32>
    %10 = arith.truncf %9 : vector<256x128xf32> to vector<256x128xbf16>
    %c0_6 = arith.constant 0 : index
    %c0_7 = arith.constant 0 : index
    %11 = vector.load %arg3[%c0_6, %c0_7] : memref<128x256xbf16, #tpu.memory_space<vmem>>, vector<128x256xbf16>
    %cst_8 = arith.constant dense<0.000000e+00> : vector<256x256xf32>
    %12 = tpu.matmul %10, %11, %cst_8 {dimension_numbers = #tpu.dot_dimension_numbers<[1], [0], [0], [1], [0, 0, 1, 1], [], []>} : vector<256x128xbf16>, vector<128x256xbf16>, vector<256x256xf32> -> vector<256x256xf32>
    %c0_9 = arith.constant 0 : index
    %c128 = arith.constant 128 : index
    %13 = vector.load %arg7[%c0_9, %c128] : memref<1x5632xf32, #tpu.memory_space<vmem>>, vector<1x256xf32>
    %14 = vector.broadcast %13 : vector<1x256xf32> to vector<256x256xf32>
    %15 = arith.addf %12, %14 : vector<256x256xf32>
    %c0_10 = arith.constant 0 : index
    %c384 = arith.constant 384 : index
    %16 = vector.load %arg7[%c0_10, %c384] : memref<1x5632xf32, #tpu.memory_space<vmem>>, vector<1x256xf32>
    %c0_11 = arith.constant 0 : index
    %c640 = arith.constant 640 : index
    %17 = vector.load %arg7[%c0_11, %c640] : memref<1x5632xf32, #tpu.memory_space<vmem>>, vector<1x256xf32>
    %18 = vector.shape_cast %15 : vector<256x256xf32> to vector<2x128x256xf32>
    %cst_12 = arith.constant dense<0.000000e+00> : vector<2x256xf32>
    %19 = vector.multi_reduction <add>, %18, %cst_12 [1] : vector<2x128x256xf32> to vector<2x256xf32>
    %20 = vector.shape_cast %19 : vector<2x256xf32> to vector<2x1x256xf32>
    %cst_13 = arith.constant 1.280000e+02 : f32
    %21 = vector.broadcast %cst_13 : f32 to vector<2x1x256xf32>
    %22 = arith.divf %20, %21 : vector<2x1x256xf32>
    %23 = arith.mulf %18, %18 : vector<2x128x256xf32>
    %cst_14 = arith.constant dense<0.000000e+00> : vector<2x256xf32>
    %24 = vector.multi_reduction <add>, %23, %cst_14 [1] : vector<2x128x256xf32> to vector<2x256xf32>
    %25 = vector.shape_cast %24 : vector<2x256xf32> to vector<2x1x256xf32>
    %cst_15 = arith.constant 1.280000e+02 : f32
    %26 = vector.broadcast %cst_15 : f32 to vector<2x1x256xf32>
    %27 = arith.divf %25, %26 : vector<2x1x256xf32>
    %28 = arith.mulf %22, %22 : vector<2x1x256xf32>
    %29 = arith.subf %27, %28 : vector<2x1x256xf32>
    %cst_16 = arith.constant 8.000000e-01 : f32
    %30 = vector.broadcast %cst_16 : f32 to vector<2x1x256xf32>
    %31 = arith.addf %29, %30 : vector<2x1x256xf32>
    %32 = math.rsqrt %31 : vector<2x1x256xf32>
    %33 = vector.shape_cast %16 : vector<1x256xf32> to vector<1x1x256xf32>
    %34 = vector.broadcast %33 : vector<1x1x256xf32> to vector<2x1x256xf32>
    %35 = arith.mulf %34, %32 : vector<2x1x256xf32>
    %36 = arith.mulf %22, %35 : vector<2x1x256xf32>
    %37 = vector.shape_cast %17 : vector<1x256xf32> to vector<1x1x256xf32>
    %38 = vector.broadcast %37 : vector<1x1x256xf32> to vector<2x1x256xf32>
    %39 = arith.subf %38, %36 : vector<2x1x256xf32>
    %40 = vector.broadcast %35 : vector<2x1x256xf32> to vector<2x128x256xf32>
    %41 = arith.mulf %18, %40 : vector<2x128x256xf32>
    %42 = vector.broadcast %39 : vector<2x1x256xf32> to vector<2x128x256xf32>
    %43 = arith.addf %41, %42 : vector<2x128x256xf32>
    %cst_17 = arith.constant 1.000000e-01 : f32
    %44 = vector.broadcast %cst_17 : f32 to vector<2x128x256xf32>
    %45 = arith.mulf %44, %43 : vector<2x128x256xf32>
    %46 = arith.maximumf %43, %45 : vector<2x128x256xf32>
    %47 = vector.shape_cast %46 : vector<2x128x256xf32> to vector<256x256xf32>
    %48 = arith.truncf %47 : vector<256x256xf32> to vector<256x256xbf16>
    %c0_18 = arith.constant 0 : index
    %c0_19 = arith.constant 0 : index
    %49 = vector.load %arg4[%c0_18, %c0_19] : memref<256x512xbf16, #tpu.memory_space<vmem>>, vector<256x512xbf16>
    %cst_20 = arith.constant dense<0.000000e+00> : vector<256x512xf32>
    %50 = tpu.matmul %48, %49, %cst_20 {dimension_numbers = #tpu.dot_dimension_numbers<[1], [0], [0], [1], [0, 0, 1, 1], [], []>} : vector<256x256xbf16>, vector<256x512xbf16>, vector<256x512xf32> -> vector<256x512xf32>
    %c0_21 = arith.constant 0 : index
    %c896 = arith.constant 896 : index
    %51 = vector.load %arg7[%c0_21, %c896] : memref<1x5632xf32, #tpu.memory_space<vmem>>, vector<1x512xf32>
    %52 = vector.broadcast %51 : vector<1x512xf32> to vector<256x512xf32>
    %53 = arith.addf %50, %52 : vector<256x512xf32>
    %c0_22 = arith.constant 0 : index
    %c1408 = arith.constant 1408 : index
    %54 = vector.load %arg7[%c0_22, %c1408] : memref<1x5632xf32, #tpu.memory_space<vmem>>, vector<1x512xf32>
    %c0_23 = arith.constant 0 : index
    %c1920 = arith.constant 1920 : index
    %55 = vector.load %arg7[%c0_23, %c1920] : memref<1x5632xf32, #tpu.memory_space<vmem>>, vector<1x512xf32>
    %56 = vector.shape_cast %53 : vector<256x512xf32> to vector<2x128x512xf32>
    %cst_24 = arith.constant dense<0.000000e+00> : vector<2x512xf32>
    %57 = vector.multi_reduction <add>, %56, %cst_24 [1] : vector<2x128x512xf32> to vector<2x512xf32>
    %58 = vector.shape_cast %57 : vector<2x512xf32> to vector<2x1x512xf32>
    %cst_25 = arith.constant 1.280000e+02 : f32
    %59 = vector.broadcast %cst_25 : f32 to vector<2x1x512xf32>
    %60 = arith.divf %58, %59 : vector<2x1x512xf32>
    %61 = arith.mulf %56, %56 : vector<2x128x512xf32>
    %cst_26 = arith.constant dense<0.000000e+00> : vector<2x512xf32>
    %62 = vector.multi_reduction <add>, %61, %cst_26 [1] : vector<2x128x512xf32> to vector<2x512xf32>
    %63 = vector.shape_cast %62 : vector<2x512xf32> to vector<2x1x512xf32>
    %cst_27 = arith.constant 1.280000e+02 : f32
    %64 = vector.broadcast %cst_27 : f32 to vector<2x1x512xf32>
    %65 = arith.divf %63, %64 : vector<2x1x512xf32>
    %66 = arith.mulf %60, %60 : vector<2x1x512xf32>
    %67 = arith.subf %65, %66 : vector<2x1x512xf32>
    %cst_28 = arith.constant 8.000000e-01 : f32
    %68 = vector.broadcast %cst_28 : f32 to vector<2x1x512xf32>
    %69 = arith.addf %67, %68 : vector<2x1x512xf32>
    %70 = math.rsqrt %69 : vector<2x1x512xf32>
    %71 = vector.shape_cast %54 : vector<1x512xf32> to vector<1x1x512xf32>
    %72 = vector.broadcast %71 : vector<1x1x512xf32> to vector<2x1x512xf32>
    %73 = arith.mulf %72, %70 : vector<2x1x512xf32>
    %74 = arith.mulf %60, %73 : vector<2x1x512xf32>
    %75 = vector.shape_cast %55 : vector<1x512xf32> to vector<1x1x512xf32>
    %76 = vector.broadcast %75 : vector<1x1x512xf32> to vector<2x1x512xf32>
    %77 = arith.subf %76, %74 : vector<2x1x512xf32>
    %78 = vector.broadcast %73 : vector<2x1x512xf32> to vector<2x128x512xf32>
    %79 = arith.mulf %56, %78 : vector<2x128x512xf32>
    %80 = vector.broadcast %77 : vector<2x1x512xf32> to vector<2x128x512xf32>
    %81 = arith.addf %79, %80 : vector<2x128x512xf32>
    %cst_29 = arith.constant 1.000000e-01 : f32
    %82 = vector.broadcast %cst_29 : f32 to vector<2x128x512xf32>
    %83 = arith.mulf %82, %81 : vector<2x128x512xf32>
    %84 = arith.maximumf %81, %83 : vector<2x128x512xf32>
    %85 = vector.shape_cast %84 : vector<2x128x512xf32> to vector<256x512xf32>
    %86 = arith.truncf %85 : vector<256x512xf32> to vector<256x512xbf16>
    %c0_30 = arith.constant 0 : index
    %c0_31 = arith.constant 0 : index
    %87 = vector.load %arg5[%c0_30, %c0_31] : memref<512x1024xbf16, #tpu.memory_space<vmem>>, vector<512x1024xbf16>
    %cst_32 = arith.constant dense<0.000000e+00> : vector<256x1024xf32>
    %88 = tpu.matmul %86, %87, %cst_32 {dimension_numbers = #tpu.dot_dimension_numbers<[1], [0], [0], [1], [0, 0, 1, 1], [], []>} : vector<256x512xbf16>, vector<512x1024xbf16>, vector<256x1024xf32> -> vector<256x1024xf32>
    %c0_33 = arith.constant 0 : index
    %c2432 = arith.constant 2432 : index
    %89 = vector.load %arg7[%c0_33, %c2432] : memref<1x5632xf32, #tpu.memory_space<vmem>>, vector<1x1024xf32>
    %90 = vector.broadcast %89 : vector<1x1024xf32> to vector<256x1024xf32>
    %91 = arith.addf %88, %90 : vector<256x1024xf32>
    %c0_34 = arith.constant 0 : index
    %c3456 = arith.constant 3456 : index
    %92 = vector.load %arg7[%c0_34, %c3456] : memref<1x5632xf32, #tpu.memory_space<vmem>>, vector<1x1024xf32>
    %c0_35 = arith.constant 0 : index
    %c4480 = arith.constant 4480 : index
    %93 = vector.load %arg7[%c0_35, %c4480] : memref<1x5632xf32, #tpu.memory_space<vmem>>, vector<1x1024xf32>
    %94 = vector.shape_cast %91 : vector<256x1024xf32> to vector<2x128x1024xf32>
    %cst_36 = arith.constant dense<0.000000e+00> : vector<2x1024xf32>
    %95 = vector.multi_reduction <add>, %94, %cst_36 [1] : vector<2x128x1024xf32> to vector<2x1024xf32>
    %96 = vector.shape_cast %95 : vector<2x1024xf32> to vector<2x1x1024xf32>
    %cst_37 = arith.constant 1.280000e+02 : f32
    %97 = vector.broadcast %cst_37 : f32 to vector<2x1x1024xf32>
    %98 = arith.divf %96, %97 : vector<2x1x1024xf32>
    %99 = arith.mulf %94, %94 : vector<2x128x1024xf32>
    %cst_38 = arith.constant dense<0.000000e+00> : vector<2x1024xf32>
    %100 = vector.multi_reduction <add>, %99, %cst_38 [1] : vector<2x128x1024xf32> to vector<2x1024xf32>
    %101 = vector.shape_cast %100 : vector<2x1024xf32> to vector<2x1x1024xf32>
    %cst_39 = arith.constant 1.280000e+02 : f32
    %102 = vector.broadcast %cst_39 : f32 to vector<2x1x1024xf32>
    %103 = arith.divf %101, %102 : vector<2x1x1024xf32>
    %104 = arith.mulf %98, %98 : vector<2x1x1024xf32>
    %105 = arith.subf %103, %104 : vector<2x1x1024xf32>
    %cst_40 = arith.constant 8.000000e-01 : f32
    %106 = vector.broadcast %cst_40 : f32 to vector<2x1x1024xf32>
    %107 = arith.addf %105, %106 : vector<2x1x1024xf32>
    %108 = math.rsqrt %107 : vector<2x1x1024xf32>
    %109 = vector.shape_cast %92 : vector<1x1024xf32> to vector<1x1x1024xf32>
    %110 = vector.broadcast %109 : vector<1x1x1024xf32> to vector<2x1x1024xf32>
    %111 = arith.mulf %110, %108 : vector<2x1x1024xf32>
    %112 = arith.mulf %98, %111 : vector<2x1x1024xf32>
    %113 = vector.shape_cast %93 : vector<1x1024xf32> to vector<1x1x1024xf32>
    %114 = vector.broadcast %113 : vector<1x1x1024xf32> to vector<2x1x1024xf32>
    %115 = arith.subf %114, %112 : vector<2x1x1024xf32>
    %116 = vector.broadcast %111 : vector<2x1x1024xf32> to vector<2x128x1024xf32>
    %117 = arith.mulf %94, %116 : vector<2x128x1024xf32>
    %118 = vector.broadcast %115 : vector<2x1x1024xf32> to vector<2x128x1024xf32>
    %119 = arith.addf %117, %118 : vector<2x128x1024xf32>
    %cst_41 = arith.constant 1.000000e-01 : f32
    %120 = vector.broadcast %cst_41 : f32 to vector<2x128x1024xf32>
    %121 = arith.mulf %120, %119 : vector<2x128x1024xf32>
    %122 = arith.maximumf %119, %121 : vector<2x128x1024xf32>
    %123 = vector.shape_cast %122 : vector<2x128x1024xf32> to vector<256x1024xf32>
    %124 = arith.truncf %123 : vector<256x1024xf32> to vector<256x1024xbf16>
    %c0_42 = arith.constant 0 : index
    %c0_43 = arith.constant 0 : index
    %125 = vector.load %arg6[%c0_42, %c0_43] : memref<1024x128xbf16, #tpu.memory_space<vmem>>, vector<1024x128xbf16>
    %cst_44 = arith.constant dense<0.000000e+00> : vector<256x128xf32>
    %126 = tpu.matmul %124, %125, %cst_44 {dimension_numbers = #tpu.dot_dimension_numbers<[1], [0], [0], [1], [0, 0, 1, 1], [], []>} : vector<256x1024xbf16>, vector<1024x128xbf16>, vector<256x128xf32> -> vector<256x128xf32>
    %c0_45 = arith.constant 0 : index
    %c5504 = arith.constant 5504 : index
    %127 = vector.load %arg7[%c0_45, %c5504] : memref<1x5632xf32, #tpu.memory_space<vmem>>, vector<1x128xf32>
    %128 = vector.broadcast %127 : vector<1x128xf32> to vector<256x128xf32>
    %129 = arith.addf %126, %128 : vector<256x128xf32>
    %130 = math.tanh %129 : vector<256x128xf32>
    %c0_46 = arith.constant 0 : index
    %c0_47 = arith.constant 0 : index
    %131 = vector.load %arg8[%c0_46, %c0_47] : memref<256x128xf32, #tpu.memory_space<vmem>>, vector<256x128xf32>
    tpu.vector_store %arg8[%c0_46, %c0_47], %130 {strides = array<i32>} : memref<256x128xf32, #tpu.memory_space<vmem>>, vector<256x128xf32>,
    return
  }
  func.func @transform_0(%arg0: i32) -> (i32, i32) {
    %c0_i32 = arith.constant 0 : i32
    %c0_i32_0 = arith.constant 0 : i32
    return %arg0, %c0_i32 : i32, i32
  }
  func.func @transform_1(%arg0: i32) -> (i32, i32) {
    %c0_i32 = arith.constant 0 : i32
    %c0_i32_0 = arith.constant 0 : i32
    %c0_i32_1 = arith.constant 0 : i32
    return %c0_i32, %c0_i32_0 : i32, i32
  }
  func.func @transform_2(%arg0: i32) -> (i32, i32) {
    %c0_i32 = arith.constant 0 : i32
    %c0_i32_0 = arith.constant 0 : i32
    %c0_i32_1 = arith.constant 0 : i32
    return %c0_i32, %c0_i32_0 : i32, i32
  }
  func.func @transform_3(%arg0: i32) -> (i32, i32) {
    %c0_i32 = arith.constant 0 : i32
    %c0_i32_0 = arith.constant 0 : i32
    %c0_i32_1 = arith.constant 0 : i32
    return %c0_i32, %c0_i32_0 : i32, i32
  }
  func.func @transform_4(%arg0: i32) -> (i32, i32) {
    %c0_i32 = arith.constant 0 : i32
    %c0_i32_0 = arith.constant 0 : i32
    %c0_i32_1 = arith.constant 0 : i32
    return %c0_i32, %c0_i32_0 : i32, i32
  }
  func.func @transform_5(%arg0: i32) -> (i32, i32) {
    %c0_i32 = arith.constant 0 : i32
    %c0_i32_0 = arith.constant 0 : i32
    %c0_i32_1 = arith.constant 0 : i32
    return %c0_i32, %c0_i32_0 : i32, i32
  }
  func.func @transform_6(%arg0: i32) -> (i32, i32) {
    %c0_i32 = arith.constant 0 : i32
    %c0_i32_0 = arith.constant 0 : i32
    %c0_i32_1 = arith.constant 0 : i32
    return %c0_i32, %c0_i32_0 : i32, i32
  }
  func.func @transform_7(%arg0: i32) -> (i32, i32) {
    %c0_i32 = arith.constant 0 : i32
    %c0_i32_0 = arith.constant 0 : i32
    return %arg0, %c0_i32 : i32, i32
  }
}

</mosaic_0001>

<llo_original>
// kernel: tpu_custom_call.1
$region0: #{tpu_custom_call.1}
  #allocation0 [shape = 'u32[]', space=smem, size = 0x4, offset = 0x4, fixed_abs, tag = 'smem constant byte address 0x4 - core index']
  #allocation1 [shape = 'u32[144,128]{1,0:T(1,128)}', space=vmem, size = 0x12000, scoped, tag = 'internal scratch']
  %s0 = inlined_call_operand.vmem [shape: f32[512,32], index: 0, kind: input, shape index: {}]
  %s1 = inlined_call_operand.hbm [shape: bf16[32,128], index: 1, kind: input, shape index: {}]
  %s2 = inlined_call_operand.vmem [shape: bf16[128,256], index: 2, kind: input, shape index: {}]
  %s3 = inlined_call_operand.vmem [shape: bf16[256,512], index: 3, kind: input, shape index: {}]
  %s4 = inlined_call_operand.hbm [shape: bf16[512,1024], index: 4, kind: input, shape index: {}]
  %s5 = inlined_call_operand.hbm [shape: bf16[1024,128], index: 5, kind: input, shape index: {}]
  %s6 = inlined_call_operand.hbm [shape: f32[1,5632], index: 6, kind: input, shape index: {}]
  %s7 = inlined_call_operand.hbm [shape: f32[512,128], index: 7, kind: output, shape index: {}]
  %s8 = sld [smem:[#allocation0]]
  $region77: #{tpu_custom_call.1} parent=0
    _
  %s10 = ssub.s32 1, %s8
  %s11 = scalar_select 0, %s10, %s8
  $region1: #{tpu_custom_call.1} parent=0
    #allocation2 [shape = 'u8[8192]{0}', space=vmem, size = 0x2000, scoped, tag = 'input window, operand 1, single buffered']
    #allocation3 [shape = 's32[2]{0}', space=sflag, size = 0x8, scoped, tag = 'scoped memory for tpu_custom_call.1']
    #allocation4 [shape = 's32[2]{0}', space=sflag, size = 0x8, scoped, tag = 'scoped memory for tpu_custom_call.1']
    #allocation5 [shape = 'u8[1048576]{0}', space=vmem, size = 0x100000, scoped, tag = 'input window, operand 4, single buffered']
    #allocation6 [shape = 's32[1]{0}', space=sflag, size = 0x4, scoped, tag = 'scoped memory for tpu_custom_call.1']
    #allocation7 [shape = 'u8[262144]{0}', space=vmem, size = 0x40000, scoped, tag = 'input window, operand 5, single buffered']
    #allocation8 [shape = 'u8[22528]{0}', space=vmem, size = 0x5800, scoped, tag = 'input window, operand 6, single buffered']
    #allocation9 [shape = 's32[1]{0}', space=sflag, size = 0x4, scoped, tag = 'scoped memory for tpu_custom_call.1']
    #allocation10 [shape = 'u8[262144]{0}', space=vmem, size = 0x40000, scoped, tag = 'output window, operand 0']
    %12 = vsyncpa [#allocation3], 0
    %13 = vsyncpa [#allocation6], 0
    %14 = vsyncpa [#allocation9], 0
    %15 = vsyncpa [#allocation4], 0
    %s16 = scalar_lea.sflag [#allocation4], 1
    %17 = vsyncpa %s16, 0
    loop: start=0, step=1, limit=4
    $region2: #{tpu_custom_call.1} parent=1 // loop_pre_header
      _
    $region3: #{tpu_custom_call.1} parent=1 // loop_header
      %s19 = sphi 0, %s23
      %p20 = scmp.ge.s32.totalorder %s19, 4
      %s29 = sphi 0, %s31
      %s32 = sphi 0, %s29
      %s33 = sphi 0, %s32
      %s49 = sphi 0, %s33
      %s53 = sphi 0, %s53
      %s55 = sphi 0, %s53
      %s56 = sphi 0, %s55
      %s70 = sphi 0, %s56
      %s74 = sphi 0, %s74
      %s76 = sphi 0, %s74
      %s77 = sphi 0, %s76
      %s91 = sphi 0, %s77
      %s95 = sphi 0, %s95
      %s97 = sphi 0, %s95
      %s98 = sphi 0, %s97
      %s112 = sphi 0, %s98
      %s116 = sphi 0, %s116
      %s118 = sphi 0, %s116
      %s119 = sphi 0, %s118
      %s133 = sphi 0, %s119
      %s137 = sphi 0, %s137
      %s139 = sphi 0, %s137
      %s140 = sphi 0, %s139
      %s154 = sphi 0, %s140
      %s158 = sphi 0, %s158
      %s160 = sphi 0, %s158
      %s161 = sphi 0, %s160
      %s175 = sphi 0, %s161
      %s181 = sphi 0, %s183
      %s184 = sphi 0, %s181
      %s185 = sphi 0, %s184
      %s201 = sphi 0, %s185
    $region4: #{tpu_custom_call.1} parent=1 // loop_header_branch
      %22 = sbr.rel (%p20) target = $region8
    $region5: #{tpu_custom_call.1} parent=1 // loop_body
      %s24 = ssub.s32 %s19, 1
      %s25 = ssub.s32 %s19, 2
      %s26 = sadd.s32 %s19, 1
      %s27 = ssub.s32 %s19, %s26
      %p28 = scmp.eq.s32.totalorder %s27, 0
      %s30 = sadd.s32 %s29, 1
      %s31 = scalar_select %p28, %s29, %s30
      %p34 = pneg %p28
      %p35 = scmp.eq.s32.totalorder %s19, 1
      %p36 = por %p34, %p35
      %p37 = scmp.ne.s32.totalorder %s29, %s32
      %p38 = scmp.eq.s32.totalorder %s19, 0
      %p39 = por %p37, %p38
      %p40 = scmp.ne.s32.totalorder %s29, %s32
      %p41 = scmp.eq.s32.totalorder %s24, 1
      %p42 = por %p40, %p41
      %p43 = scmp.ne.s32.totalorder %s32, %s33
      %p44 = scmp.eq.s32.totalorder %s24, 0
      %p45 = por %p43, %p44
      %p46 = scmp.ne.s32.totalorder %s32, %s33
      %p47 = scmp.eq.s32.totalorder %s25, 1
      %p48 = por %p46, %p47
      %p50 = scmp.ne.s32.totalorder %s33, %s49
      %p51 = scmp.eq.s32.totalorder %s25, 0
      %p52 = por %p50, %p51
      %s54 = sadd.s32 %s53, 1
      %p57 = scmp.eq.s32.totalorder %s19, 1
      %p58 = scmp.ne.s32.totalorder %s53, %s55
      %p59 = scmp.eq.s32.totalorder %s19, 0
      %p60 = por %p58, %p59
      %p61 = scmp.ne.s32.totalorder %s53, %s55
      %p62 = scmp.eq.s32.totalorder %s24, 1
      %p63 = por %p61, %p62
      %p64 = scmp.ne.s32.totalorder %s55, %s56
      %p65 = scmp.eq.s32.totalorder %s24, 0
      %p66 = por %p64, %p65
      %p67 = scmp.ne.s32.totalorder %s55, %s56
      %p68 = scmp.eq.s32.totalorder %s25, 1
      %p69 = por %p67, %p68
      %p71 = scmp.ne.s32.totalorder %s56, %s70
      %p72 = scmp.eq.s32.totalorder %s25, 0
      %p73 = por %p71, %p72
      %s75 = sadd.s32 %s74, 1
      %p78 = scmp.eq.s32.totalorder %s19, 1
      %p79 = scmp.ne.s32.totalorder %s74, %s76
      %p80 = scmp.eq.s32.totalorder %s19, 0
      %p81 = por %p79, %p80
      %p82 = scmp.ne.s32.totalorder %s74, %s76
      %p83 = scmp.eq.s32.totalorder %s24, 1
      %p84 = por %p82, %p83
      %p85 = scmp.ne.s32.totalorder %s76, %s77
      %p86 = scmp.eq.s32.totalorder %s24, 0
      %p87 = por %p85, %p86
      %p88 = scmp.ne.s32.totalorder %s76, %s77
      %p89 = scmp.eq.s32.totalorder %s25, 1
      %p90 = por %p88, %p89
      %p92 = scmp.ne.s32.totalorder %s77, %s91
      %p93 = scmp.eq.s32.totalorder %s25, 0
      %p94 = por %p92, %p93
      %s96 = sadd.s32 %s95, 1
      %p99 = scmp.eq.s32.totalorder %s19, 1
      %p100 = scmp.ne.s32.totalorder %s95, %s97
      %p101 = scmp.eq.s32.totalorder %s19, 0
      %p102 = por %p100, %p101
      %p103 = scmp.ne.s32.totalorder %s95, %s97
      %p104 = scmp.eq.s32.totalorder %s24, 1
      %p105 = por %p103, %p104
      %p106 = scmp.ne.s32.totalorder %s97, %s98
      %p107 = scmp.eq.s32.totalorder %s24, 0
      %p108 = por %p106, %p107
      %p109 = scmp.ne.s32.totalorder %s97, %s98
      %p110 = scmp.eq.s32.totalorder %s25, 1
      %p111 = por %p109, %p110
      %p113 = scmp.ne.s32.totalorder %s98, %s112
      %p114 = scmp.eq.s32.totalorder %s25, 0
      %p115 = por %p113, %p114
      %s117 = sadd.s32 %s116, 1
      %p120 = scmp.eq.s32.totalorder %s19, 1
      %p121 = scmp.ne.s32.totalorder %s116, %s118
      %p122 = scmp.eq.s32.totalorder %s19, 0
      %p123 = por %p121, %p122
      %p124 = scmp.ne.s32.totalorder %s116, %s118
      %p125 = scmp.eq.s32.totalorder %s24, 1
      %p126 = por %p124, %p125
      %p127 = scmp.ne.s32.totalorder %s118, %s119
      %p128 = scmp.eq.s32.totalorder %s24, 0
      %p129 = por %p127, %p128
      %p130 = scmp.ne.s32.totalorder %s118, %s119
      %p131 = scmp.eq.s32.totalorder %s25, 1
      %p132 = por %p130, %p131
      %p134 = scmp.ne.s32.totalorder %s119, %s133
      %p135 = scmp.eq.s32.totalorder %s25, 0
      %p136 = por %p134, %p135
      %s138 = sadd.s32 %s137, 1
      %p141 = scmp.eq.s32.totalorder %s19, 1
      %p142 = scmp.ne.s32.totalorder %s137, %s139
      %p143 = scmp.eq.s32.totalorder %s19, 0
      %p144 = por %p142, %p143
      %p145 = scmp.ne.s32.totalorder %s137, %s139
      %p146 = scmp.eq.s32.totalorder %s24, 1
      %p147 = por %p145, %p146
      %p148 = scmp.ne.s32.totalorder %s139, %s140
      %p149 = scmp.eq.s32.totalorder %s24, 0
      %p150 = por %p148, %p149
      %p151 = scmp.ne.s32.totalorder %s139, %s140
      %p152 = scmp.eq.s32.totalorder %s25, 1
      %p153 = por %p151, %p152
      %p155 = scmp.ne.s32.totalorder %s140, %s154
      %p156 = scmp.eq.s32.totalorder %s25, 0
      %p157 = por %p155, %p156
      %s159 = sadd.s32 %s158, 1
      %p162 = scmp.eq.s32.totalorder %s19, 1
      %p163 = scmp.ne.s32.totalorder %s158, %s160
      %p164 = scmp.eq.s32.totalorder %s19, 0
      %p165 = por %p163, %p164
      %p166 = scmp.ne.s32.totalorder %s158, %s160
      %p167 = scmp.eq.s32.totalorder %s24, 1
      %p168 = por %p166, %p167
      %p169 = scmp.ne.s32.totalorder %s160, %s161
      %p170 = scmp.eq.s32.totalorder %s24, 0
      %p171 = por %p169, %p170
      %p172 = scmp.ne.s32.totalorder %s160, %s161
      %p173 = scmp.eq.s32.totalorder %s25, 1
      %p174 = por %p172, %p173
      %p176 = scmp.ne.s32.totalorder %s161, %s175
      %p177 = scmp.eq.s32.totalorder %s25, 0
      %p178 = por %p176, %p177
      %s179 = ssub.s32 %s19, %s26
      %p180 = scmp.eq.s32.totalorder %s179, 0
      %s182 = sadd.s32 %s181, 1
      %s183 = scalar_select %p180, %s181, %s182
      %p186 = pneg %p180
      %p187 = scmp.eq.s32.totalorder %s19, 1
      %p188 = por %p186, %p187
      %p189 = scmp.ne.s32.totalorder %s181, %s184
      %p190 = scmp.eq.s32.totalorder %s19, 0
      %p191 = por %p189, %p190
      %p192 = scmp.ne.s32.totalorder %s181, %s184
      %p193 = scmp.eq.s32.totalorder %s24, 1
      %p194 = por %p192, %p193
      %p195 = scmp.ne.s32.totalorder %s184, %s185
      %p196 = scmp.eq.s32.totalorder %s24, 0
      %p197 = por %p195, %p196
      %p198 = scmp.ne.s32.totalorder %s184, %s185
      %p199 = scmp.eq.s32.totalorder %s25, 1
      %p200 = por %p198, %p199
      %p202 = scmp.ne.s32.totalorder %s185, %s201
      %p203 = scmp.eq.s32.totalorder %s25, 0
      %p204 = por %p202, %p203
      %p205 = scmp.le.s32.totalorder 1, %s19
      %p206 = scmp.lt.s32.totalorder %s19, 3
      %p207 = pnand %p205, %p206
      %p208 = pneg %p207
      // Predicated region
      $region9: #{tpu_custom_call.1} parent=5 // pred_check
        _
      $region10: #{tpu_custom_call.1} parent=5 // pred_check_branch
        %210 = sbr.rel (%p207) target = $region12
      $region11: #{tpu_custom_call.1} parent=5 // pred_region
        %s211 = ssub.s32 %s19, 1
        // Predicated region
        $region13: #{tpu_custom_call.1} parent=11 // pred_check
          %p212 = pneg %p66
        $region14: #{tpu_custom_call.1} parent=11 // pred_check_branch
          %214 = sbr.rel (%p212) target = $region16
        $region15: #{tpu_custom_call.1} parent=11 // pred_region
          %s216 = ssub.s32 256, 256
          %217 = vsyncadd [#allocation3], %s216
          %s218 = sshll.u32 [#allocation2], 4
          %s219 = int_to_ptr.vmem [resolvable:$true] %s218
          %224 = dma.hbm_to_vmem [thread:$0]  %s1, 256, %s219, [#allocation3], 64, 64, 4
        $region16: #{tpu_custom_call.1} parent=11 // pred_fallthru
          _
        // Predicated region
        $region17: #{tpu_custom_call.1} parent=11 // pred_check
          %p225 = pneg %p87
        $region18: #{tpu_custom_call.1} parent=11 // pred_check_branch
          %227 = sbr.rel (%p225) target = $region20
        $region19: #{tpu_custom_call.1} parent=11 // pred_region
          _
        $region20: #{tpu_custom_call.1} parent=11 // pred_fallthru
          _
        // Predicated region
        $region21: #{tpu_custom_call.1} parent=11 // pred_check
          %p228 = pneg %p108
        $region22: #{tpu_custom_call.1} parent=11 // pred_check_branch
          %230 = sbr.rel (%p228) target = $region24
        $region23: #{tpu_custom_call.1} parent=11 // pred_region
          _
        $region24: #{tpu_custom_call.1} parent=11 // pred_fallthru
          _
        // Predicated region
        $region25: #{tpu_custom_call.1} parent=11 // pred_check
          %p231 = pneg %p129
        $region26: #{tpu_custom_call.1} parent=11 // pred_check_branch
          %233 = sbr.rel (%p231) target = $region28
        $region27: #{tpu_custom_call.1} parent=11 // pred_region
          %s235 = ssub.s32 32768, 32768
          %236 = vsyncadd [#allocation6], %s235
          %s237 = sshll.u32 [#allocation5], 4
          %s238 = int_to_ptr.vmem [resolvable:$true] %s237
          %243 = dma.hbm_to_vmem [thread:$0]  %s4, 32768, %s238, [#allocation6], 512, 512, 32
        $region28: #{tpu_custom_call.1} parent=11 // pred_fallthru
          _
        // Predicated region
        $region29: #{tpu_custom_call.1} parent=11 // pred_check
          %p244 = pneg %p150
        $region30: #{tpu_custom_call.1} parent=11 // pred_check_branch
          %246 = sbr.rel (%p244) target = $region32
        $region31: #{tpu_custom_call.1} parent=11 // pred_region
          %s248 = ssub.s32 8192, 8192
          %249 = vsyncadd [#allocation6], %s248
          %s250 = sshll.u32 [#allocation7], 4
          %s251 = int_to_ptr.vmem [resolvable:$true] %s250
          %256 = dma.hbm_to_vmem [thread:$0]  %s5, 8192, %s251, [#allocation6], 64, 64, 4
        $region32: #{tpu_custom_call.1} parent=11 // pred_fallthru
          _
        // Predicated region
        $region33: #{tpu_custom_call.1} parent=11 // pred_check
          %p257 = pneg %p171
        $region34: #{tpu_custom_call.1} parent=11 // pred_check_branch
          %259 = sbr.rel (%p257) target = $region36
        $region35: #{tpu_custom_call.1} parent=11 // pred_region
          %s261 = ssub.s32 704, 704
          %262 = vsyncadd [#allocation9], %s261
          %s264 = sshll.u32 [#allocation8], 4
          %s265 = int_to_ptr.vmem [resolvable:$true] %s264
          %267 = dma.hbm_to_vmem [thread:$0]  %s6, 704, %s265, [#allocation9]
        $region36: #{tpu_custom_call.1} parent=11 // pred_fallthru
          _
      $region12: #{tpu_custom_call.1} parent=5 // pred_fallthru
        _
      %p268 = scmp.lt.s32.totalorder %s19, 2
      // Predicated region
      $region37: #{tpu_custom_call.1} parent=5 // pred_check
        %p269 = pneg %p268
      $region38: #{tpu_custom_call.1} parent=5 // pred_check_branch
        %271 = sbr.rel (%p269) target = $region40
      $region39: #{tpu_custom_call.1} parent=5 // pred_region
        // Predicated region
        $region41: #{tpu_custom_call.1} parent=39 // pred_check
          %p272 = pneg %p39
        $region42: #{tpu_custom_call.1} parent=39 // pred_check_branch
          %274 = sbr.rel (%p272) target = $region44
        $region43: #{tpu_custom_call.1} parent=39 // pred_region
          %s275 = smul.u32 32, %s19
          %p276 = scmp.lt.s32.totalorder %s275, 63
          %s277 = scalar_select %p276, %s275, 63
          %s278 = smul.addr %s277, 8
          %s279 = scalar_lea.vmem %s0, %s278
          %s280 = smul.u32 32, %s19
        $region44: #{tpu_custom_call.1} parent=39 // pred_fallthru
          _
      $region40: #{tpu_custom_call.1} parent=5 // pred_fallthru
        _
      %p281 = scmp.le.s32.totalorder 1, %s19
      %p282 = scmp.lt.s32.totalorder %s19, 3
      %p283 = pnand %p281, %p282
      %p284 = pneg %p283
      // Predicated region
      $region45: #{tpu_custom_call.1} parent=5 // pred_check
        _
      $region46: #{tpu_custom_call.1} parent=5 // pred_check_branch
        %286 = sbr.rel (%p283) target = $region48
      $region47: #{tpu_custom_call.1} parent=5 // pred_region
        %s287 = ssub.s32 %s19, 1
        // Predicated region
        $region49: #{tpu_custom_call.1} parent=47 // pred_check
          %p288 = pneg %p66
        $region50: #{tpu_custom_call.1} parent=47 // pred_check_branch
          %290 = sbr.rel (%p288) target = $region52
        $region51: #{tpu_custom_call.1} parent=47 // pred_region
          %291 = dma.done [#allocation3], 256
        $region52: #{tpu_custom_call.1} parent=47 // pred_fallthru
          _
        // Predicated region
        $region53: #{tpu_custom_call.1} parent=47 // pred_check
          %p292 = pneg %p129
        $region54: #{tpu_custom_call.1} parent=47 // pred_check_branch
          %294 = sbr.rel (%p292) target = $region56
        $region55: #{tpu_custom_call.1} parent=47 // pred_region
          %295 = dma.done [#allocation6], 32768
        $region56: #{tpu_custom_call.1} parent=47 // pred_fallthru
          _
        // Predicated region
        $region57: #{tpu_custom_call.1} parent=47 // pred_check
          %p296 = pneg %p150
        $region58: #{tpu_custom_call.1} parent=47 // pred_check_branch
          %298 = sbr.rel (%p296) target = $region60
        $region59: #{tpu_custom_call.1} parent=47 // pred_region
          %299 = dma.done [#allocation6], 8192
        $region60: #{tpu_custom_call.1} parent=47 // pred_fallthru
          _
        // Predicated region
        $region61: #{tpu_custom_call.1} parent=47 // pred_check
          %p300 = pneg %p171
        $region62: #{tpu_custom_call.1} parent=47 // pred_check_branch
          %302 = sbr.rel (%p300) target = $region64
        $region63: #{tpu_custom_call.1} parent=47 // pred_region
          %303 = dma.done [#allocation9], 704
        $region64: #{tpu_custom_call.1} parent=47 // pred_fallthru
          _
        %s304 = smul.u32 32, %s24
        %p305 = scmp.lt.s32.totalorder %s304, 63
        %s306 = scalar_select %p305, %s304, 63
        %s307 = smul.addr %s306, 8
        %s308 = scalar_lea.vmem %s0, %s307
        %p309 = pneg %p45
        %p310 = pneg %p42
        %p311 = pneg %p66
        %p312 = pneg %p63
        %p313 = pneg %p87
        %p314 = pneg %p84
        %p315 = pneg %p108
        %p316 = pneg %p105
        %p317 = pneg %p129
        %p318 = pneg %p126
        %p319 = pneg %p150
        %p320 = pneg %p147
        %p321 = pneg %p171
        %p322 = pneg %p168
        %p323 = pneg %p197
        %p324 = pneg %p194
        %s325 = sand.u32 %s184, 1
        %s326 = scalar_lea.sflag [#allocation4], %s325
        %s327 = sand.u32 %s184, 1
        %s328 = smul.addr %s327, 256
        %s329 = scalar_lea.vmem [#allocation10], %s328
        %s330 = smul.u32 32, %s24
        %p331 = scmp.lt.s32.totalorder %s330, 63
        %s332 = scalar_select %p331, %s330, 63
        %s333 = smul.addr %s332, 8
        %s334 = scalar_lea.vmem %s0, %s333
        %s335 = smul.u32 32, %s24
        %s336 = smul.u32 32, %s24
        %v338 = vld [vmem:[%s334] sm:$0xff]
        %v339 = vld [vmem:[%s334 + $0x8] sm:$0xff]
        %v340 = vld [vmem:[%s334 + $0x10] sm:$0xff]
        %v341 = vld [vmem:[%s334 + $0x18] sm:$0xff]
        %v342 = vld [vmem:[%s334 + $0x20] sm:$0xff]
        %v343 = vld [vmem:[%s334 + $0x28] sm:$0xff]
        %v344 = vld [vmem:[%s334 + $0x30] sm:$0xff]
        %v345 = vld [vmem:[%s334 + $0x38] sm:$0xff]
        %v346 = vld [vmem:[%s334 + $0x40] sm:$0xff]
        %v347 = vld [vmem:[%s334 + $0x48] sm:$0xff]
        %v348 = vld [vmem:[%s334 + $0x50] sm:$0xff]
        %v349 = vld [vmem:[%s334 + $0x58] sm:$0xff]
        %v350 = vld [vmem:[%s334 + $0x60] sm:$0xff]
        %v351 = vld [vmem:[%s334 + $0x68] sm:$0xff]
        %v352 = vld [vmem:[%s334 + $0x70] sm:$0xff]
        %v353 = vld [vmem:[%s334 + $0x78] sm:$0xff]
        %v354 = vld [vmem:[%s334 + $0x80] sm:$0xff]
        %v355 = vld [vmem:[%s334 + $0x88] sm:$0xff]
        %v356 = vld [vmem:[%s334 + $0x90] sm:$0xff]
        %v357 = vld [vmem:[%s334 + $0x98] sm:$0xff]
        %v358 = vld [vmem:[%s334 + $0xa0] sm:$0xff]
        %v359 = vld [vmem:[%s334 + $0xa8] sm:$0xff]
        %v360 = vld [vmem:[%s334 + $0xb0] sm:$0xff]
        %v361 = vld [vmem:[%s334 + $0xb8] sm:$0xff]
        %v362 = vld [vmem:[%s334 + $0xc0] sm:$0xff]
        %v363 = vld [vmem:[%s334 + $0xc8] sm:$0xff]
        %v364 = vld [vmem:[%s334 + $0xd0] sm:$0xff]
        %v365 = vld [vmem:[%s334 + $0xd8] sm:$0xff]
        %v366 = vld [vmem:[%s334 + $0xe0] sm:$0xff]
        %v367 = vld [vmem:[%s334 + $0xe8] sm:$0xff]
        %v368 = vld [vmem:[%s334 + $0xf0] sm:$0xff]
        %v369 = vld [vmem:[%s334 + $0xf8] sm:$0xff]
        %v370 = vpack.c.bf16 %v339, %v338
        %v371 = vpack.c.bf16 %v341, %v340
        %v372 = vpack.c.bf16 %v343, %v342
        %v373 = vpack.c.bf16 %v345, %v344
        %v374 = vpack.c.bf16 %v347, %v346
        %v375 = vpack.c.bf16 %v349, %v348
        %v376 = vpack.c.bf16 %v351, %v350
        %v377 = vpack.c.bf16 %v353, %v352
        %v378 = vpack.c.bf16 %v355, %v354
        %v379 = vpack.c.bf16 %v357, %v356
        %v380 = vpack.c.bf16 %v359, %v358
        %v381 = vpack.c.bf16 %v361, %v360
        %v382 = vpack.c.bf16 %v363, %v362
        %v383 = vpack.c.bf16 %v365, %v364
        %v384 = vpack.c.bf16 %v367, %v366
        %v385 = vpack.c.bf16 %v369, %v368
        %v386 = vld [vmem:[#allocation2] sm:$0xf]
        %v387 = vld [vmem:[#allocation2 + $0x4] sm:$0xf]
        %v388 = vld [vmem:[#allocation2 + $0x8] sm:$0xf]
        %v389 = vld [vmem:[#allocation2 + $0xc] sm:$0xf]
        %v390 = vld [vmem:[#allocation8] sm:$0x1]
        %v392 = vlaneseq
        %v393 = vshrl.u32 %v392, 7
        %v394 = vsub.s32 0, %v393
        %v395 = vrot.slane %v390, %v394
        %v401 = vunpack.c.l.b16 %v386
        %v402 = vunpack.c.l.b16 %v387
        %v403 = vunpack.c.l.b16 %v388
        %v404 = vunpack.c.l.b16 %v389
        %v405 = vpack.c.b16 %v402, %v401
        %v406 = vpack.c.b16 %v404, %v403
        %vm409 = vcmask 261120
        %v411 = vsel %vm409, %v370, 0
        %v414 = vsel %vm409, %v371, 0
        %v417 = vsel %vm409, %v372, 0
        %v420 = vsel %vm409, %v373, 0
        %v423 = vsel %vm409, %v374, 0
        %v426 = vsel %vm409, %v375, 0
        %v429 = vsel %vm409, %v376, 0
        %v432 = vsel %vm409, %v377, 0
        %v435 = vsel %vm409, %v378, 0
        %v438 = vsel %vm409, %v379, 0
        %v441 = vsel %vm409, %v380, 0
        %v444 = vsel %vm409, %v381, 0
        %v447 = vsel %vm409, %v382, 0
        %v450 = vsel %vm409, %v383, 0
        %v453 = vsel %vm409, %v384, 0
        %v456 = vsel %vm409, %v385, 0
        %458 = vmatprep.subr.bf16.mxu0 0
        %459 = vmatpush1.bf16.msra.mxu0 %v405
        %460 = vmatprep.subr.bf16.mxu0 0
        %461 = vmatpush1.bf16.msra.mxu0 %v406
        %462 = vmatprep.subr.bf16.mxu0 0
        %463 = vmatpush1.bf16.msra.mxu0 0
        %464 = vmatprep.subr.bf16.mxu0 0
        %465 = vmatpush1.bf16.msra.mxu0 0
        %466 = vmatprep.subr.bf16.mxu0 0
        %467 = vmatpush1.bf16.msra.mxu0 0
        %468 = vmatprep.subr.bf16.mxu0 0
        %469 = vmatpush1.bf16.msra.mxu0 0
        %470 = vmatprep.subr.bf16.mxu0 0
        %471 = vmatpush1.bf16.msra.mxu0 0
        %472 = vmatprep.subr.bf16.mxu0 0
        %473 = vmatpush1.bf16.msra.mxu0 0
        %474 = vmatprep.subr.bf16.mxu0 0
        %475 = vmatpush1.bf16.msra.mxu0 0
        %476 = vmatprep.subr.bf16.mxu0 0
        %477 = vmatpush1.bf16.msra.mxu0 0
        %478 = vmatprep.subr.bf16.mxu0 0
        %479 = vmatpush1.bf16.msra.mxu0 0
        %480 = vmatprep.subr.bf16.mxu0 0
        %481 = vmatpush1.bf16.msra.mxu0 0
        %482 = vmatprep.subr.bf16.mxu0 0
        %483 = vmatpush1.bf16.msra.mxu0 0
        %484 = vmatprep.subr.bf16.mxu0 0
        %485 = vmatpush1.bf16.msra.mxu0 0
        %486 = vmatprep.subr.bf16.mxu0 0
        %487 = vmatpush1.bf16.msra.mxu0 0
        %488 = vmatprep.subr.bf16.mxu0 0
        %489 = vmatpush1.bf16.msra.mxu0 0
        %490 = vmatprep.mubr.bf16.mxu0 0
        %491 = vmatmul.mubr.bf16.gmra.mrb[0].mxu0 %v411
        %v492 = vpop.f32.mrb[0].mxu0
        %v493 = vadd.f32 %v395, %v492
        %v494 = vpop.f32.mrb[0].mxu0
        %v495 = vpop.f32.mrb[0].mxu0
        %v496 = vadd.f32 %v395, %v495
        %v497 = vpop.f32.mrb[0].mxu0
        %498 = vmatprep.mubr.bf16.mxu0 0
        %499 = vmatmul.mubr.bf16.gmra.mrb[0].mxu0 %v414
        %v500 = vpop.f32.mrb[0].mxu0
        %v501 = vadd.f32 %v395, %v500
        %v502 = vpop.f32.mrb[0].mxu0
        %v503 = vpop.f32.mrb[0].mxu0
        %v504 = vadd.f32 %v395, %v503
        %v505 = vpop.f32.mrb[0].mxu0
        %506 = vmatprep.mubr.bf16.mxu0 0
        %507 = vmatmul.mubr.bf16.gmra.mrb[0].mxu0 %v417
        %v508 = vpop.f32.mrb[0].mxu0
        %v509 = vadd.f32 %v395, %v508
        %v510 = vpop.f32.mrb[0].mxu0
        %v511 = vpop.f32.mrb[0].mxu0
        %v512 = vadd.f32 %v395, %v511
        %v513 = vpop.f32.mrb[0].mxu0
        %514 = vmatprep.mubr.bf16.mxu0 0
        %515 = vmatmul.mubr.bf16.gmra.mrb[0].mxu0 %v420
        %v516 = vpop.f32.mrb[0].mxu0
        %v517 = vadd.f32 %v395, %v516
        %v518 = vpop.f32.mrb[0].mxu0
        %v519 = vpop.f32.mrb[0].mxu0
        %v520 = vadd.f32 %v395, %v519
        %v521 = vpop.f32.mrb[0].mxu0
        %522 = vmatprep.mubr.bf16.mxu0 0
        %523 = vmatmul.mubr.bf16.gmra.mrb[0].mxu0 %v423
        %v524 = vpop.f32.mrb[0].mxu0
        %v525 = vadd.f32 %v395, %v524
        %v526 = vpop.f32.mrb[0].mxu0
        %v527 = vpop.f32.mrb[0].mxu0
        %v528 = vadd.f32 %v395, %v527
        %v529 = vpop.f32.mrb[0].mxu0
        %530 = vmatprep.mubr.bf16.mxu0 0
        %531 = vmatmul.mubr.bf16.gmra.mrb[0].mxu0 %v426
        %v532 = vpop.f32.mrb[0].mxu0
        %v533 = vadd.f32 %v395, %v532
        %v534 = vpop.f32.mrb[0].mxu0
        %v535 = vpop.f32.mrb[0].mxu0
        %v536 = vadd.f32 %v395, %v535
        %v537 = vpop.f32.mrb[0].mxu0
        %538 = vmatprep.mubr.bf16.mxu0 0
        %539 = vmatmul.mubr.bf16.gmra.mrb[0].mxu0 %v429
        %v540 = vpop.f32.mrb[0].mxu0
        %v541 = vadd.f32 %v395, %v540
        %v542 = vpop.f32.mrb[0].mxu0
        %v543 = vpop.f32.mrb[0].mxu0
        %v544 = vadd.f32 %v395, %v543
        %v545 = vpop.f32.mrb[0].mxu0
        %546 = vmatprep.mubr.bf16.mxu0 0
        %547 = vmatmul.mubr.bf16.gmra.mrb[0].mxu0 %v432
        %v548 = vpop.f32.mrb[0].mxu0
        %v549 = vadd.f32 %v395, %v548
        %v550 = vpop.f32.mrb[0].mxu0
        %v551 = vpop.f32.mrb[0].mxu0
        %v552 = vadd.f32 %v395, %v551
        %v553 = vpop.f32.mrb[0].mxu0
        %554 = vmatprep.mubr.bf16.mxu0 0
        %555 = vmatmul.mubr.bf16.gmra.mrb[0].mxu0 %v435
        %v556 = vpop.f32.mrb[0].mxu0
        %v557 = vadd.f32 %v395, %v556
        %v558 = vpop.f32.mrb[0].mxu0
        %v559 = vpop.f32.mrb[0].mxu0
        %v560 = vadd.f32 %v395, %v559
        %v561 = vpop.f32.mrb[0].mxu0
        %562 = vmatprep.mubr.bf16.mxu0 0
        %563 = vmatmul.mubr.bf16.gmra.mrb[0].mxu0 %v438
        %v564 = vpop.f32.mrb[0].mxu0
        %v565 = vadd.f32 %v395, %v564
        %v566 = vpop.f32.mrb[0].mxu0
        %v567 = vpop.f32.mrb[0].mxu0
        %v568 = vadd.f32 %v395, %v567
        %v569 = vpop.f32.mrb[0].mxu0
        %570 = vmatprep.mubr.bf16.mxu0 0
        %571 = vmatmul.mubr.bf16.gmra.mrb[0].mxu0 %v441
        %v572 = vpop.f32.mrb[0].mxu0
        %v573 = vadd.f32 %v395, %v572
        %v574 = vpop.f32.mrb[0].mxu0
        %v575 = vpop.f32.mrb[0].mxu0
        %v576 = vadd.f32 %v395, %v575
        %v577 = vpop.f32.mrb[0].mxu0
        %578 = vmatprep.mubr.bf16.mxu0 0
        %579 = vmatmul.mubr.bf16.gmra.mrb[0].mxu0 %v444
        %v580 = vpop.f32.mrb[0].mxu0
        %v581 = vadd.f32 %v395, %v580
        %v582 = vpop.f32.mrb[0].mxu0
        %v583 = vpop.f32.mrb[0].mxu0
        %v584 = vadd.f32 %v395, %v583
        %v585 = vpop.f32.mrb[0].mxu0
        %586 = vmatprep.mubr.bf16.mxu0 0
        %587 = vmatmul.mubr.bf16.gmra.mrb[0].mxu0 %v447
        %v588 = vpop.f32.mrb[0].mxu0
        %v589 = vadd.f32 %v395, %v588
        %v590 = vpop.f32.mrb[0].mxu0
        %v591 = vpop.f32.mrb[0].mxu0
        %v592 = vadd.f32 %v395, %v591
        %v593 = vpop.f32.mrb[0].mxu0
        %594 = vmatprep.mubr.bf16.mxu0 0
        %595 = vmatmul.mubr.bf16.gmra.mrb[0].mxu0 %v450
        %v596 = vpop.f32.mrb[0].mxu0
        %v597 = vadd.f32 %v395, %v596
        %v598 = vpop.f32.mrb[0].mxu0
        %v599 = vpop.f32.mrb[0].mxu0
        %v600 = vadd.f32 %v395, %v599
        %v601 = vpop.f32.mrb[0].mxu0
        %602 = vmatprep.mubr.bf16.mxu0 0
        %603 = vmatmul.mubr.bf16.gmra.mrb[0].mxu0 %v453
        %v604 = vpop.f32.mrb[0].mxu0
        %v605 = vadd.f32 %v395, %v604
        %v606 = vpop.f32.mrb[0].mxu0
        %v607 = vpop.f32.mrb[0].mxu0
        %v608 = vadd.f32 %v395, %v607
        %v609 = vpop.f32.mrb[0].mxu0
        %610 = vmatprep.mubr.bf16.mxu0 0
        %611 = vmatmul.mubr.bf16.gmra.mrb[0].mxu0 %v456
        %v612 = vpop.f32.mrb[0].mxu0
        %v613 = vadd.f32 %v395, %v612
        %v614 = vpop.f32.mrb[0].mxu0
        %v615 = vpop.f32.mrb[0].mxu0
        %v616 = vadd.f32 %v395, %v615
        %v617 = vpop.f32.mrb[0].mxu0
        %618 = vdwg.mxu0
        %v619 = vmul.f32 %v493, 0.1
        %v620 = vmul.f32 %v496, 0.1
        %v621 = vmul.f32 %v501, 0.1
        %v622 = vmul.f32 %v504, 0.1
        %v623 = vmul.f32 %v509, 0.1
        %v624 = vmul.f32 %v512, 0.1
        %v625 = vmul.f32 %v517, 0.1
        %v626 = vmul.f32 %v520, 0.1
        %v627 = vmul.f32 %v525, 0.1
        %v628 = vmul.f32 %v528, 0.1
        %v629 = vmul.f32 %v533, 0.1
        %v630 = vmul.f32 %v536, 0.1
        %v631 = vmul.f32 %v541, 0.1
        %v632 = vmul.f32 %v544, 0.1
        %v633 = vmul.f32 %v549, 0.1
        %v634 = vmul.f32 %v552, 0.1
        %v635 = vmul.f32 %v557, 0.1
        %v636 = vmul.f32 %v560, 0.1
        %v637 = vmul.f32 %v565, 0.1
        %v638 = vmul.f32 %v568, 0.1
        %v639 = vmul.f32 %v573, 0.1
        %v640 = vmul.f32 %v576, 0.1
        %v641 = vmul.f32 %v581, 0.1
        %v642 = vmul.f32 %v584, 0.1
        %v643 = vmul.f32 %v589, 0.1
        %v644 = vmul.f32 %v592, 0.1
        %v645 = vmul.f32 %v597, 0.1
        %v646 = vmul.f32 %v600, 0.1
        %v647 = vmul.f32 %v605, 0.1
        %v648 = vmul.f32 %v608, 0.1
        %v649 = vmul.f32 %v613, 0.1
        %v650 = vmul.f32 %v616, 0.1
        %v651 = vmax.f32 %v493, %v619
        %v652 = vmax.f32 %v496, %v620
        %v653 = vmax.f32 %v501, %v621
        %v654 = vmax.f32 %v504, %v622
        %v655 = vmax.f32 %v509, %v623
        %v656 = vmax.f32 %v512, %v624
        %v657 = vmax.f32 %v517, %v625
        %v658 = vmax.f32 %v520, %v626
        %v659 = vmax.f32 %v525, %v627
        %v660 = vmax.f32 %v528, %v628
        %v661 = vmax.f32 %v533, %v629
        %v662 = vmax.f32 %v536, %v630
        %v663 = vmax.f32 %v541, %v631
        %v664 = vmax.f32 %v544, %v632
        %v665 = vmax.f32 %v549, %v633
        %v666 = vmax.f32 %v552, %v634
        %v667 = vmax.f32 %v557, %v635
        %v668 = vmax.f32 %v560, %v636
        %v669 = vmax.f32 %v565, %v637
        %v670 = vmax.f32 %v568, %v638
        %v671 = vmax.f32 %v573, %v639
        %v672 = vmax.f32 %v576, %v640
        %v673 = vmax.f32 %v581, %v641
        %v674 = vmax.f32 %v584, %v642
        %v675 = vmax.f32 %v589, %v643
        %v676 = vmax.f32 %v592, %v644
        %v677 = vmax.f32 %v597, %v645
        %v678 = vmax.f32 %v600, %v646
        %v679 = vmax.f32 %v605, %v647
        %v680 = vmax.f32 %v608, %v648
        %v681 = vmax.f32 %v613, %v649
        %v682 = vmax.f32 %v616, %v650
        %v683 = vpack.c.bf16 %v652, %v651
        %v684 = vpack.c.bf16 %v654, %v653
        %v685 = vpack.c.bf16 %v656, %v655
        %v686 = vpack.c.bf16 %v658, %v657
        %v687 = vpack.c.bf16 %v660, %v659
        %v688 = vpack.c.bf16 %v662, %v661
        %v689 = vpack.c.bf16 %v664, %v663
        %v690 = vpack.c.bf16 %v666, %v665
        %v691 = vpack.c.bf16 %v668, %v667
        %v692 = vpack.c.bf16 %v670, %v669
        %v693 = vpack.c.bf16 %v672, %v671
        %v694 = vpack.c.bf16 %v674, %v673
        %v695 = vpack.c.bf16 %v676, %v675
        %v696 = vpack.c.bf16 %v678, %v677
        %v697 = vpack.c.bf16 %v680, %v679
        %v698 = vpack.c.bf16 %v682, %v681
        %v699 = vld [vmem:[%s2] sm:$0xff]
        %v700 = vld [vmem:[%s2 + $0x8] sm:$0xff]
        %v701 = vld [vmem:[%s2 + $0x10] sm:$0xff]
        %v702 = vld [vmem:[%s2 + $0x18] sm:$0xff]
        %v703 = vld [vmem:[%s2 + $0x20] sm:$0xff]
        %v704 = vld [vmem:[%s2 + $0x28] sm:$0xff]
        %v705 = vld [vmem:[%s2 + $0x30] sm:$0xff]
        %v706 = vld [vmem:[%s2 + $0x38] sm:$0xff]
        %v707 = vld [vmem:[%s2 + $0x40] sm:$0xff]
        %v708 = vld [vmem:[%s2 + $0x48] sm:$0xff]
        %v709 = vld [vmem:[%s2 + $0x50] sm:$0xff]
        %v710 = vld [vmem:[%s2 + $0x58] sm:$0xff]
        %v711 = vld [vmem:[%s2 + $0x60] sm:$0xff]
        %v712 = vld [vmem:[%s2 + $0x68] sm:$0xff]
        %v713 = vld [vmem:[%s2 + $0x70] sm:$0xff]
        %v714 = vld [vmem:[%s2 + $0x78] sm:$0xff]
        %v715 = vld [vmem:[#allocation8 + $0x1] sm:$0x3]
        %v717 = vlaneseq
        %v718 = vshrl.u32 %v717, 7
        %v719 = vsub.s32 0, %v718
        %v720 = vrot.slane %v715, %v719
        %v721 = vlaneseq
        %v722 = vshrl.u32 %v721, 7
        %v723 = vsub.s32 1, %v722
        %v724 = vrot.slane %v715, %v723
        %v743 = vunpack.c.l.b16 %v699
        %v744 = vunpack.c.h.b16 %v699
        %v745 = vunpack.c.l.b16 %v700
        %v746 = vunpack.c.h.b16 %v700
        %v747 = vunpack.c.l.b16 %v701
        %v748 = vunpack.c.h.b16 %v701
        %v749 = vunpack.c.l.b16 %v702
        %v750 = vunpack.c.h.b16 %v702
        %v751 = vunpack.c.l.b16 %v703
        %v752 = vunpack.c.h.b16 %v703
        %v753 = vunpack.c.l.b16 %v704
        %v754 = vunpack.c.h.b16 %v704
        %v755 = vunpack.c.l.b16 %v705
        %v756 = vunpack.c.h.b16 %v705
        %v757 = vunpack.c.l.b16 %v706
        %v758 = vunpack.c.h.b16 %v706
        %v759 = vunpack.c.l.b16 %v707
        %v760 = vunpack.c.h.b16 %v707
        %v761 = vunpack.c.l.b16 %v708
        %v762 = vunpack.c.h.b16 %v708
        %v763 = vunpack.c.l.b16 %v709
        %v764 = vunpack.c.h.b16 %v709
        %v765 = vunpack.c.l.b16 %v710
        %v766 = vunpack.c.h.b16 %v710
        %v767 = vunpack.c.l.b16 %v711
        %v768 = vunpack.c.h.b16 %v711
        %v769 = vunpack.c.l.b16 %v712
        %v770 = vunpack.c.h.b16 %v712
        %v771 = vunpack.c.l.b16 %v713
        %v772 = vunpack.c.h.b16 %v713
        %v773 = vunpack.c.l.b16 %v714
        %v774 = vunpack.c.h.b16 %v714
        %v775 = vpack.c.b16 %v745, %v743
        %v776 = vpack.c.b16 %v746, %v744
        %v777 = vpack.c.b16 %v749, %v747
        %v778 = vpack.c.b16 %v750, %v748
        %v779 = vpack.c.b16 %v753, %v751
        %v780 = vpack.c.b16 %v754, %v752
        %v781 = vpack.c.b16 %v757, %v755
        %v782 = vpack.c.b16 %v758, %v756
        %v783 = vpack.c.b16 %v761, %v759
        %v784 = vpack.c.b16 %v762, %v760
        %v785 = vpack.c.b16 %v765, %v763
        %v786 = vpack.c.b16 %v766, %v764
        %v787 = vpack.c.b16 %v769, %v767
        %v788 = vpack.c.b16 %v770, %v768
        %v789 = vpack.c.b16 %v773, %v771
        %v790 = vpack.c.b16 %v774, %v772
        %807 = vmatprep.subr.bf16.mxu0 %v776
        %808 = vmatpush1.bf16.msra.mxu0 %v775
        %809 = vmatprep.subr.bf16.mxu0 %v778
        %810 = vmatpush1.bf16.msra.mxu0 %v777
        %811 = vmatprep.subr.bf16.mxu0 %v780
        %812 = vmatpush1.bf16.msra.mxu0 %v779
        %813 = vmatprep.subr.bf16.mxu0 %v782
        %814 = vmatpush1.bf16.msra.mxu0 %v781
        %815 = vmatprep.subr.bf16.mxu0 %v784
        %816 = vmatpush1.bf16.msra.mxu0 %v783
        %817 = vmatprep.subr.bf16.mxu0 %v786
        %818 = vmatpush1.bf16.msra.mxu0 %v785
        %819 = vmatprep.subr.bf16.mxu0 %v788
        %820 = vmatpush1.bf16.msra.mxu0 %v787
        %821 = vmatprep.subr.bf16.mxu0 %v790
        %822 = vmatpush1.bf16.msra.mxu0 %v789
        %823 = vmatprep.subr.bf16.mxu0 0
        %824 = vmatpush1.bf16.msra.mxu0 0
        %825 = vmatprep.subr.bf16.mxu0 0
        %826 = vmatpush1.bf16.msra.mxu0 0
        %827 = vmatprep.subr.bf16.mxu0 0
        %828 = vmatpush1.bf16.msra.mxu0 0
        %829 = vmatprep.subr.bf16.mxu0 0
        %830 = vmatpush1.bf16.msra.mxu0 0
        %831 = vmatprep.subr.bf16.mxu0 0
        %832 = vmatpush1.bf16.msra.mxu0 0
        %833 = vmatprep.subr.bf16.mxu0 0
        %834 = vmatpush1.bf16.msra.mxu0 0
        %835 = vmatprep.subr.bf16.mxu0 0
        %836 = vmatpush1.bf16.msra.mxu0 0
        %837 = vmatprep.subr.bf16.mxu0 0
        %838 = vmatpush1.bf16.msra.mxu0 0
        %839 = vmatprep.mubr.bf16.mxu0 0
        %840 = vmatmul.mubr.bf16.gmra.mrb[0].mxu0 %v683
        %v841 = vpop.f32.mrb[0].mxu0
        %v842 = vadd.f32 %v720, %v841
        %v843 = vpop.f32.mrb[0].mxu0
        %v844 = vadd.f32 %v724, %v843
        %v845 = vpop.f32.mrb[0].mxu0
        %v846 = vadd.f32 %v720, %v845
        %v847 = vpop.f32.mrb[0].mxu0
        %v848 = vadd.f32 %v724, %v847
        %849 = vmatprep.mubr.bf16.mxu0 0
        %850 = vmatmul.mubr.bf16.gmra.mrb[0].mxu0 %v684
        %v851 = vpop.f32.mrb[0].mxu0
        %v852 = vadd.f32 %v720, %v851
        %v853 = vpop.f32.mrb[0].mxu0
        %v854 = vadd.f32 %v724, %v853
        %v855 = vpop.f32.mrb[0].mxu0
        %v856 = vadd.f32 %v720, %v855
        %v857 = vpop.f32.mrb[0].mxu0
        %v858 = vadd.f32 %v724, %v857
        %859 = vmatprep.mubr.bf16.mxu0 0
        %860 = vmatmul.mubr.bf16.gmra.mrb[0].mxu0 %v685
        %v861 = vpop.f32.mrb[0].mxu0
        %v862 = vadd.f32 %v720, %v861
        %v863 = vpop.f32.mrb[0].mxu0
        %v864 = vadd.f32 %v724, %v863
        %v865 = vpop.f32.mrb[0].mxu0
        %v866 = vadd.f32 %v720, %v865
        %v867 = vpop.f32.mrb[0].mxu0
        %v868 = vadd.f32 %v724, %v867
        %869 = vmatprep.mubr.bf16.mxu0 0
        %870 = vmatmul.mubr.bf16.gmra.mrb[0].mxu0 %v686
        %v871 = vpop.f32.mrb[0].mxu0
        %v872 = vadd.f32 %v720, %v871
        %v873 = vpop.f32.mrb[0].mxu0
        %v874 = vadd.f32 %v724, %v873
        %v875 = vpop.f32.mrb[0].mxu0
        %v876 = vadd.f32 %v720, %v875
        %v877 = vpop.f32.mrb[0].mxu0
        %v878 = vadd.f32 %v724, %v877
        %879 = vmatprep.mubr.bf16.mxu0 0
        %880 = vmatmul.mubr.bf16.gmra.mrb[0].mxu0 %v687
        %v881 = vpop.f32.mrb[0].mxu0
        %v882 = vadd.f32 %v720, %v881
        %v883 = vpop.f32.mrb[0].mxu0
        %v884 = vadd.f32 %v724, %v883
        %v885 = vpop.f32.mrb[0].mxu0
        %v886 = vadd.f32 %v720, %v885
        %v887 = vpop.f32.mrb[0].mxu0
        %v888 = vadd.f32 %v724, %v887
        %889 = vmatprep.mubr.bf16.mxu0 0
        %890 = vmatmul.mubr.bf16.gmra.mrb[0].mxu0 %v688
        %v891 = vpop.f32.mrb[0].mxu0
        %v892 = vadd.f32 %v720, %v891
        %v893 = vpop.f32.mrb[0].mxu0
        %v894 = vadd.f32 %v724, %v893
        %v895 = vpop.f32.mrb[0].mxu0
        %v896 = vadd.f32 %v720, %v895
        %v897 = vpop.f32.mrb[0].mxu0
        %v898 = vadd.f32 %v724, %v897
        %899 = vmatprep.mubr.bf16.mxu0 0
        %900 = vmatmul.mubr.bf16.gmra.mrb[0].mxu0 %v689
        %v901 = vpop.f32.mrb[0].mxu0
        %v902 = vadd.f32 %v720, %v901
        %v903 = vpop.f32.mrb[0].mxu0
        %v904 = vadd.f32 %v724, %v903
        %v905 = vpop.f32.mrb[0].mxu0
        %v906 = vadd.f32 %v720, %v905
        %v907 = vpop.f32.mrb[0].mxu0
        %v908 = vadd.f32 %v724, %v907
        %909 = vmatprep.mubr.bf16.mxu0 0
        %910 = vmatmul.mubr.bf16.gmra.mrb[0].mxu0 %v690
        %v911 = vpop.f32.mrb[0].mxu0
        %v912 = vadd.f32 %v720, %v911
        %v913 = vpop.f32.mrb[0].mxu0
        %v914 = vadd.f32 %v724, %v913
        %v915 = vpop.f32.mrb[0].mxu0
        %v916 = vadd.f32 %v720, %v915
        %v917 = vpop.f32.mrb[0].mxu0
        %v918 = vadd.f32 %v724, %v917
        %919 = vmatprep.mubr.bf16.mxu0 0
        %920 = vmatmul.mubr.bf16.gmra.mrb[0].mxu0 %v691
        %v921 = vpop.f32.mrb[0].mxu0
        %v922 = vadd.f32 %v720, %v921
        %v923 = vpop.f32.mrb[0].mxu0
        %v924 = vadd.f32 %v724, %v923
        %v925 = vpop.f32.mrb[0].mxu0
        %v926 = vadd.f32 %v720, %v925
        %v927 = vpop.f32.mrb[0].mxu0
        %v928 = vadd.f32 %v724, %v927
        %929 = vmatprep.mubr.bf16.mxu0 0
        %930 = vmatmul.mubr.bf16.gmra.mrb[0].mxu0 %v692
        %v931 = vpop.f32.mrb[0].mxu0
        %v932 = vadd.f32 %v720, %v931
        %v933 = vpop.f32.mrb[0].mxu0
        %v934 = vadd.f32 %v724, %v933
        %v935 = vpop.f32.mrb[0].mxu0
        %v936 = vadd.f32 %v720, %v935
        %v937 = vpop.f32.mrb[0].mxu0
        %v938 = vadd.f32 %v724, %v937
        %939 = vmatprep.mubr.bf16.mxu0 0
        %940 = vmatmul.mubr.bf16.gmra.mrb[0].mxu0 %v693
        %v941 = vpop.f32.mrb[0].mxu0
        %v942 = vadd.f32 %v720, %v941
        %v943 = vpop.f32.mrb[0].mxu0
        %v944 = vadd.f32 %v724, %v943
        %v945 = vpop.f32.mrb[0].mxu0
        %v946 = vadd.f32 %v720, %v945
        %v947 = vpop.f32.mrb[0].mxu0
        %v948 = vadd.f32 %v724, %v947
        %949 = vmatprep.mubr.bf16.mxu0 0
        %950 = vmatmul.mubr.bf16.gmra.mrb[0].mxu0 %v694
        %v951 = vpop.f32.mrb[0].mxu0
        %v952 = vadd.f32 %v720, %v951
        %v953 = vpop.f32.mrb[0].mxu0
        %v954 = vadd.f32 %v724, %v953
        %v955 = vpop.f32.mrb[0].mxu0
        %v956 = vadd.f32 %v720, %v955
        %v957 = vpop.f32.mrb[0].mxu0
        %v958 = vadd.f32 %v724, %v957
        %959 = vmatprep.mubr.bf16.mxu0 0
        %960 = vmatmul.mubr.bf16.gmra.mrb[0].mxu0 %v695
        %v961 = vpop.f32.mrb[0].mxu0
        %v962 = vadd.f32 %v720, %v961
        %v963 = vpop.f32.mrb[0].mxu0
        %v964 = vadd.f32 %v724, %v963
        %v965 = vpop.f32.mrb[0].mxu0
        %v966 = vadd.f32 %v720, %v965
        %v967 = vpop.f32.mrb[0].mxu0
        %v968 = vadd.f32 %v724, %v967
        %969 = vmatprep.mubr.bf16.mxu0 0
        %970 = vmatmul.mubr.bf16.gmra.mrb[0].mxu0 %v696
        %v971 = vpop.f32.mrb[0].mxu0
        %v972 = vadd.f32 %v720, %v971
        %v973 = vpop.f32.mrb[0].mxu0
        %v974 = vadd.f32 %v724, %v973
        %v975 = vpop.f32.mrb[0].mxu0
        %v976 = vadd.f32 %v720, %v975
        %v977 = vpop.f32.mrb[0].mxu0
        %v978 = vadd.f32 %v724, %v977
        %979 = vmatprep.mubr.bf16.mxu0 0
        %980 = vmatmul.mubr.bf16.gmra.mrb[0].mxu0 %v697
        %v981 = vpop.f32.mrb[0].mxu0
        %v982 = vadd.f32 %v720, %v981
        %v983 = vpop.f32.mrb[0].mxu0
        %v984 = vadd.f32 %v724, %v983
        %v985 = vpop.f32.mrb[0].mxu0
        %v986 = vadd.f32 %v720, %v985
        %v987 = vpop.f32.mrb[0].mxu0
        %v988 = vadd.f32 %v724, %v987
        %989 = vmatprep.mubr.bf16.mxu0 0
        %990 = vmatmul.mubr.bf16.gmra.mrb[0].mxu0 %v698
        %v991 = vpop.f32.mrb[0].mxu0
        %v992 = vadd.f32 %v720, %v991
        %v993 = vpop.f32.mrb[0].mxu0
        %v994 = vadd.f32 %v724, %v993
        %v995 = vpop.f32.mrb[0].mxu0
        %v996 = vadd.f32 %v720, %v995
        %v997 = vpop.f32.mrb[0].mxu0
        %v998 = vadd.f32 %v724, %v997
        %999 = vdwg.mxu0
        %v1000 = vld [vmem:[#allocation8 + $0x3] sm:$0x3]
        %v1001 = vld [vmem:[#allocation8 + $0x5] sm:$0x3]
        %v1002 = vadd.f32 %v842, %v846
        %v1003 = vadd.f32 %v1002, %v852
        %v1004 = vadd.f32 %v1003, %v856
        %v1005 = vadd.f32 %v1004, %v862
        %v1006 = vadd.f32 %v1005, %v866
        %v1007 = vadd.f32 %v1006, %v872
        %v1008 = vadd.f32 %v1007, %v876
        %v1009 = vadd.f32 %v1008, %v882
        %v1010 = vadd.f32 %v1009, %v886
        %v1011 = vadd.f32 %v1010, %v892
        %v1012 = vadd.f32 %v1011, %v896
        %v1013 = vadd.f32 %v1012, %v902
        %v1014 = vadd.f32 %v1013, %v906
        %v1015 = vadd.f32 %v1014, %v912
        %v1016 = vadd.f32 %v1015, %v916
        %v1017 = vrot.slane %v1016, 4
        %v1018 = vadd.f32 %v1016, %v1017
        %v1019 = vrot.slane %v1018, 2
        %v1020 = vadd.f32 %v1018, %v1019
        %v1021 = vrot.slane %v1020, 1
        %v1022 = vadd.f32 %v1020, %v1021
        %v1023 = vadd.f32 %v844, %v848
        %v1024 = vadd.f32 %v1023, %v854
        %v1025 = vadd.f32 %v1024, %v858
        %v1026 = vadd.f32 %v1025, %v864
        %v1027 = vadd.f32 %v1026, %v868
        %v1028 = vadd.f32 %v1027, %v874
        %v1029 = vadd.f32 %v1028, %v878
        %v1030 = vadd.f32 %v1029, %v884
        %v1031 = vadd.f32 %v1030, %v888
        %v1032 = vadd.f32 %v1031, %v894
        %v1033 = vadd.f32 %v1032, %v898
        %v1034 = vadd.f32 %v1033, %v904
        %v1035 = vadd.f32 %v1034, %v908
        %v1036 = vadd.f32 %v1035, %v914
        %v1037 = vadd.f32 %v1036, %v918
        %v1038 = vrot.slane %v1037, 4
        %v1039 = vadd.f32 %v1037, %v1038
        %v1040 = vrot.slane %v1039, 2
        %v1041 = vadd.f32 %v1039, %v1040
        %v1042 = vrot.slane %v1041, 1
        %v1043 = vadd.f32 %v1041, %v1042
        %v1044 = vadd.f32 %v922, %v926
        %v1045 = vadd.f32 %v1044, %v932
        %v1046 = vadd.f32 %v1045, %v936
        %v1047 = vadd.f32 %v1046, %v942
        %v1048 = vadd.f32 %v1047, %v946
        %v1049 = vadd.f32 %v1048, %v952
        %v1050 = vadd.f32 %v1049, %v956
        %v1051 = vadd.f32 %v1050, %v962
        %v1052 = vadd.f32 %v1051, %v966
        %v1053 = vadd.f32 %v1052, %v972
        %v1054 = vadd.f32 %v1053, %v976
        %v1055 = vadd.f32 %v1054, %v982
        %v1056 = vadd.f32 %v1055, %v986
        %v1057 = vadd.f32 %v1056, %v992
        %v1058 = vadd.f32 %v1057, %v996
        %v1059 = vrot.slane %v1058, 4
        %v1060 = vadd.f32 %v1058, %v1059
        %v1061 = vrot.slane %v1060, 2
        %v1062 = vadd.f32 %v1060, %v1061
        %v1063 = vrot.slane %v1062, 1
        %v1064 = vadd.f32 %v1062, %v1063
        %v1065 = vadd.f32 %v924, %v928
        %v1066 = vadd.f32 %v1065, %v934
        %v1067 = vadd.f32 %v1066, %v938
        %v1068 = vadd.f32 %v1067, %v944
        %v1069 = vadd.f32 %v1068, %v948
        %v1070 = vadd.f32 %v1069, %v954
        %v1071 = vadd.f32 %v1070, %v958
        %v1072 = vadd.f32 %v1071, %v964
        %v1073 = vadd.f32 %v1072, %v968
        %v1074 = vadd.f32 %v1073, %v974
        %v1075 = vadd.f32 %v1074, %v978
        %v1076 = vadd.f32 %v1075, %v984
        %v1077 = vadd.f32 %v1076, %v988
        %v1078 = vadd.f32 %v1077, %v994
        %v1079 = vadd.f32 %v1078, %v998
        %v1080 = vrot.slane %v1079, 4
        %v1081 = vadd.f32 %v1079, %v1080
        %v1082 = vrot.slane %v1081, 2
        %v1083 = vadd.f32 %v1081, %v1082
        %v1084 = vrot.slane %v1083, 1
        %v1085 = vadd.f32 %v1083, %v1084
        %v1086 = vrcp.pop 128.0
        %v1087 = vmul.f32 %v1022, %v1086
        %v1088 = vmul.f32 %v1043, %v1086
        %v1089 = vmul.f32 %v1064, %v1086
        %v1090 = vmul.f32 %v1085, %v1086
        %v1091 = vmul.f32 %v842, %v842
        %v1092 = vmul.f32 %v844, %v844
        %v1093 = vmul.f32 %v846, %v846
        %v1094 = vmul.f32 %v848, %v848
        %v1095 = vmul.f32 %v852, %v852
        %v1096 = vmul.f32 %v854, %v854
        %v1097 = vmul.f32 %v856, %v856
        %v1098 = vmul.f32 %v858, %v858
        %v1099 = vmul.f32 %v862, %v862
        %v1100 = vmul.f32 %v864, %v864
        %v1101 = vmul.f32 %v866, %v866
        %v1102 = vmul.f32 %v868, %v868
        %v1103 = vmul.f32 %v872, %v872
        %v1104 = vmul.f32 %v874, %v874
        %v1105 = vmul.f32 %v876, %v876
        %v1106 = vmul.f32 %v878, %v878
        %v1107 = vmul.f32 %v882, %v882
        %v1108 = vmul.f32 %v884, %v884
        %v1109 = vmul.f32 %v886, %v886
        %v1110 = vmul.f32 %v888, %v888
        %v1111 = vmul.f32 %v892, %v892
        %v1112 = vmul.f32 %v894, %v894
        %v1113 = vmul.f32 %v896, %v896
        %v1114 = vmul.f32 %v898, %v898
        %v1115 = vmul.f32 %v902, %v902
        %v1116 = vmul.f32 %v904, %v904
        %v1117 = vmul.f32 %v906, %v906
        %v1118 = vmul.f32 %v908, %v908
        %v1119 = vmul.f32 %v912, %v912
        %v1120 = vmul.f32 %v914, %v914
        %v1121 = vmul.f32 %v916, %v916
        %v1122 = vmul.f32 %v918, %v918
        %v1123 = vmul.f32 %v922, %v922
        %v1124 = vmul.f32 %v924, %v924
        %v1125 = vmul.f32 %v926, %v926
        %v1126 = vmul.f32 %v928, %v928
        %v1127 = vmul.f32 %v932, %v932
        %v1128 = vmul.f32 %v934, %v934
        %v1129 = vmul.f32 %v936, %v936
        %v1130 = vmul.f32 %v938, %v938
        %v1131 = vmul.f32 %v942, %v942
        %v1132 = vmul.f32 %v944, %v944
        %v1133 = vmul.f32 %v946, %v946
        %v1134 = vmul.f32 %v948, %v948
        %v1135 = vmul.f32 %v952, %v952
        %v1136 = vmul.f32 %v954, %v954
        %v1137 = vmul.f32 %v956, %v956
        %v1138 = vmul.f32 %v958, %v958
        %v1139 = vmul.f32 %v962, %v962
        %v1140 = vmul.f32 %v964, %v964
        %v1141 = vmul.f32 %v966, %v966
        %v1142 = vmul.f32 %v968, %v968
        %v1143 = vmul.f32 %v972, %v972
        %v1144 = vmul.f32 %v974, %v974
        %v1145 = vmul.f32 %v976, %v976
        %v1146 = vmul.f32 %v978, %v978
        %v1147 = vmul.f32 %v982, %v982
        %v1148 = vmul.f32 %v984, %v984
        %v1149 = vmul.f32 %v986, %v986
        %v1150 = vmul.f32 %v988, %v988
        %v1151 = vmul.f32 %v992, %v992
        %v1152 = vmul.f32 %v994, %v994
        %v1153 = vmul.f32 %v996, %v996
        %v1154 = vmul.f32 %v998, %v998
        %v1155 = vadd.f32 %v1091, %v1093
        %v1156 = vadd.f32 %v1155, %v1095
        %v1157 = vadd.f32 %v1156, %v1097
        %v1158 = vadd.f32 %v1157, %v1099
        %v1159 = vadd.f32 %v1158, %v1101
        %v1160 = vadd.f32 %v1159, %v1103
        %v1161 = vadd.f32 %v1160, %v1105
        %v1162 = vadd.f32 %v1161, %v1107
        %v1163 = vadd.f32 %v1162, %v1109
        %v1164 = vadd.f32 %v1163, %v1111
        %v1165 = vadd.f32 %v1164, %v1113
        %v1166 = vadd.f32 %v1165, %v1115
        %v1167 = vadd.f32 %v1166, %v1117
        %v1168 = vadd.f32 %v1167, %v1119
        %v1169 = vadd.f32 %v1168, %v1121
        %v1170 = vrot.slane %v1169, 4
        %v1171 = vadd.f32 %v1169, %v1170
        %v1172 = vrot.slane %v1171, 2
        %v1173 = vadd.f32 %v1171, %v1172
        %v1174 = vrot.slane %v1173, 1
        %v1175 = vadd.f32 %v1173, %v1174
        %v1176 = vadd.f32 %v1092, %v1094
        %v1177 = vadd.f32 %v1176, %v1096
        %v1178 = vadd.f32 %v1177, %v1098
        %v1179 = vadd.f32 %v1178, %v1100
        %v1180 = vadd.f32 %v1179, %v1102
        %v1181 = vadd.f32 %v1180, %v1104
        %v1182 = vadd.f32 %v1181, %v1106
        %v1183 = vadd.f32 %v1182, %v1108
        %v1184 = vadd.f32 %v1183, %v1110
        %v1185 = vadd.f32 %v1184, %v1112
        %v1186 = vadd.f32 %v1185, %v1114
        %v1187 = vadd.f32 %v1186, %v1116
        %v1188 = vadd.f32 %v1187, %v1118
        %v1189 = vadd.f32 %v1188, %v1120
        %v1190 = vadd.f32 %v1189, %v1122
        %v1191 = vrot.slane %v1190, 4
        %v1192 = vadd.f32 %v1190, %v1191
        %v1193 = vrot.slane %v1192, 2
        %v1194 = vadd.f32 %v1192, %v1193
        %v1195 = vrot.slane %v1194, 1
        %v1196 = vadd.f32 %v1194, %v1195
        %v1197 = vadd.f32 %v1123, %v1125
        %v1198 = vadd.f32 %v1197, %v1127
        %v1199 = vadd.f32 %v1198, %v1129
        %v1200 = vadd.f32 %v1199, %v1131
        %v1201 = vadd.f32 %v1200, %v1133
        %v1202 = vadd.f32 %v1201, %v1135
        %v1203 = vadd.f32 %v1202, %v1137
        %v1204 = vadd.f32 %v1203, %v1139
        %v1205 = vadd.f32 %v1204, %v1141
        %v1206 = vadd.f32 %v1205, %v1143
        %v1207 = vadd.f32 %v1206, %v1145
        %v1208 = vadd.f32 %v1207, %v1147
        %v1209 = vadd.f32 %v1208, %v1149
        %v1210 = vadd.f32 %v1209, %v1151
        %v1211 = vadd.f32 %v1210, %v1153
        %v1212 = vrot.slane %v1211, 4
        %v1213 = vadd.f32 %v1211, %v1212
        %v1214 = vrot.slane %v1213, 2
        %v1215 = vadd.f32 %v1213, %v1214
        %v1216 = vrot.slane %v1215, 1
        %v1217 = vadd.f32 %v1215, %v1216
        %v1218 = vadd.f32 %v1124, %v1126
        %v1219 = vadd.f32 %v1218, %v1128
        %v1220 = vadd.f32 %v1219, %v1130
        %v1221 = vadd.f32 %v1220, %v1132
        %v1222 = vadd.f32 %v1221, %v1134
        %v1223 = vadd.f32 %v1222, %v1136
        %v1224 = vadd.f32 %v1223, %v1138
        %v1225 = vadd.f32 %v1224, %v1140
        %v1226 = vadd.f32 %v1225, %v1142
        %v1227 = vadd.f32 %v1226, %v1144
        %v1228 = vadd.f32 %v1227, %v1146
        %v1229 = vadd.f32 %v1228, %v1148
        %v1230 = vadd.f32 %v1229, %v1150
        %v1231 = vadd.f32 %v1230, %v1152
        %v1232 = vadd.f32 %v1231, %v1154
        %v1233 = vrot.slane %v1232, 4
        %v1234 = vadd.f32 %v1232, %v1233
        %v1235 = vrot.slane %v1234, 2
        %v1236 = vadd.f32 %v1234, %v1235
        %v1237 = vrot.slane %v1236, 1
        %v1238 = vadd.f32 %v1236, %v1237
        %v1239 = vmul.f32 %v1175, %v1086
        %v1240 = vmul.f32 %v1196, %v1086
        %v1241 = vmul.f32 %v1217, %v1086
        %v1242 = vmul.f32 %v1238, %v1086
        %v1243 = vmul.f32 %v1087, %v1087
        %v1244 = vmul.f32 %v1088, %v1088
        %v1245 = vmul.f32 %v1089, %v1089
        %v1246 = vmul.f32 %v1090, %v1090
        %v1247 = vsub.f32 %v1239, %v1243
        %v1248 = vsub.f32 %v1240, %v1244
        %v1249 = vsub.f32 %v1241, %v1245
        %v1250 = vsub.f32 %v1242, %v1246
        %v1251 = vadd.f32 %v1247, 0.8
        %v1252 = vadd.f32 %v1248, 0.8
        %v1253 = vadd.f32 %v1249, 0.8
        %v1254 = vadd.f32 %v1250, 0.8
        %v1255 = vrsqrt.pop %v1251
        %v1256 = vrsqrt.pop %v1252
        %v1257 = vrsqrt.pop %v1253
        %v1258 = vrsqrt.pop %v1254
        %v1263 = vcombine.low %v1255, %v1256
        %v1265 = vunpack.c.l.s4 1966171168
        %v1266 = vunpack.c.0.s8 %v1265
        %v1267 = vlaneseq
        %v1268 = vshrl.u32 %v1267, 7
        %v1269 = vsub.s32 %v1266, %v1268
        %v1270 = vrot.slane %v1263, %v1269
        %v1272 = vunpack.c.l.s4 1966171168
        %v1273 = vunpack.c.0.s8 %v1272
        %v1274 = vlaneseq
        %v1275 = vshrl.u32 %v1274, 7
        %v1276 = vsub.s32 %v1273, %v1275
        %v1277 = vrot.slane %v1270, %v1276
        %v1278 = vcombine.low %v1257, %v1258
        %v1280 = vunpack.c.l.s4 1966171168
        %v1281 = vunpack.c.0.s8 %v1280
        %v1282 = vlaneseq
        %v1283 = vshrl.u32 %v1282, 7
        %v1284 = vsub.s32 %v1281, %v1283
        %v1285 = vrot.slane %v1278, %v1284
        %v1287 = vunpack.c.l.s4 1966171168
        %v1288 = vunpack.c.0.s8 %v1287
        %v1289 = vlaneseq
        %v1290 = vshrl.u32 %v1289, 7
        %v1291 = vsub.s32 %v1288, %v1290
        %v1292 = vrot.slane %v1285, %v1291
        %v1295 = vmul.f32 %v1000, %v1277
        %v1296 = vmul.f32 %v1000, %v1292
        %v1299 = vlaneseq
        %v1300 = vshrl.u32 %v1299, 7
        %v1301 = vsub.s32 0, %v1300
        %v1302 = vrot.slane %v1295, %v1301
        %v1303 = vlaneseq
        %v1304 = vshrl.u32 %v1303, 7
        %v1305 = vsub.s32 1, %v1304
        %v1306 = vrot.slane %v1295, %v1305
        %v1307 = vlaneseq
        %v1308 = vshrl.u32 %v1307, 7
        %v1309 = vsub.s32 0, %v1308
        %v1310 = vrot.slane %v1296, %v1309
        %v1311 = vlaneseq
        %v1312 = vshrl.u32 %v1311, 7
        %v1313 = vsub.s32 1, %v1312
        %v1314 = vrot.slane %v1296, %v1313
        %v1319 = vmul.f32 %v1087, %v1302
        %v1320 = vmul.f32 %v1088, %v1306
        %v1321 = vmul.f32 %v1089, %v1310
        %v1322 = vmul.f32 %v1090, %v1314
        %v1327 = vcombine.low %v1319, %v1320
        %v1329 = vunpack.c.l.s4 1966171168
        %v1330 = vunpack.c.0.s8 %v1329
        %v1331 = vlaneseq
        %v1332 = vshrl.u32 %v1331, 7
        %v1333 = vsub.s32 %v1330, %v1332
        %v1334 = vrot.slane %v1327, %v1333
        %v1336 = vunpack.c.l.s4 1966171168
        %v1337 = vunpack.c.0.s8 %v1336
        %v1338 = vlaneseq
        %v1339 = vshrl.u32 %v1338, 7
        %v1340 = vsub.s32 %v1337, %v1339
        %v1341 = vrot.slane %v1334, %v1340
        %v1342 = vcombine.low %v1321, %v1322
        %v1344 = vunpack.c.l.s4 1966171168
        %v1345 = vunpack.c.0.s8 %v1344
        %v1346 = vlaneseq
        %v1347 = vshrl.u32 %v1346, 7
        %v1348 = vsub.s32 %v1345, %v1347
        %v1349 = vrot.slane %v1342, %v1348
        %v1351 = vunpack.c.l.s4 1966171168
        %v1352 = vunpack.c.0.s8 %v1351
        %v1353 = vlaneseq
        %v1354 = vshrl.u32 %v1353, 7
        %v1355 = vsub.s32 %v1352, %v1354
        %v1356 = vrot.slane %v1349, %v1355
        %v1359 = vsub.f32 %v1001, %v1341
        %v1360 = vsub.f32 %v1001, %v1356
        %v1361 = vmul.f32 %v842, %v1302
        %v1362 = vmul.f32 %v844, %v1306
        %v1363 = vmul.f32 %v846, %v1302
        %v1364 = vmul.f32 %v848, %v1306
        %v1365 = vmul.f32 %v852, %v1302
        %v1366 = vmul.f32 %v854, %v1306
        %v1367 = vmul.f32 %v856, %v1302
        %v1368 = vmul.f32 %v858, %v1306
        %v1369 = vmul.f32 %v862, %v1302
        %v1370 = vmul.f32 %v864, %v1306
        %v1371 = vmul.f32 %v866, %v1302
        %v1372 = vmul.f32 %v868, %v1306
        %v1373 = vmul.f32 %v872, %v1302
        %v1374 = vmul.f32 %v874, %v1306
        %v1375 = vmul.f32 %v876, %v1302
        %v1376 = vmul.f32 %v878, %v1306
        %v1377 = vmul.f32 %v882, %v1302
        %v1378 = vmul.f32 %v884, %v1306
        %v1379 = vmul.f32 %v886, %v1302
        %v1380 = vmul.f32 %v888, %v1306
        %v1381 = vmul.f32 %v892, %v1302
        %v1382 = vmul.f32 %v894, %v1306
        %v1383 = vmul.f32 %v896, %v1302
        %v1384 = vmul.f32 %v898, %v1306
        %v1385 = vmul.f32 %v902, %v1302
        %v1386 = vmul.f32 %v904, %v1306
        %v1387 = vmul.f32 %v906, %v1302
        %v1388 = vmul.f32 %v908, %v1306
        %v1389 = vmul.f32 %v912, %v1302
        %v1390 = vmul.f32 %v914, %v1306
        %v1391 = vmul.f32 %v916, %v1302
        %v1392 = vmul.f32 %v918, %v1306
        %v1393 = vmul.f32 %v922, %v1310
        %v1394 = vmul.f32 %v924, %v1314
        %v1395 = vmul.f32 %v926, %v1310
        %v1396 = vmul.f32 %v928, %v1314
        %v1397 = vmul.f32 %v932, %v1310
        %v1398 = vmul.f32 %v934, %v1314
        %v1399 = vmul.f32 %v936, %v1310
        %v1400 = vmul.f32 %v938, %v1314
        %v1401 = vmul.f32 %v942, %v1310
        %v1402 = vmul.f32 %v944, %v1314
        %v1403 = vmul.f32 %v946, %v1310
        %v1404 = vmul.f32 %v948, %v1314
        %v1405 = vmul.f32 %v952, %v1310
        %v1406 = vmul.f32 %v954, %v1314
        %v1407 = vmul.f32 %v956, %v1310
        %v1408 = vmul.f32 %v958, %v1314
        %v1409 = vmul.f32 %v962, %v1310
        %v1410 = vmul.f32 %v964, %v1314
        %v1411 = vmul.f32 %v966, %v1310
        %v1412 = vmul.f32 %v968, %v1314
        %v1413 = vmul.f32 %v972, %v1310
        %v1414 = vmul.f32 %v974, %v1314
        %v1415 = vmul.f32 %v976, %v1310
        %v1416 = vmul.f32 %v978, %v1314
        %v1417 = vmul.f32 %v982, %v1310
        %v1418 = vmul.f32 %v984, %v1314
        %v1419 = vmul.f32 %v986, %v1310
        %v1420 = vmul.f32 %v988, %v1314
        %v1421 = vmul.f32 %v992, %v1310
        %v1422 = vmul.f32 %v994, %v1314
        %v1423 = vmul.f32 %v996, %v1310
        %v1424 = vmul.f32 %v998, %v1314
        %v1427 = vlaneseq
        %v1428 = vshrl.u32 %v1427, 7
        %v1429 = vsub.s32 0, %v1428
        %v1430 = vrot.slane %v1359, %v1429
        %v1431 = vlaneseq
        %v1432 = vshrl.u32 %v1431, 7
        %v1433 = vsub.s32 1, %v1432
        %v1434 = vrot.slane %v1359, %v1433
        %v1435 = vlaneseq
        %v1436 = vshrl.u32 %v1435, 7
        %v1437 = vsub.s32 0, %v1436
        %v1438 = vrot.slane %v1360, %v1437
        %v1439 = vlaneseq
        %v1440 = vshrl.u32 %v1439, 7
        %v1441 = vsub.s32 1, %v1440
        %v1442 = vrot.slane %v1360, %v1441
        %v1447 = vadd.f32 %v1361, %v1430
        %v1448 = vadd.f32 %v1362, %v1434
        %v1449 = vadd.f32 %v1363, %v1430
        %v1450 = vadd.f32 %v1364, %v1434
        %v1451 = vadd.f32 %v1365, %v1430
        %v1452 = vadd.f32 %v1366, %v1434
        %v1453 = vadd.f32 %v1367, %v1430
        %v1454 = vadd.f32 %v1368, %v1434
        %v1455 = vadd.f32 %v1369, %v1430
        %v1456 = vadd.f32 %v1370, %v1434
        %v1457 = vadd.f32 %v1371, %v1430
        %v1458 = vadd.f32 %v1372, %v1434
        %v1459 = vadd.f32 %v1373, %v1430
        %v1460 = vadd.f32 %v1374, %v1434
        %v1461 = vadd.f32 %v1375, %v1430
        %v1462 = vadd.f32 %v1376, %v1434
        %v1463 = vadd.f32 %v1377, %v1430
        %v1464 = vadd.f32 %v1378, %v1434
        %v1465 = vadd.f32 %v1379, %v1430
        %v1466 = vadd.f32 %v1380, %v1434
        %v1467 = vadd.f32 %v1381, %v1430
        %v1468 = vadd.f32 %v1382, %v1434
        %v1469 = vadd.f32 %v1383, %v1430
        %v1470 = vadd.f32 %v1384, %v1434
        %v1471 = vadd.f32 %v1385, %v1430
        %v1472 = vadd.f32 %v1386, %v1434
        %v1473 = vadd.f32 %v1387, %v1430
        %v1474 = vadd.f32 %v1388, %v1434
        %v1475 = vadd.f32 %v1389, %v1430
        %v1476 = vadd.f32 %v1390, %v1434
        %v1477 = vadd.f32 %v1391, %v1430
        %v1478 = vadd.f32 %v1392, %v1434
        %v1479 = vadd.f32 %v1393, %v1438
        %v1480 = vadd.f32 %v1394, %v1442
        %v1481 = vadd.f32 %v1395, %v1438
        %v1482 = vadd.f32 %v1396, %v1442
        %v1483 = vadd.f32 %v1397, %v1438
        %v1484 = vadd.f32 %v1398, %v1442
        %v1485 = vadd.f32 %v1399, %v1438
        %v1486 = vadd.f32 %v1400, %v1442
        %v1487 = vadd.f32 %v1401, %v1438
        %v1488 = vadd.f32 %v1402, %v1442
        %v1489 = vadd.f32 %v1403, %v1438
        %v1490 = vadd.f32 %v1404, %v1442
        %v1491 = vadd.f32 %v1405, %v1438
        %v1492 = vadd.f32 %v1406, %v1442
        %v1493 = vadd.f32 %v1407, %v1438
        %v1494 = vadd.f32 %v1408, %v1442
        %v1495 = vadd.f32 %v1409, %v1438
        %v1496 = vadd.f32 %v1410, %v1442
        %v1497 = vadd.f32 %v1411, %v1438
        %v1498 = vadd.f32 %v1412, %v1442
        %v1499 = vadd.f32 %v1413, %v1438
        %v1500 = vadd.f32 %v1414, %v1442
        %v1501 = vadd.f32 %v1415, %v1438
        %v1502 = vadd.f32 %v1416, %v1442
        %v1503 = vadd.f32 %v1417, %v1438
        %v1504 = vadd.f32 %v1418, %v1442
        %v1505 = vadd.f32 %v1419, %v1438
        %v1506 = vadd.f32 %v1420, %v1442
        %v1507 = vadd.f32 %v1421, %v1438
        %v1508 = vadd.f32 %v1422, %v1442
        %v1509 = vadd.f32 %v1423, %v1438
        %v1510 = vadd.f32 %v1424, %v1442
        %v1511 = vmul.f32 %v1447, 0.1
        %v1512 = vmul.f32 %v1448, 0.1
        %v1513 = vmul.f32 %v1449, 0.1
        %v1514 = vmul.f32 %v1450, 0.1
        %v1515 = vmul.f32 %v1451, 0.1
        %v1516 = vmul.f32 %v1452, 0.1
        %v1517 = vmul.f32 %v1453, 0.1
        %v1518 = vmul.f32 %v1454, 0.1
        %v1519 = vmul.f32 %v1455, 0.1
        %v1520 = vmul.f32 %v1456, 0.1
        %v1521 = vmul.f32 %v1457, 0.1
        %v1522 = vmul.f32 %v1458, 0.1
        %v1523 = vmul.f32 %v1459, 0.1
        %v1524 = vmul.f32 %v1460, 0.1
        %v1525 = vmul.f32 %v1461, 0.1
        %v1526 = vmul.f32 %v1462, 0.1
        %v1527 = vmul.f32 %v1463, 0.1
        %v1528 = vmul.f32 %v1464, 0.1
        %v1529 = vmul.f32 %v1465, 0.1
        %v1530 = vmul.f32 %v1466, 0.1
        %v1531 = vmul.f32 %v1467, 0.1
        %v1532 = vmul.f32 %v1468, 0.1
        %v1533 = vmul.f32 %v1469, 0.1
        %v1534 = vmul.f32 %v1470, 0.1
        %v1535 = vmul.f32 %v1471, 0.1
        %v1536 = vmul.f32 %v1472, 0.1
        %v1537 = vmul.f32 %v1473, 0.1
        %v1538 = vmul.f32 %v1474, 0.1
        %v1539 = vmul.f32 %v1475, 0.1
        %v1540 = vmul.f32 %v1476, 0.1
        %v1541 = vmul.f32 %v1477, 0.1
        %v1542 = vmul.f32 %v1478, 0.1
        %v1543 = vmul.f32 %v1479, 0.1
        %v1544 = vmul.f32 %v1480, 0.1
        %v1545 = vmul.f32 %v1481, 0.1
        %v1546 = vmul.f32 %v1482, 0.1
        %v1547 = vmul.f32 %v1483, 0.1
        %v1548 = vmul.f32 %v1484, 0.1
        %v1549 = vmul.f32 %v1485, 0.1
        %v1550 = vmul.f32 %v1486, 0.1
        %v1551 = vmul.f32 %v1487, 0.1
        %v1552 = vmul.f32 %v1488, 0.1
        %v1553 = vmul.f32 %v1489, 0.1
        %v1554 = vmul.f32 %v1490, 0.1
        %v1555 = vmul.f32 %v1491, 0.1
        %v1556 = vmul.f32 %v1492, 0.1
        %v1557 = vmul.f32 %v1493, 0.1
        %v1558 = vmul.f32 %v1494, 0.1
        %v1559 = vmul.f32 %v1495, 0.1
        %v1560 = vmul.f32 %v1496, 0.1
        %v1561 = vmul.f32 %v1497, 0.1
        %v1562 = vmul.f32 %v1498, 0.1
        %v1563 = vmul.f32 %v1499, 0.1
        %v1564 = vmul.f32 %v1500, 0.1
        %v1565 = vmul.f32 %v1501, 0.1
        %v1566 = vmul.f32 %v1502, 0.1
        %v1567 = vmul.f32 %v1503, 0.1
        %v1568 = vmul.f32 %v1504, 0.1
        %v1569 = vmul.f32 %v1505, 0.1
        %v1570 = vmul.f32 %v1506, 0.1
        %v1571 = vmul.f32 %v1507, 0.1
        %v1572 = vmul.f32 %v1508, 0.1
        %v1573 = vmul.f32 %v1509, 0.1
        %v1574 = vmul.f32 %v1510, 0.1
        %v1575 = vmax.f32 %v1447, %v1511
        %v1576 = vmax.f32 %v1448, %v1512
        %v1577 = vmax.f32 %v1449, %v1513
        %v1578 = vmax.f32 %v1450, %v1514
        %v1579 = vmax.f32 %v1451, %v1515
        %v1580 = vmax.f32 %v1452, %v1516
        %v1581 = vmax.f32 %v1453, %v1517
        %v1582 = vmax.f32 %v1454, %v1518
        %v1583 = vmax.f32 %v1455, %v1519
        %v1584 = vmax.f32 %v1456, %v1520
        %v1585 = vmax.f32 %v1457, %v1521
        %v1586 = vmax.f32 %v1458, %v1522
        %v1587 = vmax.f32 %v1459, %v1523
        %v1588 = vmax.f32 %v1460, %v1524
        %v1589 = vmax.f32 %v1461, %v1525
        %v1590 = vmax.f32 %v1462, %v1526
        %v1591 = vmax.f32 %v1463, %v1527
        %v1592 = vmax.f32 %v1464, %v1528
        %v1593 = vmax.f32 %v1465, %v1529
        %v1594 = vmax.f32 %v1466, %v1530
        %v1595 = vmax.f32 %v1467, %v1531
        %v1596 = vmax.f32 %v1468, %v1532
        %v1597 = vmax.f32 %v1469, %v1533
        %v1598 = vmax.f32 %v1470, %v1534
        %v1599 = vmax.f32 %v1471, %v1535
        %v1600 = vmax.f32 %v1472, %v1536
        %v1601 = vmax.f32 %v1473, %v1537
        %v1602 = vmax.f32 %v1474, %v1538
        %v1603 = vmax.f32 %v1475, %v1539
        %v1604 = vmax.f32 %v1476, %v1540
        %v1605 = vmax.f32 %v1477, %v1541
        %v1606 = vmax.f32 %v1478, %v1542
        %v1607 = vmax.f32 %v1479, %v1543
        %v1608 = vmax.f32 %v1480, %v1544
        %v1609 = vmax.f32 %v1481, %v1545
        %v1610 = vmax.f32 %v1482, %v1546
        %v1611 = vmax.f32 %v1483, %v1547
        %v1612 = vmax.f32 %v1484, %v1548
        %v1613 = vmax.f32 %v1485, %v1549
        %v1614 = vmax.f32 %v1486, %v1550
        %v1615 = vmax.f32 %v1487, %v1551
        %v1616 = vmax.f32 %v1488, %v1552
        %v1617 = vmax.f32 %v1489, %v1553
        %v1618 = vmax.f32 %v1490, %v1554
        %v1619 = vmax.f32 %v1491, %v1555
        %v1620 = vmax.f32 %v1492, %v1556
        %v1621 = vmax.f32 %v1493, %v1557
        %v1622 = vmax.f32 %v1494, %v1558
        %v1623 = vmax.f32 %v1495, %v1559
        %v1624 = vmax.f32 %v1496, %v1560
        %v1625 = vmax.f32 %v1497, %v1561
        %v1626 = vmax.f32 %v1498, %v1562
        %v1627 = vmax.f32 %v1499, %v1563
        %v1628 = vmax.f32 %v1500, %v1564
        %v1629 = vmax.f32 %v1501, %v1565
        %v1630 = vmax.f32 %v1502, %v1566
        %v1631 = vmax.f32 %v1503, %v1567
        %v1632 = vmax.f32 %v1504, %v1568
        %v1633 = vmax.f32 %v1505, %v1569
        %v1634 = vmax.f32 %v1506, %v1570
        %v1635 = vmax.f32 %v1507, %v1571
        %v1636 = vmax.f32 %v1508, %v1572
        %v1637 = vmax.f32 %v1509, %v1573
        %v1638 = vmax.f32 %v1510, %v1574
        %v1639 = vpack.c.bf16 %v1577, %v1575
        %v1640 = vpack.c.bf16 %v1578, %v1576
        %v1641 = vpack.c.bf16 %v1581, %v1579
        %v1642 = vpack.c.bf16 %v1582, %v1580
        %v1643 = vpack.c.bf16 %v1585, %v1583
        %v1644 = vpack.c.bf16 %v1586, %v1584
        %v1645 = vpack.c.bf16 %v1589, %v1587
        %v1646 = vpack.c.bf16 %v1590, %v1588
        %v1647 = vpack.c.bf16 %v1593, %v1591
        %v1648 = vpack.c.bf16 %v1594, %v1592
        %v1649 = vpack.c.bf16 %v1597, %v1595
        %v1650 = vpack.c.bf16 %v1598, %v1596
        %v1651 = vpack.c.bf16 %v1601, %v1599
        %v1652 = vpack.c.bf16 %v1602, %v1600
        %v1653 = vpack.c.bf16 %v1605, %v1603
        %v1654 = vpack.c.bf16 %v1606, %v1604
        %v1655 = vpack.c.bf16 %v1609, %v1607
        %v1656 = vpack.c.bf16 %v1610, %v1608
        %v1657 = vpack.c.bf16 %v1613, %v1611
        %v1658 = vpack.c.bf16 %v1614, %v1612
        %v1659 = vpack.c.bf16 %v1617, %v1615
        %v1660 = vpack.c.bf16 %v1618, %v1616
        %v1661 = vpack.c.bf16 %v1621, %v1619
        %v1662 = vpack.c.bf16 %v1622, %v1620
        %v1663 = vpack.c.bf16 %v1625, %v1623
        %v1664 = vpack.c.bf16 %v1626, %v1624
        %v1665 = vpack.c.bf16 %v1629, %v1627
        %v1666 = vpack.c.bf16 %v1630, %v1628
        %v1667 = vpack.c.bf16 %v1633, %v1631
        %v1668 = vpack.c.bf16 %v1634, %v1632
        %v1669 = vpack.c.bf16 %v1637, %v1635
        %v1670 = vpack.c.bf16 %v1638, %v1636
        %v1671 = vld [vmem:[%s3] sm:$0xff]
        %v1672 = vld [vmem:[%s3 + $0x8] sm:$0xff]
        %v1673 = vld [vmem:[%s3 + $0x10] sm:$0xff]
        %v1674 = vld [vmem:[%s3 + $0x18] sm:$0xff]
        %v1675 = vld [vmem:[%s3 + $0x20] sm:$0xff]
        %v1676 = vld [vmem:[%s3 + $0x28] sm:$0xff]
        %v1677 = vld [vmem:[%s3 + $0x30] sm:$0xff]
        %v1678 = vld [vmem:[%s3 + $0x38] sm:$0xff]
        %v1679 = vld [vmem:[%s3 + $0x40] sm:$0xff]
        %v1680 = vld [vmem:[%s3 + $0x48] sm:$0xff]
        %v1681 = vld [vmem:[%s3 + $0x50] sm:$0xff]
        %v1682 = vld [vmem:[%s3 + $0x58] sm:$0xff]
        %v1683 = vld [vmem:[%s3 + $0x60] sm:$0xff]
        %v1684 = vld [vmem:[%s3 + $0x68] sm:$0xff]
        %v1685 = vld [vmem:[%s3 + $0x70] sm:$0xff]
        %v1686 = vld [vmem:[%s3 + $0x78] sm:$0xff]
        %v1687 = vld [vmem:[%s3 + $0x80] sm:$0xff]
        %v1688 = vld [vmem:[%s3 + $0x88] sm:$0xff]
        %v1689 = vld [vmem:[%s3 + $0x90] sm:$0xff]
        %v1690 = vld [vmem:[%s3 + $0x98] sm:$0xff]
        %v1691 = vld [vmem:[%s3 + $0xa0] sm:$0xff]
        %v1692 = vld [vmem:[%s3 + $0xa8] sm:$0xff]
        %v1693 = vld [vmem:[%s3 + $0xb0] sm:$0xff]
        %v1694 = vld [vmem:[%s3 + $0xb8] sm:$0xff]
        %v1695 = vld [vmem:[%s3 + $0xc0] sm:$0xff]
        %v1696 = vld [vmem:[%s3 + $0xc8] sm:$0xff]
        %v1697 = vld [vmem:[%s3 + $0xd0] sm:$0xff]
        %v1698 = vld [vmem:[%s3 + $0xd8] sm:$0xff]
        %v1699 = vld [vmem:[%s3 + $0xe0] sm:$0xff]
        %v1700 = vld [vmem:[%s3 + $0xe8] sm:$0xff]
        %v1701 = vld [vmem:[%s3 + $0xf0] sm:$0xff]
        %v1702 = vld [vmem:[%s3 + $0xf8] sm:$0xff]
        %v1703 = vld [vmem:[%s3 + $0x100] sm:$0xff]
        %v1704 = vld [vmem:[%s3 + $0x108] sm:$0xff]
        %v1705 = vld [vmem:[%s3 + $0x110] sm:$0xff]
        %v1706 = vld [vmem:[%s3 + $0x118] sm:$0xff]
        %v1707 = vld [vmem:[%s3 + $0x120] sm:$0xff]
        %v1708 = vld [vmem:[%s3 + $0x128] sm:$0xff]
        %v1709 = vld [vmem:[%s3 + $0x130] sm:$0xff]
        %v1710 = vld [vmem:[%s3 + $0x138] sm:$0xff]
        %v1711 = vld [vmem:[%s3 + $0x140] sm:$0xff]
        %v1712 = vld [vmem:[%s3 + $0x148] sm:$0xff]
        %v1713 = vld [vmem:[%s3 + $0x150] sm:$0xff]
        %v1714 = vld [vmem:[%s3 + $0x158] sm:$0xff]
        %v1715 = vld [vmem:[%s3 + $0x160] sm:$0xff]
        %v1716 = vld [vmem:[%s3 + $0x168] sm:$0xff]
        %v1717 = vld [vmem:[%s3 + $0x170] sm:$0xff]
        %v1718 = vld [vmem:[%s3 + $0x178] sm:$0xff]
        %v1719 = vld [vmem:[%s3 + $0x180] sm:$0xff]
        %v1720 = vld [vmem:[%s3 + $0x188] sm:$0xff]
        %v1721 = vld [vmem:[%s3 + $0x190] sm:$0xff]
        %v1722 = vld [vmem:[%s3 + $0x198] sm:$0xff]
        %v1723 = vld [vmem:[%s3 + $0x1a0] sm:$0xff]
        %v1724 = vld [vmem:[%s3 + $0x1a8] sm:$0xff]
        %v1725 = vld [vmem:[%s3 + $0x1b0] sm:$0xff]
        %v1726 = vld [vmem:[%s3 + $0x1b8] sm:$0xff]
        %v1727 = vld [vmem:[%s3 + $0x1c0] sm:$0xff]
        %v1728 = vld [vmem:[%s3 + $0x1c8] sm:$0xff]
        %v1729 = vld [vmem:[%s3 + $0x1d0] sm:$0xff]
        %v1730 = vld [vmem:[%s3 + $0x1d8] sm:$0xff]
        %v1731 = vld [vmem:[%s3 + $0x1e0] sm:$0xff]
        %v1732 = vld [vmem:[%s3 + $0x1e8] sm:$0xff]
        %v1733 = vld [vmem:[%s3 + $0x1f0] sm:$0xff]
        %v1734 = vld [vmem:[%s3 + $0x1f8] sm:$0xff]
        %v1735 = vld [vmem:[#allocation8 + $0x7] sm:$0xf]
        %v1737 = vlaneseq
        %v1738 = vshrl.u32 %v1737, 7
        %v1739 = vsub.s32 0, %v1738
        %v1740 = vrot.slane %v1735, %v1739
        %v1741 = vlaneseq
        %v1742 = vshrl.u32 %v1741, 7
        %v1743 = vsub.s32 1, %v1742
        %v1744 = vrot.slane %v1735, %v1743
        %v1745 = vlaneseq
        %v1746 = vshrl.u32 %v1745, 7
        %v1747 = vsub.s32 2, %v1746
        %v1748 = vrot.slane %v1735, %v1747
        %v1749 = vlaneseq
        %v1750 = vshrl.u32 %v1749, 7
        %v1751 = vsub.s32 3, %v1750
        %v1752 = vrot.slane %v1735, %v1751
        %v1821 = vunpack.c.l.b16 %v1671
        %v1822 = vunpack.c.h.b16 %v1671
        %v1823 = vunpack.c.l.b16 %v1672
        %v1824 = vunpack.c.h.b16 %v1672
        %v1825 = vunpack.c.l.b16 %v1673
        %v1826 = vunpack.c.h.b16 %v1673
        %v1827 = vunpack.c.l.b16 %v1674
        %v1828 = vunpack.c.h.b16 %v1674
        %v1829 = vunpack.c.l.b16 %v1675
        %v1830 = vunpack.c.h.b16 %v1675
        %v1831 = vunpack.c.l.b16 %v1676
        %v1832 = vunpack.c.h.b16 %v1676
        %v1833 = vunpack.c.l.b16 %v1677
        %v1834 = vunpack.c.h.b16 %v1677
        %v1835 = vunpack.c.l.b16 %v1678
        %v1836 = vunpack.c.h.b16 %v1678
        %v1837 = vunpack.c.l.b16 %v1679
        %v1838 = vunpack.c.h.b16 %v1679
        %v1839 = vunpack.c.l.b16 %v1680
        %v1840 = vunpack.c.h.b16 %v1680
        %v1841 = vunpack.c.l.b16 %v1681
        %v1842 = vunpack.c.h.b16 %v1681
        %v1843 = vunpack.c.l.b16 %v1682
        %v1844 = vunpack.c.h.b16 %v1682
        %v1845 = vunpack.c.l.b16 %v1683
        %v1846 = vunpack.c.h.b16 %v1683
        %v1847 = vunpack.c.l.b16 %v1684
        %v1848 = vunpack.c.h.b16 %v1684
        %v1849 = vunpack.c.l.b16 %v1685
        %v1850 = vunpack.c.h.b16 %v1685
        %v1851 = vunpack.c.l.b16 %v1686
        %v1852 = vunpack.c.h.b16 %v1686
        %v1853 = vunpack.c.l.b16 %v1687
        %v1854 = vunpack.c.h.b16 %v1687
        %v1855 = vunpack.c.l.b16 %v1688
        %v1856 = vunpack.c.h.b16 %v1688
        %v1857 = vunpack.c.l.b16 %v1689
        %v1858 = vunpack.c.h.b16 %v1689
        %v1859 = vunpack.c.l.b16 %v1690
        %v1860 = vunpack.c.h.b16 %v1690
        %v1861 = vunpack.c.l.b16 %v1691
        %v1862 = vunpack.c.h.b16 %v1691
        %v1863 = vunpack.c.l.b16 %v1692
        %v1864 = vunpack.c.h.b16 %v1692
        %v1865 = vunpack.c.l.b16 %v1693
        %v1866 = vunpack.c.h.b16 %v1693
        %v1867 = vunpack.c.l.b16 %v1694
        %v1868 = vunpack.c.h.b16 %v1694
        %v1869 = vunpack.c.l.b16 %v1695
        %v1870 = vunpack.c.h.b16 %v1695
        %v1871 = vunpack.c.l.b16 %v1696
        %v1872 = vunpack.c.h.b16 %v1696
        %v1873 = vunpack.c.l.b16 %v1697
        %v1874 = vunpack.c.h.b16 %v1697
        %v1875 = vunpack.c.l.b16 %v1698
        %v1876 = vunpack.c.h.b16 %v1698
        %v1877 = vunpack.c.l.b16 %v1699
        %v1878 = vunpack.c.h.b16 %v1699
        %v1879 = vunpack.c.l.b16 %v1700
        %v1880 = vunpack.c.h.b16 %v1700
        %v1881 = vunpack.c.l.b16 %v1701
        %v1882 = vunpack.c.h.b16 %v1701
        %v1883 = vunpack.c.l.b16 %v1702
        %v1884 = vunpack.c.h.b16 %v1702
        %v1885 = vunpack.c.l.b16 %v1703
        %v1886 = vunpack.c.h.b16 %v1703
        %v1887 = vunpack.c.l.b16 %v1704
        %v1888 = vunpack.c.h.b16 %v1704
        %v1889 = vunpack.c.l.b16 %v1705
        %v1890 = vunpack.c.h.b16 %v1705
        %v1891 = vunpack.c.l.b16 %v1706
        %v1892 = vunpack.c.h.b16 %v1706
        %v1893 = vunpack.c.l.b16 %v1707
        %v1894 = vunpack.c.h.b16 %v1707
        %v1895 = vunpack.c.l.b16 %v1708
        %v1896 = vunpack.c.h.b16 %v1708
        %v1897 = vunpack.c.l.b16 %v1709
        %v1898 = vunpack.c.h.b16 %v1709
        %v1899 = vunpack.c.l.b16 %v1710
        %v1900 = vunpack.c.h.b16 %v1710
        %v1901 = vunpack.c.l.b16 %v1711
        %v1902 = vunpack.c.h.b16 %v1711
        %v1903 = vunpack.c.l.b16 %v1712
        %v1904 = vunpack.c.h.b16 %v1712
        %v1905 = vunpack.c.l.b16 %v1713
        %v1906 = vunpack.c.h.b16 %v1713
        %v1907 = vunpack.c.l.b16 %v1714
        %v1908 = vunpack.c.h.b16 %v1714
        %v1909 = vunpack.c.l.b16 %v1715
        %v1910 = vunpack.c.h.b16 %v1715
        %v1911 = vunpack.c.l.b16 %v1716
        %v1912 = vunpack.c.h.b16 %v1716
        %v1913 = vunpack.c.l.b16 %v1717
        %v1914 = vunpack.c.h.b16 %v1717
        %v1915 = vunpack.c.l.b16 %v1718
        %v1916 = vunpack.c.h.b16 %v1718
        %v1917 = vunpack.c.l.b16 %v1719
        %v1918 = vunpack.c.h.b16 %v1719
        %v1919 = vunpack.c.l.b16 %v1720
        %v1920 = vunpack.c.h.b16 %v1720
        %v1921 = vunpack.c.l.b16 %v1721
        %v1922 = vunpack.c.h.b16 %v1721
        %v1923 = vunpack.c.l.b16 %v1722
        %v1924 = vunpack.c.h.b16 %v1722
        %v1925 = vunpack.c.l.b16 %v1723
        %v1926 = vunpack.c.h.b16 %v1723
        %v1927 = vunpack.c.l.b16 %v1724
        %v1928 = vunpack.c.h.b16 %v1724
        %v1929 = vunpack.c.l.b16 %v1725
        %v1930 = vunpack.c.h.b16 %v1725
        %v1931 = vunpack.c.l.b16 %v1726
        %v1932 = vunpack.c.h.b16 %v1726
        %v1933 = vunpack.c.l.b16 %v1727
        %v1934 = vunpack.c.h.b16 %v1727
        %v1935 = vunpack.c.l.b16 %v1728
        %v1936 = vunpack.c.h.b16 %v1728
        %v1937 = vunpack.c.l.b16 %v1729
        %v1938 = vunpack.c.h.b16 %v1729
        %v1939 = vunpack.c.l.b16 %v1730
        %v1940 = vunpack.c.h.b16 %v1730
        %v1941 = vunpack.c.l.b16 %v1731
        %v1942 = vunpack.c.h.b16 %v1731
        %v1943 = vunpack.c.l.b16 %v1732
        %v1944 = vunpack.c.h.b16 %v1732
        %v1945 = vunpack.c.l.b16 %v1733
        %v1946 = vunpack.c.h.b16 %v1733
        %v1947 = vunpack.c.l.b16 %v1734
        %v1948 = vunpack.c.h.b16 %v1734
        %v1949 = vpack.c.b16 %v1825, %v1821
        %v1950 = vpack.c.b16 %v1826, %v1822
        %v1951 = vpack.c.b16 %v1827, %v1823
        %v1952 = vpack.c.b16 %v1828, %v1824
        %v1953 = vpack.c.b16 %v1833, %v1829
        %v1954 = vpack.c.b16 %v1834, %v1830
        %v1955 = vpack.c.b16 %v1835, %v1831
        %v1956 = vpack.c.b16 %v1836, %v1832
        %v1957 = vpack.c.b16 %v1841, %v1837
        %v1958 = vpack.c.b16 %v1842, %v1838
        %v1959 = vpack.c.b16 %v1843, %v1839
        %v1960 = vpack.c.b16 %v1844, %v1840
        %v1961 = vpack.c.b16 %v1849, %v1845
        %v1962 = vpack.c.b16 %v1850, %v1846
        %v1963 = vpack.c.b16 %v1851, %v1847
        %v1964 = vpack.c.b16 %v1852, %v1848
        %v1965 = vpack.c.b16 %v1857, %v1853
        %v1966 = vpack.c.b16 %v1858, %v1854
        %v1967 = vpack.c.b16 %v1859, %v1855
        %v1968 = vpack.c.b16 %v1860, %v1856
        %v1969 = vpack.c.b16 %v1865, %v1861
        %v1970 = vpack.c.b16 %v1866, %v1862
        %v1971 = vpack.c.b16 %v1867, %v1863
        %v1972 = vpack.c.b16 %v1868, %v1864
        %v1973 = vpack.c.b16 %v1873, %v1869
        %v1974 = vpack.c.b16 %v1874, %v1870
        %v1975 = vpack.c.b16 %v1875, %v1871
        %v1976 = vpack.c.b16 %v1876, %v1872
        %v1977 = vpack.c.b16 %v1881, %v1877
        %v1978 = vpack.c.b16 %v1882, %v1878
        %v1979 = vpack.c.b16 %v1883, %v1879
        %v1980 = vpack.c.b16 %v1884, %v1880
        %v1981 = vpack.c.b16 %v1889, %v1885
        %v1982 = vpack.c.b16 %v1890, %v1886
        %v1983 = vpack.c.b16 %v1891, %v1887
        %v1984 = vpack.c.b16 %v1892, %v1888
        %v1985 = vpack.c.b16 %v1897, %v1893
        %v1986 = vpack.c.b16 %v1898, %v1894
        %v1987 = vpack.c.b16 %v1899, %v1895
        %v1988 = vpack.c.b16 %v1900, %v1896
        %v1989 = vpack.c.b16 %v1905, %v1901
        %v1990 = vpack.c.b16 %v1906, %v1902
        %v1991 = vpack.c.b16 %v1907, %v1903
        %v1992 = vpack.c.b16 %v1908, %v1904
        %v1993 = vpack.c.b16 %v1913, %v1909
        %v1994 = vpack.c.b16 %v1914, %v1910
        %v1995 = vpack.c.b16 %v1915, %v1911
        %v1996 = vpack.c.b16 %v1916, %v1912
        %v1997 = vpack.c.b16 %v1921, %v1917
        %v1998 = vpack.c.b16 %v1922, %v1918
        %v1999 = vpack.c.b16 %v1923, %v1919
        %v2000 = vpack.c.b16 %v1924, %v1920
        %v2001 = vpack.c.b16 %v1929, %v1925
        %v2002 = vpack.c.b16 %v1930, %v1926
        %v2003 = vpack.c.b16 %v1931, %v1927
        %v2004 = vpack.c.b16 %v1932, %v1928
        %v2005 = vpack.c.b16 %v1937, %v1933
        %v2006 = vpack.c.b16 %v1938, %v1934
        %v2007 = vpack.c.b16 %v1939, %v1935
        %v2008 = vpack.c.b16 %v1940, %v1936
        %v2009 = vpack.c.b16 %v1945, %v1941
        %v2010 = vpack.c.b16 %v1946, %v1942
        %v2011 = vpack.c.b16 %v1947, %v1943
        %v2012 = vpack.c.b16 %v1948, %v1944
        %2077 = vmatprep.subr.bf16.mxu0 %v1950
        %2078 = vmatpush1.bf16.msra.mxu0 %v1949
        %2079 = vmatprep.subr.bf16.mxu0 %v1954
        %2080 = vmatpush1.bf16.msra.mxu0 %v1953
        %2081 = vmatprep.subr.bf16.mxu0 %v1958
        %2082 = vmatpush1.bf16.msra.mxu0 %v1957
        %2083 = vmatprep.subr.bf16.mxu0 %v1962
        %2084 = vmatpush1.bf16.msra.mxu0 %v1961
        %2085 = vmatprep.subr.bf16.mxu0 %v1966
        %2086 = vmatpush1.bf16.msra.mxu0 %v1965
        %2087 = vmatprep.subr.bf16.mxu0 %v1970
        %2088 = vmatpush1.bf16.msra.mxu0 %v1969
        %2089 = vmatprep.subr.bf16.mxu0 %v1974
        %2090 = vmatpush1.bf16.msra.mxu0 %v1973
        %2091 = vmatprep.subr.bf16.mxu0 %v1978
        %2092 = vmatpush1.bf16.msra.mxu0 %v1977
        %2093 = vmatprep.subr.bf16.mxu0 %v1982
        %2094 = vmatpush1.bf16.msra.mxu0 %v1981
        %2095 = vmatprep.subr.bf16.mxu0 %v1986
        %2096 = vmatpush1.bf16.msra.mxu0 %v1985
        %2097 = vmatprep.subr.bf16.mxu0 %v1990
        %2098 = vmatpush1.bf16.msra.mxu0 %v1989
        %2099 = vmatprep.subr.bf16.mxu0 %v1994
        %2100 = vmatpush1.bf16.msra.mxu0 %v1993
        %2101 = vmatprep.subr.bf16.mxu0 %v1998
        %2102 = vmatpush1.bf16.msra.mxu0 %v1997
        %2103 = vmatprep.subr.bf16.mxu0 %v2002
        %2104 = vmatpush1.bf16.msra.mxu0 %v2001
        %2105 = vmatprep.subr.bf16.mxu0 %v2006
        %2106 = vmatpush1.bf16.msra.mxu0 %v2005
        %2107 = vmatprep.subr.bf16.mxu0 %v2010
        %2108 = vmatpush1.bf16.msra.mxu0 %v2009
        %2109 = vmatprep.mubr.bf16.mxu0 %v1640
        %2110 = vmatmul.mubr.bf16.gmra.mrb[0].mxu0 %v1639
        %v2111 = vpop.f32.mrb[0].mxu0
        %v2112 = vadd.f32 %v1740, %v2111
        %v2113 = vpop.f32.mrb[0].mxu0
        %v2114 = vadd.f32 %v1744, %v2113
        %v2115 = vpop.f32.mrb[0].mxu0
        %v2116 = vadd.f32 %v1740, %v2115
        %v2117 = vpop.f32.mrb[0].mxu0
        %v2118 = vadd.f32 %v1744, %v2117
        %2119 = vmatprep.mubr.bf16.mxu0 %v1642
        %2120 = vmatmul.mubr.bf16.gmra.mrb[0].mxu0 %v1641
        %v2121 = vpop.f32.mrb[0].mxu0
        %v2122 = vadd.f32 %v1740, %v2121
        %v2123 = vpop.f32.mrb[0].mxu0
        %v2124 = vadd.f32 %v1744, %v2123
        %v2125 = vpop.f32.mrb[0].mxu0
        %v2126 = vadd.f32 %v1740, %v2125
        %v2127 = vpop.f32.mrb[0].mxu0
        %v2128 = vadd.f32 %v1744, %v2127
        %2129 = vmatprep.mubr.bf16.mxu0 %v1644
        %2130 = vmatmul.mubr.bf16.gmra.mrb[0].mxu0 %v1643
        %v2131 = vpop.f32.mrb[0].mxu0
        %v2132 = vadd.f32 %v1740, %v2131
        %v2133 = vpop.f32.mrb[0].mxu0
        %v2134 = vadd.f32 %v1744, %v2133
        %v2135 = vpop.f32.mrb[0].mxu0
        %v2136 = vadd.f32 %v1740, %v2135
        %v2137 = vpop.f32.mrb[0].mxu0
        %v2138 = vadd.f32 %v1744, %v2137
        %2139 = vmatprep.mubr.bf16.mxu0 %v1646
        %2140 = vmatmul.mubr.bf16.gmra.mrb[0].mxu0 %v1645
        %v2141 = vpop.f32.mrb[0].mxu0
        %v2142 = vadd.f32 %v1740, %v2141
        %v2143 = vpop.f32.mrb[0].mxu0
        %v2144 = vadd.f32 %v1744, %v2143
        %v2145 = vpop.f32.mrb[0].mxu0
        %v2146 = vadd.f32 %v1740, %v2145
        %v2147 = vpop.f32.mrb[0].mxu0
        %v2148 = vadd.f32 %v1744, %v2147
        %2149 = vmatprep.mubr.bf16.mxu0 %v1648
        %2150 = vmatmul.mubr.bf16.gmra.mrb[0].mxu0 %v1647
        %v2151 = vpop.f32.mrb[0].mxu0
        %v2152 = vadd.f32 %v1740, %v2151
        %v2153 = vpop.f32.mrb[0].mxu0
        %v2154 = vadd.f32 %v1744, %v2153
        %v2155 = vpop.f32.mrb[0].mxu0
        %v2156 = vadd.f32 %v1740, %v2155
        %v2157 = vpop.f32.mrb[0].mxu0
        %v2158 = vadd.f32 %v1744, %v2157
        %2159 = vmatprep.mubr.bf16.mxu0 %v1650
        %2160 = vmatmul.mubr.bf16.gmra.mrb[0].mxu0 %v1649
        %v2161 = vpop.f32.mrb[0].mxu0
        %v2162 = vadd.f32 %v1740, %v2161
        %v2163 = vpop.f32.mrb[0].mxu0
        %v2164 = vadd.f32 %v1744, %v2163
        %v2165 = vpop.f32.mrb[0].mxu0
        %v2166 = vadd.f32 %v1740, %v2165
        %v2167 = vpop.f32.mrb[0].mxu0
        %v2168 = vadd.f32 %v1744, %v2167
        %2169 = vmatprep.mubr.bf16.mxu0 %v1652
        %2170 = vmatmul.mubr.bf16.gmra.mrb[0].mxu0 %v1651
        %v2171 = vpop.f32.mrb[0].mxu0
        %v2172 = vadd.f32 %v1740, %v2171
        %v2173 = vpop.f32.mrb[0].mxu0
        %v2174 = vadd.f32 %v1744, %v2173
        %v2175 = vpop.f32.mrb[0].mxu0
        %v2176 = vadd.f32 %v1740, %v2175
        %v2177 = vpop.f32.mrb[0].mxu0
        %v2178 = vadd.f32 %v1744, %v2177
        %2179 = vmatprep.mubr.bf16.mxu0 %v1654
        %2180 = vmatmul.mubr.bf16.gmra.mrb[0].mxu0 %v1653
        %v2181 = vpop.f32.mrb[0].mxu0
        %v2182 = vadd.f32 %v1740, %v2181
        %v2183 = vpop.f32.mrb[0].mxu0
        %v2184 = vadd.f32 %v1744, %v2183
        %v2185 = vpop.f32.mrb[0].mxu0
        %v2186 = vadd.f32 %v1740, %v2185
        %v2187 = vpop.f32.mrb[0].mxu0
        %v2188 = vadd.f32 %v1744, %v2187
        %2189 = vmatprep.mubr.bf16.mxu0 %v1656
        %2190 = vmatmul.mubr.bf16.gmra.mrb[0].mxu0 %v1655
        %v2191 = vpop.f32.mrb[0].mxu0
        %v2192 = vadd.f32 %v1740, %v2191
        %v2193 = vpop.f32.mrb[0].mxu0
        %v2194 = vadd.f32 %v1744, %v2193
        %v2195 = vpop.f32.mrb[0].mxu0
        %v2196 = vadd.f32 %v1740, %v2195
        %v2197 = vpop.f32.mrb[0].mxu0
        %v2198 = vadd.f32 %v1744, %v2197
        %2199 = vmatprep.mubr.bf16.mxu0 %v1658
        %2200 = vmatmul.mubr.bf16.gmra.mrb[0].mxu0 %v1657
        %v2201 = vpop.f32.mrb[0].mxu0
        %v2202 = vadd.f32 %v1740, %v2201
        %v2203 = vpop.f32.mrb[0].mxu0
        %v2204 = vadd.f32 %v1744, %v2203
        %v2205 = vpop.f32.mrb[0].mxu0
        %v2206 = vadd.f32 %v1740, %v2205
        %v2207 = vpop.f32.mrb[0].mxu0
        %v2208 = vadd.f32 %v1744, %v2207
        %2209 = vmatprep.mubr.bf16.mxu0 %v1660
        %2210 = vmatmul.mubr.bf16.gmra.mrb[0].mxu0 %v1659
        %v2211 = vpop.f32.mrb[0].mxu0
        %v2212 = vadd.f32 %v1740, %v2211
        %v2213 = vpop.f32.mrb[0].mxu0
        %v2214 = vadd.f32 %v1744, %v2213
        %v2215 = vpop.f32.mrb[0].mxu0
        %v2216 = vadd.f32 %v1740, %v2215
        %v2217 = vpop.f32.mrb[0].mxu0
        %v2218 = vadd.f32 %v1744, %v2217
        %2219 = vmatprep.mubr.bf16.mxu0 %v1662
        %2220 = vmatmul.mubr.bf16.gmra.mrb[0].mxu0 %v1661
        %v2221 = vpop.f32.mrb[0].mxu0
        %v2222 = vadd.f32 %v1740, %v2221
        %v2223 = vpop.f32.mrb[0].mxu0
        %v2224 = vadd.f32 %v1744, %v2223
        %v2225 = vpop.f32.mrb[0].mxu0
        %v2226 = vadd.f32 %v1740, %v2225
        %v2227 = vpop.f32.mrb[0].mxu0
        %v2228 = vadd.f32 %v1744, %v2227
        %2229 = vmatprep.mubr.bf16.mxu0 %v1664
        %2230 = vmatmul.mubr.bf16.gmra.mrb[0].mxu0 %v1663
        %v2231 = vpop.f32.mrb[0].mxu0
        %v2232 = vadd.f32 %v1740, %v2231
        %v2233 = vpop.f32.mrb[0].mxu0
        %v2234 = vadd.f32 %v1744, %v2233
        %v2235 = vpop.f32.mrb[0].mxu0
        %v2236 = vadd.f32 %v1740, %v2235
        %v2237 = vpop.f32.mrb[0].mxu0
        %v2238 = vadd.f32 %v1744, %v2237
        %2239 = vmatprep.mubr.bf16.mxu0 %v1666
        %2240 = vmatmul.mubr.bf16.gmra.mrb[0].mxu0 %v1665
        %v2241 = vpop.f32.mrb[0].mxu0
        %v2242 = vadd.f32 %v1740, %v2241
        %v2243 = vpop.f32.mrb[0].mxu0
        %v2244 = vadd.f32 %v1744, %v2243
        %v2245 = vpop.f32.mrb[0].mxu0
        %v2246 = vadd.f32 %v1740, %v2245
        %v2247 = vpop.f32.mrb[0].mxu0
        %v2248 = vadd.f32 %v1744, %v2247
        %2249 = vmatprep.mubr.bf16.mxu0 %v1668
        %2250 = vmatmul.mubr.bf16.gmra.mrb[0].mxu0 %v1667
        %v2251 = vpop.f32.mrb[0].mxu0
        %v2252 = vadd.f32 %v1740, %v2251
        %v2253 = vpop.f32.mrb[0].mxu0
        %v2254 = vadd.f32 %v1744, %v2253
        %v2255 = vpop.f32.mrb[0].mxu0
        %v2256 = vadd.f32 %v1740, %v2255
        %v2257 = vpop.f32.mrb[0].mxu0
        %v2258 = vadd.f32 %v1744, %v2257
        %2259 = vmatprep.mubr.bf16.mxu0 %v1670
        %2260 = vmatmul.mubr.bf16.gmra.mrb[0].mxu0 %v1669
        %v2261 = vpop.f32.mrb[0].mxu0
        %v2262 = vadd.f32 %v1740, %v2261
        %v2263 = vpop.f32.mrb[0].mxu0
        %v2264 = vadd.f32 %v1744, %v2263
        %v2265 = vpop.f32.mrb[0].mxu0
        %v2266 = vadd.f32 %v1740, %v2265
        %v2267 = vpop.f32.mrb[0].mxu0
        %v2268 = vadd.f32 %v1744, %v2267
        %2269 = vdwg.mxu0
        %2270 = vmatprep.subr.bf16.mxu0 %v1952
        %2271 = vmatpush1.bf16.msra.mxu0 %v1951
        %2272 = vmatprep.subr.bf16.mxu0 %v1956
        %2273 = vmatpush1.bf16.msra.mxu0 %v1955
        %2274 = vmatprep.subr.bf16.mxu0 %v1960
        %2275 = vmatpush1.bf16.msra.mxu0 %v1959
        %2276 = vmatprep.subr.bf16.mxu0 %v1964
        %2277 = vmatpush1.bf16.msra.mxu0 %v1963
        %2278 = vmatprep.subr.bf16.mxu0 %v1968
        %2279 = vmatpush1.bf16.msra.mxu0 %v1967
        %2280 = vmatprep.subr.bf16.mxu0 %v1972
        %2281 = vmatpush1.bf16.msra.mxu0 %v1971
        %2282 = vmatprep.subr.bf16.mxu0 %v1976
        %2283 = vmatpush1.bf16.msra.mxu0 %v1975
        %2284 = vmatprep.subr.bf16.mxu0 %v1980
        %2285 = vmatpush1.bf16.msra.mxu0 %v1979
        %2286 = vmatprep.subr.bf16.mxu0 %v1984
        %2287 = vmatpush1.bf16.msra.mxu0 %v1983
        %2288 = vmatprep.subr.bf16.mxu0 %v1988
        %2289 = vmatpush1.bf16.msra.mxu0 %v1987
        %2290 = vmatprep.subr.bf16.mxu0 %v1992
        %2291 = vmatpush1.bf16.msra.mxu0 %v1991
        %2292 = vmatprep.subr.bf16.mxu0 %v1996
        %2293 = vmatpush1.bf16.msra.mxu0 %v1995
        %2294 = vmatprep.subr.bf16.mxu0 %v2000
        %2295 = vmatpush1.bf16.msra.mxu0 %v1999
        %2296 = vmatprep.subr.bf16.mxu0 %v2004
        %2297 = vmatpush1.bf16.msra.mxu0 %v2003
        %2298 = vmatprep.subr.bf16.mxu0 %v2008
        %2299 = vmatpush1.bf16.msra.mxu0 %v2007
        %2300 = vmatprep.subr.bf16.mxu0 %v2012
        %2301 = vmatpush1.bf16.msra.mxu0 %v2011
        %2302 = vmatprep.mubr.bf16.mxu0 %v1640
        %2303 = vmatmul.mubr.bf16.gmra.mrb[0].mxu0 %v1639
        %v2304 = vpop.f32.mrb[0].mxu0
        %v2305 = vadd.f32 %v1748, %v2304
        %v2306 = vpop.f32.mrb[0].mxu0
        %v2307 = vadd.f32 %v1752, %v2306
        %v2308 = vpop.f32.mrb[0].mxu0
        %v2309 = vadd.f32 %v1748, %v2308
        %v2310 = vpop.f32.mrb[0].mxu0
        %v2311 = vadd.f32 %v1752, %v2310
        %2312 = vmatprep.mubr.bf16.mxu0 %v1642
        %2313 = vmatmul.mubr.bf16.gmra.mrb[0].mxu0 %v1641
        %v2314 = vpop.f32.mrb[0].mxu0
        %v2315 = vadd.f32 %v1748, %v2314
        %v2316 = vpop.f32.mrb[0].mxu0
        %v2317 = vadd.f32 %v1752, %v2316
        %v2318 = vpop.f32.mrb[0].mxu0
        %v2319 = vadd.f32 %v1748, %v2318
        %v2320 = vpop.f32.mrb[0].mxu0
        %v2321 = vadd.f32 %v1752, %v2320
        %2322 = vmatprep.mubr.bf16.mxu0 %v1644
        %2323 = vmatmul.mubr.bf16.gmra.mrb[0].mxu0 %v1643
        %v2324 = vpop.f32.mrb[0].mxu0
        %v2325 = vadd.f32 %v1748, %v2324
        %v2326 = vpop.f32.mrb[0].mxu0
        %v2327 = vadd.f32 %v1752, %v2326
        %v2328 = vpop.f32.mrb[0].mxu0
        %v2329 = vadd.f32 %v1748, %v2328
        %v2330 = vpop.f32.mrb[0].mxu0
        %v2331 = vadd.f32 %v1752, %v2330
        %2332 = vmatprep.mubr.bf16.mxu0 %v1646
        %2333 = vmatmul.mubr.bf16.gmra.mrb[0].mxu0 %v1645
        %v2334 = vpop.f32.mrb[0].mxu0
        %v2335 = vadd.f32 %v1748, %v2334
        %v2336 = vpop.f32.mrb[0].mxu0
        %v2337 = vadd.f32 %v1752, %v2336
        %v2338 = vpop.f32.mrb[0].mxu0
        %v2339 = vadd.f32 %v1748, %v2338
        %v2340 = vpop.f32.mrb[0].mxu0
        %v2341 = vadd.f32 %v1752, %v2340
        %2342 = vmatprep.mubr.bf16.mxu0 %v1648
        %2343 = vmatmul.mubr.bf16.gmra.mrb[0].mxu0 %v1647
        %v2344 = vpop.f32.mrb[0].mxu0
        %v2345 = vadd.f32 %v1748, %v2344
        %v2346 = vpop.f32.mrb[0].mxu0
        %v2347 = vadd.f32 %v1752, %v2346
        %v2348 = vpop.f32.mrb[0].mxu0
        %v2349 = vadd.f32 %v1748, %v2348
        %v2350 = vpop.f32.mrb[0].mxu0
        %v2351 = vadd.f32 %v1752, %v2350
        %2352 = vmatprep.mubr.bf16.mxu0 %v1650
        %2353 = vmatmul.mubr.bf16.gmra.mrb[0].mxu0 %v1649
        %v2354 = vpop.f32.mrb[0].mxu0
        %v2355 = vadd.f32 %v1748, %v2354
        %v2356 = vpop.f32.mrb[0].mxu0
        %v2357 = vadd.f32 %v1752, %v2356
        %v2358 = vpop.f32.mrb[0].mxu0
        %v2359 = vadd.f32 %v1748, %v2358
        %v2360 = vpop.f32.mrb[0].mxu0
        %v2361 = vadd.f32 %v1752, %v2360
        %2362 = vmatprep.mubr.bf16.mxu0 %v1652
        %2363 = vmatmul.mubr.bf16.gmra.mrb[0].mxu0 %v1651
        %v2364 = vpop.f32.mrb[0].mxu0
        %v2365 = vadd.f32 %v1748, %v2364
        %v2366 = vpop.f32.mrb[0].mxu0
        %v2367 = vadd.f32 %v1752, %v2366
        %v2368 = vpop.f32.mrb[0].mxu0
        %v2369 = vadd.f32 %v1748, %v2368
        %v2370 = vpop.f32.mrb[0].mxu0
        %v2371 = vadd.f32 %v1752, %v2370
        %2372 = vmatprep.mubr.bf16.mxu0 %v1654
        %2373 = vmatmul.mubr.bf16.gmra.mrb[0].mxu0 %v1653
        %v2374 = vpop.f32.mrb[0].mxu0
        %v2375 = vadd.f32 %v1748, %v2374
        %v2376 = vpop.f32.mrb[0].mxu0
        %v2377 = vadd.f32 %v1752, %v2376
        %v2378 = vpop.f32.mrb[0].mxu0
        %v2379 = vadd.f32 %v1748, %v2378
        %v2380 = vpop.f32.mrb[0].mxu0
        %v2381 = vadd.f32 %v1752, %v2380
        %2382 = vmatprep.mubr.bf16.mxu0 %v1656
        %2383 = vmatmul.mubr.bf16.gmra.mrb[0].mxu0 %v1655
        %v2384 = vpop.f32.mrb[0].mxu0
        %v2385 = vadd.f32 %v1748, %v2384
        %v2386 = vpop.f32.mrb[0].mxu0
        %v2387 = vadd.f32 %v1752, %v2386
        %v2388 = vpop.f32.mrb[0].mxu0
        %v2389 = vadd.f32 %v1748, %v2388
        %v2390 = vpop.f32.mrb[0].mxu0
        %v2391 = vadd.f32 %v1752, %v2390
        %2392 = vmatprep.mubr.bf16.mxu0 %v1658
        %2393 = vmatmul.mubr.bf16.gmra.mrb[0].mxu0 %v1657
        %v2394 = vpop.f32.mrb[0].mxu0
        %v2395 = vadd.f32 %v1748, %v2394
        %v2396 = vpop.f32.mrb[0].mxu0
        %v2397 = vadd.f32 %v1752, %v2396
        %v2398 = vpop.f32.mrb[0].mxu0
        %v2399 = vadd.f32 %v1748, %v2398
        %v2400 = vpop.f32.mrb[0].mxu0
        %v2401 = vadd.f32 %v1752, %v2400
        %2402 = vmatprep.mubr.bf16.mxu0 %v1660
        %2403 = vmatmul.mubr.bf16.gmra.mrb[0].mxu0 %v1659
        %v2404 = vpop.f32.mrb[0].mxu0
        %v2405 = vadd.f32 %v1748, %v2404
        %v2406 = vpop.f32.mrb[0].mxu0
        %v2407 = vadd.f32 %v1752, %v2406
        %v2408 = vpop.f32.mrb[0].mxu0
        %v2409 = vadd.f32 %v1748, %v2408
        %v2410 = vpop.f32.mrb[0].mxu0
        %v2411 = vadd.f32 %v1752, %v2410
        %2412 = vmatprep.mubr.bf16.mxu0 %v1662
        %2413 = vmatmul.mubr.bf16.gmra.mrb[0].mxu0 %v1661
        %v2414 = vpop.f32.mrb[0].mxu0
        %v2415 = vadd.f32 %v1748, %v2414
        %v2416 = vpop.f32.mrb[0].mxu0
        %v2417 = vadd.f32 %v1752, %v2416
        %v2418 = vpop.f32.mrb[0].mxu0
        %v2419 = vadd.f32 %v1748, %v2418
        %v2420 = vpop.f32.mrb[0].mxu0
        %v2421 = vadd.f32 %v1752, %v2420
        %2422 = vmatprep.mubr.bf16.mxu0 %v1664
        %2423 = vmatmul.mubr.bf16.gmra.mrb[0].mxu0 %v1663
        %v2424 = vpop.f32.mrb[0].mxu0
        %v2425 = vadd.f32 %v1748, %v2424
        %v2426 = vpop.f32.mrb[0].mxu0
        %v2427 = vadd.f32 %v1752, %v2426
        %v2428 = vpop.f32.mrb[0].mxu0
        %v2429 = vadd.f32 %v1748, %v2428
        %v2430 = vpop.f32.mrb[0].mxu0
        %v2431 = vadd.f32 %v1752, %v2430
        %2432 = vmatprep.mubr.bf16.mxu0 %v1666
        %2433 = vmatmul.mubr.bf16.gmra.mrb[0].mxu0 %v1665
        %v2434 = vpop.f32.mrb[0].mxu0
        %v2435 = vadd.f32 %v1748, %v2434
        %v2436 = vpop.f32.mrb[0].mxu0
        %v2437 = vadd.f32 %v1752, %v2436
        %v2438 = vpop.f32.mrb[0].mxu0
        %v2439 = vadd.f32 %v1748, %v2438
        %v2440 = vpop.f32.mrb[0].mxu0
        %v2441 = vadd.f32 %v1752, %v2440
        %2442 = vmatprep.mubr.bf16.mxu0 %v1668
        %2443 = vmatmul.mubr.bf16.gmra.mrb[0].mxu0 %v1667
        %v2444 = vpop.f32.mrb[0].mxu0
        %v2445 = vadd.f32 %v1748, %v2444
        %v2446 = vpop.f32.mrb[0].mxu0
        %v2447 = vadd.f32 %v1752, %v2446
        %v2448 = vpop.f32.mrb[0].mxu0
        %v2449 = vadd.f32 %v1748, %v2448
        %v2450 = vpop.f32.mrb[0].mxu0
        %v2451 = vadd.f32 %v1752, %v2450
        %2452 = vmatprep.mubr.bf16.mxu0 %v1670
        %2453 = vmatmul.mubr.bf16.gmra.mrb[0].mxu0 %v1669
        %v2454 = vpop.f32.mrb[0].mxu0
        %v2455 = vadd.f32 %v1748, %v2454
        %v2456 = vpop.f32.mrb[0].mxu0
        %v2457 = vadd.f32 %v1752, %v2456
        %v2458 = vpop.f32.mrb[0].mxu0
        %v2459 = vadd.f32 %v1748, %v2458
        %v2460 = vpop.f32.mrb[0].mxu0
        %v2461 = vadd.f32 %v1752, %v2460
        %2462 = vdwg.mxu0
        %v2463 = vld [vmem:[#allocation8 + $0xb] sm:$0xf]
        %v2464 = vld [vmem:[#allocation8 + $0xf] sm:$0xf]
        %v2465 = vadd.f32 %v2112, %v2116
        %v2466 = vadd.f32 %v2465, %v2122
        %v2467 = vadd.f32 %v2466, %v2126
        %v2468 = vadd.f32 %v2467, %v2132
        %v2469 = vadd.f32 %v2468, %v2136
        %v2470 = vadd.f32 %v2469, %v2142
        %v2471 = vadd.f32 %v2470, %v2146
        %v2472 = vadd.f32 %v2471, %v2152
        %v2473 = vadd.f32 %v2472, %v2156
        %v2474 = vadd.f32 %v2473, %v2162
        %v2475 = vadd.f32 %v2474, %v2166
        %v2476 = vadd.f32 %v2475, %v2172
        %v2477 = vadd.f32 %v2476, %v2176
        %v2478 = vadd.f32 %v2477, %v2182
        %v2479 = vadd.f32 %v2478, %v2186
        %v2480 = vrot.slane %v2479, 4
        %v2481 = vadd.f32 %v2479, %v2480
        %v2482 = vrot.slane %v2481, 2
        %v2483 = vadd.f32 %v2481, %v2482
        %v2484 = vrot.slane %v2483, 1
        %v2485 = vadd.f32 %v2483, %v2484
        %v2486 = vadd.f32 %v2114, %v2118
        %v2487 = vadd.f32 %v2486, %v2124
        %v2488 = vadd.f32 %v2487, %v2128
        %v2489 = vadd.f32 %v2488, %v2134
        %v2490 = vadd.f32 %v2489, %v2138
        %v2491 = vadd.f32 %v2490, %v2144
        %v2492 = vadd.f32 %v2491, %v2148
        %v2493 = vadd.f32 %v2492, %v2154
        %v2494 = vadd.f32 %v2493, %v2158
        %v2495 = vadd.f32 %v2494, %v2164
        %v2496 = vadd.f32 %v2495, %v2168
        %v2497 = vadd.f32 %v2496, %v2174
        %v2498 = vadd.f32 %v2497, %v2178
        %v2499 = vadd.f32 %v2498, %v2184
        %v2500 = vadd.f32 %v2499, %v2188
        %v2501 = vrot.slane %v2500, 4
        %v2502 = vadd.f32 %v2500, %v2501
        %v2503 = vrot.slane %v2502, 2
        %v2504 = vadd.f32 %v2502, %v2503
        %v2505 = vrot.slane %v2504, 1
        %v2506 = vadd.f32 %v2504, %v2505
        %v2507 = vadd.f32 %v2305, %v2309
        %v2508 = vadd.f32 %v2507, %v2315
        %v2509 = vadd.f32 %v2508, %v2319
        %v2510 = vadd.f32 %v2509, %v2325
        %v2511 = vadd.f32 %v2510, %v2329
        %v2512 = vadd.f32 %v2511, %v2335
        %v2513 = vadd.f32 %v2512, %v2339
        %v2514 = vadd.f32 %v2513, %v2345
        %v2515 = vadd.f32 %v2514, %v2349
        %v2516 = vadd.f32 %v2515, %v2355
        %v2517 = vadd.f32 %v2516, %v2359
        %v2518 = vadd.f32 %v2517, %v2365
        %v2519 = vadd.f32 %v2518, %v2369
        %v2520 = vadd.f32 %v2519, %v2375
        %v2521 = vadd.f32 %v2520, %v2379
        %v2522 = vrot.slane %v2521, 4
        %v2523 = vadd.f32 %v2521, %v2522
        %v2524 = vrot.slane %v2523, 2
        %v2525 = vadd.f32 %v2523, %v2524
        %v2526 = vrot.slane %v2525, 1
        %v2527 = vadd.f32 %v2525, %v2526
        %v2528 = vadd.f32 %v2307, %v2311
        %v2529 = vadd.f32 %v2528, %v2317
        %v2530 = vadd.f32 %v2529, %v2321
        %v2531 = vadd.f32 %v2530, %v2327
        %v2532 = vadd.f32 %v2531, %v2331
        %v2533 = vadd.f32 %v2532, %v2337
        %v2534 = vadd.f32 %v2533, %v2341
        %v2535 = vadd.f32 %v2534, %v2347
        %v2536 = vadd.f32 %v2535, %v2351
        %v2537 = vadd.f32 %v2536, %v2357
        %v2538 = vadd.f32 %v2537, %v2361
        %v2539 = vadd.f32 %v2538, %v2367
        %v2540 = vadd.f32 %v2539, %v2371
        %v2541 = vadd.f32 %v2540, %v2377
        %v2542 = vadd.f32 %v2541, %v2381
        %v2543 = vrot.slane %v2542, 4
        %v2544 = vadd.f32 %v2542, %v2543
        %v2545 = vrot.slane %v2544, 2
        %v2546 = vadd.f32 %v2544, %v2545
        %v2547 = vrot.slane %v2546, 1
        %v2548 = vadd.f32 %v2546, %v2547
        %v2549 = vadd.f32 %v2192, %v2196
        %v2550 = vadd.f32 %v2549, %v2202
        %v2551 = vadd.f32 %v2550, %v2206
        %v2552 = vadd.f32 %v2551, %v2212
        %v2553 = vadd.f32 %v2552, %v2216
        %v2554 = vadd.f32 %v2553, %v2222
        %v2555 = vadd.f32 %v2554, %v2226
        %v2556 = vadd.f32 %v2555, %v2232
        %v2557 = vadd.f32 %v2556, %v2236
        %v2558 = vadd.f32 %v2557, %v2242
        %v2559 = vadd.f32 %v2558, %v2246
        %v2560 = vadd.f32 %v2559, %v2252
        %v2561 = vadd.f32 %v2560, %v2256
        %v2562 = vadd.f32 %v2561, %v2262
        %v2563 = vadd.f32 %v2562, %v2266
        %v2564 = vrot.slane %v2563, 4
        %v2565 = vadd.f32 %v2563, %v2564
        %v2566 = vrot.slane %v2565, 2
        %v2567 = vadd.f32 %v2565, %v2566
        %v2568 = vrot.slane %v2567, 1
        %v2569 = vadd.f32 %v2567, %v2568
        %v2570 = vadd.f32 %v2194, %v2198
        %v2571 = vadd.f32 %v2570, %v2204
        %v2572 = vadd.f32 %v2571, %v2208
        %v2573 = vadd.f32 %v2572, %v2214
        %v2574 = vadd.f32 %v2573, %v2218
        %v2575 = vadd.f32 %v2574, %v2224
        %v2576 = vadd.f32 %v2575, %v2228
        %v2577 = vadd.f32 %v2576, %v2234
        %v2578 = vadd.f32 %v2577, %v2238
        %v2579 = vadd.f32 %v2578, %v2244
        %v2580 = vadd.f32 %v2579, %v2248
        %v2581 = vadd.f32 %v2580, %v2254
        %v2582 = vadd.f32 %v2581, %v2258
        %v2583 = vadd.f32 %v2582, %v2264
        %v2584 = vadd.f32 %v2583, %v2268
        %v2585 = vrot.slane %v2584, 4
        %v2586 = vadd.f32 %v2584, %v2585
        %v2587 = vrot.slane %v2586, 2
        %v2588 = vadd.f32 %v2586, %v2587
        %v2589 = vrot.slane %v2588, 1
        %v2590 = vadd.f32 %v2588, %v2589
        %v2591 = vadd.f32 %v2385, %v2389
        %v2592 = vadd.f32 %v2591, %v2395
        %v2593 = vadd.f32 %v2592, %v2399
        %v2594 = vadd.f32 %v2593, %v2405
        %v2595 = vadd.f32 %v2594, %v2409
        %v2596 = vadd.f32 %v2595, %v2415
        %v2597 = vadd.f32 %v2596, %v2419
        %v2598 = vadd.f32 %v2597, %v2425
        %v2599 = vadd.f32 %v2598, %v2429
        %v2600 = vadd.f32 %v2599, %v2435
        %v2601 = vadd.f32 %v2600, %v2439
        %v2602 = vadd.f32 %v2601, %v2445
        %v2603 = vadd.f32 %v2602, %v2449
        %v2604 = vadd.f32 %v2603, %v2455
        %v2605 = vadd.f32 %v2604, %v2459
        %v2606 = vrot.slane %v2605, 4
        %v2607 = vadd.f32 %v2605, %v2606
        %v2608 = vrot.slane %v2607, 2
        %v2609 = vadd.f32 %v2607, %v2608
        %v2610 = vrot.slane %v2609, 1
        %v2611 = vadd.f32 %v2609, %v2610
        %v2612 = vadd.f32 %v2387, %v2391
        %v2613 = vadd.f32 %v2612, %v2397
        %v2614 = vadd.f32 %v2613, %v2401
        %v2615 = vadd.f32 %v2614, %v2407
        %v2616 = vadd.f32 %v2615, %v2411
        %v2617 = vadd.f32 %v2616, %v2417
        %v2618 = vadd.f32 %v2617, %v2421
        %v2619 = vadd.f32 %v2618, %v2427
        %v2620 = vadd.f32 %v2619, %v2431
        %v2621 = vadd.f32 %v2620, %v2437
        %v2622 = vadd.f32 %v2621, %v2441
        %v2623 = vadd.f32 %v2622, %v2447
        %v2624 = vadd.f32 %v2623, %v2451
        %v2625 = vadd.f32 %v2624, %v2457
        %v2626 = vadd.f32 %v2625, %v2461
        %v2627 = vrot.slane %v2626, 4
        %v2628 = vadd.f32 %v2626, %v2627
        %v2629 = vrot.slane %v2628, 2
        %v2630 = vadd.f32 %v2628, %v2629
        %v2631 = vrot.slane %v2630, 1
        %v2632 = vadd.f32 %v2630, %v2631
        %v2633 = vmul.f32 %v2485, %v1086
        %v2634 = vmul.f32 %v2506, %v1086
        %v2635 = vmul.f32 %v2527, %v1086
        %v2636 = vmul.f32 %v2548, %v1086
        %v2637 = vmul.f32 %v2569, %v1086
        %v2638 = vmul.f32 %v2590, %v1086
        %v2639 = vmul.f32 %v2611, %v1086
        %v2640 = vmul.f32 %v2632, %v1086
        %v2641 = vmul.f32 %v2112, %v2112
        %v2642 = vmul.f32 %v2114, %v2114
        %v2643 = vmul.f32 %v2305, %v2305
        %v2644 = vmul.f32 %v2307, %v2307
        %v2645 = vmul.f32 %v2116, %v2116
        %v2646 = vmul.f32 %v2118, %v2118
        %v2647 = vmul.f32 %v2309, %v2309
        %v2648 = vmul.f32 %v2311, %v2311
        %v2649 = vmul.f32 %v2122, %v2122
        %v2650 = vmul.f32 %v2124, %v2124
        %v2651 = vmul.f32 %v2315, %v2315
        %v2652 = vmul.f32 %v2317, %v2317
        %v2653 = vmul.f32 %v2126, %v2126
        %v2654 = vmul.f32 %v2128, %v2128
        %v2655 = vmul.f32 %v2319, %v2319
        %v2656 = vmul.f32 %v2321, %v2321
        %v2657 = vmul.f32 %v2132, %v2132
        %v2658 = vmul.f32 %v2134, %v2134
        %v2659 = vmul.f32 %v2325, %v2325
        %v2660 = vmul.f32 %v2327, %v2327
        %v2661 = vmul.f32 %v2136, %v2136
        %v2662 = vmul.f32 %v2138, %v2138
        %v2663 = vmul.f32 %v2329, %v2329
        %v2664 = vmul.f32 %v2331, %v2331
        %v2665 = vmul.f32 %v2142, %v2142
        %v2666 = vmul.f32 %v2144, %v2144
        %v2667 = vmul.f32 %v2335, %v2335
        %v2668 = vmul.f32 %v2337, %v2337
        %v2669 = vmul.f32 %v2146, %v2146
        %v2670 = vmul.f32 %v2148, %v2148
        %v2671 = vmul.f32 %v2339, %v2339
        %v2672 = vmul.f32 %v2341, %v2341
        %v2673 = vmul.f32 %v2152, %v2152
        %v2674 = vmul.f32 %v2154, %v2154
        %v2675 = vmul.f32 %v2345, %v2345
        %v2676 = vmul.f32 %v2347, %v2347
        %v2677 = vmul.f32 %v2156, %v2156
        %v2678 = vmul.f32 %v2158, %v2158
        %v2679 = vmul.f32 %v2349, %v2349
        %v2680 = vmul.f32 %v2351, %v2351
        %v2681 = vmul.f32 %v2162, %v2162
        %v2682 = vmul.f32 %v2164, %v2164
        %v2683 = vmul.f32 %v2355, %v2355
        %v2684 = vmul.f32 %v2357, %v2357
        %v2685 = vmul.f32 %v2166, %v2166
        %v2686 = vmul.f32 %v2168, %v2168
        %v2687 = vmul.f32 %v2359, %v2359
        %v2688 = vmul.f32 %v2361, %v2361
        %v2689 = vmul.f32 %v2172, %v2172
        %v2690 = vmul.f32 %v2174, %v2174
        %v2691 = vmul.f32 %v2365, %v2365
        %v2692 = vmul.f32 %v2367, %v2367
        %v2693 = vmul.f32 %v2176, %v2176
        %v2694 = vmul.f32 %v2178, %v2178
        %v2695 = vmul.f32 %v2369, %v2369
        %v2696 = vmul.f32 %v2371, %v2371
        %v2697 = vmul.f32 %v2182, %v2182
        %v2698 = vmul.f32 %v2184, %v2184
        %v2699 = vmul.f32 %v2375, %v2375
        %v2700 = vmul.f32 %v2377, %v2377
        %v2701 = vmul.f32 %v2186, %v2186
        %v2702 = vmul.f32 %v2188, %v2188
        %v2703 = vmul.f32 %v2379, %v2379
        %v2704 = vmul.f32 %v2381, %v2381
        %v2705 = vmul.f32 %v2192, %v2192
        %v2706 = vmul.f32 %v2194, %v2194
        %v2707 = vmul.f32 %v2385, %v2385
        %v2708 = vmul.f32 %v2387, %v2387
        %v2709 = vmul.f32 %v2196, %v2196
        %v2710 = vmul.f32 %v2198, %v2198
        %v2711 = vmul.f32 %v2389, %v2389
        %v2712 = vmul.f32 %v2391, %v2391
        %v2713 = vmul.f32 %v2202, %v2202
        %v2714 = vmul.f32 %v2204, %v2204
        %v2715 = vmul.f32 %v2395, %v2395
        %v2716 = vmul.f32 %v2397, %v2397
        %v2717 = vmul.f32 %v2206, %v2206
        %v2718 = vmul.f32 %v2208, %v2208
        %v2719 = vmul.f32 %v2399, %v2399
        %v2720 = vmul.f32 %v2401, %v2401
        %v2721 = vmul.f32 %v2212, %v2212
        %v2722 = vmul.f32 %v2214, %v2214
        %v2723 = vmul.f32 %v2405, %v2405
        %v2724 = vmul.f32 %v2407, %v2407
        %v2725 = vmul.f32 %v2216, %v2216
        %v2726 = vmul.f32 %v2218, %v2218
        %v2727 = vmul.f32 %v2409, %v2409
        %v2728 = vmul.f32 %v2411, %v2411
        %v2729 = vmul.f32 %v2222, %v2222
        %v2730 = vmul.f32 %v2224, %v2224
        %v2731 = vmul.f32 %v2415, %v2415
        %v2732 = vmul.f32 %v2417, %v2417
        %v2733 = vmul.f32 %v2226, %v2226
        %v2734 = vmul.f32 %v2228, %v2228
        %v2735 = vmul.f32 %v2419, %v2419
        %v2736 = vmul.f32 %v2421, %v2421
        %v2737 = vmul.f32 %v2232, %v2232
        %v2738 = vmul.f32 %v2234, %v2234
        %v2739 = vmul.f32 %v2425, %v2425
        %v2740 = vmul.f32 %v2427, %v2427
        %v2741 = vmul.f32 %v2236, %v2236
        %v2742 = vmul.f32 %v2238, %v2238
        %v2743 = vmul.f32 %v2429, %v2429
        %v2744 = vmul.f32 %v2431, %v2431
        %v2745 = vmul.f32 %v2242, %v2242
        %v2746 = vmul.f32 %v2244, %v2244
        %v2747 = vmul.f32 %v2435, %v2435
        %v2748 = vmul.f32 %v2437, %v2437
        %v2749 = vmul.f32 %v2246, %v2246
        %v2750 = vmul.f32 %v2248, %v2248
        %v2751 = vmul.f32 %v2439, %v2439
        %v2752 = vmul.f32 %v2441, %v2441
        %v2753 = vmul.f32 %v2252, %v2252
        %v2754 = vmul.f32 %v2254, %v2254
        %v2755 = vmul.f32 %v2445, %v2445
        %v2756 = vmul.f32 %v2447, %v2447
        %v2757 = vmul.f32 %v2256, %v2256
        %v2758 = vmul.f32 %v2258, %v2258
        %v2759 = vmul.f32 %v2449, %v2449
        %v2760 = vmul.f32 %v2451, %v2451
        %v2761 = vmul.f32 %v2262, %v2262
        %v2762 = vmul.f32 %v2264, %v2264
        %v2763 = vmul.f32 %v2455, %v2455
        %v2764 = vmul.f32 %v2457, %v2457
        %v2765 = vmul.f32 %v2266, %v2266
        %v2766 = vmul.f32 %v2268, %v2268
        %v2767 = vmul.f32 %v2459, %v2459
        %v2768 = vmul.f32 %v2461, %v2461
        %v2769 = vadd.f32 %v2641, %v2645
        %v2770 = vadd.f32 %v2769, %v2649
        %v2771 = vadd.f32 %v2770, %v2653
        %v2772 = vadd.f32 %v2771, %v2657
        %v2773 = vadd.f32 %v2772, %v2661
        %v2774 = vadd.f32 %v2773, %v2665
        %v2775 = vadd.f32 %v2774, %v2669
        %v2776 = vadd.f32 %v2775, %v2673
        %v2777 = vadd.f32 %v2776, %v2677
        %v2778 = vadd.f32 %v2777, %v2681
        %v2779 = vadd.f32 %v2778, %v2685
        %v2780 = vadd.f32 %v2779, %v2689
        %v2781 = vadd.f32 %v2780, %v2693
        %v2782 = vadd.f32 %v2781, %v2697
        %v2783 = vadd.f32 %v2782, %v2701
        %v2784 = vrot.slane %v2783, 4
        %v2785 = vadd.f32 %v2783, %v2784
        %v2786 = vrot.slane %v2785, 2
        %v2787 = vadd.f32 %v2785, %v2786
        %v2788 = vrot.slane %v2787, 1
        %v2789 = vadd.f32 %v2787, %v2788
        %v2790 = vadd.f32 %v2642, %v2646
        %v2791 = vadd.f32 %v2790, %v2650
        %v2792 = vadd.f32 %v2791, %v2654
        %v2793 = vadd.f32 %v2792, %v2658
        %v2794 = vadd.f32 %v2793, %v2662
        %v2795 = vadd.f32 %v2794, %v2666
        %v2796 = vadd.f32 %v2795, %v2670
        %v2797 = vadd.f32 %v2796, %v2674
        %v2798 = vadd.f32 %v2797, %v2678
        %v2799 = vadd.f32 %v2798, %v2682
        %v2800 = vadd.f32 %v2799, %v2686
        %v2801 = vadd.f32 %v2800, %v2690
        %v2802 = vadd.f32 %v2801, %v2694
        %v2803 = vadd.f32 %v2802, %v2698
        %v2804 = vadd.f32 %v2803, %v2702
        %v2805 = vrot.slane %v2804, 4
        %v2806 = vadd.f32 %v2804, %v2805
        %v2807 = vrot.slane %v2806, 2
        %v2808 = vadd.f32 %v2806, %v2807
        %v2809 = vrot.slane %v2808, 1
        %v2810 = vadd.f32 %v2808, %v2809
        %v2811 = vadd.f32 %v2643, %v2647
        %v2812 = vadd.f32 %v2811, %v2651
        %v2813 = vadd.f32 %v2812, %v2655
        %v2814 = vadd.f32 %v2813, %v2659
        %v2815 = vadd.f32 %v2814, %v2663
        %v2816 = vadd.f32 %v2815, %v2667
        %v2817 = vadd.f32 %v2816, %v2671
        %v2818 = vadd.f32 %v2817, %v2675
        %v2819 = vadd.f32 %v2818, %v2679
        %v2820 = vadd.f32 %v2819, %v2683
        %v2821 = vadd.f32 %v2820, %v2687
        %v2822 = vadd.f32 %v2821, %v2691
        %v2823 = vadd.f32 %v2822, %v2695
        %v2824 = vadd.f32 %v2823, %v2699
        %v2825 = vadd.f32 %v2824, %v2703
        %v2826 = vrot.slane %v2825, 4
        %v2827 = vadd.f32 %v2825, %v2826
        %v2828 = vrot.slane %v2827, 2
        %v2829 = vadd.f32 %v2827, %v2828
        %v2830 = vrot.slane %v2829, 1
        %v2831 = vadd.f32 %v2829, %v2830
        %v2832 = vadd.f32 %v2644, %v2648
        %v2833 = vadd.f32 %v2832, %v2652
        %v2834 = vadd.f32 %v2833, %v2656
        %v2835 = vadd.f32 %v2834, %v2660
        %v2836 = vadd.f32 %v2835, %v2664
        %v2837 = vadd.f32 %v2836, %v2668
        %v2838 = vadd.f32 %v2837, %v2672
        %v2839 = vadd.f32 %v2838, %v2676
        %v2840 = vadd.f32 %v2839, %v2680
        %v2841 = vadd.f32 %v2840, %v2684
        %v2842 = vadd.f32 %v2841, %v2688
        %v2843 = vadd.f32 %v2842, %v2692
        %v2844 = vadd.f32 %v2843, %v2696
        %v2845 = vadd.f32 %v2844, %v2700
        %v2846 = vadd.f32 %v2845, %v2704
        %v2847 = vrot.slane %v2846, 4
        %v2848 = vadd.f32 %v2846, %v2847
        %v2849 = vrot.slane %v2848, 2
        %v2850 = vadd.f32 %v2848, %v2849
        %v2851 = vrot.slane %v2850, 1
        %v2852 = vadd.f32 %v2850, %v2851
        %v2853 = vadd.f32 %v2705, %v2709
        %v2854 = vadd.f32 %v2853, %v2713
        %v2855 = vadd.f32 %v2854, %v2717
        %v2856 = vadd.f32 %v2855, %v2721
        %v2857 = vadd.f32 %v2856, %v2725
        %v2858 = vadd.f32 %v2857, %v2729
        %v2859 = vadd.f32 %v2858, %v2733
        %v2860 = vadd.f32 %v2859, %v2737
        %v2861 = vadd.f32 %v2860, %v2741
        %v2862 = vadd.f32 %v2861, %v2745
        %v2863 = vadd.f32 %v2862, %v2749
        %v2864 = vadd.f32 %v2863, %v2753
        %v2865 = vadd.f32 %v2864, %v2757
        %v2866 = vadd.f32 %v2865, %v2761
        %v2867 = vadd.f32 %v2866, %v2765
        %v2868 = vrot.slane %v2867, 4
        %v2869 = vadd.f32 %v2867, %v2868
        %v2870 = vrot.slane %v2869, 2
        %v2871 = vadd.f32 %v2869, %v2870
        %v2872 = vrot.slane %v2871, 1
        %v2873 = vadd.f32 %v2871, %v2872
        %v2874 = vadd.f32 %v2706, %v2710
        %v2875 = vadd.f32 %v2874, %v2714
        %v2876 = vadd.f32 %v2875, %v2718
        %v2877 = vadd.f32 %v2876, %v2722
        %v2878 = vadd.f32 %v2877, %v2726
        %v2879 = vadd.f32 %v2878, %v2730
        %v2880 = vadd.f32 %v2879, %v2734
        %v2881 = vadd.f32 %v2880, %v2738
        %v2882 = vadd.f32 %v2881, %v2742
        %v2883 = vadd.f32 %v2882, %v2746
        %v2884 = vadd.f32 %v2883, %v2750
        %v2885 = vadd.f32 %v2884, %v2754
        %v2886 = vadd.f32 %v2885, %v2758
        %v2887 = vadd.f32 %v2886, %v2762
        %v2888 = vadd.f32 %v2887, %v2766
        %v2889 = vrot.slane %v2888, 4
        %v2890 = vadd.f32 %v2888, %v2889
        %v2891 = vrot.slane %v2890, 2
        %v2892 = vadd.f32 %v2890, %v2891
        %v2893 = vrot.slane %v2892, 1
        %v2894 = vadd.f32 %v2892, %v2893
        %v2895 = vadd.f32 %v2707, %v2711
        %v2896 = vadd.f32 %v2895, %v2715
        %v2897 = vadd.f32 %v2896, %v2719
        %v2898 = vadd.f32 %v2897, %v2723
        %v2899 = vadd.f32 %v2898, %v2727
        %v2900 = vadd.f32 %v2899, %v2731
        %v2901 = vadd.f32 %v2900, %v2735
        %v2902 = vadd.f32 %v2901, %v2739
        %v2903 = vadd.f32 %v2902, %v2743
        %v2904 = vadd.f32 %v2903, %v2747
        %v2905 = vadd.f32 %v2904, %v2751
        %v2906 = vadd.f32 %v2905, %v2755
        %v2907 = vadd.f32 %v2906, %v2759
        %v2908 = vadd.f32 %v2907, %v2763
        %v2909 = vadd.f32 %v2908, %v2767
        %v2910 = vrot.slane %v2909, 4
        %v2911 = vadd.f32 %v2909, %v2910
        %v2912 = vrot.slane %v2911, 2
        %v2913 = vadd.f32 %v2911, %v2912
        %v2914 = vrot.slane %v2913, 1
        %v2915 = vadd.f32 %v2913, %v2914
        %v2916 = vadd.f32 %v2708, %v2712
        %v2917 = vadd.f32 %v2916, %v2716
        %v2918 = vadd.f32 %v2917, %v2720
        %v2919 = vadd.f32 %v2918, %v2724
        %v2920 = vadd.f32 %v2919, %v2728
        %v2921 = vadd.f32 %v2920, %v2732
        %v2922 = vadd.f32 %v2921, %v2736
        %v2923 = vadd.f32 %v2922, %v2740
        %v2924 = vadd.f32 %v2923, %v2744
        %v2925 = vadd.f32 %v2924, %v2748
        %v2926 = vadd.f32 %v2925, %v2752
        %v2927 = vadd.f32 %v2926, %v2756
        %v2928 = vadd.f32 %v2927, %v2760
        %v2929 = vadd.f32 %v2928, %v2764
        %v2930 = vadd.f32 %v2929, %v2768
        %v2931 = vrot.slane %v2930, 4
        %v2932 = vadd.f32 %v2930, %v2931
        %v2933 = vrot.slane %v2932, 2
        %v2934 = vadd.f32 %v2932, %v2933
        %v2935 = vrot.slane %v2934, 1
        %v2936 = vadd.f32 %v2934, %v2935
        %v2937 = vmul.f32 %v2789, %v1086
        %v2938 = vmul.f32 %v2810, %v1086
        %v2939 = vmul.f32 %v2831, %v1086
        %v2940 = vmul.f32 %v2852, %v1086
        %v2941 = vmul.f32 %v2873, %v1086
        %v2942 = vmul.f32 %v2894, %v1086
        %v2943 = vmul.f32 %v2915, %v1086
        %v2944 = vmul.f32 %v2936, %v1086
        %v2945 = vmul.f32 %v2633, %v2633
        %v2946 = vmul.f32 %v2634, %v2634
        %v2947 = vmul.f32 %v2635, %v2635
        %v2948 = vmul.f32 %v2636, %v2636
        %v2949 = vmul.f32 %v2637, %v2637
        %v2950 = vmul.f32 %v2638, %v2638
        %v2951 = vmul.f32 %v2639, %v2639
        %v2952 = vmul.f32 %v2640, %v2640
        %v2953 = vsub.f32 %v2937, %v2945
        %v2954 = vsub.f32 %v2938, %v2946
        %v2955 = vsub.f32 %v2939, %v2947
        %v2956 = vsub.f32 %v2940, %v2948
        %v2957 = vsub.f32 %v2941, %v2949
        %v2958 = vsub.f32 %v2942, %v2950
        %v2959 = vsub.f32 %v2943, %v2951
        %v2960 = vsub.f32 %v2944, %v2952
        %v2961 = vadd.f32 %v2953, 0.8
        %v2962 = vadd.f32 %v2954, 0.8
        %v2963 = vadd.f32 %v2955, 0.8
        %v2964 = vadd.f32 %v2956, 0.8
        %v2965 = vadd.f32 %v2957, 0.8
        %v2966 = vadd.f32 %v2958, 0.8
        %v2967 = vadd.f32 %v2959, 0.8
        %v2968 = vadd.f32 %v2960, 0.8
        %v2969 = vrsqrt.pop %v2961
        %v2970 = vrsqrt.pop %v2962
        %v2971 = vrsqrt.pop %v2963
        %v2972 = vrsqrt.pop %v2964
        %v2973 = vrsqrt.pop %v2965
        %v2974 = vrsqrt.pop %v2966
        %v2975 = vrsqrt.pop %v2967
        %v2976 = vrsqrt.pop %v2968
        %v2985 = vcombine.low %v2969, %v2970
        %v2986 = vcombine.low %v2971, %v2972
        %v2988 = vunpack.c.l.s4 1966171168
        %v2989 = vunpack.c.0.s8 %v2988
        %v2990 = vlaneseq
        %v2991 = vshrl.u32 %v2990, 7
        %v2992 = vsub.s32 %v2989, %v2991
        %v2993 = vrot.slane %v2985, %v2992
        %v2995 = vunpack.c.l.s4 1966171168
        %v2996 = vunpack.c.0.s8 %v2995
        %v2997 = vlaneseq
        %v2998 = vshrl.u32 %v2997, 7
        %v2999 = vsub.s32 %v2996, %v2998
        %v3000 = vrot.slane %v2986, %v2999
        %v3001 = vcombine.low %v2993, %v3000
        %v3003 = vunpack.c.l.s4 1966171168
        %v3004 = vunpack.c.0.s8 %v3003
        %v3005 = vlaneseq
        %v3006 = vshrl.u32 %v3005, 7
        %v3007 = vsub.s32 %v3004, %v3006
        %v3008 = vrot.slane %v3001, %v3007
        %v3009 = vcombine.low %v2973, %v2974
        %v3010 = vcombine.low %v2975, %v2976
        %v3012 = vunpack.c.l.s4 1966171168
        %v3013 = vunpack.c.0.s8 %v3012
        %v3014 = vlaneseq
        %v3015 = vshrl.u32 %v3014, 7
        %v3016 = vsub.s32 %v3013, %v3015
        %v3017 = vrot.slane %v3009, %v3016
        %v3019 = vunpack.c.l.s4 1966171168
        %v3020 = vunpack.c.0.s8 %v3019
        %v3021 = vlaneseq
        %v3022 = vshrl.u32 %v3021, 7
        %v3023 = vsub.s32 %v3020, %v3022
        %v3024 = vrot.slane %v3010, %v3023
        %v3025 = vcombine.low %v3017, %v3024
        %v3027 = vunpack.c.l.s4 1966171168
        %v3028 = vunpack.c.0.s8 %v3027
        %v3029 = vlaneseq
        %v3030 = vshrl.u32 %v3029, 7
        %v3031 = vsub.s32 %v3028, %v3030
        %v3032 = vrot.slane %v3025, %v3031
        %v3035 = vmul.f32 %v2463, %v3008
        %v3036 = vmul.f32 %v2463, %v3032
        %v3039 = vlaneseq
        %v3040 = vshrl.u32 %v3039, 7
        %v3041 = vsub.s32 0, %v3040
        %v3042 = vrot.slane %v3035, %v3041
        %v3043 = vlaneseq
        %v3044 = vshrl.u32 %v3043, 7
        %v3045 = vsub.s32 1, %v3044
        %v3046 = vrot.slane %v3035, %v3045
        %v3047 = vlaneseq
        %v3048 = vshrl.u32 %v3047, 7
        %v3049 = vsub.s32 2, %v3048
        %v3050 = vrot.slane %v3035, %v3049
        %v3051 = vlaneseq
        %v3052 = vshrl.u32 %v3051, 7
        %v3053 = vsub.s32 3, %v3052
        %v3054 = vrot.slane %v3035, %v3053
        %v3055 = vlaneseq
        %v3056 = vshrl.u32 %v3055, 7
        %v3057 = vsub.s32 0, %v3056
        %v3058 = vrot.slane %v3036, %v3057
        %v3059 = vlaneseq
        %v3060 = vshrl.u32 %v3059, 7
        %v3061 = vsub.s32 1, %v3060
        %v3062 = vrot.slane %v3036, %v3061
        %v3063 = vlaneseq
        %v3064 = vshrl.u32 %v3063, 7
        %v3065 = vsub.s32 2, %v3064
        %v3066 = vrot.slane %v3036, %v3065
        %v3067 = vlaneseq
        %v3068 = vshrl.u32 %v3067, 7
        %v3069 = vsub.s32 3, %v3068
        %v3070 = vrot.slane %v3036, %v3069
        %v3079 = vmul.f32 %v2633, %v3042
        %v3080 = vmul.f32 %v2634, %v3046
        %v3081 = vmul.f32 %v2635, %v3050
        %v3082 = vmul.f32 %v2636, %v3054
        %v3083 = vmul.f32 %v2637, %v3058
        %v3084 = vmul.f32 %v2638, %v3062
        %v3085 = vmul.f32 %v2639, %v3066
        %v3086 = vmul.f32 %v2640, %v3070
        %v3095 = vcombine.low %v3079, %v3080
        %v3096 = vcombine.low %v3081, %v3082
        %v3098 = vunpack.c.l.s4 1966171168
        %v3099 = vunpack.c.0.s8 %v3098
        %v3100 = vlaneseq
        %v3101 = vshrl.u32 %v3100, 7
        %v3102 = vsub.s32 %v3099, %v3101
        %v3103 = vrot.slane %v3095, %v3102
        %v3105 = vunpack.c.l.s4 1966171168
        %v3106 = vunpack.c.0.s8 %v3105
        %v3107 = vlaneseq
        %v3108 = vshrl.u32 %v3107, 7
        %v3109 = vsub.s32 %v3106, %v3108
        %v3110 = vrot.slane %v3096, %v3109
        %v3111 = vcombine.low %v3103, %v3110
        %v3113 = vunpack.c.l.s4 1966171168
        %v3114 = vunpack.c.0.s8 %v3113
        %v3115 = vlaneseq
        %v3116 = vshrl.u32 %v3115, 7
        %v3117 = vsub.s32 %v3114, %v3116
        %v3118 = vrot.slane %v3111, %v3117
        %v3119 = vcombine.low %v3083, %v3084
        %v3120 = vcombine.low %v3085, %v3086
        %v3122 = vunpack.c.l.s4 1966171168
        %v3123 = vunpack.c.0.s8 %v3122
        %v3124 = vlaneseq
        %v3125 = vshrl.u32 %v3124, 7
        %v3126 = vsub.s32 %v3123, %v3125
        %v3127 = vrot.slane %v3119, %v3126
        %v3129 = vunpack.c.l.s4 1966171168
        %v3130 = vunpack.c.0.s8 %v3129
        %v3131 = vlaneseq
        %v3132 = vshrl.u32 %v3131, 7
        %v3133 = vsub.s32 %v3130, %v3132
        %v3134 = vrot.slane %v3120, %v3133
        %v3135 = vcombine.low %v3127, %v3134
        %v3137 = vunpack.c.l.s4 1966171168
        %v3138 = vunpack.c.0.s8 %v3137
        %v3139 = vlaneseq
        %v3140 = vshrl.u32 %v3139, 7
        %v3141 = vsub.s32 %v3138, %v3140
        %v3142 = vrot.slane %v3135, %v3141
        %v3145 = vsub.f32 %v2464, %v3118
        %v3146 = vsub.f32 %v2464, %v3142
        %v3147 = vmul.f32 %v2112, %v3042
        %v3148 = vmul.f32 %v2114, %v3046
        %v3149 = vmul.f32 %v2305, %v3050
        %v3150 = vmul.f32 %v2307, %v3054
        %v3151 = vmul.f32 %v2116, %v3042
        %v3152 = vmul.f32 %v2118, %v3046
        %v3153 = vmul.f32 %v2309, %v3050
        %v3154 = vmul.f32 %v2311, %v3054
        %v3155 = vmul.f32 %v2122, %v3042
        %v3156 = vmul.f32 %v2124, %v3046
        %v3157 = vmul.f32 %v2315, %v3050
        %v3158 = vmul.f32 %v2317, %v3054
        %v3159 = vmul.f32 %v2126, %v3042
        %v3160 = vmul.f32 %v2128, %v3046
        %v3161 = vmul.f32 %v2319, %v3050
        %v3162 = vmul.f32 %v2321, %v3054
        %v3163 = vmul.f32 %v2132, %v3042
        %v3164 = vmul.f32 %v2134, %v3046
        %v3165 = vmul.f32 %v2325, %v3050
        %v3166 = vmul.f32 %v2327, %v3054
        %v3167 = vmul.f32 %v2136, %v3042
        %v3168 = vmul.f32 %v2138, %v3046
        %v3169 = vmul.f32 %v2329, %v3050
        %v3170 = vmul.f32 %v2331, %v3054
        %v3171 = vmul.f32 %v2142, %v3042
        %v3172 = vmul.f32 %v2144, %v3046
        %v3173 = vmul.f32 %v2335, %v3050
        %v3174 = vmul.f32 %v2337, %v3054
        %v3175 = vmul.f32 %v2146, %v3042
        %v3176 = vmul.f32 %v2148, %v3046
        %v3177 = vmul.f32 %v2339, %v3050
        %v3178 = vmul.f32 %v2341, %v3054
        %v3179 = vmul.f32 %v2152, %v3042
        %v3180 = vmul.f32 %v2154, %v3046
        %v3181 = vmul.f32 %v2345, %v3050
        %v3182 = vmul.f32 %v2347, %v3054
        %v3183 = vmul.f32 %v2156, %v3042
        %v3184 = vmul.f32 %v2158, %v3046
        %v3185 = vmul.f32 %v2349, %v3050
        %v3186 = vmul.f32 %v2351, %v3054
        %v3187 = vmul.f32 %v2162, %v3042
        %v3188 = vmul.f32 %v2164, %v3046
        %v3189 = vmul.f32 %v2355, %v3050
        %v3190 = vmul.f32 %v2357, %v3054
        %v3191 = vmul.f32 %v2166, %v3042
        %v3192 = vmul.f32 %v2168, %v3046
        %v3193 = vmul.f32 %v2359, %v3050
        %v3194 = vmul.f32 %v2361, %v3054
        %v3195 = vmul.f32 %v2172, %v3042
        %v3196 = vmul.f32 %v2174, %v3046
        %v3197 = vmul.f32 %v2365, %v3050
        %v3198 = vmul.f32 %v2367, %v3054
        %v3199 = vmul.f32 %v2176, %v3042
        %v3200 = vmul.f32 %v2178, %v3046
        %v3201 = vmul.f32 %v2369, %v3050
        %v3202 = vmul.f32 %v2371, %v3054
        %v3203 = vmul.f32 %v2182, %v3042
        %v3204 = vmul.f32 %v2184, %v3046
        %v3205 = vmul.f32 %v2375, %v3050
        %v3206 = vmul.f32 %v2377, %v3054
        %v3207 = vmul.f32 %v2186, %v3042
        %v3208 = vmul.f32 %v2188, %v3046
        %v3209 = vmul.f32 %v2379, %v3050
        %v3210 = vmul.f32 %v2381, %v3054
        %v3211 = vmul.f32 %v2192, %v3058
        %v3212 = vmul.f32 %v2194, %v3062
        %v3213 = vmul.f32 %v2385, %v3066
        %v3214 = vmul.f32 %v2387, %v3070
        %v3215 = vmul.f32 %v2196, %v3058
        %v3216 = vmul.f32 %v2198, %v3062
        %v3217 = vmul.f32 %v2389, %v3066
        %v3218 = vmul.f32 %v2391, %v3070
        %v3219 = vmul.f32 %v2202, %v3058
        %v3220 = vmul.f32 %v2204, %v3062
        %v3221 = vmul.f32 %v2395, %v3066
        %v3222 = vmul.f32 %v2397, %v3070
        %v3223 = vmul.f32 %v2206, %v3058
        %v3224 = vmul.f32 %v2208, %v3062
        %v3225 = vmul.f32 %v2399, %v3066
        %v3226 = vmul.f32 %v2401, %v3070
        %v3227 = vmul.f32 %v2212, %v3058
        %v3228 = vmul.f32 %v2214, %v3062
        %v3229 = vmul.f32 %v2405, %v3066
        %v3230 = vmul.f32 %v2407, %v3070
        %v3231 = vmul.f32 %v2216, %v3058
        %v3232 = vmul.f32 %v2218, %v3062
        %v3233 = vmul.f32 %v2409, %v3066
        %v3234 = vmul.f32 %v2411, %v3070
        %v3235 = vmul.f32 %v2222, %v3058
        %v3236 = vmul.f32 %v2224, %v3062
        %v3237 = vmul.f32 %v2415, %v3066
        %v3238 = vmul.f32 %v2417, %v3070
        %v3239 = vmul.f32 %v2226, %v3058
        %v3240 = vmul.f32 %v2228, %v3062
        %v3241 = vmul.f32 %v2419, %v3066
        %v3242 = vmul.f32 %v2421, %v3070
        %v3243 = vmul.f32 %v2232, %v3058
        %v3244 = vmul.f32 %v2234, %v3062
        %v3245 = vmul.f32 %v2425, %v3066
        %v3246 = vmul.f32 %v2427, %v3070
        %v3247 = vmul.f32 %v2236, %v3058
        %v3248 = vmul.f32 %v2238, %v3062
        %v3249 = vmul.f32 %v2429, %v3066
        %v3250 = vmul.f32 %v2431, %v3070
        %v3251 = vmul.f32 %v2242, %v3058
        %v3252 = vmul.f32 %v2244, %v3062
        %v3253 = vmul.f32 %v2435, %v3066
        %v3254 = vmul.f32 %v2437, %v3070
        %v3255 = vmul.f32 %v2246, %v3058
        %v3256 = vmul.f32 %v2248, %v3062
        %v3257 = vmul.f32 %v2439, %v3066
        %v3258 = vmul.f32 %v2441, %v3070
        %v3259 = vmul.f32 %v2252, %v3058
        %v3260 = vmul.f32 %v2254, %v3062
        %v3261 = vmul.f32 %v2445, %v3066
        %v3262 = vmul.f32 %v2447, %v3070
        %v3263 = vmul.f32 %v2256, %v3058
        %v3264 = vmul.f32 %v2258, %v3062
        %v3265 = vmul.f32 %v2449, %v3066
        %v3266 = vmul.f32 %v2451, %v3070
        %v3267 = vmul.f32 %v2262, %v3058
        %v3268 = vmul.f32 %v2264, %v3062
        %v3269 = vmul.f32 %v2455, %v3066
        %v3270 = vmul.f32 %v2457, %v3070
        %v3271 = vmul.f32 %v2266, %v3058
        %v3272 = vmul.f32 %v2268, %v3062
        %v3273 = vmul.f32 %v2459, %v3066
        %v3274 = vmul.f32 %v2461, %v3070
        %v3277 = vlaneseq
        %v3278 = vshrl.u32 %v3277, 7
        %v3279 = vsub.s32 0, %v3278
        %v3280 = vrot.slane %v3145, %v3279
        %v3281 = vlaneseq
        %v3282 = vshrl.u32 %v3281, 7
        %v3283 = vsub.s32 1, %v3282
        %v3284 = vrot.slane %v3145, %v3283
        %v3285 = vlaneseq
        %v3286 = vshrl.u32 %v3285, 7
        %v3287 = vsub.s32 2, %v3286
        %v3288 = vrot.slane %v3145, %v3287
        %v3289 = vlaneseq
        %v3290 = vshrl.u32 %v3289, 7
        %v3291 = vsub.s32 3, %v3290
        %v3292 = vrot.slane %v3145, %v3291
        %v3293 = vlaneseq
        %v3294 = vshrl.u32 %v3293, 7
        %v3295 = vsub.s32 0, %v3294
        %v3296 = vrot.slane %v3146, %v3295
        %v3297 = vlaneseq
        %v3298 = vshrl.u32 %v3297, 7
        %v3299 = vsub.s32 1, %v3298
        %v3300 = vrot.slane %v3146, %v3299
        %v3301 = vlaneseq
        %v3302 = vshrl.u32 %v3301, 7
        %v3303 = vsub.s32 2, %v3302
        %v3304 = vrot.slane %v3146, %v3303
        %v3305 = vlaneseq
        %v3306 = vshrl.u32 %v3305, 7
        %v3307 = vsub.s32 3, %v3306
        %v3308 = vrot.slane %v3146, %v3307
        %v3317 = vadd.f32 %v3147, %v3280
        %v3318 = vadd.f32 %v3148, %v3284
        %v3319 = vadd.f32 %v3149, %v3288
        %v3320 = vadd.f32 %v3150, %v3292
        %v3321 = vadd.f32 %v3151, %v3280
        %v3322 = vadd.f32 %v3152, %v3284
        %v3323 = vadd.f32 %v3153, %v3288
        %v3324 = vadd.f32 %v3154, %v3292
        %v3325 = vadd.f32 %v3155, %v3280
        %v3326 = vadd.f32 %v3156, %v3284
        %v3327 = vadd.f32 %v3157, %v3288
        %v3328 = vadd.f32 %v3158, %v3292
        %v3329 = vadd.f32 %v3159, %v3280
        %v3330 = vadd.f32 %v3160, %v3284
        %v3331 = vadd.f32 %v3161, %v3288
        %v3332 = vadd.f32 %v3162, %v3292
        %v3333 = vadd.f32 %v3163, %v3280
        %v3334 = vadd.f32 %v3164, %v3284
        %v3335 = vadd.f32 %v3165, %v3288
        %v3336 = vadd.f32 %v3166, %v3292
        %v3337 = vadd.f32 %v3167, %v3280
        %v3338 = vadd.f32 %v3168, %v3284
        %v3339 = vadd.f32 %v3169, %v3288
        %v3340 = vadd.f32 %v3170, %v3292
        %v3341 = vadd.f32 %v3171, %v3280
        %v3342 = vadd.f32 %v3172, %v3284
        %v3343 = vadd.f32 %v3173, %v3288
        %v3344 = vadd.f32 %v3174, %v3292
        %v3345 = vadd.f32 %v3175, %v3280
        %v3346 = vadd.f32 %v3176, %v3284
        %v3347 = vadd.f32 %v3177, %v3288
        %v3348 = vadd.f32 %v3178, %v3292
        %v3349 = vadd.f32 %v3179, %v3280
        %v3350 = vadd.f32 %v3180, %v3284
        %v3351 = vadd.f32 %v3181, %v3288
        %v3352 = vadd.f32 %v3182, %v3292
        %v3353 = vadd.f32 %v3183, %v3280
        %v3354 = vadd.f32 %v3184, %v3284
        %v3355 = vadd.f32 %v3185, %v3288
        %v3356 = vadd.f32 %v3186, %v3292
        %v3357 = vadd.f32 %v3187, %v3280
        %v3358 = vadd.f32 %v3188, %v3284
        %v3359 = vadd.f32 %v3189, %v3288
        %v3360 = vadd.f32 %v3190, %v3292
        %v3361 = vadd.f32 %v3191, %v3280
        %v3362 = vadd.f32 %v3192, %v3284
        %v3363 = vadd.f32 %v3193, %v3288
        %v3364 = vadd.f32 %v3194, %v3292
        %v3365 = vadd.f32 %v3195, %v3280
        %v3366 = vadd.f32 %v3196, %v3284
        %v3367 = vadd.f32 %v3197, %v3288
        %v3368 = vadd.f32 %v3198, %v3292
        %v3369 = vadd.f32 %v3199, %v3280
        %v3370 = vadd.f32 %v3200, %v3284
        %v3371 = vadd.f32 %v3201, %v3288
        %v3372 = vadd.f32 %v3202, %v3292
        %v3373 = vadd.f32 %v3203, %v3280
        %v3374 = vadd.f32 %v3204, %v3284
        %v3375 = vadd.f32 %v3205, %v3288
        %v3376 = vadd.f32 %v3206, %v3292
        %v3377 = vadd.f32 %v3207, %v3280
        %v3378 = vadd.f32 %v3208, %v3284
        %v3379 = vadd.f32 %v3209, %v3288
        %v3380 = vadd.f32 %v3210, %v3292
        %v3381 = vadd.f32 %v3211, %v3296
        %v3382 = vadd.f32 %v3212, %v3300
        %v3383 = vadd.f32 %v3213, %v3304
        %v3384 = vadd.f32 %v3214, %v3308
        %v3385 = vadd.f32 %v3215, %v3296
        %v3386 = vadd.f32 %v3216, %v3300
        %v3387 = vadd.f32 %v3217, %v3304
        %v3388 = vadd.f32 %v3218, %v3308
        %v3389 = vadd.f32 %v3219, %v3296
        %v3390 = vadd.f32 %v3220, %v3300
        %v3391 = vadd.f32 %v3221, %v3304
        %v3392 = vadd.f32 %v3222, %v3308
        %v3393 = vadd.f32 %v3223, %v3296
        %v3394 = vadd.f32 %v3224, %v3300
        %v3395 = vadd.f32 %v3225, %v3304
        %v3396 = vadd.f32 %v3226, %v3308
        %v3397 = vadd.f32 %v3227, %v3296
        %v3398 = vadd.f32 %v3228, %v3300
        %v3399 = vadd.f32 %v3229, %v3304
        %v3400 = vadd.f32 %v3230, %v3308
        %v3401 = vadd.f32 %v3231, %v3296
        %v3402 = vadd.f32 %v3232, %v3300
        %v3403 = vadd.f32 %v3233, %v3304
        %v3404 = vadd.f32 %v3234, %v3308
        %v3405 = vadd.f32 %v3235, %v3296
        %v3406 = vadd.f32 %v3236, %v3300
        %v3407 = vadd.f32 %v3237, %v3304
        %v3408 = vadd.f32 %v3238, %v3308
        %v3409 = vadd.f32 %v3239, %v3296
        %v3410 = vadd.f32 %v3240, %v3300
        %v3411 = vadd.f32 %v3241, %v3304
        %v3412 = vadd.f32 %v3242, %v3308
        %v3413 = vadd.f32 %v3243, %v3296
        %v3414 = vadd.f32 %v3244, %v3300
        %v3415 = vadd.f32 %v3245, %v3304
        %v3416 = vadd.f32 %v3246, %v3308
        %v3417 = vadd.f32 %v3247, %v3296
        %v3418 = vadd.f32 %v3248, %v3300
        %v3419 = vadd.f32 %v3249, %v3304
        %v3420 = vadd.f32 %v3250, %v3308
        %v3421 = vadd.f32 %v3251, %v3296
        %v3422 = vadd.f32 %v3252, %v3300
        %v3423 = vadd.f32 %v3253, %v3304
        %v3424 = vadd.f32 %v3254, %v3308
        %v3425 = vadd.f32 %v3255, %v3296
        %v3426 = vadd.f32 %v3256, %v3300
        %v3427 = vadd.f32 %v3257, %v3304
        %v3428 = vadd.f32 %v3258, %v3308
        %v3429 = vadd.f32 %v3259, %v3296
        %v3430 = vadd.f32 %v3260, %v3300
        %v3431 = vadd.f32 %v3261, %v3304
        %v3432 = vadd.f32 %v3262, %v3308
        %v3433 = vadd.f32 %v3263, %v3296
        %v3434 = vadd.f32 %v3264, %v3300
        %v3435 = vadd.f32 %v3265, %v3304
        %v3436 = vadd.f32 %v3266, %v3308
        %v3437 = vadd.f32 %v3267, %v3296
        %v3438 = vadd.f32 %v3268, %v3300
        %v3439 = vadd.f32 %v3269, %v3304
        %v3440 = vadd.f32 %v3270, %v3308
        %v3441 = vadd.f32 %v3271, %v3296
        %v3442 = vadd.f32 %v3272, %v3300
        %v3443 = vadd.f32 %v3273, %v3304
        %v3444 = vadd.f32 %v3274, %v3308
        %v3445 = vmul.f32 %v3317, 0.1
        %v3446 = vmul.f32 %v3318, 0.1
        %v3447 = vmul.f32 %v3319, 0.1
        %v3448 = vmul.f32 %v3320, 0.1
        %v3449 = vmul.f32 %v3321, 0.1
        %v3450 = vmul.f32 %v3322, 0.1
        %v3451 = vmul.f32 %v3323, 0.1
        %v3452 = vmul.f32 %v3324, 0.1
        %v3453 = vmul.f32 %v3325, 0.1
        %v3454 = vmul.f32 %v3326, 0.1
        %v3455 = vmul.f32 %v3327, 0.1
        %v3456 = vmul.f32 %v3328, 0.1
        %v3457 = vmul.f32 %v3329, 0.1
        %v3458 = vmul.f32 %v3330, 0.1
        %v3459 = vmul.f32 %v3331, 0.1
        %v3460 = vmul.f32 %v3332, 0.1
        %v3461 = vmul.f32 %v3333, 0.1
        %v3462 = vmul.f32 %v3334, 0.1
        %v3463 = vmul.f32 %v3335, 0.1
        %v3464 = vmul.f32 %v3336, 0.1
        %v3465 = vmul.f32 %v3337, 0.1
        %v3466 = vmul.f32 %v3338, 0.1
        %v3467 = vmul.f32 %v3339, 0.1
        %v3468 = vmul.f32 %v3340, 0.1
        %v3469 = vmul.f32 %v3341, 0.1
        %v3470 = vmul.f32 %v3342, 0.1
        %v3471 = vmul.f32 %v3343, 0.1
        %v3472 = vmul.f32 %v3344, 0.1
        %v3473 = vmul.f32 %v3345, 0.1
        %v3474 = vmul.f32 %v3346, 0.1
        %v3475 = vmul.f32 %v3347, 0.1
        %v3476 = vmul.f32 %v3348, 0.1
        %v3477 = vmul.f32 %v3349, 0.1
        %v3478 = vmul.f32 %v3350, 0.1
        %v3479 = vmul.f32 %v3351, 0.1
        %v3480 = vmul.f32 %v3352, 0.1
        %v3481 = vmul.f32 %v3353, 0.1
        %v3482 = vmul.f32 %v3354, 0.1
        %v3483 = vmul.f32 %v3355, 0.1
        %v3484 = vmul.f32 %v3356, 0.1
        %v3485 = vmul.f32 %v3357, 0.1
        %v3486 = vmul.f32 %v3358, 0.1
        %v3487 = vmul.f32 %v3359, 0.1
        %v3488 = vmul.f32 %v3360, 0.1
        %v3489 = vmul.f32 %v3361, 0.1
        %v3490 = vmul.f32 %v3362, 0.1
        %v3491 = vmul.f32 %v3363, 0.1
        %v3492 = vmul.f32 %v3364, 0.1
        %v3493 = vmul.f32 %v3365, 0.1
        %v3494 = vmul.f32 %v3366, 0.1
        %v3495 = vmul.f32 %v3367, 0.1
        %v3496 = vmul.f32 %v3368, 0.1
        %v3497 = vmul.f32 %v3369, 0.1
        %v3498 = vmul.f32 %v3370, 0.1
        %v3499 = vmul.f32 %v3371, 0.1
        %v3500 = vmul.f32 %v3372, 0.1
        %v3501 = vmul.f32 %v3373, 0.1
        %v3502 = vmul.f32 %v3374, 0.1
        %v3503 = vmul.f32 %v3375, 0.1
        %v3504 = vmul.f32 %v3376, 0.1
        %v3505 = vmul.f32 %v3377, 0.1
        %v3506 = vmul.f32 %v3378, 0.1
        %v3507 = vmul.f32 %v3379, 0.1
        %v3508 = vmul.f32 %v3380, 0.1
        %v3509 = vmul.f32 %v3381, 0.1
        %v3510 = vmul.f32 %v3382, 0.1
        %v3511 = vmul.f32 %v3383, 0.1
        %v3512 = vmul.f32 %v3384, 0.1
        %v3513 = vmul.f32 %v3385, 0.1
        %v3514 = vmul.f32 %v3386, 0.1
        %v3515 = vmul.f32 %v3387, 0.1
        %v3516 = vmul.f32 %v3388, 0.1
        %v3517 = vmul.f32 %v3389, 0.1
        %v3518 = vmul.f32 %v3390, 0.1
        %v3519 = vmul.f32 %v3391, 0.1
        %v3520 = vmul.f32 %v3392, 0.1
        %v3521 = vmul.f32 %v3393, 0.1
        %v3522 = vmul.f32 %v3394, 0.1
        %v3523 = vmul.f32 %v3395, 0.1
        %v3524 = vmul.f32 %v3396, 0.1
        %v3525 = vmul.f32 %v3397, 0.1
        %v3526 = vmul.f32 %v3398, 0.1
        %v3527 = vmul.f32 %v3399, 0.1
        %v3528 = vmul.f32 %v3400, 0.1
        %v3529 = vmul.f32 %v3401, 0.1
        %v3530 = vmul.f32 %v3402, 0.1
        %v3531 = vmul.f32 %v3403, 0.1
        %v3532 = vmul.f32 %v3404, 0.1
        %v3533 = vmul.f32 %v3405, 0.1
        %v3534 = vmul.f32 %v3406, 0.1
        %v3535 = vmul.f32 %v3407, 0.1
        %v3536 = vmul.f32 %v3408, 0.1
        %v3537 = vmul.f32 %v3409, 0.1
        %v3538 = vmul.f32 %v3410, 0.1
        %v3539 = vmul.f32 %v3411, 0.1
        %v3540 = vmul.f32 %v3412, 0.1
        %v3541 = vmul.f32 %v3413, 0.1
        %v3542 = vmul.f32 %v3414, 0.1
        %v3543 = vmul.f32 %v3415, 0.1
        %v3544 = vmul.f32 %v3416, 0.1
        %v3545 = vmul.f32 %v3417, 0.1
        %v3546 = vmul.f32 %v3418, 0.1
        %v3547 = vmul.f32 %v3419, 0.1
        %v3548 = vmul.f32 %v3420, 0.1
        %v3549 = vmul.f32 %v3421, 0.1
        %v3550 = vmul.f32 %v3422, 0.1
        %v3551 = vmul.f32 %v3423, 0.1
        %v3552 = vmul.f32 %v3424, 0.1
        %v3553 = vmul.f32 %v3425, 0.1
        %v3554 = vmul.f32 %v3426, 0.1
        %v3555 = vmul.f32 %v3427, 0.1
        %v3556 = vmul.f32 %v3428, 0.1
        %v3557 = vmul.f32 %v3429, 0.1
        %v3558 = vmul.f32 %v3430, 0.1
        %v3559 = vmul.f32 %v3431, 0.1
        %v3560 = vmul.f32 %v3432, 0.1
        %v3561 = vmul.f32 %v3433, 0.1
        %v3562 = vmul.f32 %v3434, 0.1
        %v3563 = vmul.f32 %v3435, 0.1
        %v3564 = vmul.f32 %v3436, 0.1
        %v3565 = vmul.f32 %v3437, 0.1
        %v3566 = vmul.f32 %v3438, 0.1
        %v3567 = vmul.f32 %v3439, 0.1
        %v3568 = vmul.f32 %v3440, 0.1
        %v3569 = vmul.f32 %v3441, 0.1
        %v3570 = vmul.f32 %v3442, 0.1
        %v3571 = vmul.f32 %v3443, 0.1
        %v3572 = vmul.f32 %v3444, 0.1
        %v3573 = vmax.f32 %v3317, %v3445
        %v3574 = vmax.f32 %v3318, %v3446
        %v3575 = vmax.f32 %v3319, %v3447
        %v3576 = vmax.f32 %v3320, %v3448
        %v3577 = vmax.f32 %v3321, %v3449
        %v3578 = vmax.f32 %v3322, %v3450
        %v3579 = vmax.f32 %v3323, %v3451
        %v3580 = vmax.f32 %v3324, %v3452
        %v3581 = vmax.f32 %v3325, %v3453
        %v3582 = vmax.f32 %v3326, %v3454
        %v3583 = vmax.f32 %v3327, %v3455
        %v3584 = vmax.f32 %v3328, %v3456
        %v3585 = vmax.f32 %v3329, %v3457
        %v3586 = vmax.f32 %v3330, %v3458
        %v3587 = vmax.f32 %v3331, %v3459
        %v3588 = vmax.f32 %v3332, %v3460
        %v3589 = vmax.f32 %v3333, %v3461
        %v3590 = vmax.f32 %v3334, %v3462
        %v3591 = vmax.f32 %v3335, %v3463
        %v3592 = vmax.f32 %v3336, %v3464
        %v3593 = vmax.f32 %v3337, %v3465
        %v3594 = vmax.f32 %v3338, %v3466
        %v3595 = vmax.f32 %v3339, %v3467
        %v3596 = vmax.f32 %v3340, %v3468
        %v3597 = vmax.f32 %v3341, %v3469
        %v3598 = vmax.f32 %v3342, %v3470
        %v3599 = vmax.f32 %v3343, %v3471
        %v3600 = vmax.f32 %v3344, %v3472
        %v3601 = vmax.f32 %v3345, %v3473
        %v3602 = vmax.f32 %v3346, %v3474
        %v3603 = vmax.f32 %v3347, %v3475
        %v3604 = vmax.f32 %v3348, %v3476
        %v3605 = vmax.f32 %v3349, %v3477
        %v3606 = vmax.f32 %v3350, %v3478
        %v3607 = vmax.f32 %v3351, %v3479
        %v3608 = vmax.f32 %v3352, %v3480
        %v3609 = vmax.f32 %v3353, %v3481
        %v3610 = vmax.f32 %v3354, %v3482
        %v3611 = vmax.f32 %v3355, %v3483
        %v3612 = vmax.f32 %v3356, %v3484
        %v3613 = vmax.f32 %v3357, %v3485
        %v3614 = vmax.f32 %v3358, %v3486
        %v3615 = vmax.f32 %v3359, %v3487
        %v3616 = vmax.f32 %v3360, %v3488
        %v3617 = vmax.f32 %v3361, %v3489
        %v3618 = vmax.f32 %v3362, %v3490
        %v3619 = vmax.f32 %v3363, %v3491
        %v3620 = vmax.f32 %v3364, %v3492
        %v3621 = vmax.f32 %v3365, %v3493
        %v3622 = vmax.f32 %v3366, %v3494
        %v3623 = vmax.f32 %v3367, %v3495
        %v3624 = vmax.f32 %v3368, %v3496
        %v3625 = vmax.f32 %v3369, %v3497
        %v3626 = vmax.f32 %v3370, %v3498
        %v3627 = vmax.f32 %v3371, %v3499
        %v3628 = vmax.f32 %v3372, %v3500
        %v3629 = vmax.f32 %v3373, %v3501
        %v3630 = vmax.f32 %v3374, %v3502
        %v3631 = vmax.f32 %v3375, %v3503
        %v3632 = vmax.f32 %v3376, %v3504
        %v3633 = vmax.f32 %v3377, %v3505
        %v3634 = vmax.f32 %v3378, %v3506
        %v3635 = vmax.f32 %v3379, %v3507
        %v3636 = vmax.f32 %v3380, %v3508
        %v3637 = vmax.f32 %v3381, %v3509
        %v3638 = vmax.f32 %v3382, %v3510
        %v3639 = vmax.f32 %v3383, %v3511
        %v3640 = vmax.f32 %v3384, %v3512
        %v3641 = vmax.f32 %v3385, %v3513
        %v3642 = vmax.f32 %v3386, %v3514
        %v3643 = vmax.f32 %v3387, %v3515
        %v3644 = vmax.f32 %v3388, %v3516
        %v3645 = vmax.f32 %v3389, %v3517
        %v3646 = vmax.f32 %v3390, %v3518
        %v3647 = vmax.f32 %v3391, %v3519
        %v3648 = vmax.f32 %v3392, %v3520
        %v3649 = vmax.f32 %v3393, %v3521
        %v3650 = vmax.f32 %v3394, %v3522
        %v3651 = vmax.f32 %v3395, %v3523
        %v3652 = vmax.f32 %v3396, %v3524
        %v3653 = vmax.f32 %v3397, %v3525
        %v3654 = vmax.f32 %v3398, %v3526
        %v3655 = vmax.f32 %v3399, %v3527
        %v3656 = vmax.f32 %v3400, %v3528
        %v3657 = vmax.f32 %v3401, %v3529
        %v3658 = vmax.f32 %v3402, %v3530
        %v3659 = vmax.f32 %v3403, %v3531
        %v3660 = vmax.f32 %v3404, %v3532
        %v3661 = vmax.f32 %v3405, %v3533
        %v3662 = vmax.f32 %v3406, %v3534
        %v3663 = vmax.f32 %v3407, %v3535
        %v3664 = vmax.f32 %v3408, %v3536
        %v3665 = vmax.f32 %v3409, %v3537
        %v3666 = vmax.f32 %v3410, %v3538
        %v3667 = vmax.f32 %v3411, %v3539
        %v3668 = vmax.f32 %v3412, %v3540
        %v3669 = vmax.f32 %v3413, %v3541
        %v3670 = vmax.f32 %v3414, %v3542
        %v3671 = vmax.f32 %v3415, %v3543
        %v3672 = vmax.f32 %v3416, %v3544
        %v3673 = vmax.f32 %v3417, %v3545
        %v3674 = vmax.f32 %v3418, %v3546
        %v3675 = vmax.f32 %v3419, %v3547
        %v3676 = vmax.f32 %v3420, %v3548
        %v3677 = vmax.f32 %v3421, %v3549
        %v3678 = vmax.f32 %v3422, %v3550
        %v3679 = vmax.f32 %v3423, %v3551
        %v3680 = vmax.f32 %v3424, %v3552
        %v3681 = vmax.f32 %v3425, %v3553
        %v3682 = vmax.f32 %v3426, %v3554
        %v3683 = vmax.f32 %v3427, %v3555
        %v3684 = vmax.f32 %v3428, %v3556
        %v3685 = vmax.f32 %v3429, %v3557
        %v3686 = vmax.f32 %v3430, %v3558
        %v3687 = vmax.f32 %v3431, %v3559
        %v3688 = vmax.f32 %v3432, %v3560
        %v3689 = vmax.f32 %v3433, %v3561
        %v3690 = vmax.f32 %v3434, %v3562
        %v3691 = vmax.f32 %v3435, %v3563
        %v3692 = vmax.f32 %v3436, %v3564
        %v3693 = vmax.f32 %v3437, %v3565
        %v3694 = vmax.f32 %v3438, %v3566
        %v3695 = vmax.f32 %v3439, %v3567
        %v3696 = vmax.f32 %v3440, %v3568
        %v3697 = vmax.f32 %v3441, %v3569
        %v3698 = vmax.f32 %v3442, %v3570
        %v3699 = vmax.f32 %v3443, %v3571
        %v3700 = vmax.f32 %v3444, %v3572
        %v3701 = vpack.c.bf16 %v3577, %v3573
        %v3702 = vpack.c.bf16 %v3578, %v3574
        %v3703 = vpack.c.bf16 %v3579, %v3575
        %v3704 = vpack.c.bf16 %v3580, %v3576
        %v3705 = vpack.c.bf16 %v3585, %v3581
        %v3706 = vpack.c.bf16 %v3586, %v3582
        %v3707 = vpack.c.bf16 %v3587, %v3583
        %v3708 = vpack.c.bf16 %v3588, %v3584
        %v3709 = vpack.c.bf16 %v3593, %v3589
        %v3710 = vpack.c.bf16 %v3594, %v3590
        %v3711 = vpack.c.bf16 %v3595, %v3591
        %v3712 = vpack.c.bf16 %v3596, %v3592
        %v3713 = vpack.c.bf16 %v3601, %v3597
        %v3714 = vpack.c.bf16 %v3602, %v3598
        %v3715 = vpack.c.bf16 %v3603, %v3599
        %v3716 = vpack.c.bf16 %v3604, %v3600
        %v3717 = vpack.c.bf16 %v3609, %v3605
        %v3718 = vpack.c.bf16 %v3610, %v3606
        %v3719 = vpack.c.bf16 %v3611, %v3607
        %v3720 = vpack.c.bf16 %v3612, %v3608
        %v3721 = vpack.c.bf16 %v3617, %v3613
        %v3722 = vpack.c.bf16 %v3618, %v3614
        %v3723 = vpack.c.bf16 %v3619, %v3615
        %v3724 = vpack.c.bf16 %v3620, %v3616
        %v3725 = vpack.c.bf16 %v3625, %v3621
        %v3726 = vpack.c.bf16 %v3626, %v3622
        %v3727 = vpack.c.bf16 %v3627, %v3623
        %v3728 = vpack.c.bf16 %v3628, %v3624
        %v3729 = vpack.c.bf16 %v3633, %v3629
        %v3730 = vpack.c.bf16 %v3634, %v3630
        %v3731 = vpack.c.bf16 %v3635, %v3631
        %v3732 = vpack.c.bf16 %v3636, %v3632
        %v3733 = vpack.c.bf16 %v3641, %v3637
        %v3734 = vpack.c.bf16 %v3642, %v3638
        %v3735 = vpack.c.bf16 %v3643, %v3639
        %v3736 = vpack.c.bf16 %v3644, %v3640
        %v3737 = vpack.c.bf16 %v3649, %v3645
        %v3738 = vpack.c.bf16 %v3650, %v3646
        %v3739 = vpack.c.bf16 %v3651, %v3647
        %v3740 = vpack.c.bf16 %v3652, %v3648
        %v3741 = vpack.c.bf16 %v3657, %v3653
        %v3742 = vpack.c.bf16 %v3658, %v3654
        %v3743 = vpack.c.bf16 %v3659, %v3655
        %v3744 = vpack.c.bf16 %v3660, %v3656
        %v3745 = vpack.c.bf16 %v3665, %v3661
        %v3746 = vpack.c.bf16 %v3666, %v3662
        %v3747 = vpack.c.bf16 %v3667, %v3663
        %v3748 = vpack.c.bf16 %v3668, %v3664
        %v3749 = vpack.c.bf16 %v3673, %v3669
        %v3750 = vpack.c.bf16 %v3674, %v3670
        %v3751 = vpack.c.bf16 %v3675, %v3671
        %v3752 = vpack.c.bf16 %v3676, %v3672
        %v3753 = vpack.c.bf16 %v3681, %v3677
        %v3754 = vpack.c.bf16 %v3682, %v3678
        %v3755 = vpack.c.bf16 %v3683, %v3679
        %v3756 = vpack.c.bf16 %v3684, %v3680
        %v3757 = vpack.c.bf16 %v3689, %v3685
        %v3758 = vpack.c.bf16 %v3690, %v3686
        %v3759 = vpack.c.bf16 %v3691, %v3687
        %v3760 = vpack.c.bf16 %v3692, %v3688
        %v3761 = vpack.c.bf16 %v3697, %v3693
        %v3762 = vpack.c.bf16 %v3698, %v3694
        %v3763 = vpack.c.bf16 %v3699, %v3695
        %v3764 = vpack.c.bf16 %v3700, %v3696
        %v3765 = vld [vmem:[#allocation5] sm:$0xff]
        %v3766 = vld [vmem:[#allocation5 + $0x8] sm:$0xff]
        %v3767 = vld [vmem:[#allocation5 + $0x10] sm:$0xff]
        %v3768 = vld [vmem:[#allocation5 + $0x18] sm:$0xff]
        %v3769 = vld [vmem:[#allocation5 + $0x20] sm:$0xff]
        %v3770 = vld [vmem:[#allocation5 + $0x28] sm:$0xff]
        %v3771 = vld [vmem:[#allocation5 + $0x30] sm:$0xff]
        %v3772 = vld [vmem:[#allocation5 + $0x38] sm:$0xff]
        %v3773 = vld [vmem:[#allocation5 + $0x40] sm:$0xff]
        %v3774 = vld [vmem:[#allocation5 + $0x48] sm:$0xff]
        %v3775 = vld [vmem:[#allocation5 + $0x50] sm:$0xff]
        %v3776 = vld [vmem:[#allocation5 + $0x58] sm:$0xff]
        %v3777 = vld [vmem:[#allocation5 + $0x60] sm:$0xff]
        %v3778 = vld [vmem:[#allocation5 + $0x68] sm:$0xff]
        %v3779 = vld [vmem:[#allocation5 + $0x70] sm:$0xff]
        %v3780 = vld [vmem:[#allocation5 + $0x78] sm:$0xff]
        %v3781 = vld [vmem:[#allocation5 + $0x80] sm:$0xff]
        %v3782 = vld [vmem:[#allocation5 + $0x88] sm:$0xff]
        %v3783 = vld [vmem:[#allocation5 + $0x90] sm:$0xff]
        %v3784 = vld [vmem:[#allocation5 + $0x98] sm:$0xff]
        %v3785 = vld [vmem:[#allocation5 + $0xa0] sm:$0xff]
        %v3786 = vld [vmem:[#allocation5 + $0xa8] sm:$0xff]
        %v3787 = vld [vmem:[#allocation5 + $0xb0] sm:$0xff]
        %v3788 = vld [vmem:[#allocation5 + $0xb8] sm:$0xff]
        %v3789 = vld [vmem:[#allocation5 + $0xc0] sm:$0xff]
        %v3790 = vld [vmem:[#allocation5 + $0xc8] sm:$0xff]
        %v3791 = vld [vmem:[#allocation5 + $0xd0] sm:$0xff]
        %v3792 = vld [vmem:[#allocation5 + $0xd8] sm:$0xff]
        %v3793 = vld [vmem:[#allocation5 + $0xe0] sm:$0xff]
        %v3794 = vld [vmem:[#allocation5 + $0xe8] sm:$0xff]
        %v3795 = vld [vmem:[#allocation5 + $0xf0] sm:$0xff]
        %v3796 = vld [vmem:[#allocation5 + $0xf8] sm:$0xff]
        %v3797 = vld [vmem:[#allocation5 + $0x100] sm:$0xff]
        %v3798 = vld [vmem:[#allocation5 + $0x108] sm:$0xff]
        %v3799 = vld [vmem:[#allocation5 + $0x110] sm:$0xff]
        %v3800 = vld [vmem:[#allocation5 + $0x118] sm:$0xff]
        %v3801 = vld [vmem:[#allocation5 + $0x120] sm:$0xff]
        %v3802 = vld [vmem:[#allocation5 + $0x128] sm:$0xff]
        %v3803 = vld [vmem:[#allocation5 + $0x130] sm:$0xff]
        %v3804 = vld [vmem:[#allocation5 + $0x138] sm:$0xff]
        %v3805 = vld [vmem:[#allocation5 + $0x140] sm:$0xff]
        %v3806 = vld [vmem:[#allocation5 + $0x148] sm:$0xff]
        %v3807 = vld [vmem:[#allocation5 + $0x150] sm:$0xff]
        %v3808 = vld [vmem:[#allocation5 + $0x158] sm:$0xff]
        %v3809 = vld [vmem:[#allocation5 + $0x160] sm:$0xff]
        %v3810 = vld [vmem:[#allocation5 + $0x168] sm:$0xff]
        %v3811 = vld [vmem:[#allocation5 + $0x170] sm:$0xff]
        %v3812 = vld [vmem:[#allocation5 + $0x178] sm:$0xff]
        %v3813 = vld [vmem:[#allocation5 + $0x180] sm:$0xff]
        %v3814 = vld [vmem:[#allocation5 + $0x188] sm:$0xff]
        %v3815 = vld [vmem:[#allocation5 + $0x190] sm:$0xff]
        %v3816 = vld [vmem:[#allocation5 + $0x198] sm:$0xff]
        %v3817 = vld [vmem:[#allocation5 + $0x1a0] sm:$0xff]
        %v3818 = vld [vmem:[#allocation5 + $0x1a8] sm:$0xff]
        %v3819 = vld [vmem:[#allocation5 + $0x1b0] sm:$0xff]
        %v3820 = vld [vmem:[#allocation5 + $0x1b8] sm:$0xff]
        %v3821 = vld [vmem:[#allocation5 + $0x1c0] sm:$0xff]
        %v3822 = vld [vmem:[#allocation5 + $0x1c8] sm:$0xff]
        %v3823 = vld [vmem:[#allocation5 + $0x1d0] sm:$0xff]
        %v3824 = vld [vmem:[#allocation5 + $0x1d8] sm:$0xff]
        %v3825 = vld [vmem:[#allocation5 + $0x1e0] sm:$0xff]
        %v3826 = vld [vmem:[#allocation5 + $0x1e8] sm:$0xff]
        %v3827 = vld [vmem:[#allocation5 + $0x1f0] sm:$0xff]
        %v3828 = vld [vmem:[#allocation5 + $0x1f8] sm:$0xff]
        %v3829 = vld [vmem:[#allocation5 + $0x200] sm:$0xff]
        %v3830 = vld [vmem:[#allocation5 + $0x208] sm:$0xff]
        %v3831 = vld [vmem:[#allocation5 + $0x210] sm:$0xff]
        %v3832 = vld [vmem:[#allocation5 + $0x218] sm:$0xff]
        %v3833 = vld [vmem:[#allocation5 + $0x220] sm:$0xff]
        %v3834 = vld [vmem:[#allocation5 + $0x228] sm:$0xff]
        %v3835 = vld [vmem:[#allocation5 + $0x230] sm:$0xff]
        %v3836 = vld [vmem:[#allocation5 + $0x238] sm:$0xff]
        %v3837 = vld [vmem:[#allocation5 + $0x240] sm:$0xff]
        %v3838 = vld [vmem:[#allocation5 + $0x248] sm:$0xff]
        %v3839 = vld [vmem:[#allocation5 + $0x250] sm:$0xff]
        %v3840 = vld [vmem:[#allocation5 + $0x258] sm:$0xff]
        %v3841 = vld [vmem:[#allocation5 + $0x260] sm:$0xff]
        %v3842 = vld [vmem:[#allocation5 + $0x268] sm:$0xff]
        %v3843 = vld [vmem:[#allocation5 + $0x270] sm:$0xff]
        %v3844 = vld [vmem:[#allocation5 + $0x278] sm:$0xff]
        %v3845 = vld [vmem:[#allocation5 + $0x280] sm:$0xff]
        %v3846 = vld [vmem:[#allocation5 + $0x288] sm:$0xff]
        %v3847 = vld [vmem:[#allocation5 + $0x290] sm:$0xff]
        %v3848 = vld [vmem:[#allocation5 + $0x298] sm:$0xff]
        %v3849 = vld [vmem:[#allocation5 + $0x2a0] sm:$0xff]
        %v3850 = vld [vmem:[#allocation5 + $0x2a8] sm:$0xff]
        %v3851 = vld [vmem:[#allocation5 + $0x2b0] sm:$0xff]
        %v3852 = vld [vmem:[#allocation5 + $0x2b8] sm:$0xff]
        %v3853 = vld [vmem:[#allocation5 + $0x2c0] sm:$0xff]
        %v3854 = vld [vmem:[#allocation5 + $0x2c8] sm:$0xff]
        %v3855 = vld [vmem:[#allocation5 + $0x2d0] sm:$0xff]
        %v3856 = vld [vmem:[#allocation5 + $0x2d8] sm:$0xff]
        %v3857 = vld [vmem:[#allocation5 + $0x2e0] sm:$0xff]
        %v3858 = vld [vmem:[#allocation5 + $0x2e8] sm:$0xff]
        %v3859 = vld [vmem:[#allocation5 + $0x2f0] sm:$0xff]
        %v3860 = vld [vmem:[#allocation5 + $0x2f8] sm:$0xff]
        %v3861 = vld [vmem:[#allocation5 + $0x300] sm:$0xff]
        %v3862 = vld [vmem:[#allocation5 + $0x308] sm:$0xff]
        %v3863 = vld [vmem:[#allocation5 + $0x310] sm:$0xff]
        %v3864 = vld [vmem:[#allocation5 + $0x318] sm:$0xff]
        %v3865 = vld [vmem:[#allocation5 + $0x320] sm:$0xff]
        %v3866 = vld [vmem:[#allocation5 + $0x328] sm:$0xff]
        %v3867 = vld [vmem:[#allocation5 + $0x330] sm:$0xff]
        %v3868 = vld [vmem:[#allocation5 + $0x338] sm:$0xff]
        %v3869 = vld [vmem:[#allocation5 + $0x340] sm:$0xff]
        %v3870 = vld [vmem:[#allocation5 + $0x348] sm:$0xff]
        %v3871 = vld [vmem:[#allocation5 + $0x350] sm:$0xff]
        %v3872 = vld [vmem:[#allocation5 + $0x358] sm:$0xff]
        %v3873 = vld [vmem:[#allocation5 + $0x360] sm:$0xff]
        %v3874 = vld [vmem:[#allocation5 + $0x368] sm:$0xff]
        %v3875 = vld [vmem:[#allocation5 + $0x370] sm:$0xff]
        %v3876 = vld [vmem:[#allocation5 + $0x378] sm:$0xff]
        %v3877 = vld [vmem:[#allocation5 + $0x380] sm:$0xff]
        %v3878 = vld [vmem:[#allocation5 + $0x388] sm:$0xff]
        %v3879 = vld [vmem:[#allocation5 + $0x390] sm:$0xff]
        %v3880 = vld [vmem:[#allocation5 + $0x398] sm:$0xff]
        %v3881 = vld [vmem:[#allocation5 + $0x3a0] sm:$0xff]
        %v3882 = vld [vmem:[#allocation5 + $0x3a8] sm:$0xff]
        %v3883 = vld [vmem:[#allocation5 + $0x3b0] sm:$0xff]
        %v3884 = vld [vmem:[#allocation5 + $0x3b8] sm:$0xff]
        %v3885 = vld [vmem:[#allocation5 + $0x3c0] sm:$0xff]
        %v3886 = vld [vmem:[#allocation5 + $0x3c8] sm:$0xff]
        %v3887 = vld [vmem:[#allocation5 + $0x3d0] sm:$0xff]
        %v3888 = vld [vmem:[#allocation5 + $0x3d8] sm:$0xff]
        %v3889 = vld [vmem:[#allocation5 + $0x3e0] sm:$0xff]
        %v3890 = vld [vmem:[#allocation5 + $0x3e8] sm:$0xff]
        %v3891 = vld [vmem:[#allocation5 + $0x3f0] sm:$0xff]
        %v3892 = vld [vmem:[#allocation5 + $0x3f8] sm:$0xff]
        %v3893 = vld [vmem:[#allocation5 + $0x400] sm:$0xff]
        %v3894 = vld [vmem:[#allocation5 + $0x408] sm:$0xff]
        %v3895 = vld [vmem:[#allocation5 + $0x410] sm:$0xff]
        %v3896 = vld [vmem:[#allocation5 + $0x418] sm:$0xff]
        %v3897 = vld [vmem:[#allocation5 + $0x420] sm:$0xff]
        %v3898 = vld [vmem:[#allocation5 + $0x428] sm:$0xff]
        %v3899 = vld [vmem:[#allocation5 + $0x430] sm:$0xff]
        %v3900 = vld [vmem:[#allocation5 + $0x438] sm:$0xff]
        %v3901 = vld [vmem:[#allocation5 + $0x440] sm:$0xff]
        %v3902 = vld [vmem:[#allocation5 + $0x448] sm:$0xff]
        %v3903 = vld [vmem:[#allocation5 + $0x450] sm:$0xff]
        %v3904 = vld [vmem:[#allocation5 + $0x458] sm:$0xff]
        %v3905 = vld [vmem:[#allocation5 + $0x460] sm:$0xff]
        %v3906 = vld [vmem:[#allocation5 + $0x468] sm:$0xff]
        %v3907 = vld [vmem:[#allocation5 + $0x470] sm:$0xff]
        %v3908 = vld [vmem:[#allocation5 + $0x478] sm:$0xff]
        %v3909 = vld [vmem:[#allocation5 + $0x480] sm:$0xff]
        %v3910 = vld [vmem:[#allocation5 + $0x488] sm:$0xff]
        %v3911 = vld [vmem:[#allocation5 + $0x490] sm:$0xff]
        %v3912 = vld [vmem:[#allocation5 + $0x498] sm:$0xff]
        %v3913 = vld [vmem:[#allocation5 + $0x4a0] sm:$0xff]
        %v3914 = vld [vmem:[#allocation5 + $0x4a8] sm:$0xff]
        %v3915 = vld [vmem:[#allocation5 + $0x4b0] sm:$0xff]
        %v3916 = vld [vmem:[#allocation5 + $0x4b8] sm:$0xff]
        %v3917 = vld [vmem:[#allocation5 + $0x4c0] sm:$0xff]
        %v3918 = vld [vmem:[#allocation5 + $0x4c8] sm:$0xff]
        %v3919 = vld [vmem:[#allocation5 + $0x4d0] sm:$0xff]
        %v3920 = vld [vmem:[#allocation5 + $0x4d8] sm:$0xff]
        %v3921 = vld [vmem:[#allocation5 + $0x4e0] sm:$0xff]
        %v3922 = vld [vmem:[#allocation5 + $0x4e8] sm:$0xff]
        %v3923 = vld [vmem:[#allocation5 + $0x4f0] sm:$0xff]
        %v3924 = vld [vmem:[#allocation5 + $0x4f8] sm:$0xff]
        %v3925 = vld [vmem:[#allocation5 + $0x500] sm:$0xff]
        %v3926 = vld [vmem:[#allocation5 + $0x508] sm:$0xff]
        %v3927 = vld [vmem:[#allocation5 + $0x510] sm:$0xff]
        %v3928 = vld [vmem:[#allocation5 + $0x518] sm:$0xff]
        %v3929 = vld [vmem:[#allocation5 + $0x520] sm:$0xff]
        %v3930 = vld [vmem:[#allocation5 + $0x528] sm:$0xff]
        %v3931 = vld [vmem:[#allocation5 + $0x530] sm:$0xff]
        %v3932 = vld [vmem:[#allocation5 + $0x538] sm:$0xff]
        %v3933 = vld [vmem:[#allocation5 + $0x540] sm:$0xff]
        %v3934 = vld [vmem:[#allocation5 + $0x548] sm:$0xff]
        %v3935 = vld [vmem:[#allocation5 + $0x550] sm:$0xff]
        %v3936 = vld [vmem:[#allocation5 + $0x558] sm:$0xff]
        %v3937 = vld [vmem:[#allocation5 + $0x560] sm:$0xff]
        %v3938 = vld [vmem:[#allocation5 + $0x568] sm:$0xff]
        %v3939 = vld [vmem:[#allocation5 + $0x570] sm:$0xff]
        %v3940 = vld [vmem:[#allocation5 + $0x578] sm:$0xff]
        %v3941 = vld [vmem:[#allocation5 + $0x580] sm:$0xff]
        %v3942 = vld [vmem:[#allocation5 + $0x588] sm:$0xff]
        %v3943 = vld [vmem:[#allocation5 + $0x590] sm:$0xff]
        %v3944 = vld [vmem:[#allocation5 + $0x598] sm:$0xff]
        %v3945 = vld [vmem:[#allocation5 + $0x5a0] sm:$0xff]
        %v3946 = vld [vmem:[#allocation5 + $0x5a8] sm:$0xff]
        %v3947 = vld [vmem:[#allocation5 + $0x5b0] sm:$0xff]
        %v3948 = vld [vmem:[#allocation5 + $0x5b8] sm:$0xff]
        %v3949 = vld [vmem:[#allocation5 + $0x5c0] sm:$0xff]
        %v3950 = vld [vmem:[#allocation5 + $0x5c8] sm:$0xff]
        %v3951 = vld [vmem:[#allocation5 + $0x5d0] sm:$0xff]
        %v3952 = vld [vmem:[#allocation5 + $0x5d8] sm:$0xff]
        %v3953 = vld [vmem:[#allocation5 + $0x5e0] sm:$0xff]
        %v3954 = vld [vmem:[#allocation5 + $0x5e8] sm:$0xff]
        %v3955 = vld [vmem:[#allocation5 + $0x5f0] sm:$0xff]
        %v3956 = vld [vmem:[#allocation5 + $0x5f8] sm:$0xff]
        %v3957 = vld [vmem:[#allocation5 + $0x600] sm:$0xff]
        %v3958 = vld [vmem:[#allocation5 + $0x608] sm:$0xff]
        %v3959 = vld [vmem:[#allocation5 + $0x610] sm:$0xff]
        %v3960 = vld [vmem:[#allocation5 + $0x618] sm:$0xff]
        %v3961 = vld [vmem:[#allocation5 + $0x620] sm:$0xff]
        %v3962 = vld [vmem:[#allocation5 + $0x628] sm:$0xff]
        %v3963 = vld [vmem:[#allocation5 + $0x630] sm:$0xff]
        %v3964 = vld [vmem:[#allocation5 + $0x638] sm:$0xff]
        %v3965 = vld [vmem:[#allocation5 + $0x640] sm:$0xff]
        %v3966 = vld [vmem:[#allocation5 + $0x648] sm:$0xff]
        %v3967 = vld [vmem:[#allocation5 + $0x650] sm:$0xff]
        %v3968 = vld [vmem:[#allocation5 + $0x658] sm:$0xff]
        %v3969 = vld [vmem:[#allocation5 + $0x660] sm:$0xff]
        %v3970 = vld [vmem:[#allocation5 + $0x668] sm:$0xff]
        %v3971 = vld [vmem:[#allocation5 + $0x670] sm:$0xff]
        %v3972 = vld [vmem:[#allocation5 + $0x678] sm:$0xff]
        %v3973 = vld [vmem:[#allocation5 + $0x680] sm:$0xff]
        %v3974 = vld [vmem:[#allocation5 + $0x688] sm:$0xff]
        %v3975 = vld [vmem:[#allocation5 + $0x690] sm:$0xff]
        %v3976 = vld [vmem:[#allocation5 + $0x698] sm:$0xff]
        %v3977 = vld [vmem:[#allocation5 + $0x6a0] sm:$0xff]
        %v3978 = vld [vmem:[#allocation5 + $0x6a8] sm:$0xff]
        %v3979 = vld [vmem:[#allocation5 + $0x6b0] sm:$0xff]
        %v3980 = vld [vmem:[#allocation5 + $0x6b8] sm:$0xff]
        %v3981 = vld [vmem:[#allocation5 + $0x6c0] sm:$0xff]
        %v3982 = vld [vmem:[#allocation5 + $0x6c8] sm:$0xff]
        %v3983 = vld [vmem:[#allocation5 + $0x6d0] sm:$0xff]
        %v3984 = vld [vmem:[#allocation5 + $0x6d8] sm:$0xff]
        %v3985 = vld [vmem:[#allocation5 + $0x6e0] sm:$0xff]
        %v3986 = vld [vmem:[#allocation5 + $0x6e8] sm:$0xff]
        %v3987 = vld [vmem:[#allocation5 + $0x6f0] sm:$0xff]
        %v3988 = vld [vmem:[#allocation5 + $0x6f8] sm:$0xff]
        %v3989 = vld [vmem:[#allocation5 + $0x700] sm:$0xff]
        %v3990 = vld [vmem:[#allocation5 + $0x708] sm:$0xff]
        %v3991 = vld [vmem:[#allocation5 + $0x710] sm:$0xff]
        %v3992 = vld [vmem:[#allocation5 + $0x718] sm:$0xff]
        %v3993 = vld [vmem:[#allocation5 + $0x720] sm:$0xff]
        %v3994 = vld [vmem:[#allocation5 + $0x728] sm:$0xff]
        %v3995 = vld [vmem:[#allocation5 + $0x730] sm:$0xff]
        %v3996 = vld [vmem:[#allocation5 + $0x738] sm:$0xff]
        %v3997 = vld [vmem:[#allocation5 + $0x740] sm:$0xff]
        %v3998 = vld [vmem:[#allocation5 + $0x748] sm:$0xff]
        %v3999 = vld [vmem:[#allocation5 + $0x750] sm:$0xff]
        %v4000 = vld [vmem:[#allocation5 + $0x758] sm:$0xff]
        %v4001 = vld [vmem:[#allocation5 + $0x760] sm:$0xff]
        %v4002 = vld [vmem:[#allocation5 + $0x768] sm:$0xff]
        %v4003 = vld [vmem:[#allocation5 + $0x770] sm:$0xff]
        %v4004 = vld [vmem:[#allocation5 + $0x778] sm:$0xff]
        %v4005 = vld [vmem:[#allocation5 + $0x780] sm:$0xff]
        %v4006 = vld [vmem:[#allocation5 + $0x788] sm:$0xff]
        %v4007 = vld [vmem:[#allocation5 + $0x790] sm:$0xff]
        %v4008 = vld [vmem:[#allocation5 + $0x798] sm:$0xff]
        %v4009 = vld [vmem:[#allocation5 + $0x7a0] sm:$0xff]
        %v4010 = vld [vmem:[#allocation5 + $0x7a8] sm:$0xff]
        %v4011 = vld [vmem:[#allocation5 + $0x7b0] sm:$0xff]
        %v4012 = vld [vmem:[#allocation5 + $0x7b8] sm:$0xff]
        %v4013 = vld [vmem:[#allocation5 + $0x7c0] sm:$0xff]
        %v4014 = vld [vmem:[#allocation5 + $0x7c8] sm:$0xff]
        %v4015 = vld [vmem:[#allocation5 + $0x7d0] sm:$0xff]
        %v4016 = vld [vmem:[#allocation5 + $0x7d8] sm:$0xff]
        %v4017 = vld [vmem:[#allocation5 + $0x7e0] sm:$0xff]
        %v4018 = vld [vmem:[#allocation5 + $0x7e8] sm:$0xff]
        %v4019 = vld [vmem:[#allocation5 + $0x7f0] sm:$0xff]
        %v4020 = vld [vmem:[#allocation5 + $0x7f8] sm:$0xff]
        %v4021 = vld [vmem:[#allocation8 + $0x13] sm:$0xff]
        %v4023 = vlaneseq
        %v4024 = vshrl.u32 %v4023, 7
        %v4025 = vsub.s32 0, %v4024
        %v4026 = vrot.slane %v4021, %v4025
        %v4027 = vlaneseq
        %v4028 = vshrl.u32 %v4027, 7
        %v4029 = vsub.s32 1, %v4028
        %v4030 = vrot.slane %v4021, %v4029
        %v4031 = vlaneseq
        %v4032 = vshrl.u32 %v4031, 7
        %v4033 = vsub.s32 2, %v4032
        %v4034 = vrot.slane %v4021, %v4033
        %v4035 = vlaneseq
        %v4036 = vshrl.u32 %v4035, 7
        %v4037 = vsub.s32 3, %v4036
        %v4038 = vrot.slane %v4021, %v4037
        %v4039 = vlaneseq
        %v4040 = vshrl.u32 %v4039, 7
        %v4041 = vsub.s32 4, %v4040
        %v4042 = vrot.slane %v4021, %v4041
        %v4043 = vlaneseq
        %v4044 = vshrl.u32 %v4043, 7
        %v4045 = vsub.s32 5, %v4044
        %v4046 = vrot.slane %v4021, %v4045
        %v4047 = vlaneseq
        %v4048 = vshrl.u32 %v4047, 7
        %v4049 = vsub.s32 6, %v4048
        %v4050 = vrot.slane %v4021, %v4049
        %v4051 = vlaneseq
        %v4052 = vshrl.u32 %v4051, 7
        %v4053 = vsub.s32 7, %v4052
        %v4054 = vrot.slane %v4021, %v4053
        %v4319 = vunpack.c.l.b16 %v3765
        %v4320 = vunpack.c.h.b16 %v3765
        %v4321 = vunpack.c.l.b16 %v3766
        %v4322 = vunpack.c.h.b16 %v3766
        %v4323 = vunpack.c.l.b16 %v3767
        %v4324 = vunpack.c.h.b16 %v3767
        %v4325 = vunpack.c.l.b16 %v3768
        %v4326 = vunpack.c.h.b16 %v3768
        %v4327 = vunpack.c.l.b16 %v3769
        %v4328 = vunpack.c.h.b16 %v3769
        %v4329 = vunpack.c.l.b16 %v3770
        %v4330 = vunpack.c.h.b16 %v3770
        %v4331 = vunpack.c.l.b16 %v3771
        %v4332 = vunpack.c.h.b16 %v3771
        %v4333 = vunpack.c.l.b16 %v3772
        %v4334 = vunpack.c.h.b16 %v3772
        %v4335 = vunpack.c.l.b16 %v3773
        %v4336 = vunpack.c.h.b16 %v3773
        %v4337 = vunpack.c.l.b16 %v3774
        %v4338 = vunpack.c.h.b16 %v3774
        %v4339 = vunpack.c.l.b16 %v3775
        %v4340 = vunpack.c.h.b16 %v3775
        %v4341 = vunpack.c.l.b16 %v3776
        %v4342 = vunpack.c.h.b16 %v3776
        %v4343 = vunpack.c.l.b16 %v3777
        %v4344 = vunpack.c.h.b16 %v3777
        %v4345 = vunpack.c.l.b16 %v3778
        %v4346 = vunpack.c.h.b16 %v3778
        %v4347 = vunpack.c.l.b16 %v3779
        %v4348 = vunpack.c.h.b16 %v3779
        %v4349 = vunpack.c.l.b16 %v3780
        %v4350 = vunpack.c.h.b16 %v3780
        %v4351 = vunpack.c.l.b16 %v3781
        %v4352 = vunpack.c.h.b16 %v3781
        %v4353 = vunpack.c.l.b16 %v3782
        %v4354 = vunpack.c.h.b16 %v3782
        %v4355 = vunpack.c.l.b16 %v3783
        %v4356 = vunpack.c.h.b16 %v3783
        %v4357 = vunpack.c.l.b16 %v3784
        %v4358 = vunpack.c.h.b16 %v3784
        %v4359 = vunpack.c.l.b16 %v3785
        %v4360 = vunpack.c.h.b16 %v3785
        %v4361 = vunpack.c.l.b16 %v3786
        %v4362 = vunpack.c.h.b16 %v3786
        %v4363 = vunpack.c.l.b16 %v3787
        %v4364 = vunpack.c.h.b16 %v3787
        %v4365 = vunpack.c.l.b16 %v3788
        %v4366 = vunpack.c.h.b16 %v3788
        %v4367 = vunpack.c.l.b16 %v3789
        %v4368 = vunpack.c.h.b16 %v3789
        %v4369 = vunpack.c.l.b16 %v3790
        %v4370 = vunpack.c.h.b16 %v3790
        %v4371 = vunpack.c.l.b16 %v3791
        %v4372 = vunpack.c.h.b16 %v3791
        %v4373 = vunpack.c.l.b16 %v3792
        %v4374 = vunpack.c.h.b16 %v3792
        %v4375 = vunpack.c.l.b16 %v3793
        %v4376 = vunpack.c.h.b16 %v3793
        %v4377 = vunpack.c.l.b16 %v3794
        %v4378 = vunpack.c.h.b16 %v3794
        %v4379 = vunpack.c.l.b16 %v3795
        %v4380 = vunpack.c.h.b16 %v3795
        %v4381 = vunpack.c.l.b16 %v3796
        %v4382 = vunpack.c.h.b16 %v3796
        %v4383 = vunpack.c.l.b16 %v3797
        %v4384 = vunpack.c.h.b16 %v3797
        %v4385 = vunpack.c.l.b16 %v3798
        %v4386 = vunpack.c.h.b16 %v3798
        %v4387 = vunpack.c.l.b16 %v3799
        %v4388 = vunpack.c.h.b16 %v3799
        %v4389 = vunpack.c.l.b16 %v3800
        %v4390 = vunpack.c.h.b16 %v3800
        %v4391 = vunpack.c.l.b16 %v3801
        %v4392 = vunpack.c.h.b16 %v3801
        %v4393 = vunpack.c.l.b16 %v3802
        %v4394 = vunpack.c.h.b16 %v3802
        %v4395 = vunpack.c.l.b16 %v3803
        %v4396 = vunpack.c.h.b16 %v3803
        %v4397 = vunpack.c.l.b16 %v3804
        %v4398 = vunpack.c.h.b16 %v3804
        %v4399 = vunpack.c.l.b16 %v3805
        %v4400 = vunpack.c.h.b16 %v3805
        %v4401 = vunpack.c.l.b16 %v3806
        %v4402 = vunpack.c.h.b16 %v3806
        %v4403 = vunpack.c.l.b16 %v3807
        %v4404 = vunpack.c.h.b16 %v3807
        %v4405 = vunpack.c.l.b16 %v3808
        %v4406 = vunpack.c.h.b16 %v3808
        %v4407 = vunpack.c.l.b16 %v3809
        %v4408 = vunpack.c.h.b16 %v3809
        %v4409 = vunpack.c.l.b16 %v3810
        %v4410 = vunpack.c.h.b16 %v3810
        %v4411 = vunpack.c.l.b16 %v3811
        %v4412 = vunpack.c.h.b16 %v3811
        %v4413 = vunpack.c.l.b16 %v3812
        %v4414 = vunpack.c.h.b16 %v3812
        %v4415 = vunpack.c.l.b16 %v3813
        %v4416 = vunpack.c.h.b16 %v3813
        %v4417 = vunpack.c.l.b16 %v3814
        %v4418 = vunpack.c.h.b16 %v3814
        %v4419 = vunpack.c.l.b16 %v3815
        %v4420 = vunpack.c.h.b16 %v3815
        %v4421 = vunpack.c.l.b16 %v3816
        %v4422 = vunpack.c.h.b16 %v3816
        %v4423 = vunpack.c.l.b16 %v3817
        %v4424 = vunpack.c.h.b16 %v3817
        %v4425 = vunpack.c.l.b16 %v3818
        %v4426 = vunpack.c.h.b16 %v3818
        %v4427 = vunpack.c.l.b16 %v3819
        %v4428 = vunpack.c.h.b16 %v3819
        %v4429 = vunpack.c.l.b16 %v3820
        %v4430 = vunpack.c.h.b16 %v3820
        %v4431 = vunpack.c.l.b16 %v3821
        %v4432 = vunpack.c.h.b16 %v3821
        %v4433 = vunpack.c.l.b16 %v3822
        %v4434 = vunpack.c.h.b16 %v3822
        %v4435 = vunpack.c.l.b16 %v3823
        %v4436 = vunpack.c.h.b16 %v3823
        %v4437 = vunpack.c.l.b16 %v3824
        %v4438 = vunpack.c.h.b16 %v3824
        %v4439 = vunpack.c.l.b16 %v3825
        %v4440 = vunpack.c.h.b16 %v3825
        %v4441 = vunpack.c.l.b16 %v3826
        %v4442 = vunpack.c.h.b16 %v3826
        %v4443 = vunpack.c.l.b16 %v3827
        %v4444 = vunpack.c.h.b16 %v3827
        %v4445 = vunpack.c.l.b16 %v3828
        %v4446 = vunpack.c.h.b16 %v3828
        %v4447 = vunpack.c.l.b16 %v3829
        %v4448 = vunpack.c.h.b16 %v3829
        %v4449 = vunpack.c.l.b16 %v3830
        %v4450 = vunpack.c.h.b16 %v3830
        %v4451 = vunpack.c.l.b16 %v3831
        %v4452 = vunpack.c.h.b16 %v3831
        %v4453 = vunpack.c.l.b16 %v3832
        %v4454 = vunpack.c.h.b16 %v3832
        %v4455 = vunpack.c.l.b16 %v3833
        %v4456 = vunpack.c.h.b16 %v3833
        %v4457 = vunpack.c.l.b16 %v3834
        %v4458 = vunpack.c.h.b16 %v3834
        %v4459 = vunpack.c.l.b16 %v3835
        %v4460 = vunpack.c.h.b16 %v3835
        %v4461 = vunpack.c.l.b16 %v3836
        %v4462 = vunpack.c.h.b16 %v3836
        %v4463 = vunpack.c.l.b16 %v3837
        %v4464 = vunpack.c.h.b16 %v3837
        %v4465 = vunpack.c.l.b16 %v3838
        %v4466 = vunpack.c.h.b16 %v3838
        %v4467 = vunpack.c.l.b16 %v3839
        %v4468 = vunpack.c.h.b16 %v3839
        %v4469 = vunpack.c.l.b16 %v3840
        %v4470 = vunpack.c.h.b16 %v3840
        %v4471 = vunpack.c.l.b16 %v3841
        %v4472 = vunpack.c.h.b16 %v3841
        %v4473 = vunpack.c.l.b16 %v3842
        %v4474 = vunpack.c.h.b16 %v3842
        %v4475 = vunpack.c.l.b16 %v3843
        %v4476 = vunpack.c.h.b16 %v3843
        %v4477 = vunpack.c.l.b16 %v3844
        %v4478 = vunpack.c.h.b16 %v3844
        %v4479 = vunpack.c.l.b16 %v3845
        %v4480 = vunpack.c.h.b16 %v3845
        %v4481 = vunpack.c.l.b16 %v3846
        %v4482 = vunpack.c.h.b16 %v3846
        %v4483 = vunpack.c.l.b16 %v3847
        %v4484 = vunpack.c.h.b16 %v3847
        %v4485 = vunpack.c.l.b16 %v3848
        %v4486 = vunpack.c.h.b16 %v3848
        %v4487 = vunpack.c.l.b16 %v3849
        %v4488 = vunpack.c.h.b16 %v3849
        %v4489 = vunpack.c.l.b16 %v3850
        %v4490 = vunpack.c.h.b16 %v3850
        %v4491 = vunpack.c.l.b16 %v3851
        %v4492 = vunpack.c.h.b16 %v3851
        %v4493 = vunpack.c.l.b16 %v3852
        %v4494 = vunpack.c.h.b16 %v3852
        %v4495 = vunpack.c.l.b16 %v3853
        %v4496 = vunpack.c.h.b16 %v3853
        %v4497 = vunpack.c.l.b16 %v3854
        %v4498 = vunpack.c.h.b16 %v3854
        %v4499 = vunpack.c.l.b16 %v3855
        %v4500 = vunpack.c.h.b16 %v3855
        %v4501 = vunpack.c.l.b16 %v3856
        %v4502 = vunpack.c.h.b16 %v3856
        %v4503 = vunpack.c.l.b16 %v3857
        %v4504 = vunpack.c.h.b16 %v3857
        %v4505 = vunpack.c.l.b16 %v3858
        %v4506 = vunpack.c.h.b16 %v3858
        %v4507 = vunpack.c.l.b16 %v3859
        %v4508 = vunpack.c.h.b16 %v3859
        %v4509 = vunpack.c.l.b16 %v3860
        %v4510 = vunpack.c.h.b16 %v3860
        %v4511 = vunpack.c.l.b16 %v3861
        %v4512 = vunpack.c.h.b16 %v3861
        %v4513 = vunpack.c.l.b16 %v3862
        %v4514 = vunpack.c.h.b16 %v3862
        %v4515 = vunpack.c.l.b16 %v3863
        %v4516 = vunpack.c.h.b16 %v3863
        %v4517 = vunpack.c.l.b16 %v3864
        %v4518 = vunpack.c.h.b16 %v3864
        %v4519 = vunpack.c.l.b16 %v3865
        %v4520 = vunpack.c.h.b16 %v3865
        %v4521 = vunpack.c.l.b16 %v3866
        %v4522 = vunpack.c.h.b16 %v3866
        %v4523 = vunpack.c.l.b16 %v3867
        %v4524 = vunpack.c.h.b16 %v3867
        %v4525 = vunpack.c.l.b16 %v3868
        %v4526 = vunpack.c.h.b16 %v3868
        %v4527 = vunpack.c.l.b16 %v3869
        %v4528 = vunpack.c.h.b16 %v3869
        %v4529 = vunpack.c.l.b16 %v3870
        %v4530 = vunpack.c.h.b16 %v3870
        %v4531 = vunpack.c.l.b16 %v3871
        %v4532 = vunpack.c.h.b16 %v3871
        %v4533 = vunpack.c.l.b16 %v3872
        %v4534 = vunpack.c.h.b16 %v3872
        %v4535 = vunpack.c.l.b16 %v3873
        %v4536 = vunpack.c.h.b16 %v3873
        %v4537 = vunpack.c.l.b16 %v3874
        %v4538 = vunpack.c.h.b16 %v3874
        %v4539 = vunpack.c.l.b16 %v3875
        %v4540 = vunpack.c.h.b16 %v3875
        %v4541 = vunpack.c.l.b16 %v3876
        %v4542 = vunpack.c.h.b16 %v3876
        %v4543 = vunpack.c.l.b16 %v3877
        %v4544 = vunpack.c.h.b16 %v3877
        %v4545 = vunpack.c.l.b16 %v3878
        %v4546 = vunpack.c.h.b16 %v3878
        %v4547 = vunpack.c.l.b16 %v3879
        %v4548 = vunpack.c.h.b16 %v3879
        %v4549 = vunpack.c.l.b16 %v3880
        %v4550 = vunpack.c.h.b16 %v3880
        %v4551 = vunpack.c.l.b16 %v3881
        %v4552 = vunpack.c.h.b16 %v3881
        %v4553 = vunpack.c.l.b16 %v3882
        %v4554 = vunpack.c.h.b16 %v3882
        %v4555 = vunpack.c.l.b16 %v3883
        %v4556 = vunpack.c.h.b16 %v3883
        %v4557 = vunpack.c.l.b16 %v3884
        %v4558 = vunpack.c.h.b16 %v3884
        %v4559 = vunpack.c.l.b16 %v3885
        %v4560 = vunpack.c.h.b16 %v3885
        %v4561 = vunpack.c.l.b16 %v3886
        %v4562 = vunpack.c.h.b16 %v3886
        %v4563 = vunpack.c.l.b16 %v3887
        %v4564 = vunpack.c.h.b16 %v3887
        %v4565 = vunpack.c.l.b16 %v3888
        %v4566 = vunpack.c.h.b16 %v3888
        %v4567 = vunpack.c.l.b16 %v3889
        %v4568 = vunpack.c.h.b16 %v3889
        %v4569 = vunpack.c.l.b16 %v3890
        %v4570 = vunpack.c.h.b16 %v3890
        %v4571 = vunpack.c.l.b16 %v3891
        %v4572 = vunpack.c.h.b16 %v3891
        %v4573 = vunpack.c.l.b16 %v3892
        %v4574 = vunpack.c.h.b16 %v3892
        %v4575 = vunpack.c.l.b16 %v3893
        %v4576 = vunpack.c.h.b16 %v3893
        %v4577 = vunpack.c.l.b16 %v3894
        %v4578 = vunpack.c.h.b16 %v3894
        %v4579 = vunpack.c.l.b16 %v3895
        %v4580 = vunpack.c.h.b16 %v3895
        %v4581 = vunpack.c.l.b16 %v3896
        %v4582 = vunpack.c.h.b16 %v3896
        %v4583 = vunpack.c.l.b16 %v3897
        %v4584 = vunpack.c.h.b16 %v3897
        %v4585 = vunpack.c.l.b16 %v3898
        %v4586 = vunpack.c.h.b16 %v3898
        %v4587 = vunpack.c.l.b16 %v3899
        %v4588 = vunpack.c.h.b16 %v3899
        %v4589 = vunpack.c.l.b16 %v3900
        %v4590 = vunpack.c.h.b16 %v3900
        %v4591 = vunpack.c.l.b16 %v3901
        %v4592 = vunpack.c.h.b16 %v3901
        %v4593 = vunpack.c.l.b16 %v3902
        %v4594 = vunpack.c.h.b16 %v3902
        %v4595 = vunpack.c.l.b16 %v3903
        %v4596 = vunpack.c.h.b16 %v3903
        %v4597 = vunpack.c.l.b16 %v3904
        %v4598 = vunpack.c.h.b16 %v3904
        %v4599 = vunpack.c.l.b16 %v3905
        %v4600 = vunpack.c.h.b16 %v3905
        %v4601 = vunpack.c.l.b16 %v3906
        %v4602 = vunpack.c.h.b16 %v3906
        %v4603 = vunpack.c.l.b16 %v3907
        %v4604 = vunpack.c.h.b16 %v3907
        %v4605 = vunpack.c.l.b16 %v3908
        %v4606 = vunpack.c.h.b16 %v3908
        %v4607 = vunpack.c.l.b16 %v3909
        %v4608 = vunpack.c.h.b16 %v3909
        %v4609 = vunpack.c.l.b16 %v3910
        %v4610 = vunpack.c.h.b16 %v3910
        %v4611 = vunpack.c.l.b16 %v3911
        %v4612 = vunpack.c.h.b16 %v3911
        %v4613 = vunpack.c.l.b16 %v3912
        %v4614 = vunpack.c.h.b16 %v3912
        %v4615 = vunpack.c.l.b16 %v3913
        %v4616 = vunpack.c.h.b16 %v3913
        %v4617 = vunpack.c.l.b16 %v3914
        %v4618 = vunpack.c.h.b16 %v3914
        %v4619 = vunpack.c.l.b16 %v3915
        %v4620 = vunpack.c.h.b16 %v3915
        %v4621 = vunpack.c.l.b16 %v3916
        %v4622 = vunpack.c.h.b16 %v3916
        %v4623 = vunpack.c.l.b16 %v3917
        %v4624 = vunpack.c.h.b16 %v3917
        %v4625 = vunpack.c.l.b16 %v3918
        %v4626 = vunpack.c.h.b16 %v3918
        %v4627 = vunpack.c.l.b16 %v3919
        %v4628 = vunpack.c.h.b16 %v3919
        %v4629 = vunpack.c.l.b16 %v3920
        %v4630 = vunpack.c.h.b16 %v3920
        %v4631 = vunpack.c.l.b16 %v3921
        %v4632 = vunpack.c.h.b16 %v3921
        %v4633 = vunpack.c.l.b16 %v3922
        %v4634 = vunpack.c.h.b16 %v3922
        %v4635 = vunpack.c.l.b16 %v3923
        %v4636 = vunpack.c.h.b16 %v3923
        %v4637 = vunpack.c.l.b16 %v3924
        %v4638 = vunpack.c.h.b16 %v3924
        %v4639 = vunpack.c.l.b16 %v3925
        %v4640 = vunpack.c.h.b16 %v3925
        %v4641 = vunpack.c.l.b16 %v3926
        %v4642 = vunpack.c.h.b16 %v3926
        %v4643 = vunpack.c.l.b16 %v3927
        %v4644 = vunpack.c.h.b16 %v3927
        %v4645 = vunpack.c.l.b16 %v3928
        %v4646 = vunpack.c.h.b16 %v3928
        %v4647 = vunpack.c.l.b16 %v3929
        %v4648 = vunpack.c.h.b16 %v3929
        %v4649 = vunpack.c.l.b16 %v3930
        %v4650 = vunpack.c.h.b16 %v3930
        %v4651 = vunpack.c.l.b16 %v3931
        %v4652 = vunpack.c.h.b16 %v3931
        %v4653 = vunpack.c.l.b16 %v3932
        %v4654 = vunpack.c.h.b16 %v3932
        %v4655 = vunpack.c.l.b16 %v3933
        %v4656 = vunpack.c.h.b16 %v3933
        %v4657 = vunpack.c.l.b16 %v3934
        %v4658 = vunpack.c.h.b16 %v3934
        %v4659 = vunpack.c.l.b16 %v3935
        %v4660 = vunpack.c.h.b16 %v3935
        %v4661 = vunpack.c.l.b16 %v3936
        %v4662 = vunpack.c.h.b16 %v3936
        %v4663 = vunpack.c.l.b16 %v3937
        %v4664 = vunpack.c.h.b16 %v3937
        %v4665 = vunpack.c.l.b16 %v3938
        %v4666 = vunpack.c.h.b16 %v3938
        %v4667 = vunpack.c.l.b16 %v3939
        %v4668 = vunpack.c.h.b16 %v3939
        %v4669 = vunpack.c.l.b16 %v3940
        %v4670 = vunpack.c.h.b16 %v3940
        %v4671 = vunpack.c.l.b16 %v3941
        %v4672 = vunpack.c.h.b16 %v3941
        %v4673 = vunpack.c.l.b16 %v3942
        %v4674 = vunpack.c.h.b16 %v3942
        %v4675 = vunpack.c.l.b16 %v3943
        %v4676 = vunpack.c.h.b16 %v3943
        %v4677 = vunpack.c.l.b16 %v3944
        %v4678 = vunpack.c.h.b16 %v3944
        %v4679 = vunpack.c.l.b16 %v3945
        %v4680 = vunpack.c.h.b16 %v3945
        %v4681 = vunpack.c.l.b16 %v3946
        %v4682 = vunpack.c.h.b16 %v3946
        %v4683 = vunpack.c.l.b16 %v3947
        %v4684 = vunpack.c.h.b16 %v3947
        %v4685 = vunpack.c.l.b16 %v3948
        %v4686 = vunpack.c.h.b16 %v3948
        %v4687 = vunpack.c.l.b16 %v3949
        %v4688 = vunpack.c.h.b16 %v3949
        %v4689 = vunpack.c.l.b16 %v3950
        %v4690 = vunpack.c.h.b16 %v3950
        %v4691 = vunpack.c.l.b16 %v3951
        %v4692 = vunpack.c.h.b16 %v3951
        %v4693 = vunpack.c.l.b16 %v3952
        %v4694 = vunpack.c.h.b16 %v3952
        %v4695 = vunpack.c.l.b16 %v3953
        %v4696 = vunpack.c.h.b16 %v3953
        %v4697 = vunpack.c.l.b16 %v3954
        %v4698 = vunpack.c.h.b16 %v3954
        %v4699 = vunpack.c.l.b16 %v3955
        %v4700 = vunpack.c.h.b16 %v3955
        %v4701 = vunpack.c.l.b16 %v3956
        %v4702 = vunpack.c.h.b16 %v3956
        %v4703 = vunpack.c.l.b16 %v3957
        %v4704 = vunpack.c.h.b16 %v3957
        %v4705 = vunpack.c.l.b16 %v3958
        %v4706 = vunpack.c.h.b16 %v3958
        %v4707 = vunpack.c.l.b16 %v3959
        %v4708 = vunpack.c.h.b16 %v3959
        %v4709 = vunpack.c.l.b16 %v3960
        %v4710 = vunpack.c.h.b16 %v3960
        %v4711 = vunpack.c.l.b16 %v3961
        %v4712 = vunpack.c.h.b16 %v3961
        %v4713 = vunpack.c.l.b16 %v3962
        %v4714 = vunpack.c.h.b16 %v3962
        %v4715 = vunpack.c.l.b16 %v3963
        %v4716 = vunpack.c.h.b16 %v3963
        %v4717 = vunpack.c.l.b16 %v3964
        %v4718 = vunpack.c.h.b16 %v3964
        %v4719 = vunpack.c.l.b16 %v3965
        %v4720 = vunpack.c.h.b16 %v3965
        %v4721 = vunpack.c.l.b16 %v3966
        %v4722 = vunpack.c.h.b16 %v3966
        %v4723 = vunpack.c.l.b16 %v3967
        %v4724 = vunpack.c.h.b16 %v3967
        %v4725 = vunpack.c.l.b16 %v3968
        %v4726 = vunpack.c.h.b16 %v3968
        %v4727 = vunpack.c.l.b16 %v3969
        %v4728 = vunpack.c.h.b16 %v3969
        %v4729 = vunpack.c.l.b16 %v3970
        %v4730 = vunpack.c.h.b16 %v3970
        %v4731 = vunpack.c.l.b16 %v3971
        %v4732 = vunpack.c.h.b16 %v3971
        %v4733 = vunpack.c.l.b16 %v3972
        %v4734 = vunpack.c.h.b16 %v3972
        %v4735 = vunpack.c.l.b16 %v3973
        %v4736 = vunpack.c.h.b16 %v3973
        %v4737 = vunpack.c.l.b16 %v3974
        %v4738 = vunpack.c.h.b16 %v3974
        %v4739 = vunpack.c.l.b16 %v3975
        %v4740 = vunpack.c.h.b16 %v3975
        %v4741 = vunpack.c.l.b16 %v3976
        %v4742 = vunpack.c.h.b16 %v3976
        %v4743 = vunpack.c.l.b16 %v3977
        %v4744 = vunpack.c.h.b16 %v3977
        %v4745 = vunpack.c.l.b16 %v3978
        %v4746 = vunpack.c.h.b16 %v3978
        %v4747 = vunpack.c.l.b16 %v3979
        %v4748 = vunpack.c.h.b16 %v3979
        %v4749 = vunpack.c.l.b16 %v3980
        %v4750 = vunpack.c.h.b16 %v3980
        %v4751 = vunpack.c.l.b16 %v3981
        %v4752 = vunpack.c.h.b16 %v3981
        %v4753 = vunpack.c.l.b16 %v3982
        %v4754 = vunpack.c.h.b16 %v3982
        %v4755 = vunpack.c.l.b16 %v3983
        %v4756 = vunpack.c.h.b16 %v3983
        %v4757 = vunpack.c.l.b16 %v3984
        %v4758 = vunpack.c.h.b16 %v3984
        %v4759 = vunpack.c.l.b16 %v3985
        %v4760 = vunpack.c.h.b16 %v3985
        %v4761 = vunpack.c.l.b16 %v3986
        %v4762 = vunpack.c.h.b16 %v3986
        %v4763 = vunpack.c.l.b16 %v3987
        %v4764 = vunpack.c.h.b16 %v3987
        %v4765 = vunpack.c.l.b16 %v3988
        %v4766 = vunpack.c.h.b16 %v3988
        %v4767 = vunpack.c.l.b16 %v3989
        %v4768 = vunpack.c.h.b16 %v3989
        %v4769 = vunpack.c.l.b16 %v3990
        %v4770 = vunpack.c.h.b16 %v3990
        %v4771 = vunpack.c.l.b16 %v3991
        %v4772 = vunpack.c.h.b16 %v3991
        %v4773 = vunpack.c.l.b16 %v3992
        %v4774 = vunpack.c.h.b16 %v3992
        %v4775 = vunpack.c.l.b16 %v3993
        %v4776 = vunpack.c.h.b16 %v3993
        %v4777 = vunpack.c.l.b16 %v3994
        %v4778 = vunpack.c.h.b16 %v3994
        %v4779 = vunpack.c.l.b16 %v3995
        %v4780 = vunpack.c.h.b16 %v3995
        %v4781 = vunpack.c.l.b16 %v3996
        %v4782 = vunpack.c.h.b16 %v3996
        %v4783 = vunpack.c.l.b16 %v3997
        %v4784 = vunpack.c.h.b16 %v3997
        %v4785 = vunpack.c.l.b16 %v3998
        %v4786 = vunpack.c.h.b16 %v3998
        %v4787 = vunpack.c.l.b16 %v3999
        %v4788 = vunpack.c.h.b16 %v3999
        %v4789 = vunpack.c.l.b16 %v4000
        %v4790 = vunpack.c.h.b16 %v4000
        %v4791 = vunpack.c.l.b16 %v4001
        %v4792 = vunpack.c.h.b16 %v4001
        %v4793 = vunpack.c.l.b16 %v4002
        %v4794 = vunpack.c.h.b16 %v4002
        %v4795 = vunpack.c.l.b16 %v4003
        %v4796 = vunpack.c.h.b16 %v4003
        %v4797 = vunpack.c.l.b16 %v4004
        %v4798 = vunpack.c.h.b16 %v4004
        %v4799 = vunpack.c.l.b16 %v4005
        %v4800 = vunpack.c.h.b16 %v4005
        %v4801 = vunpack.c.l.b16 %v4006
        %v4802 = vunpack.c.h.b16 %v4006
        %v4803 = vunpack.c.l.b16 %v4007
        %v4804 = vunpack.c.h.b16 %v4007
        %v4805 = vunpack.c.l.b16 %v4008
        %v4806 = vunpack.c.h.b16 %v4008
        %v4807 = vunpack.c.l.b16 %v4009
        %v4808 = vunpack.c.h.b16 %v4009
        %v4809 = vunpack.c.l.b16 %v4010
        %v4810 = vunpack.c.h.b16 %v4010
        %v4811 = vunpack.c.l.b16 %v4011
        %v4812 = vunpack.c.h.b16 %v4011
        %v4813 = vunpack.c.l.b16 %v4012
        %v4814 = vunpack.c.h.b16 %v4012
        %v4815 = vunpack.c.l.b16 %v4013
        %v4816 = vunpack.c.h.b16 %v4013
        %v4817 = vunpack.c.l.b16 %v4014
        %v4818 = vunpack.c.h.b16 %v4014
        %v4819 = vunpack.c.l.b16 %v4015
        %v4820 = vunpack.c.h.b16 %v4015
        %v4821 = vunpack.c.l.b16 %v4016
        %v4822 = vunpack.c.h.b16 %v4016
        %v4823 = vunpack.c.l.b16 %v4017
        %v4824 = vunpack.c.h.b16 %v4017
        %v4825 = vunpack.c.l.b16 %v4018
        %v4826 = vunpack.c.h.b16 %v4018
        %v4827 = vunpack.c.l.b16 %v4019
        %v4828 = vunpack.c.h.b16 %v4019
        %v4829 = vunpack.c.l.b16 %v4020
        %v4830 = vunpack.c.h.b16 %v4020
        %v4831 = vpack.c.b16 %v4327, %v4319
        %v4832 = vpack.c.b16 %v4328, %v4320
        %v4833 = vpack.c.b16 %v4329, %v4321
        %v4834 = vpack.c.b16 %v4330, %v4322
        %v4835 = vpack.c.b16 %v4331, %v4323
        %v4836 = vpack.c.b16 %v4332, %v4324
        %v4837 = vpack.c.b16 %v4333, %v4325
        %v4838 = vpack.c.b16 %v4334, %v4326
        %v4839 = vpack.c.b16 %v4343, %v4335
        %v4840 = vpack.c.b16 %v4344, %v4336
        %v4841 = vpack.c.b16 %v4345, %v4337
        %v4842 = vpack.c.b16 %v4346, %v4338
        %v4843 = vpack.c.b16 %v4347, %v4339
        %v4844 = vpack.c.b16 %v4348, %v4340
        %v4845 = vpack.c.b16 %v4349, %v4341
        %v4846 = vpack.c.b16 %v4350, %v4342
        %v4847 = vpack.c.b16 %v4359, %v4351
        %v4848 = vpack.c.b16 %v4360, %v4352
        %v4849 = vpack.c.b16 %v4361, %v4353
        %v4850 = vpack.c.b16 %v4362, %v4354
        %v4851 = vpack.c.b16 %v4363, %v4355
        %v4852 = vpack.c.b16 %v4364, %v4356
        %v4853 = vpack.c.b16 %v4365, %v4357
        %v4854 = vpack.c.b16 %v4366, %v4358
        %v4855 = vpack.c.b16 %v4375, %v4367
        %v4856 = vpack.c.b16 %v4376, %v4368
        %v4857 = vpack.c.b16 %v4377, %v4369
        %v4858 = vpack.c.b16 %v4378, %v4370
        %v4859 = vpack.c.b16 %v4379, %v4371
        %v4860 = vpack.c.b16 %v4380, %v4372
        %v4861 = vpack.c.b16 %v4381, %v4373
        %v4862 = vpack.c.b16 %v4382, %v4374
        %v4863 = vpack.c.b16 %v4391, %v4383
        %v4864 = vpack.c.b16 %v4392, %v4384
        %v4865 = vpack.c.b16 %v4393, %v4385
        %v4866 = vpack.c.b16 %v4394, %v4386
        %v4867 = vpack.c.b16 %v4395, %v4387
        %v4868 = vpack.c.b16 %v4396, %v4388
        %v4869 = vpack.c.b16 %v4397, %v4389
        %v4870 = vpack.c.b16 %v4398, %v4390
        %v4871 = vpack.c.b16 %v4407, %v4399
        %v4872 = vpack.c.b16 %v4408, %v4400
        %v4873 = vpack.c.b16 %v4409, %v4401
        %v4874 = vpack.c.b16 %v4410, %v4402
        %v4875 = vpack.c.b16 %v4411, %v4403
        %v4876 = vpack.c.b16 %v4412, %v4404
        %v4877 = vpack.c.b16 %v4413, %v4405
        %v4878 = vpack.c.b16 %v4414, %v4406
        %v4879 = vpack.c.b16 %v4423, %v4415
        %v4880 = vpack.c.b16 %v4424, %v4416
        %v4881 = vpack.c.b16 %v4425, %v4417
        %v4882 = vpack.c.b16 %v4426, %v4418
        %v4883 = vpack.c.b16 %v4427, %v4419
        %v4884 = vpack.c.b16 %v4428, %v4420
        %v4885 = vpack.c.b16 %v4429, %v4421
        %v4886 = vpack.c.b16 %v4430, %v4422
        %v4887 = vpack.c.b16 %v4439, %v4431
        %v4888 = vpack.c.b16 %v4440, %v4432
        %v4889 = vpack.c.b16 %v4441, %v4433
        %v4890 = vpack.c.b16 %v4442, %v4434
        %v4891 = vpack.c.b16 %v4443, %v4435
        %v4892 = vpack.c.b16 %v4444, %v4436
        %v4893 = vpack.c.b16 %v4445, %v4437
        %v4894 = vpack.c.b16 %v4446, %v4438
        %v4895 = vpack.c.b16 %v4455, %v4447
        %v4896 = vpack.c.b16 %v4456, %v4448
        %v4897 = vpack.c.b16 %v4457, %v4449
        %v4898 = vpack.c.b16 %v4458, %v4450
        %v4899 = vpack.c.b16 %v4459, %v4451
        %v4900 = vpack.c.b16 %v4460, %v4452
        %v4901 = vpack.c.b16 %v4461, %v4453
        %v4902 = vpack.c.b16 %v4462, %v4454
        %v4903 = vpack.c.b16 %v4471, %v4463
        %v4904 = vpack.c.b16 %v4472, %v4464
        %v4905 = vpack.c.b16 %v4473, %v4465
        %v4906 = vpack.c.b16 %v4474, %v4466
        %v4907 = vpack.c.b16 %v4475, %v4467
        %v4908 = vpack.c.b16 %v4476, %v4468
        %v4909 = vpack.c.b16 %v4477, %v4469
        %v4910 = vpack.c.b16 %v4478, %v4470
        %v4911 = vpack.c.b16 %v4487, %v4479
        %v4912 = vpack.c.b16 %v4488, %v4480
        %v4913 = vpack.c.b16 %v4489, %v4481
        %v4914 = vpack.c.b16 %v4490, %v4482
        %v4915 = vpack.c.b16 %v4491, %v4483
        %v4916 = vpack.c.b16 %v4492, %v4484
        %v4917 = vpack.c.b16 %v4493, %v4485
        %v4918 = vpack.c.b16 %v4494, %v4486
        %v4919 = vpack.c.b16 %v4503, %v4495
        %v4920 = vpack.c.b16 %v4504, %v4496
        %v4921 = vpack.c.b16 %v4505, %v4497
        %v4922 = vpack.c.b16 %v4506, %v4498
        %v4923 = vpack.c.b16 %v4507, %v4499
        %v4924 = vpack.c.b16 %v4508, %v4500
        %v4925 = vpack.c.b16 %v4509, %v4501
        %v4926 = vpack.c.b16 %v4510, %v4502
        %v4927 = vpack.c.b16 %v4519, %v4511
        %v4928 = vpack.c.b16 %v4520, %v4512
        %v4929 = vpack.c.b16 %v4521, %v4513
        %v4930 = vpack.c.b16 %v4522, %v4514
        %v4931 = vpack.c.b16 %v4523, %v4515
        %v4932 = vpack.c.b16 %v4524, %v4516
        %v4933 = vpack.c.b16 %v4525, %v4517
        %v4934 = vpack.c.b16 %v4526, %v4518
        %v4935 = vpack.c.b16 %v4535, %v4527
        %v4936 = vpack.c.b16 %v4536, %v4528
        %v4937 = vpack.c.b16 %v4537, %v4529
        %v4938 = vpack.c.b16 %v4538, %v4530
        %v4939 = vpack.c.b16 %v4539, %v4531
        %v4940 = vpack.c.b16 %v4540, %v4532
        %v4941 = vpack.c.b16 %v4541, %v4533
        %v4942 = vpack.c.b16 %v4542, %v4534
        %v4943 = vpack.c.b16 %v4551, %v4543
        %v4944 = vpack.c.b16 %v4552, %v4544
        %v4945 = vpack.c.b16 %v4553, %v4545
        %v4946 = vpack.c.b16 %v4554, %v4546
        %v4947 = vpack.c.b16 %v4555, %v4547
        %v4948 = vpack.c.b16 %v4556, %v4548
        %v4949 = vpack.c.b16 %v4557, %v4549
        %v4950 = vpack.c.b16 %v4558, %v4550
        %v4951 = vpack.c.b16 %v4567, %v4559
        %v4952 = vpack.c.b16 %v4568, %v4560
        %v4953 = vpack.c.b16 %v4569, %v4561
        %v4954 = vpack.c.b16 %v4570, %v4562
        %v4955 = vpack.c.b16 %v4571, %v4563
        %v4956 = vpack.c.b16 %v4572, %v4564
        %v4957 = vpack.c.b16 %v4573, %v4565
        %v4958 = vpack.c.b16 %v4574, %v4566
        %v4959 = vpack.c.b16 %v4583, %v4575
        %v4960 = vpack.c.b16 %v4584, %v4576
        %v4961 = vpack.c.b16 %v4585, %v4577
        %v4962 = vpack.c.b16 %v4586, %v4578
        %v4963 = vpack.c.b16 %v4587, %v4579
        %v4964 = vpack.c.b16 %v4588, %v4580
        %v4965 = vpack.c.b16 %v4589, %v4581
        %v4966 = vpack.c.b16 %v4590, %v4582
        %v4967 = vpack.c.b16 %v4599, %v4591
        %v4968 = vpack.c.b16 %v4600, %v4592
        %v4969 = vpack.c.b16 %v4601, %v4593
        %v4970 = vpack.c.b16 %v4602, %v4594
        %v4971 = vpack.c.b16 %v4603, %v4595
        %v4972 = vpack.c.b16 %v4604, %v4596
        %v4973 = vpack.c.b16 %v4605, %v4597
        %v4974 = vpack.c.b16 %v4606, %v4598
        %v4975 = vpack.c.b16 %v4615, %v4607
        %v4976 = vpack.c.b16 %v4616, %v4608
        %v4977 = vpack.c.b16 %v4617, %v4609
        %v4978 = vpack.c.b16 %v4618, %v4610
        %v4979 = vpack.c.b16 %v4619, %v4611
        %v4980 = vpack.c.b16 %v4620, %v4612
        %v4981 = vpack.c.b16 %v4621, %v4613
        %v4982 = vpack.c.b16 %v4622, %v4614
        %v4983 = vpack.c.b16 %v4631, %v4623
        %v4984 = vpack.c.b16 %v4632, %v4624
        %v4985 = vpack.c.b16 %v4633, %v4625
        %v4986 = vpack.c.b16 %v4634, %v4626
        %v4987 = vpack.c.b16 %v4635, %v4627
        %v4988 = vpack.c.b16 %v4636, %v4628
        %v4989 = vpack.c.b16 %v4637, %v4629
        %v4990 = vpack.c.b16 %v4638, %v4630
        %v4991 = vpack.c.b16 %v4647, %v4639
        %v4992 = vpack.c.b16 %v4648, %v4640
        %v4993 = vpack.c.b16 %v4649, %v4641
        %v4994 = vpack.c.b16 %v4650, %v4642
        %v4995 = vpack.c.b16 %v4651, %v4643
        %v4996 = vpack.c.b16 %v4652, %v4644
        %v4997 = vpack.c.b16 %v4653, %v4645
        %v4998 = vpack.c.b16 %v4654, %v4646
        %v4999 = vpack.c.b16 %v4663, %v4655
        %v5000 = vpack.c.b16 %v4664, %v4656
        %v5001 = vpack.c.b16 %v4665, %v4657
        %v5002 = vpack.c.b16 %v4666, %v4658
        %v5003 = vpack.c.b16 %v4667, %v4659
        %v5004 = vpack.c.b16 %v4668, %v4660
        %v5005 = vpack.c.b16 %v4669, %v4661
        %v5006 = vpack.c.b16 %v4670, %v4662
        %v5007 = vpack.c.b16 %v4679, %v4671
        %v5008 = vpack.c.b16 %v4680, %v4672
        %v5009 = vpack.c.b16 %v4681, %v4673
        %v5010 = vpack.c.b16 %v4682, %v4674
        %v5011 = vpack.c.b16 %v4683, %v4675
        %v5012 = vpack.c.b16 %v4684, %v4676
        %v5013 = vpack.c.b16 %v4685, %v4677
        %v5014 = vpack.c.b16 %v4686, %v4678
        %v5015 = vpack.c.b16 %v4695, %v4687
        %v5016 = vpack.c.b16 %v4696, %v4688
        %v5017 = vpack.c.b16 %v4697, %v4689
        %v5018 = vpack.c.b16 %v4698, %v4690
        %v5019 = vpack.c.b16 %v4699, %v4691
        %v5020 = vpack.c.b16 %v4700, %v4692
        %v5021 = vpack.c.b16 %v4701, %v4693
        %v5022 = vpack.c.b16 %v4702, %v4694
        %v5023 = vpack.c.b16 %v4711, %v4703
        %v5024 = vpack.c.b16 %v4712, %v4704
        %v5025 = vpack.c.b16 %v4713, %v4705
        %v5026 = vpack.c.b16 %v4714, %v4706
        %v5027 = vpack.c.b16 %v4715, %v4707
        %v5028 = vpack.c.b16 %v4716, %v4708
        %v5029 = vpack.c.b16 %v4717, %v4709
        %v5030 = vpack.c.b16 %v4718, %v4710
        %v5031 = vpack.c.b16 %v4727, %v4719
        %v5032 = vpack.c.b16 %v4728, %v4720
        %v5033 = vpack.c.b16 %v4729, %v4721
        %v5034 = vpack.c.b16 %v4730, %v4722
        %v5035 = vpack.c.b16 %v4731, %v4723
        %v5036 = vpack.c.b16 %v4732, %v4724
        %v5037 = vpack.c.b16 %v4733, %v4725
        %v5038 = vpack.c.b16 %v4734, %v4726
        %v5039 = vpack.c.b16 %v4743, %v4735
        %v5040 = vpack.c.b16 %v4744, %v4736
        %v5041 = vpack.c.b16 %v4745, %v4737
        %v5042 = vpack.c.b16 %v4746, %v4738
        %v5043 = vpack.c.b16 %v4747, %v4739
        %v5044 = vpack.c.b16 %v4748, %v4740
        %v5045 = vpack.c.b16 %v4749, %v4741
        %v5046 = vpack.c.b16 %v4750, %v4742
        %v5047 = vpack.c.b16 %v4759, %v4751
        %v5048 = vpack.c.b16 %v4760, %v4752
        %v5049 = vpack.c.b16 %v4761, %v4753
        %v5050 = vpack.c.b16 %v4762, %v4754
        %v5051 = vpack.c.b16 %v4763, %v4755
        %v5052 = vpack.c.b16 %v4764, %v4756
        %v5053 = vpack.c.b16 %v4765, %v4757
        %v5054 = vpack.c.b16 %v4766, %v4758
        %v5055 = vpack.c.b16 %v4775, %v4767
        %v5056 = vpack.c.b16 %v4776, %v4768
        %v5057 = vpack.c.b16 %v4777, %v4769
        %v5058 = vpack.c.b16 %v4778, %v4770
        %v5059 = vpack.c.b16 %v4779, %v4771
        %v5060 = vpack.c.b16 %v4780, %v4772
        %v5061 = vpack.c.b16 %v4781, %v4773
        %v5062 = vpack.c.b16 %v4782, %v4774
        %v5063 = vpack.c.b16 %v4791, %v4783
        %v5064 = vpack.c.b16 %v4792, %v4784
        %v5065 = vpack.c.b16 %v4793, %v4785
        %v5066 = vpack.c.b16 %v4794, %v4786
        %v5067 = vpack.c.b16 %v4795, %v4787
        %v5068 = vpack.c.b16 %v4796, %v4788
        %v5069 = vpack.c.b16 %v4797, %v4789
        %v5070 = vpack.c.b16 %v4798, %v4790
        %v5071 = vpack.c.b16 %v4807, %v4799
        %v5072 = vpack.c.b16 %v4808, %v4800
        %v5073 = vpack.c.b16 %v4809, %v4801
        %v5074 = vpack.c.b16 %v4810, %v4802
        %v5075 = vpack.c.b16 %v4811, %v4803
        %v5076 = vpack.c.b16 %v4812, %v4804
        %v5077 = vpack.c.b16 %v4813, %v4805
        %v5078 = vpack.c.b16 %v4814, %v4806
        %v5079 = vpack.c.b16 %v4823, %v4815
        %v5080 = vpack.c.b16 %v4824, %v4816
        %v5081 = vpack.c.b16 %v4825, %v4817
        %v5082 = vpack.c.b16 %v4826, %v4818
        %v5083 = vpack.c.b16 %v4827, %v4819
        %v5084 = vpack.c.b16 %v4828, %v4820
        %v5085 = vpack.c.b16 %v4829, %v4821
        %v5086 = vpack.c.b16 %v4830, %v4822
        %5343 = vmatprep.subr.bf16.mxu0 %v4832
        %5344 = vmatpush1.bf16.msra.mxu0 %v4831
        %5345 = vmatprep.subr.bf16.mxu0 %v4840
        %5346 = vmatpush1.bf16.msra.mxu0 %v4839
        %5347 = vmatprep.subr.bf16.mxu0 %v4848
        %5348 = vmatpush1.bf16.msra.mxu0 %v4847
        %5349 = vmatprep.subr.bf16.mxu0 %v4856
        %5350 = vmatpush1.bf16.msra.mxu0 %v4855
        %5351 = vmatprep.subr.bf16.mxu0 %v4864
        %5352 = vmatpush1.bf16.msra.mxu0 %v4863
        %5353 = vmatprep.subr.bf16.mxu0 %v4872
        %5354 = vmatpush1.bf16.msra.mxu0 %v4871
        %5355 = vmatprep.subr.bf16.mxu0 %v4880
        %5356 = vmatpush1.bf16.msra.mxu0 %v4879
        %5357 = vmatprep.subr.bf16.mxu0 %v4888
        %5358 = vmatpush1.bf16.msra.mxu0 %v4887
        %5359 = vmatprep.subr.bf16.mxu0 %v4896
        %5360 = vmatpush1.bf16.msra.mxu0 %v4895
        %5361 = vmatprep.subr.bf16.mxu0 %v4904
        %5362 = vmatpush1.bf16.msra.mxu0 %v4903
        %5363 = vmatprep.subr.bf16.mxu0 %v4912
        %5364 = vmatpush1.bf16.msra.mxu0 %v4911
        %5365 = vmatprep.subr.bf16.mxu0 %v4920
        %5366 = vmatpush1.bf16.msra.mxu0 %v4919
        %5367 = vmatprep.subr.bf16.mxu0 %v4928
        %5368 = vmatpush1.bf16.msra.mxu0 %v4927
        %5369 = vmatprep.subr.bf16.mxu0 %v4936
        %5370 = vmatpush1.bf16.msra.mxu0 %v4935
        %5371 = vmatprep.subr.bf16.mxu0 %v4944
        %5372 = vmatpush1.bf16.msra.mxu0 %v4943
        %5373 = vmatprep.subr.bf16.mxu0 %v4952
        %5374 = vmatpush1.bf16.msra.mxu0 %v4951
        %5375 = vmatprep.mubr.bf16.mxu0 %v3702
        %5376 = vmatmul.mubr.bf16.gmra.mrb[0].mxu0 %v3701
        %v5377 = vpop.f32.mrb[0].mxu0
        %v5378 = vadd.f32 %v4026, %v5377
        %v5379 = vpop.f32.mrb[0].mxu0
        %v5380 = vadd.f32 %v4030, %v5379
        %v5381 = vpop.f32.mrb[0].mxu0
        %v5382 = vadd.f32 %v4026, %v5381
        %v5383 = vpop.f32.mrb[0].mxu0
        %v5384 = vadd.f32 %v4030, %v5383
        %5385 = vmatprep.mubr.bf16.mxu0 %v3706
        %5386 = vmatmul.mubr.bf16.gmra.mrb[0].mxu0 %v3705
        %v5387 = vpop.f32.mrb[0].mxu0
        %v5388 = vadd.f32 %v4026, %v5387
        %v5389 = vpop.f32.mrb[0].mxu0
        %v5390 = vadd.f32 %v4030, %v5389
        %v5391 = vpop.f32.mrb[0].mxu0
        %v5392 = vadd.f32 %v4026, %v5391
        %v5393 = vpop.f32.mrb[0].mxu0
        %v5394 = vadd.f32 %v4030, %v5393
        %5395 = vmatprep.mubr.bf16.mxu0 %v3710
        %5396 = vmatmul.mubr.bf16.gmra.mrb[0].mxu0 %v3709
        %v5397 = vpop.f32.mrb[0].mxu0
        %v5398 = vadd.f32 %v4026, %v5397
        %v5399 = vpop.f32.mrb[0].mxu0
        %v5400 = vadd.f32 %v4030, %v5399
        %v5401 = vpop.f32.mrb[0].mxu0
        %v5402 = vadd.f32 %v4026, %v5401
        %v5403 = vpop.f32.mrb[0].mxu0
        %v5404 = vadd.f32 %v4030, %v5403
        %5405 = vmatprep.mubr.bf16.mxu0 %v3714
        %5406 = vmatmul.mubr.bf16.gmra.mrb[0].mxu0 %v3713
        %v5407 = vpop.f32.mrb[0].mxu0
        %v5408 = vadd.f32 %v4026, %v5407
        %v5409 = vpop.f32.mrb[0].mxu0
        %v5410 = vadd.f32 %v4030, %v5409
        %v5411 = vpop.f32.mrb[0].mxu0
        %v5412 = vadd.f32 %v4026, %v5411
        %v5413 = vpop.f32.mrb[0].mxu0
        %v5414 = vadd.f32 %v4030, %v5413
        %5415 = vmatprep.mubr.bf16.mxu0 %v3718
        %5416 = vmatmul.mubr.bf16.gmra.mrb[0].mxu0 %v3717
        %v5417 = vpop.f32.mrb[0].mxu0
        %v5418 = vadd.f32 %v4026, %v5417
        %v5419 = vpop.f32.mrb[0].mxu0
        %v5420 = vadd.f32 %v4030, %v5419
        %v5421 = vpop.f32.mrb[0].mxu0
        %v5422 = vadd.f32 %v4026, %v5421
        %v5423 = vpop.f32.mrb[0].mxu0
        %v5424 = vadd.f32 %v4030, %v5423
        %5425 = vmatprep.mubr.bf16.mxu0 %v3722
        %5426 = vmatmul.mubr.bf16.gmra.mrb[0].mxu0 %v3721
        %v5427 = vpop.f32.mrb[0].mxu0
        %v5428 = vadd.f32 %v4026, %v5427
        %v5429 = vpop.f32.mrb[0].mxu0
        %v5430 = vadd.f32 %v4030, %v5429
        %v5431 = vpop.f32.mrb[0].mxu0
        %v5432 = vadd.f32 %v4026, %v5431
        %v5433 = vpop.f32.mrb[0].mxu0
        %v5434 = vadd.f32 %v4030, %v5433
        %5435 = vmatprep.mubr.bf16.mxu0 %v3726
        %5436 = vmatmul.mubr.bf16.gmra.mrb[0].mxu0 %v3725
        %v5437 = vpop.f32.mrb[0].mxu0
        %v5438 = vadd.f32 %v4026, %v5437
        %v5439 = vpop.f32.mrb[0].mxu0
        %v5440 = vadd.f32 %v4030, %v5439
        %v5441 = vpop.f32.mrb[0].mxu0
        %v5442 = vadd.f32 %v4026, %v5441
        %v5443 = vpop.f32.mrb[0].mxu0
        %v5444 = vadd.f32 %v4030, %v5443
        %5445 = vmatprep.mubr.bf16.mxu0 %v3730
        %5446 = vmatmul.mubr.bf16.gmra.mrb[0].mxu0 %v3729
        %v5447 = vpop.f32.mrb[0].mxu0
        %v5448 = vadd.f32 %v4026, %v5447
        %v5449 = vpop.f32.mrb[0].mxu0
        %v5450 = vadd.f32 %v4030, %v5449
        %v5451 = vpop.f32.mrb[0].mxu0
        %v5452 = vadd.f32 %v4026, %v5451
        %v5453 = vpop.f32.mrb[0].mxu0
        %v5454 = vadd.f32 %v4030, %v5453
        %5455 = vmatprep.mubr.bf16.mxu0 %v3734
        %5456 = vmatmul.mubr.bf16.gmra.mrb[0].mxu0 %v3733
        %v5457 = vpop.f32.mrb[0].mxu0
        %v5458 = vadd.f32 %v4026, %v5457
        %v5459 = vpop.f32.mrb[0].mxu0
        %v5460 = vadd.f32 %v4030, %v5459
        %v5461 = vpop.f32.mrb[0].mxu0
        %v5462 = vadd.f32 %v4026, %v5461
        %v5463 = vpop.f32.mrb[0].mxu0
        %v5464 = vadd.f32 %v4030, %v5463
        %5465 = vmatprep.mubr.bf16.mxu0 %v3738
        %5466 = vmatmul.mubr.bf16.gmra.mrb[0].mxu0 %v3737
        %v5467 = vpop.f32.mrb[0].mxu0
        %v5468 = vadd.f32 %v4026, %v5467
        %v5469 = vpop.f32.mrb[0].mxu0
        %v5470 = vadd.f32 %v4030, %v5469
        %v5471 = vpop.f32.mrb[0].mxu0
        %v5472 = vadd.f32 %v4026, %v5471
        %v5473 = vpop.f32.mrb[0].mxu0
        %v5474 = vadd.f32 %v4030, %v5473
        %5475 = vmatprep.mubr.bf16.mxu0 %v3742
        %5476 = vmatmul.mubr.bf16.gmra.mrb[0].mxu0 %v3741
        %v5477 = vpop.f32.mrb[0].mxu0
        %v5478 = vadd.f32 %v4026, %v5477
        %v5479 = vpop.f32.mrb[0].mxu0
        %v5480 = vadd.f32 %v4030, %v5479
        %v5481 = vpop.f32.mrb[0].mxu0
        %v5482 = vadd.f32 %v4026, %v5481
        %v5483 = vpop.f32.mrb[0].mxu0
        %v5484 = vadd.f32 %v4030, %v5483
        %5485 = vmatprep.mubr.bf16.mxu0 %v3746
        %5486 = vmatmul.mubr.bf16.gmra.mrb[0].mxu0 %v3745
        %v5487 = vpop.f32.mrb[0].mxu0
        %v5488 = vadd.f32 %v4026, %v5487
        %v5489 = vpop.f32.mrb[0].mxu0
        %v5490 = vadd.f32 %v4030, %v5489
        %v5491 = vpop.f32.mrb[0].mxu0
        %v5492 = vadd.f32 %v4026, %v5491
        %v5493 = vpop.f32.mrb[0].mxu0
        %v5494 = vadd.f32 %v4030, %v5493
        %5495 = vmatprep.mubr.bf16.mxu0 %v3750
        %5496 = vmatmul.mubr.bf16.gmra.mrb[0].mxu0 %v3749
        %v5497 = vpop.f32.mrb[0].mxu0
        %v5498 = vadd.f32 %v4026, %v5497
        %v5499 = vpop.f32.mrb[0].mxu0
        %v5500 = vadd.f32 %v4030, %v5499
        %v5501 = vpop.f32.mrb[0].mxu0
        %v5502 = vadd.f32 %v4026, %v5501
        %v5503 = vpop.f32.mrb[0].mxu0
        %v5504 = vadd.f32 %v4030, %v5503
        %5505 = vmatprep.mubr.bf16.mxu0 %v3754
        %5506 = vmatmul.mubr.bf16.gmra.mrb[0].mxu0 %v3753
        %v5507 = vpop.f32.mrb[0].mxu0
        %v5508 = vadd.f32 %v4026, %v5507
        %v5509 = vpop.f32.mrb[0].mxu0
        %v5510 = vadd.f32 %v4030, %v5509
        %v5511 = vpop.f32.mrb[0].mxu0
        %v5512 = vadd.f32 %v4026, %v5511
        %v5513 = vpop.f32.mrb[0].mxu0
        %v5514 = vadd.f32 %v4030, %v5513
        %5515 = vmatprep.mubr.bf16.mxu0 %v3758
        %5516 = vmatmul.mubr.bf16.gmra.mrb[0].mxu0 %v3757
        %v5517 = vpop.f32.mrb[0].mxu0
        %v5518 = vadd.f32 %v4026, %v5517
        %v5519 = vpop.f32.mrb[0].mxu0
        %v5520 = vadd.f32 %v4030, %v5519
        %v5521 = vpop.f32.mrb[0].mxu0
        %v5522 = vadd.f32 %v4026, %v5521
        %v5523 = vpop.f32.mrb[0].mxu0
        %v5524 = vadd.f32 %v4030, %v5523
        %5525 = vmatprep.mubr.bf16.mxu0 %v3762
        %5526 = vmatmul.mubr.bf16.gmra.mrb[0].mxu0 %v3761
        %v5527 = vpop.f32.mrb[0].mxu0
        %v5528 = vadd.f32 %v4026, %v5527
        %v5529 = vpop.f32.mrb[0].mxu0
        %v5530 = vadd.f32 %v4030, %v5529
        %v5531 = vpop.f32.mrb[0].mxu0
        %v5532 = vadd.f32 %v4026, %v5531
        %v5533 = vpop.f32.mrb[0].mxu0
        %v5534 = vadd.f32 %v4030, %v5533
        %5535 = vdwg.mxu0
        %5536 = vmatprep.subr.bf16.mxu0 %v4960
        %5537 = vmatpush1.bf16.msra.mxu0 %v4959
        %5538 = vmatprep.subr.bf16.mxu0 %v4968
        %5539 = vmatpush1.bf16.msra.mxu0 %v4967
        %5540 = vmatprep.subr.bf16.mxu0 %v4976
        %5541 = vmatpush1.bf16.msra.mxu0 %v4975
        %5542 = vmatprep.subr.bf16.mxu0 %v4984
        %5543 = vmatpush1.bf16.msra.mxu0 %v4983
        %5544 = vmatprep.subr.bf16.mxu0 %v4992
        %5545 = vmatpush1.bf16.msra.mxu0 %v4991
        %5546 = vmatprep.subr.bf16.mxu0 %v5000
        %5547 = vmatpush1.bf16.msra.mxu0 %v4999
        %5548 = vmatprep.subr.bf16.mxu0 %v5008
        %5549 = vmatpush1.bf16.msra.mxu0 %v5007
        %5550 = vmatprep.subr.bf16.mxu0 %v5016
        %5551 = vmatpush1.bf16.msra.mxu0 %v5015
        %5552 = vmatprep.subr.bf16.mxu0 %v5024
        %5553 = vmatpush1.bf16.msra.mxu0 %v5023
        %5554 = vmatprep.subr.bf16.mxu0 %v5032
        %5555 = vmatpush1.bf16.msra.mxu0 %v5031
        %5556 = vmatprep.subr.bf16.mxu0 %v5040
        %5557 = vmatpush1.bf16.msra.mxu0 %v5039
        %5558 = vmatprep.subr.bf16.mxu0 %v5048
        %5559 = vmatpush1.bf16.msra.mxu0 %v5047
        %5560 = vmatprep.subr.bf16.mxu0 %v5056
        %5561 = vmatpush1.bf16.msra.mxu0 %v5055
        %5562 = vmatprep.subr.bf16.mxu0 %v5064
        %5563 = vmatpush1.bf16.msra.mxu0 %v5063
        %5564 = vmatprep.subr.bf16.mxu0 %v5072
        %5565 = vmatpush1.bf16.msra.mxu0 %v5071
        %5566 = vmatprep.subr.bf16.mxu0 %v5080
        %5567 = vmatpush1.bf16.msra.mxu0 %v5079
        %5568 = vmatprep.mubr.bf16.mxu0 %v3704
        %5569 = vmatmul.mubr.bf16.gmra.mrb[0].mxu0 %v3703
        %v5570 = vpop.f32.mrb[0].mxu0
        %v5571 = vadd.f32 %v5378, %v5570
        %v5572 = vpop.f32.mrb[0].mxu0
        %v5573 = vadd.f32 %v5380, %v5572
        %v5574 = vpop.f32.mrb[0].mxu0
        %v5575 = vadd.f32 %v5382, %v5574
        %v5576 = vpop.f32.mrb[0].mxu0
        %v5577 = vadd.f32 %v5384, %v5576
        %5578 = vmatprep.mubr.bf16.mxu0 %v3708
        %5579 = vmatmul.mubr.bf16.gmra.mrb[0].mxu0 %v3707
        %v5580 = vpop.f32.mrb[0].mxu0
        %v5581 = vadd.f32 %v5388, %v5580
        %v5582 = vpop.f32.mrb[0].mxu0
        %v5583 = vadd.f32 %v5390, %v5582
        %v5584 = vpop.f32.mrb[0].mxu0
        %v5585 = vadd.f32 %v5392, %v5584
        %v5586 = vpop.f32.mrb[0].mxu0
        %v5587 = vadd.f32 %v5394, %v5586
        %5588 = vmatprep.mubr.bf16.mxu0 %v3712
        %5589 = vmatmul.mubr.bf16.gmra.mrb[0].mxu0 %v3711
        %v5590 = vpop.f32.mrb[0].mxu0
        %v5591 = vadd.f32 %v5398, %v5590
        %v5592 = vpop.f32.mrb[0].mxu0
        %v5593 = vadd.f32 %v5400, %v5592
        %v5594 = vpop.f32.mrb[0].mxu0
        %v5595 = vadd.f32 %v5402, %v5594
        %v5596 = vpop.f32.mrb[0].mxu0
        %v5597 = vadd.f32 %v5404, %v5596
        %5598 = vmatprep.mubr.bf16.mxu0 %v3716
        %5599 = vmatmul.mubr.bf16.gmra.mrb[0].mxu0 %v3715
        %v5600 = vpop.f32.mrb[0].mxu0
        %v5601 = vadd.f32 %v5408, %v5600
        %v5602 = vpop.f32.mrb[0].mxu0
        %v5603 = vadd.f32 %v5410, %v5602
        %v5604 = vpop.f32.mrb[0].mxu0
        %v5605 = vadd.f32 %v5412, %v5604
        %v5606 = vpop.f32.mrb[0].mxu0
        %v5607 = vadd.f32 %v5414, %v5606
        %5608 = vmatprep.mubr.bf16.mxu0 %v3720
        %5609 = vmatmul.mubr.bf16.gmra.mrb[0].mxu0 %v3719
        %v5610 = vpop.f32.mrb[0].mxu0
        %v5611 = vadd.f32 %v5418, %v5610
        %v5612 = vpop.f32.mrb[0].mxu0
        %v5613 = vadd.f32 %v5420, %v5612
        %v5614 = vpop.f32.mrb[0].mxu0
        %v5615 = vadd.f32 %v5422, %v5614
        %v5616 = vpop.f32.mrb[0].mxu0
        %v5617 = vadd.f32 %v5424, %v5616
        %5618 = vmatprep.mubr.bf16.mxu0 %v3724
        %5619 = vmatmul.mubr.bf16.gmra.mrb[0].mxu0 %v3723
        %v5620 = vpop.f32.mrb[0].mxu0
        %v5621 = vadd.f32 %v5428, %v5620
        %v5622 = vpop.f32.mrb[0].mxu0
        %v5623 = vadd.f32 %v5430, %v5622
        %v5624 = vpop.f32.mrb[0].mxu0
        %v5625 = vadd.f32 %v5432, %v5624
        %v5626 = vpop.f32.mrb[0].mxu0
        %v5627 = vadd.f32 %v5434, %v5626
        %5628 = vmatprep.mubr.bf16.mxu0 %v3728
        %5629 = vmatmul.mubr.bf16.gmra.mrb[0].mxu0 %v3727
        %v5630 = vpop.f32.mrb[0].mxu0
        %v5631 = vadd.f32 %v5438, %v5630
        %v5632 = vpop.f32.mrb[0].mxu0
        %v5633 = vadd.f32 %v5440, %v5632
        %v5634 = vpop.f32.mrb[0].mxu0
        %v5635 = vadd.f32 %v5442, %v5634
        %v5636 = vpop.f32.mrb[0].mxu0
        %v5637 = vadd.f32 %v5444, %v5636
        %5638 = vmatprep.mubr.bf16.mxu0 %v3732
        %5639 = vmatmul.mubr.bf16.gmra.mrb[0].mxu0 %v3731
        %v5640 = vpop.f32.mrb[0].mxu0
        %v5641 = vadd.f32 %v5448, %v5640
        %v5642 = vpop.f32.mrb[0].mxu0
        %v5643 = vadd.f32 %v5450, %v5642
        %v5644 = vpop.f32.mrb[0].mxu0
        %v5645 = vadd.f32 %v5452, %v5644
        %v5646 = vpop.f32.mrb[0].mxu0
        %v5647 = vadd.f32 %v5454, %v5646
        %5648 = vmatprep.mubr.bf16.mxu0 %v3736
        %5649 = vmatmul.mubr.bf16.gmra.mrb[0].mxu0 %v3735
        %v5650 = vpop.f32.mrb[0].mxu0
        %v5651 = vadd.f32 %v5458, %v5650
        %v5652 = vpop.f32.mrb[0].mxu0
        %v5653 = vadd.f32 %v5460, %v5652
        %v5654 = vpop.f32.mrb[0].mxu0
        %v5655 = vadd.f32 %v5462, %v5654
        %v5656 = vpop.f32.mrb[0].mxu0
        %v5657 = vadd.f32 %v5464, %v5656
        %5658 = vmatprep.mubr.bf16.mxu0 %v3740
        %5659 = vmatmul.mubr.bf16.gmra.mrb[0].mxu0 %v3739
        %v5660 = vpop.f32.mrb[0].mxu0
        %v5661 = vadd.f32 %v5468, %v5660
        %v5662 = vpop.f32.mrb[0].mxu0
        %v5663 = vadd.f32 %v5470, %v5662
        %v5664 = vpop.f32.mrb[0].mxu0
        %v5665 = vadd.f32 %v5472, %v5664
        %v5666 = vpop.f32.mrb[0].mxu0
        %v5667 = vadd.f32 %v5474, %v5666
        %5668 = vmatprep.mubr.bf16.mxu0 %v3744
        %5669 = vmatmul.mubr.bf16.gmra.mrb[0].mxu0 %v3743
        %v5670 = vpop.f32.mrb[0].mxu0
        %v5671 = vadd.f32 %v5478, %v5670
        %v5672 = vpop.f32.mrb[0].mxu0
        %v5673 = vadd.f32 %v5480, %v5672
        %v5674 = vpop.f32.mrb[0].mxu0
        %v5675 = vadd.f32 %v5482, %v5674
        %v5676 = vpop.f32.mrb[0].mxu0
        %v5677 = vadd.f32 %v5484, %v5676
        %5678 = vmatprep.mubr.bf16.mxu0 %v3748
        %5679 = vmatmul.mubr.bf16.gmra.mrb[0].mxu0 %v3747
        %v5680 = vpop.f32.mrb[0].mxu0
        %v5681 = vadd.f32 %v5488, %v5680
        %v5682 = vpop.f32.mrb[0].mxu0
        %v5683 = vadd.f32 %v5490, %v5682
        %v5684 = vpop.f32.mrb[0].mxu0
        %v5685 = vadd.f32 %v5492, %v5684
        %v5686 = vpop.f32.mrb[0].mxu0
        %v5687 = vadd.f32 %v5494, %v5686
        %5688 = vmatprep.mubr.bf16.mxu0 %v3752
        %5689 = vmatmul.mubr.bf16.gmra.mrb[0].mxu0 %v3751
        %v5690 = vpop.f32.mrb[0].mxu0
        %v5691 = vadd.f32 %v5498, %v5690
        %v5692 = vpop.f32.mrb[0].mxu0
        %v5693 = vadd.f32 %v5500, %v5692
        %v5694 = vpop.f32.mrb[0].mxu0
        %v5695 = vadd.f32 %v5502, %v5694
        %v5696 = vpop.f32.mrb[0].mxu0
        %v5697 = vadd.f32 %v5504, %v5696
        %5698 = vmatprep.mubr.bf16.mxu0 %v3756
        %5699 = vmatmul.mubr.bf16.gmra.mrb[0].mxu0 %v3755
        %v5700 = vpop.f32.mrb[0].mxu0
        %v5701 = vadd.f32 %v5508, %v5700
        %v5702 = vpop.f32.mrb[0].mxu0
        %v5703 = vadd.f32 %v5510, %v5702
        %v5704 = vpop.f32.mrb[0].mxu0
        %v5705 = vadd.f32 %v5512, %v5704
        %v5706 = vpop.f32.mrb[0].mxu0
        %v5707 = vadd.f32 %v5514, %v5706
        %5708 = vmatprep.mubr.bf16.mxu0 %v3760
        %5709 = vmatmul.mubr.bf16.gmra.mrb[0].mxu0 %v3759
        %v5710 = vpop.f32.mrb[0].mxu0
        %v5711 = vadd.f32 %v5518, %v5710
        %v5712 = vpop.f32.mrb[0].mxu0
        %v5713 = vadd.f32 %v5520, %v5712
        %v5714 = vpop.f32.mrb[0].mxu0
        %v5715 = vadd.f32 %v5522, %v5714
        %v5716 = vpop.f32.mrb[0].mxu0
        %v5717 = vadd.f32 %v5524, %v5716
        %5718 = vmatprep.mubr.bf16.mxu0 %v3764
        %5719 = vmatmul.mubr.bf16.gmra.mrb[0].mxu0 %v3763
        %v5720 = vpop.f32.mrb[0].mxu0
        %v5721 = vadd.f32 %v5528, %v5720
        %v5722 = vpop.f32.mrb[0].mxu0
        %v5723 = vadd.f32 %v5530, %v5722
        %v5724 = vpop.f32.mrb[0].mxu0
        %v5725 = vadd.f32 %v5532, %v5724
        %v5726 = vpop.f32.mrb[0].mxu0
        %v5727 = vadd.f32 %v5534, %v5726
        %5728 = vdwg.mxu0
        %5729 = vmatprep.subr.bf16.mxu0 %v4834
        %5730 = vmatpush1.bf16.msra.mxu0 %v4833
        %5731 = vmatprep.subr.bf16.mxu0 %v4842
        %5732 = vmatpush1.bf16.msra.mxu0 %v4841
        %5733 = vmatprep.subr.bf16.mxu0 %v4850
        %5734 = vmatpush1.bf16.msra.mxu0 %v4849
        %5735 = vmatprep.subr.bf16.mxu0 %v4858
        %5736 = vmatpush1.bf16.msra.mxu0 %v4857
        %5737 = vmatprep.subr.bf16.mxu0 %v4866
        %5738 = vmatpush1.bf16.msra.mxu0 %v4865
        %5739 = vmatprep.subr.bf16.mxu0 %v4874
        %5740 = vmatpush1.bf16.msra.mxu0 %v4873
        %5741 = vmatprep.subr.bf16.mxu0 %v4882
        %5742 = vmatpush1.bf16.msra.mxu0 %v4881
        %5743 = vmatprep.subr.bf16.mxu0 %v4890
        %5744 = vmatpush1.bf16.msra.mxu0 %v4889
        %5745 = vmatprep.subr.bf16.mxu0 %v4898
        %5746 = vmatpush1.bf16.msra.mxu0 %v4897
        %5747 = vmatprep.subr.bf16.mxu0 %v4906
        %5748 = vmatpush1.bf16.msra.mxu0 %v4905
        %5749 = vmatprep.subr.bf16.mxu0 %v4914
        %5750 = vmatpush1.bf16.msra.mxu0 %v4913
        %5751 = vmatprep.subr.bf16.mxu0 %v4922
        %5752 = vmatpush1.bf16.msra.mxu0 %v4921
        %5753 = vmatprep.subr.bf16.mxu0 %v4930
        %5754 = vmatpush1.bf16.msra.mxu0 %v4929
        %5755 = vmatprep.subr.bf16.mxu0 %v4938
        %5756 = vmatpush1.bf16.msra.mxu0 %v4937
        %5757 = vmatprep.subr.bf16.mxu0 %v4946
        %5758 = vmatpush1.bf16.msra.mxu0 %v4945
        %5759 = vmatprep.subr.bf16.mxu0 %v4954
        %5760 = vmatpush1.bf16.msra.mxu0 %v4953
        %5761 = vmatprep.mubr.bf16.mxu0 %v3702
        %5762 = vmatmul.mubr.bf16.gmra.mrb[0].mxu0 %v3701
        %v5763 = vpop.f32.mrb[0].mxu0
        %v5764 = vadd.f32 %v4034, %v5763
        %v5765 = vpop.f32.mrb[0].mxu0
        %v5766 = vadd.f32 %v4038, %v5765
        %v5767 = vpop.f32.mrb[0].mxu0
        %v5768 = vadd.f32 %v4034, %v5767
        %v5769 = vpop.f32.mrb[0].mxu0
        %v5770 = vadd.f32 %v4038, %v5769
        %5771 = vmatprep.mubr.bf16.mxu0 %v3706
        %5772 = vmatmul.mubr.bf16.gmra.mrb[0].mxu0 %v3705
        %v5773 = vpop.f32.mrb[0].mxu0
        %v5774 = vadd.f32 %v4034, %v5773
        %v5775 = vpop.f32.mrb[0].mxu0
        %v5776 = vadd.f32 %v4038, %v5775
        %v5777 = vpop.f32.mrb[0].mxu0
        %v5778 = vadd.f32 %v4034, %v5777
        %v5779 = vpop.f32.mrb[0].mxu0
        %v5780 = vadd.f32 %v4038, %v5779
        %5781 = vmatprep.mubr.bf16.mxu0 %v3710
        %5782 = vmatmul.mubr.bf16.gmra.mrb[0].mxu0 %v3709
        %v5783 = vpop.f32.mrb[0].mxu0
        %v5784 = vadd.f32 %v4034, %v5783
        %v5785 = vpop.f32.mrb[0].mxu0
        %v5786 = vadd.f32 %v4038, %v5785
        %v5787 = vpop.f32.mrb[0].mxu0
        %v5788 = vadd.f32 %v4034, %v5787
        %v5789 = vpop.f32.mrb[0].mxu0
        %v5790 = vadd.f32 %v4038, %v5789
        %5791 = vmatprep.mubr.bf16.mxu0 %v3714
        %5792 = vmatmul.mubr.bf16.gmra.mrb[0].mxu0 %v3713
        %v5793 = vpop.f32.mrb[0].mxu0
        %v5794 = vadd.f32 %v4034, %v5793
        %v5795 = vpop.f32.mrb[0].mxu0
        %v5796 = vadd.f32 %v4038, %v5795
        %v5797 = vpop.f32.mrb[0].mxu0
        %v5798 = vadd.f32 %v4034, %v5797
        %v5799 = vpop.f32.mrb[0].mxu0
        %v5800 = vadd.f32 %v4038, %v5799
        %5801 = vmatprep.mubr.bf16.mxu0 %v3718
        %5802 = vmatmul.mubr.bf16.gmra.mrb[0].mxu0 %v3717
        %v5803 = vpop.f32.mrb[0].mxu0
        %v5804 = vadd.f32 %v4034, %v5803
        %v5805 = vpop.f32.mrb[0].mxu0
        %v5806 = vadd.f32 %v4038, %v5805
        %v5807 = vpop.f32.mrb[0].mxu0
        %v5808 = vadd.f32 %v4034, %v5807
        %v5809 = vpop.f32.mrb[0].mxu0
        %v5810 = vadd.f32 %v4038, %v5809
        %5811 = vmatprep.mubr.bf16.mxu0 %v3722
        %5812 = vmatmul.mubr.bf16.gmra.mrb[0].mxu0 %v3721
        %v5813 = vpop.f32.mrb[0].mxu0
        %v5814 = vadd.f32 %v4034, %v5813
        %v5815 = vpop.f32.mrb[0].mxu0
        %v5816 = vadd.f32 %v4038, %v5815
        %v5817 = vpop.f32.mrb[0].mxu0
        %v5818 = vadd.f32 %v4034, %v5817
        %v5819 = vpop.f32.mrb[0].mxu0
        %v5820 = vadd.f32 %v4038, %v5819
        %5821 = vmatprep.mubr.bf16.mxu0 %v3726
        %5822 = vmatmul.mubr.bf16.gmra.mrb[0].mxu0 %v3725
        %v5823 = vpop.f32.mrb[0].mxu0
        %v5824 = vadd.f32 %v4034, %v5823
        %v5825 = vpop.f32.mrb[0].mxu0
        %v5826 = vadd.f32 %v4038, %v5825
        %v5827 = vpop.f32.mrb[0].mxu0
        %v5828 = vadd.f32 %v4034, %v5827
        %v5829 = vpop.f32.mrb[0].mxu0
        %v5830 = vadd.f32 %v4038, %v5829
        %5831 = vmatprep.mubr.bf16.mxu0 %v3730
        %5832 = vmatmul.mubr.bf16.gmra.mrb[0].mxu0 %v3729
        %v5833 = vpop.f32.mrb[0].mxu0
        %v5834 = vadd.f32 %v4034, %v5833
        %v5835 = vpop.f32.mrb[0].mxu0
        %v5836 = vadd.f32 %v4038, %v5835
        %v5837 = vpop.f32.mrb[0].mxu0
        %v5838 = vadd.f32 %v4034, %v5837
        %v5839 = vpop.f32.mrb[0].mxu0
        %v5840 = vadd.f32 %v4038, %v5839
        %5841 = vmatprep.mubr.bf16.mxu0 %v3734
        %5842 = vmatmul.mubr.bf16.gmra.mrb[0].mxu0 %v3733
        %v5843 = vpop.f32.mrb[0].mxu0
        %v5844 = vadd.f32 %v4034, %v5843
        %v5845 = vpop.f32.mrb[0].mxu0
        %v5846 = vadd.f32 %v4038, %v5845
        %v5847 = vpop.f32.mrb[0].mxu0
        %v5848 = vadd.f32 %v4034, %v5847
        %v5849 = vpop.f32.mrb[0].mxu0
        %v5850 = vadd.f32 %v4038, %v5849
        %5851 = vmatprep.mubr.bf16.mxu0 %v3738
        %5852 = vmatmul.mubr.bf16.gmra.mrb[0].mxu0 %v3737
        %v5853 = vpop.f32.mrb[0].mxu0
        %v5854 = vadd.f32 %v4034, %v5853
        %v5855 = vpop.f32.mrb[0].mxu0
        %v5856 = vadd.f32 %v4038, %v5855
        %v5857 = vpop.f32.mrb[0].mxu0
        %v5858 = vadd.f32 %v4034, %v5857
        %v5859 = vpop.f32.mrb[0].mxu0
        %v5860 = vadd.f32 %v4038, %v5859
        %5861 = vmatprep.mubr.bf16.mxu0 %v3742
        %5862 = vmatmul.mubr.bf16.gmra.mrb[0].mxu0 %v3741
        %v5863 = vpop.f32.mrb[0].mxu0
        %v5864 = vadd.f32 %v4034, %v5863
        %v5865 = vpop.f32.mrb[0].mxu0
        %v5866 = vadd.f32 %v4038, %v5865
        %v5867 = vpop.f32.mrb[0].mxu0
        %v5868 = vadd.f32 %v4034, %v5867
        %v5869 = vpop.f32.mrb[0].mxu0
        %v5870 = vadd.f32 %v4038, %v5869
        %5871 = vmatprep.mubr.bf16.mxu0 %v3746
        %5872 = vmatmul.mubr.bf16.gmra.mrb[0].mxu0 %v3745
        %v5873 = vpop.f32.mrb[0].mxu0
        %v5874 = vadd.f32 %v4034, %v5873
        %v5875 = vpop.f32.mrb[0].mxu0
        %v5876 = vadd.f32 %v4038, %v5875
        %v5877 = vpop.f32.mrb[0].mxu0
        %v5878 = vadd.f32 %v4034, %v5877
        %v5879 = vpop.f32.mrb[0].mxu0
        %v5880 = vadd.f32 %v4038, %v5879
        %5881 = vmatprep.mubr.bf16.mxu0 %v3750
        %5882 = vmatmul.mubr.bf16.gmra.mrb[0].mxu0 %v3749
        %v5883 = vpop.f32.mrb[0].mxu0
        %v5884 = vadd.f32 %v4034, %v5883
        %v5885 = vpop.f32.mrb[0].mxu0
        %v5886 = vadd.f32 %v4038, %v5885
        %v5887 = vpop.f32.mrb[0].mxu0
        %v5888 = vadd.f32 %v4034, %v5887
        %v5889 = vpop.f32.mrb[0].mxu0
        %v5890 = vadd.f32 %v4038, %v5889
        %5891 = vmatprep.mubr.bf16.mxu0 %v3754
        %5892 = vmatmul.mubr.bf16.gmra.mrb[0].mxu0 %v3753
        %v5893 = vpop.f32.mrb[0].mxu0
        %v5894 = vadd.f32 %v4034, %v5893
        %v5895 = vpop.f32.mrb[0].mxu0
        %v5896 = vadd.f32 %v4038, %v5895
        %v5897 = vpop.f32.mrb[0].mxu0
        %v5898 = vadd.f32 %v4034, %v5897
        %v5899 = vpop.f32.mrb[0].mxu0
        %v5900 = vadd.f32 %v4038, %v5899
        %5901 = vmatprep.mubr.bf16.mxu0 %v3758
        %5902 = vmatmul.mubr.bf16.gmra.mrb[0].mxu0 %v3757
        %v5903 = vpop.f32.mrb[0].mxu0
        %v5904 = vadd.f32 %v4034, %v5903
        %v5905 = vpop.f32.mrb[0].mxu0
        %v5906 = vadd.f32 %v4038, %v5905
        %v5907 = vpop.f32.mrb[0].mxu0
        %v5908 = vadd.f32 %v4034, %v5907
        %v5909 = vpop.f32.mrb[0].mxu0
        %v5910 = vadd.f32 %v4038, %v5909
        %5911 = vmatprep.mubr.bf16.mxu0 %v3762
        %5912 = vmatmul.mubr.bf16.gmra.mrb[0].mxu0 %v3761
        %v5913 = vpop.f32.mrb[0].mxu0
        %v5914 = vadd.f32 %v4034, %v5913
        %v5915 = vpop.f32.mrb[0].mxu0
        %v5916 = vadd.f32 %v4038, %v5915
        %v5917 = vpop.f32.mrb[0].mxu0
        %v5918 = vadd.f32 %v4034, %v5917
        %v5919 = vpop.f32.mrb[0].mxu0
        %v5920 = vadd.f32 %v4038, %v5919
        %5921 = vdwg.mxu0
        %5922 = vmatprep.subr.bf16.mxu0 %v4962
        %5923 = vmatpush1.bf16.msra.mxu0 %v4961
        %5924 = vmatprep.subr.bf16.mxu0 %v4970
        %5925 = vmatpush1.bf16.msra.mxu0 %v4969
        %5926 = vmatprep.subr.bf16.mxu0 %v4978
        %5927 = vmatpush1.bf16.msra.mxu0 %v4977
        %5928 = vmatprep.subr.bf16.mxu0 %v4986
        %5929 = vmatpush1.bf16.msra.mxu0 %v4985
        %5930 = vmatprep.subr.bf16.mxu0 %v4994
        %5931 = vmatpush1.bf16.msra.mxu0 %v4993
        %5932 = vmatprep.subr.bf16.mxu0 %v5002
        %5933 = vmatpush1.bf16.msra.mxu0 %v5001
        %5934 = vmatprep.subr.bf16.mxu0 %v5010
        %5935 = vmatpush1.bf16.msra.mxu0 %v5009
        %5936 = vmatprep.subr.bf16.mxu0 %v5018
        %5937 = vmatpush1.bf16.msra.mxu0 %v5017
        %5938 = vmatprep.subr.bf16.mxu0 %v5026
        %5939 = vmatpush1.bf16.msra.mxu0 %v5025
        %5940 = vmatprep.subr.bf16.mxu0 %v5034
        %5941 = vmatpush1.bf16.msra.mxu0 %v5033
        %5942 = vmatprep.subr.bf16.mxu0 %v5042
        %5943 = vmatpush1.bf16.msra.mxu0 %v5041
        %5944 = vmatprep.subr.bf16.mxu0 %v5050
        %5945 = vmatpush1.bf16.msra.mxu0 %v5049
        %5946 = vmatprep.subr.bf16.mxu0 %v5058
        %5947 = vmatpush1.bf16.msra.mxu0 %v5057
        %5948 = vmatprep.subr.bf16.mxu0 %v5066
        %5949 = vmatpush1.bf16.msra.mxu0 %v5065
        %5950 = vmatprep.subr.bf16.mxu0 %v5074
        %5951 = vmatpush1.bf16.msra.mxu0 %v5073
        %5952 = vmatprep.subr.bf16.mxu0 %v5082
        %5953 = vmatpush1.bf16.msra.mxu0 %v5081
        %5954 = vmatprep.mubr.bf16.mxu0 %v3704
        %5955 = vmatmul.mubr.bf16.gmra.mrb[0].mxu0 %v3703
        %v5956 = vpop.f32.mrb[0].mxu0
        %v5957 = vadd.f32 %v5764, %v5956
        %v5958 = vpop.f32.mrb[0].mxu0
        %v5959 = vadd.f32 %v5766, %v5958
        %v5960 = vpop.f32.mrb[0].mxu0
        %v5961 = vadd.f32 %v5768, %v5960
        %v5962 = vpop.f32.mrb[0].mxu0
        %v5963 = vadd.f32 %v5770, %v5962
        %5964 = vmatprep.mubr.bf16.mxu0 %v3708
        %5965 = vmatmul.mubr.bf16.gmra.mrb[0].mxu0 %v3707
        %v5966 = vpop.f32.mrb[0].mxu0
        %v5967 = vadd.f32 %v5774, %v5966
        %v5968 = vpop.f32.mrb[0].mxu0
        %v5969 = vadd.f32 %v5776, %v5968
        %v5970 = vpop.f32.mrb[0].mxu0
        %v5971 = vadd.f32 %v5778, %v5970
        %v5972 = vpop.f32.mrb[0].mxu0
        %v5973 = vadd.f32 %v5780, %v5972
        %5974 = vmatprep.mubr.bf16.mxu0 %v3712
        %5975 = vmatmul.mubr.bf16.gmra.mrb[0].mxu0 %v3711
        %v5976 = vpop.f32.mrb[0].mxu0
        %v5977 = vadd.f32 %v5784, %v5976
        %v5978 = vpop.f32.mrb[0].mxu0
        %v5979 = vadd.f32 %v5786, %v5978
        %v5980 = vpop.f32.mrb[0].mxu0
        %v5981 = vadd.f32 %v5788, %v5980
        %v5982 = vpop.f32.mrb[0].mxu0
        %v5983 = vadd.f32 %v5790, %v5982
        %5984 = vmatprep.mubr.bf16.mxu0 %v3716
        %5985 = vmatmul.mubr.bf16.gmra.mrb[0].mxu0 %v3715
        %v5986 = vpop.f32.mrb[0].mxu0
        %v5987 = vadd.f32 %v5794, %v5986
        %v5988 = vpop.f32.mrb[0].mxu0
        %v5989 = vadd.f32 %v5796, %v5988
        %v5990 = vpop.f32.mrb[0].mxu0
        %v5991 = vadd.f32 %v5798, %v5990
        %v5992 = vpop.f32.mrb[0].mxu0
        %v5993 = vadd.f32 %v5800, %v5992
        %5994 = vmatprep.mubr.bf16.mxu0 %v3720
        %5995 = vmatmul.mubr.bf16.gmra.mrb[0].mxu0 %v3719
        %v5996 = vpop.f32.mrb[0].mxu0
        %v5997 = vadd.f32 %v5804, %v5996
        %v5998 = vpop.f32.mrb[0].mxu0
        %v5999 = vadd.f32 %v5806, %v5998
        %v6000 = vpop.f32.mrb[0].mxu0
        %v6001 = vadd.f32 %v5808, %v6000
        %v6002 = vpop.f32.mrb[0].mxu0
        %v6003 = vadd.f32 %v5810, %v6002
        %6004 = vmatprep.mubr.bf16.mxu0 %v3724
        %6005 = vmatmul.mubr.bf16.gmra.mrb[0].mxu0 %v3723
        %v6006 = vpop.f32.mrb[0].mxu0
        %v6007 = vadd.f32 %v5814, %v6006
        %v6008 = vpop.f32.mrb[0].mxu0
        %v6009 = vadd.f32 %v5816, %v6008
        %v6010 = vpop.f32.mrb[0].mxu0
        %v6011 = vadd.f32 %v5818, %v6010
        %v6012 = vpop.f32.mrb[0].mxu0
        %v6013 = vadd.f32 %v5820, %v6012
        %6014 = vmatprep.mubr.bf16.mxu0 %v3728
        %6015 = vmatmul.mubr.bf16.gmra.mrb[0].mxu0 %v3727
        %v6016 = vpop.f32.mrb[0].mxu0
        %v6017 = vadd.f32 %v5824, %v6016
        %v6018 = vpop.f32.mrb[0].mxu0
        %v6019 = vadd.f32 %v5826, %v6018
        %v6020 = vpop.f32.mrb[0].mxu0
        %v6021 = vadd.f32 %v5828, %v6020
        %v6022 = vpop.f32.mrb[0].mxu0
        %v6023 = vadd.f32 %v5830, %v6022
        %6024 = vmatprep.mubr.bf16.mxu0 %v3732
        %6025 = vmatmul.mubr.bf16.gmra.mrb[0].mxu0 %v3731
        %v6026 = vpop.f32.mrb[0].mxu0
        %v6027 = vadd.f32 %v5834, %v6026
        %v6028 = vpop.f32.mrb[0].mxu0
        %v6029 = vadd.f32 %v5836, %v6028
        %v6030 = vpop.f32.mrb[0].mxu0
        %v6031 = vadd.f32 %v5838, %v6030
        %v6032 = vpop.f32.mrb[0].mxu0
        %v6033 = vadd.f32 %v5840, %v6032
        %6034 = vmatprep.mubr.bf16.mxu0 %v3736
        %6035 = vmatmul.mubr.bf16.gmra.mrb[0].mxu0 %v3735
        %v6036 = vpop.f32.mrb[0].mxu0
        %v6037 = vadd.f32 %v5844, %v6036
        %v6038 = vpop.f32.mrb[0].mxu0
        %v6039 = vadd.f32 %v5846, %v6038
        %v6040 = vpop.f32.mrb[0].mxu0
        %v6041 = vadd.f32 %v5848, %v6040
        %v6042 = vpop.f32.mrb[0].mxu0
        %v6043 = vadd.f32 %v5850, %v6042
        %6044 = vmatprep.mubr.bf16.mxu0 %v3740
        %6045 = vmatmul.mubr.bf16.gmra.mrb[0].mxu0 %v3739
        %v6046 = vpop.f32.mrb[0].mxu0
        %v6047 = vadd.f32 %v5854, %v6046
        %v6048 = vpop.f32.mrb[0].mxu0
        %v6049 = vadd.f32 %v5856, %v6048
        %v6050 = vpop.f32.mrb[0].mxu0
        %v6051 = vadd.f32 %v5858, %v6050
        %v6052 = vpop.f32.mrb[0].mxu0
        %v6053 = vadd.f32 %v5860, %v6052
        %6054 = vmatprep.mubr.bf16.mxu0 %v3744
        %6055 = vmatmul.mubr.bf16.gmra.mrb[0].mxu0 %v3743
        %v6056 = vpop.f32.mrb[0].mxu0
        %v6057 = vadd.f32 %v5864, %v6056
        %v6058 = vpop.f32.mrb[0].mxu0
        %v6059 = vadd.f32 %v5866, %v6058
        %v6060 = vpop.f32.mrb[0].mxu0
        %v6061 = vadd.f32 %v5868, %v6060
        %v6062 = vpop.f32.mrb[0].mxu0
        %v6063 = vadd.f32 %v5870, %v6062
        %6064 = vmatprep.mubr.bf16.mxu0 %v3748
        %6065 = vmatmul.mubr.bf16.gmra.mrb[0].mxu0 %v3747
        %v6066 = vpop.f32.mrb[0].mxu0
        %v6067 = vadd.f32 %v5874, %v6066
        %v6068 = vpop.f32.mrb[0].mxu0
        %v6069 = vadd.f32 %v5876, %v6068
        %v6070 = vpop.f32.mrb[0].mxu0
        %v6071 = vadd.f32 %v5878, %v6070
        %v6072 = vpop.f32.mrb[0].mxu0
        %v6073 = vadd.f32 %v5880, %v6072
        %6074 = vmatprep.mubr.bf16.mxu0 %v3752
        %6075 = vmatmul.mubr.bf16.gmra.mrb[0].mxu0 %v3751
        %v6076 = vpop.f32.mrb[0].mxu0
        %v6077 = vadd.f32 %v5884, %v6076
        %v6078 = vpop.f32.mrb[0].mxu0
        %v6079 = vadd.f32 %v5886, %v6078
        %v6080 = vpop.f32.mrb[0].mxu0
        %v6081 = vadd.f32 %v5888, %v6080
        %v6082 = vpop.f32.mrb[0].mxu0
        %v6083 = vadd.f32 %v5890, %v6082
        %6084 = vmatprep.mubr.bf16.mxu0 %v3756
        %6085 = vmatmul.mubr.bf16.gmra.mrb[0].mxu0 %v3755
        %v6086 = vpop.f32.mrb[0].mxu0
        %v6087 = vadd.f32 %v5894, %v6086
        %v6088 = vpop.f32.mrb[0].mxu0
        %v6089 = vadd.f32 %v5896, %v6088
        %v6090 = vpop.f32.mrb[0].mxu0
        %v6091 = vadd.f32 %v5898, %v6090
        %v6092 = vpop.f32.mrb[0].mxu0
        %v6093 = vadd.f32 %v5900, %v6092
        %6094 = vmatprep.mubr.bf16.mxu0 %v3760
        %6095 = vmatmul.mubr.bf16.gmra.mrb[0].mxu0 %v3759
        %v6096 = vpop.f32.mrb[0].mxu0
        %v6097 = vadd.f32 %v5904, %v6096
        %v6098 = vpop.f32.mrb[0].mxu0
        %v6099 = vadd.f32 %v5906, %v6098
        %v6100 = vpop.f32.mrb[0].mxu0
        %v6101 = vadd.f32 %v5908, %v6100
        %v6102 = vpop.f32.mrb[0].mxu0
        %v6103 = vadd.f32 %v5910, %v6102
        %6104 = vmatprep.mubr.bf16.mxu0 %v3764
        %6105 = vmatmul.mubr.bf16.gmra.mrb[0].mxu0 %v3763
        %v6106 = vpop.f32.mrb[0].mxu0
        %v6107 = vadd.f32 %v5914, %v6106
        %v6108 = vpop.f32.mrb[0].mxu0
        %v6109 = vadd.f32 %v5916, %v6108
        %v6110 = vpop.f32.mrb[0].mxu0
        %v6111 = vadd.f32 %v5918, %v6110
        %v6112 = vpop.f32.mrb[0].mxu0
        %v6113 = vadd.f32 %v5920, %v6112
        %6114 = vdwg.mxu0
        %6115 = vmatprep.subr.bf16.mxu0 %v4836
        %6116 = vmatpush1.bf16.msra.mxu0 %v4835
        %6117 = vmatprep.subr.bf16.mxu0 %v4844
        %6118 = vmatpush1.bf16.msra.mxu0 %v4843
        %6119 = vmatprep.subr.bf16.mxu0 %v4852
        %6120 = vmatpush1.bf16.msra.mxu0 %v4851
        %6121 = vmatprep.subr.bf16.mxu0 %v4860
        %6122 = vmatpush1.bf16.msra.mxu0 %v4859
        %6123 = vmatprep.subr.bf16.mxu0 %v4868
        %6124 = vmatpush1.bf16.msra.mxu0 %v4867
        %6125 = vmatprep.subr.bf16.mxu0 %v4876
        %6126 = vmatpush1.bf16.msra.mxu0 %v4875
        %6127 = vmatprep.subr.bf16.mxu0 %v4884
        %6128 = vmatpush1.bf16.msra.mxu0 %v4883
        %6129 = vmatprep.subr.bf16.mxu0 %v4892
        %6130 = vmatpush1.bf16.msra.mxu0 %v4891
        %6131 = vmatprep.subr.bf16.mxu0 %v4900
        %6132 = vmatpush1.bf16.msra.mxu0 %v4899
        %6133 = vmatprep.subr.bf16.mxu0 %v4908
        %6134 = vmatpush1.bf16.msra.mxu0 %v4907
        %6135 = vmatprep.subr.bf16.mxu0 %v4916
        %6136 = vmatpush1.bf16.msra.mxu0 %v4915
        %6137 = vmatprep.subr.bf16.mxu0 %v4924
        %6138 = vmatpush1.bf16.msra.mxu0 %v4923
        %6139 = vmatprep.subr.bf16.mxu0 %v4932
        %6140 = vmatpush1.bf16.msra.mxu0 %v4931
        %6141 = vmatprep.subr.bf16.mxu0 %v4940
        %6142 = vmatpush1.bf16.msra.mxu0 %v4939
        %6143 = vmatprep.subr.bf16.mxu0 %v4948
        %6144 = vmatpush1.bf16.msra.mxu0 %v4947
        %6145 = vmatprep.subr.bf16.mxu0 %v4956
        %6146 = vmatpush1.bf16.msra.mxu0 %v4955
        %6147 = vmatprep.mubr.bf16.mxu0 %v3702
        %6148 = vmatmul.mubr.bf16.gmra.mrb[0].mxu0 %v3701
        %v6149 = vpop.f32.mrb[0].mxu0
        %v6150 = vadd.f32 %v4042, %v6149
        %v6151 = vpop.f32.mrb[0].mxu0
        %v6152 = vadd.f32 %v4046, %v6151
        %v6153 = vpop.f32.mrb[0].mxu0
        %v6154 = vadd.f32 %v4042, %v6153
        %v6155 = vpop.f32.mrb[0].mxu0
        %v6156 = vadd.f32 %v4046, %v6155
        %6157 = vmatprep.mubr.bf16.mxu0 %v3706
        %6158 = vmatmul.mubr.bf16.gmra.mrb[0].mxu0 %v3705
        %v6159 = vpop.f32.mrb[0].mxu0
        %v6160 = vadd.f32 %v4042, %v6159
        %v6161 = vpop.f32.mrb[0].mxu0
        %v6162 = vadd.f32 %v4046, %v6161
        %v6163 = vpop.f32.mrb[0].mxu0
        %v6164 = vadd.f32 %v4042, %v6163
        %v6165 = vpop.f32.mrb[0].mxu0
        %v6166 = vadd.f32 %v4046, %v6165
        %6167 = vmatprep.mubr.bf16.mxu0 %v3710
        %6168 = vmatmul.mubr.bf16.gmra.mrb[0].mxu0 %v3709
        %v6169 = vpop.f32.mrb[0].mxu0
        %v6170 = vadd.f32 %v4042, %v6169
        %v6171 = vpop.f32.mrb[0].mxu0
        %v6172 = vadd.f32 %v4046, %v6171
        %v6173 = vpop.f32.mrb[0].mxu0
        %v6174 = vadd.f32 %v4042, %v6173
        %v6175 = vpop.f32.mrb[0].mxu0
        %v6176 = vadd.f32 %v4046, %v6175
        %6177 = vmatprep.mubr.bf16.mxu0 %v3714
        %6178 = vmatmul.mubr.bf16.gmra.mrb[0].mxu0 %v3713
        %v6179 = vpop.f32.mrb[0].mxu0
        %v6180 = vadd.f32 %v4042, %v6179
        %v6181 = vpop.f32.mrb[0].mxu0
        %v6182 = vadd.f32 %v4046, %v6181
        %v6183 = vpop.f32.mrb[0].mxu0
        %v6184 = vadd.f32 %v4042, %v6183
        %v6185 = vpop.f32.mrb[0].mxu0
        %v6186 = vadd.f32 %v4046, %v6185
        %6187 = vmatprep.mubr.bf16.mxu0 %v3718
        %6188 = vmatmul.mubr.bf16.gmra.mrb[0].mxu0 %v3717
        %v6189 = vpop.f32.mrb[0].mxu0
        %v6190 = vadd.f32 %v4042, %v6189
        %v6191 = vpop.f32.mrb[0].mxu0
        %v6192 = vadd.f32 %v4046, %v6191
        %v6193 = vpop.f32.mrb[0].mxu0
        %v6194 = vadd.f32 %v4042, %v6193
        %v6195 = vpop.f32.mrb[0].mxu0
        %v6196 = vadd.f32 %v4046, %v6195
        %6197 = vmatprep.mubr.bf16.mxu0 %v3722
        %6198 = vmatmul.mubr.bf16.gmra.mrb[0].mxu0 %v3721
        %v6199 = vpop.f32.mrb[0].mxu0
        %v6200 = vadd.f32 %v4042, %v6199
        %v6201 = vpop.f32.mrb[0].mxu0
        %v6202 = vadd.f32 %v4046, %v6201
        %v6203 = vpop.f32.mrb[0].mxu0
        %v6204 = vadd.f32 %v4042, %v6203
        %v6205 = vpop.f32.mrb[0].mxu0
        %v6206 = vadd.f32 %v4046, %v6205
        %6207 = vmatprep.mubr.bf16.mxu0 %v3726
        %6208 = vmatmul.mubr.bf16.gmra.mrb[0].mxu0 %v3725
        %v6209 = vpop.f32.mrb[0].mxu0
        %v6210 = vadd.f32 %v4042, %v6209
        %v6211 = vpop.f32.mrb[0].mxu0
        %v6212 = vadd.f32 %v4046, %v6211
        %v6213 = vpop.f32.mrb[0].mxu0
        %v6214 = vadd.f32 %v4042, %v6213
        %v6215 = vpop.f32.mrb[0].mxu0
        %v6216 = vadd.f32 %v4046, %v6215
        %6217 = vmatprep.mubr.bf16.mxu0 %v3730
        %6218 = vmatmul.mubr.bf16.gmra.mrb[0].mxu0 %v3729
        %v6219 = vpop.f32.mrb[0].mxu0
        %v6220 = vadd.f32 %v4042, %v6219
        %v6221 = vpop.f32.mrb[0].mxu0
        %v6222 = vadd.f32 %v4046, %v6221
        %v6223 = vpop.f32.mrb[0].mxu0
        %v6224 = vadd.f32 %v4042, %v6223
        %v6225 = vpop.f32.mrb[0].mxu0
        %v6226 = vadd.f32 %v4046, %v6225
        %6227 = vmatprep.mubr.bf16.mxu0 %v3734
        %6228 = vmatmul.mubr.bf16.gmra.mrb[0].mxu0 %v3733
        %v6229 = vpop.f32.mrb[0].mxu0
        %v6230 = vadd.f32 %v4042, %v6229
        %v6231 = vpop.f32.mrb[0].mxu0
        %v6232 = vadd.f32 %v4046, %v6231
        %v6233 = vpop.f32.mrb[0].mxu0
        %v6234 = vadd.f32 %v4042, %v6233
        %v6235 = vpop.f32.mrb[0].mxu0
        %v6236 = vadd.f32 %v4046, %v6235
        %6237 = vmatprep.mubr.bf16.mxu0 %v3738
        %6238 = vmatmul.mubr.bf16.gmra.mrb[0].mxu0 %v3737
        %v6239 = vpop.f32.mrb[0].mxu0
        %v6240 = vadd.f32 %v4042, %v6239
        %v6241 = vpop.f32.mrb[0].mxu0
        %v6242 = vadd.f32 %v4046, %v6241
        %v6243 = vpop.f32.mrb[0].mxu0
        %v6244 = vadd.f32 %v4042, %v6243
        %v6245 = vpop.f32.mrb[0].mxu0
        %v6246 = vadd.f32 %v4046, %v6245
        %6247 = vmatprep.mubr.bf16.mxu0 %v3742
        %6248 = vmatmul.mubr.bf16.gmra.mrb[0].mxu0 %v3741
        %v6249 = vpop.f32.mrb[0].mxu0
        %v6250 = vadd.f32 %v4042, %v6249
        %v6251 = vpop.f32.mrb[0].mxu0
        %v6252 = vadd.f32 %v4046, %v6251
        %v6253 = vpop.f32.mrb[0].mxu0
        %v6254 = vadd.f32 %v4042, %v6253
        %v6255 = vpop.f32.mrb[0].mxu0
        %v6256 = vadd.f32 %v4046, %v6255
        %6257 = vmatprep.mubr.bf16.mxu0 %v3746
        %6258 = vmatmul.mubr.bf16.gmra.mrb[0].mxu0 %v3745
        %v6259 = vpop.f32.mrb[0].mxu0
        %v6260 = vadd.f32 %v4042, %v6259
        %v6261 = vpop.f32.mrb[0].mxu0
        %v6262 = vadd.f32 %v4046, %v6261
        %v6263 = vpop.f32.mrb[0].mxu0
        %v6264 = vadd.f32 %v4042, %v6263
        %v6265 = vpop.f32.mrb[0].mxu0
        %v6266 = vadd.f32 %v4046, %v6265
        %6267 = vmatprep.mubr.bf16.mxu0 %v3750
        %6268 = vmatmul.mubr.bf16.gmra.mrb[0].mxu0 %v3749
        %v6269 = vpop.f32.mrb[0].mxu0
        %v6270 = vadd.f32 %v4042, %v6269
        %v6271 = vpop.f32.mrb[0].mxu0
        %v6272 = vadd.f32 %v4046, %v6271
        %v6273 = vpop.f32.mrb[0].mxu0
        %v6274 = vadd.f32 %v4042, %v6273
        %v6275 = vpop.f32.mrb[0].mxu0
        %v6276 = vadd.f32 %v4046, %v6275
        %6277 = vmatprep.mubr.bf16.mxu0 %v3754
        %6278 = vmatmul.mubr.bf16.gmra.mrb[0].mxu0 %v3753
        %v6279 = vpop.f32.mrb[0].mxu0
        %v6280 = vadd.f32 %v4042, %v6279
        %v6281 = vpop.f32.mrb[0].mxu0
        %v6282 = vadd.f32 %v4046, %v6281
        %v6283 = vpop.f32.mrb[0].mxu0
        %v6284 = vadd.f32 %v4042, %v6283
        %v6285 = vpop.f32.mrb[0].mxu0
        %v6286 = vadd.f32 %v4046, %v6285
        %6287 = vmatprep.mubr.bf16.mxu0 %v3758
        %6288 = vmatmul.mubr.bf16.gmra.mrb[0].mxu0 %v3757
        %v6289 = vpop.f32.mrb[0].mxu0
        %v6290 = vadd.f32 %v4042, %v6289
        %v6291 = vpop.f32.mrb[0].mxu0
        %v6292 = vadd.f32 %v4046, %v6291
        %v6293 = vpop.f32.mrb[0].mxu0
        %v6294 = vadd.f32 %v4042, %v6293
        %v6295 = vpop.f32.mrb[0].mxu0
        %v6296 = vadd.f32 %v4046, %v6295
        %6297 = vmatprep.mubr.bf16.mxu0 %v3762
        %6298 = vmatmul.mubr.bf16.gmra.mrb[0].mxu0 %v3761
        %v6299 = vpop.f32.mrb[0].mxu0
        %v6300 = vadd.f32 %v4042, %v6299
        %v6301 = vpop.f32.mrb[0].mxu0
        %v6302 = vadd.f32 %v4046, %v6301
        %v6303 = vpop.f32.mrb[0].mxu0
        %v6304 = vadd.f32 %v4042, %v6303
        %v6305 = vpop.f32.mrb[0].mxu0
        %v6306 = vadd.f32 %v4046, %v6305
        %6307 = vdwg.mxu0
        %6308 = vmatprep.subr.bf16.mxu0 %v4964
        %6309 = vmatpush1.bf16.msra.mxu0 %v4963
        %6310 = vmatprep.subr.bf16.mxu0 %v4972
        %6311 = vmatpush1.bf16.msra.mxu0 %v4971
        %6312 = vmatprep.subr.bf16.mxu0 %v4980
        %6313 = vmatpush1.bf16.msra.mxu0 %v4979
        %6314 = vmatprep.subr.bf16.mxu0 %v4988
        %6315 = vmatpush1.bf16.msra.mxu0 %v4987
        %6316 = vmatprep.subr.bf16.mxu0 %v4996
        %6317 = vmatpush1.bf16.msra.mxu0 %v4995
        %6318 = vmatprep.subr.bf16.mxu0 %v5004
        %6319 = vmatpush1.bf16.msra.mxu0 %v5003
        %6320 = vmatprep.subr.bf16.mxu0 %v5012
        %6321 = vmatpush1.bf16.msra.mxu0 %v5011
        %6322 = vmatprep.subr.bf16.mxu0 %v5020
        %6323 = vmatpush1.bf16.msra.mxu0 %v5019
        %6324 = vmatprep.subr.bf16.mxu0 %v5028
        %6325 = vmatpush1.bf16.msra.mxu0 %v5027
        %6326 = vmatprep.subr.bf16.mxu0 %v5036
        %6327 = vmatpush1.bf16.msra.mxu0 %v5035
        %6328 = vmatprep.subr.bf16.mxu0 %v5044
        %6329 = vmatpush1.bf16.msra.mxu0 %v5043
        %6330 = vmatprep.subr.bf16.mxu0 %v5052
        %6331 = vmatpush1.bf16.msra.mxu0 %v5051
        %6332 = vmatprep.subr.bf16.mxu0 %v5060
        %6333 = vmatpush1.bf16.msra.mxu0 %v5059
        %6334 = vmatprep.subr.bf16.mxu0 %v5068
        %6335 = vmatpush1.bf16.msra.mxu0 %v5067
        %6336 = vmatprep.subr.bf16.mxu0 %v5076
        %6337 = vmatpush1.bf16.msra.mxu0 %v5075
        %6338 = vmatprep.subr.bf16.mxu0 %v5084
        %6339 = vmatpush1.bf16.msra.mxu0 %v5083
        %6340 = vmatprep.mubr.bf16.mxu0 %v3704
        %6341 = vmatmul.mubr.bf16.gmra.mrb[0].mxu0 %v3703
        %v6342 = vpop.f32.mrb[0].mxu0
        %v6343 = vadd.f32 %v6150, %v6342
        %v6344 = vpop.f32.mrb[0].mxu0
        %v6345 = vadd.f32 %v6152, %v6344
        %v6346 = vpop.f32.mrb[0].mxu0
        %v6347 = vadd.f32 %v6154, %v6346
        %v6348 = vpop.f32.mrb[0].mxu0
        %v6349 = vadd.f32 %v6156, %v6348
        %6350 = vmatprep.mubr.bf16.mxu0 %v3708
        %6351 = vmatmul.mubr.bf16.gmra.mrb[0].mxu0 %v3707
        %v6352 = vpop.f32.mrb[0].mxu0
        %v6353 = vadd.f32 %v6160, %v6352
        %v6354 = vpop.f32.mrb[0].mxu0
        %v6355 = vadd.f32 %v6162, %v6354
        %v6356 = vpop.f32.mrb[0].mxu0
        %v6357 = vadd.f32 %v6164, %v6356
        %v6358 = vpop.f32.mrb[0].mxu0
        %v6359 = vadd.f32 %v6166, %v6358
        %6360 = vmatprep.mubr.bf16.mxu0 %v3712
        %6361 = vmatmul.mubr.bf16.gmra.mrb[0].mxu0 %v3711
        %v6362 = vpop.f32.mrb[0].mxu0
        %v6363 = vadd.f32 %v6170, %v6362
        %v6364 = vpop.f32.mrb[0].mxu0
        %v6365 = vadd.f32 %v6172, %v6364
        %v6366 = vpop.f32.mrb[0].mxu0
        %v6367 = vadd.f32 %v6174, %v6366
        %v6368 = vpop.f32.mrb[0].mxu0
        %v6369 = vadd.f32 %v6176, %v6368
        %6370 = vmatprep.mubr.bf16.mxu0 %v3716
        %6371 = vmatmul.mubr.bf16.gmra.mrb[0].mxu0 %v3715
        %v6372 = vpop.f32.mrb[0].mxu0
        %v6373 = vadd.f32 %v6180, %v6372
        %v6374 = vpop.f32.mrb[0].mxu0
        %v6375 = vadd.f32 %v6182, %v6374
        %v6376 = vpop.f32.mrb[0].mxu0
        %v6377 = vadd.f32 %v6184, %v6376
        %v6378 = vpop.f32.mrb[0].mxu0
        %v6379 = vadd.f32 %v6186, %v6378
        %6380 = vmatprep.mubr.bf16.mxu0 %v3720
        %6381 = vmatmul.mubr.bf16.gmra.mrb[0].mxu0 %v3719
        %v6382 = vpop.f32.mrb[0].mxu0
        %v6383 = vadd.f32 %v6190, %v6382
        %v6384 = vpop.f32.mrb[0].mxu0
        %v6385 = vadd.f32 %v6192, %v6384
        %v6386 = vpop.f32.mrb[0].mxu0
        %v6387 = vadd.f32 %v6194, %v6386
        %v6388 = vpop.f32.mrb[0].mxu0
        %v6389 = vadd.f32 %v6196, %v6388
        %6390 = vmatprep.mubr.bf16.mxu0 %v3724
        %6391 = vmatmul.mubr.bf16.gmra.mrb[0].mxu0 %v3723
        %v6392 = vpop.f32.mrb[0].mxu0
        %v6393 = vadd.f32 %v6200, %v6392
        %v6394 = vpop.f32.mrb[0].mxu0
        %v6395 = vadd.f32 %v6202, %v6394
        %v6396 = vpop.f32.mrb[0].mxu0
        %v6397 = vadd.f32 %v6204, %v6396
        %v6398 = vpop.f32.mrb[0].mxu0
        %v6399 = vadd.f32 %v6206, %v6398
        %6400 = vmatprep.mubr.bf16.mxu0 %v3728
        %6401 = vmatmul.mubr.bf16.gmra.mrb[0].mxu0 %v3727
        %v6402 = vpop.f32.mrb[0].mxu0
        %v6403 = vadd.f32 %v6210, %v6402
        %v6404 = vpop.f32.mrb[0].mxu0
        %v6405 = vadd.f32 %v6212, %v6404
        %v6406 = vpop.f32.mrb[0].mxu0
        %v6407 = vadd.f32 %v6214, %v6406
        %v6408 = vpop.f32.mrb[0].mxu0
        %v6409 = vadd.f32 %v6216, %v6408
        %6410 = vmatprep.mubr.bf16.mxu0 %v3732
        %6411 = vmatmul.mubr.bf16.gmra.mrb[0].mxu0 %v3731
        %v6412 = vpop.f32.mrb[0].mxu0
        %v6413 = vadd.f32 %v6220, %v6412
        %v6414 = vpop.f32.mrb[0].mxu0
        %v6415 = vadd.f32 %v6222, %v6414
        %v6416 = vpop.f32.mrb[0].mxu0
        %v6417 = vadd.f32 %v6224, %v6416
        %v6418 = vpop.f32.mrb[0].mxu0
        %v6419 = vadd.f32 %v6226, %v6418
        %6420 = vmatprep.mubr.bf16.mxu0 %v3736
        %6421 = vmatmul.mubr.bf16.gmra.mrb[0].mxu0 %v3735
        %v6422 = vpop.f32.mrb[0].mxu0
        %v6423 = vadd.f32 %v6230, %v6422
        %v6424 = vpop.f32.mrb[0].mxu0
        %v6425 = vadd.f32 %v6232, %v6424
        %v6426 = vpop.f32.mrb[0].mxu0
        %v6427 = vadd.f32 %v6234, %v6426
        %v6428 = vpop.f32.mrb[0].mxu0
        %v6429 = vadd.f32 %v6236, %v6428
        %6430 = vmatprep.mubr.bf16.mxu0 %v3740
        %6431 = vmatmul.mubr.bf16.gmra.mrb[0].mxu0 %v3739
        %v6432 = vpop.f32.mrb[0].mxu0
        %v6433 = vadd.f32 %v6240, %v6432
        %v6434 = vpop.f32.mrb[0].mxu0
        %v6435 = vadd.f32 %v6242, %v6434
        %v6436 = vpop.f32.mrb[0].mxu0
        %v6437 = vadd.f32 %v6244, %v6436
        %v6438 = vpop.f32.mrb[0].mxu0
        %v6439 = vadd.f32 %v6246, %v6438
        %6440 = vmatprep.mubr.bf16.mxu0 %v3744
        %6441 = vmatmul.mubr.bf16.gmra.mrb[0].mxu0 %v3743
        %v6442 = vpop.f32.mrb[0].mxu0
        %v6443 = vadd.f32 %v6250, %v6442
        %v6444 = vpop.f32.mrb[0].mxu0
        %v6445 = vadd.f32 %v6252, %v6444
        %v6446 = vpop.f32.mrb[0].mxu0
        %v6447 = vadd.f32 %v6254, %v6446
        %v6448 = vpop.f32.mrb[0].mxu0
        %v6449 = vadd.f32 %v6256, %v6448
        %6450 = vmatprep.mubr.bf16.mxu0 %v3748
        %6451 = vmatmul.mubr.bf16.gmra.mrb[0].mxu0 %v3747
        %v6452 = vpop.f32.mrb[0].mxu0
        %v6453 = vadd.f32 %v6260, %v6452
        %v6454 = vpop.f32.mrb[0].mxu0
        %v6455 = vadd.f32 %v6262, %v6454
        %v6456 = vpop.f32.mrb[0].mxu0
        %v6457 = vadd.f32 %v6264, %v6456
        %v6458 = vpop.f32.mrb[0].mxu0
        %v6459 = vadd.f32 %v6266, %v6458
        %6460 = vmatprep.mubr.bf16.mxu0 %v3752
        %6461 = vmatmul.mubr.bf16.gmra.mrb[0].mxu0 %v3751
        %v6462 = vpop.f32.mrb[0].mxu0
        %v6463 = vadd.f32 %v6270, %v6462
        %v6464 = vpop.f32.mrb[0].mxu0
        %v6465 = vadd.f32 %v6272, %v6464
        %v6466 = vpop.f32.mrb[0].mxu0
        %v6467 = vadd.f32 %v6274, %v6466
        %v6468 = vpop.f32.mrb[0].mxu0
        %v6469 = vadd.f32 %v6276, %v6468
        %6470 = vmatprep.mubr.bf16.mxu0 %v3756
        %6471 = vmatmul.mubr.bf16.gmra.mrb[0].mxu0 %v3755
        %v6472 = vpop.f32.mrb[0].mxu0
        %v6473 = vadd.f32 %v6280, %v6472
        %v6474 = vpop.f32.mrb[0].mxu0
        %v6475 = vadd.f32 %v6282, %v6474
        %v6476 = vpop.f32.mrb[0].mxu0
        %v6477 = vadd.f32 %v6284, %v6476
        %v6478 = vpop.f32.mrb[0].mxu0
        %v6479 = vadd.f32 %v6286, %v6478
        %6480 = vmatprep.mubr.bf16.mxu0 %v3760
        %6481 = vmatmul.mubr.bf16.gmra.mrb[0].mxu0 %v3759
        %v6482 = vpop.f32.mrb[0].mxu0
        %v6483 = vadd.f32 %v6290, %v6482
        %v6484 = vpop.f32.mrb[0].mxu0
        %v6485 = vadd.f32 %v6292, %v6484
        %v6486 = vpop.f32.mrb[0].mxu0
        %v6487 = vadd.f32 %v6294, %v6486
        %v6488 = vpop.f32.mrb[0].mxu0
        %v6489 = vadd.f32 %v6296, %v6488
        %6490 = vmatprep.mubr.bf16.mxu0 %v3764
        %6491 = vmatmul.mubr.bf16.gmra.mrb[0].mxu0 %v3763
        %v6492 = vpop.f32.mrb[0].mxu0
        %v6493 = vadd.f32 %v6300, %v6492
        %v6494 = vpop.f32.mrb[0].mxu0
        %v6495 = vadd.f32 %v6302, %v6494
        %v6496 = vpop.f32.mrb[0].mxu0
        %v6497 = vadd.f32 %v6304, %v6496
        %v6498 = vpop.f32.mrb[0].mxu0
        %v6499 = vadd.f32 %v6306, %v6498
        %6500 = vdwg.mxu0
        %6501 = vmatprep.subr.bf16.mxu0 %v4838
        %6502 = vmatpush1.bf16.msra.mxu0 %v4837
        %6503 = vmatprep.subr.bf16.mxu0 %v4846
        %6504 = vmatpush1.bf16.msra.mxu0 %v4845
        %6505 = vmatprep.subr.bf16.mxu0 %v4854
        %6506 = vmatpush1.bf16.msra.mxu0 %v4853
        %6507 = vmatprep.subr.bf16.mxu0 %v4862
        %6508 = vmatpush1.bf16.msra.mxu0 %v4861
        %6509 = vmatprep.subr.bf16.mxu0 %v4870
        %6510 = vmatpush1.bf16.msra.mxu0 %v4869
        %6511 = vmatprep.subr.bf16.mxu0 %v4878
        %6512 = vmatpush1.bf16.msra.mxu0 %v4877
        %6513 = vmatprep.subr.bf16.mxu0 %v4886
        %6514 = vmatpush1.bf16.msra.mxu0 %v4885
        %6515 = vmatprep.subr.bf16.mxu0 %v4894
        %6516 = vmatpush1.bf16.msra.mxu0 %v4893
        %6517 = vmatprep.subr.bf16.mxu0 %v4902
        %6518 = vmatpush1.bf16.msra.mxu0 %v4901
        %6519 = vmatprep.subr.bf16.mxu0 %v4910
        %6520 = vmatpush1.bf16.msra.mxu0 %v4909
        %6521 = vmatprep.subr.bf16.mxu0 %v4918
        %6522 = vmatpush1.bf16.msra.mxu0 %v4917
        %6523 = vmatprep.subr.bf16.mxu0 %v4926
        %6524 = vmatpush1.bf16.msra.mxu0 %v4925
        %6525 = vmatprep.subr.bf16.mxu0 %v4934
        %6526 = vmatpush1.bf16.msra.mxu0 %v4933
        %6527 = vmatprep.subr.bf16.mxu0 %v4942
        %6528 = vmatpush1.bf16.msra.mxu0 %v4941
        %6529 = vmatprep.subr.bf16.mxu0 %v4950
        %6530 = vmatpush1.bf16.msra.mxu0 %v4949
        %6531 = vmatprep.subr.bf16.mxu0 %v4958
        %6532 = vmatpush1.bf16.msra.mxu0 %v4957
        %6533 = vmatprep.mubr.bf16.mxu0 %v3702
        %6534 = vmatmul.mubr.bf16.gmra.mrb[0].mxu0 %v3701
        %v6535 = vpop.f32.mrb[0].mxu0
        %v6536 = vadd.f32 %v4050, %v6535
        %v6537 = vpop.f32.mrb[0].mxu0
        %v6538 = vadd.f32 %v4054, %v6537
        %v6539 = vpop.f32.mrb[0].mxu0
        %v6540 = vadd.f32 %v4050, %v6539
        %v6541 = vpop.f32.mrb[0].mxu0
        %v6542 = vadd.f32 %v4054, %v6541
        %6543 = vmatprep.mubr.bf16.mxu0 %v3706
        %6544 = vmatmul.mubr.bf16.gmra.mrb[0].mxu0 %v3705
        %v6545 = vpop.f32.mrb[0].mxu0
        %v6546 = vadd.f32 %v4050, %v6545
        %v6547 = vpop.f32.mrb[0].mxu0
        %v6548 = vadd.f32 %v4054, %v6547
        %v6549 = vpop.f32.mrb[0].mxu0
        %v6550 = vadd.f32 %v4050, %v6549
        %v6551 = vpop.f32.mrb[0].mxu0
        %v6552 = vadd.f32 %v4054, %v6551
        %6553 = vmatprep.mubr.bf16.mxu0 %v3710
        %6554 = vmatmul.mubr.bf16.gmra.mrb[0].mxu0 %v3709
        %v6555 = vpop.f32.mrb[0].mxu0
        %v6556 = vadd.f32 %v4050, %v6555
        %v6557 = vpop.f32.mrb[0].mxu0
        %v6558 = vadd.f32 %v4054, %v6557
        %v6559 = vpop.f32.mrb[0].mxu0
        %v6560 = vadd.f32 %v4050, %v6559
        %v6561 = vpop.f32.mrb[0].mxu0
        %v6562 = vadd.f32 %v4054, %v6561
        %6563 = vmatprep.mubr.bf16.mxu0 %v3714
        %6564 = vmatmul.mubr.bf16.gmra.mrb[0].mxu0 %v3713
        %v6565 = vpop.f32.mrb[0].mxu0
        %v6566 = vadd.f32 %v4050, %v6565
        %v6567 = vpop.f32.mrb[0].mxu0
        %v6568 = vadd.f32 %v4054, %v6567
        %v6569 = vpop.f32.mrb[0].mxu0
        %v6570 = vadd.f32 %v4050, %v6569
        %v6571 = vpop.f32.mrb[0].mxu0
        %v6572 = vadd.f32 %v4054, %v6571
        %6573 = vmatprep.mubr.bf16.mxu0 %v3718
        %6574 = vmatmul.mubr.bf16.gmra.mrb[0].mxu0 %v3717
        %v6575 = vpop.f32.mrb[0].mxu0
        %v6576 = vadd.f32 %v4050, %v6575
        %v6577 = vpop.f32.mrb[0].mxu0
        %v6578 = vadd.f32 %v4054, %v6577
        %v6579 = vpop.f32.mrb[0].mxu0
        %v6580 = vadd.f32 %v4050, %v6579
        %v6581 = vpop.f32.mrb[0].mxu0
        %v6582 = vadd.f32 %v4054, %v6581
        %6583 = vmatprep.mubr.bf16.mxu0 %v3722
        %6584 = vmatmul.mubr.bf16.gmra.mrb[0].mxu0 %v3721
        %v6585 = vpop.f32.mrb[0].mxu0
        %v6586 = vadd.f32 %v4050, %v6585
        %v6587 = vpop.f32.mrb[0].mxu0
        %v6588 = vadd.f32 %v4054, %v6587
        %v6589 = vpop.f32.mrb[0].mxu0
        %v6590 = vadd.f32 %v4050, %v6589
        %v6591 = vpop.f32.mrb[0].mxu0
        %v6592 = vadd.f32 %v4054, %v6591
        %6593 = vmatprep.mubr.bf16.mxu0 %v3726
        %6594 = vmatmul.mubr.bf16.gmra.mrb[0].mxu0 %v3725
        %v6595 = vpop.f32.mrb[0].mxu0
        %v6596 = vadd.f32 %v4050, %v6595
        %v6597 = vpop.f32.mrb[0].mxu0
        %v6598 = vadd.f32 %v4054, %v6597
        %v6599 = vpop.f32.mrb[0].mxu0
        %v6600 = vadd.f32 %v4050, %v6599
        %v6601 = vpop.f32.mrb[0].mxu0
        %v6602 = vadd.f32 %v4054, %v6601
        %6603 = vmatprep.mubr.bf16.mxu0 %v3730
        %6604 = vmatmul.mubr.bf16.gmra.mrb[0].mxu0 %v3729
        %v6605 = vpop.f32.mrb[0].mxu0
        %v6606 = vadd.f32 %v4050, %v6605
        %v6607 = vpop.f32.mrb[0].mxu0
        %v6608 = vadd.f32 %v4054, %v6607
        %v6609 = vpop.f32.mrb[0].mxu0
        %v6610 = vadd.f32 %v4050, %v6609
        %v6611 = vpop.f32.mrb[0].mxu0
        %v6612 = vadd.f32 %v4054, %v6611
        %6613 = vmatprep.mubr.bf16.mxu0 %v3734
        %6614 = vmatmul.mubr.bf16.gmra.mrb[0].mxu0 %v3733
        %v6615 = vpop.f32.mrb[0].mxu0
        %v6616 = vadd.f32 %v4050, %v6615
        %v6617 = vpop.f32.mrb[0].mxu0
        %v6618 = vadd.f32 %v4054, %v6617
        %v6619 = vpop.f32.mrb[0].mxu0
        %v6620 = vadd.f32 %v4050, %v6619
        %v6621 = vpop.f32.mrb[0].mxu0
        %v6622 = vadd.f32 %v4054, %v6621
        %6623 = vmatprep.mubr.bf16.mxu0 %v3738
        %6624 = vmatmul.mubr.bf16.gmra.mrb[0].mxu0 %v3737
        %v6625 = vpop.f32.mrb[0].mxu0
        %v6626 = vadd.f32 %v4050, %v6625
        %v6627 = vpop.f32.mrb[0].mxu0
        %v6628 = vadd.f32 %v4054, %v6627
        %v6629 = vpop.f32.mrb[0].mxu0
        %v6630 = vadd.f32 %v4050, %v6629
        %v6631 = vpop.f32.mrb[0].mxu0
        %v6632 = vadd.f32 %v4054, %v6631
        %6633 = vmatprep.mubr.bf16.mxu0 %v3742
        %6634 = vmatmul.mubr.bf16.gmra.mrb[0].mxu0 %v3741
        %v6635 = vpop.f32.mrb[0].mxu0
        %v6636 = vadd.f32 %v4050, %v6635
        %v6637 = vpop.f32.mrb[0].mxu0
        %v6638 = vadd.f32 %v4054, %v6637
        %v6639 = vpop.f32.mrb[0].mxu0
        %v6640 = vadd.f32 %v4050, %v6639
        %v6641 = vpop.f32.mrb[0].mxu0
        %v6642 = vadd.f32 %v4054, %v6641
        %6643 = vmatprep.mubr.bf16.mxu0 %v3746
        %6644 = vmatmul.mubr.bf16.gmra.mrb[0].mxu0 %v3745
        %v6645 = vpop.f32.mrb[0].mxu0
        %v6646 = vadd.f32 %v4050, %v6645
        %v6647 = vpop.f32.mrb[0].mxu0
        %v6648 = vadd.f32 %v4054, %v6647
        %v6649 = vpop.f32.mrb[0].mxu0
        %v6650 = vadd.f32 %v4050, %v6649
        %v6651 = vpop.f32.mrb[0].mxu0
        %v6652 = vadd.f32 %v4054, %v6651
        %6653 = vmatprep.mubr.bf16.mxu0 %v3750
        %6654 = vmatmul.mubr.bf16.gmra.mrb[0].mxu0 %v3749
        %v6655 = vpop.f32.mrb[0].mxu0
        %v6656 = vadd.f32 %v4050, %v6655
        %v6657 = vpop.f32.mrb[0].mxu0
        %v6658 = vadd.f32 %v4054, %v6657
        %v6659 = vpop.f32.mrb[0].mxu0
        %v6660 = vadd.f32 %v4050, %v6659
        %v6661 = vpop.f32.mrb[0].mxu0
        %v6662 = vadd.f32 %v4054, %v6661
        %6663 = vmatprep.mubr.bf16.mxu0 %v3754
        %6664 = vmatmul.mubr.bf16.gmra.mrb[0].mxu0 %v3753
        %v6665 = vpop.f32.mrb[0].mxu0
        %v6666 = vadd.f32 %v4050, %v6665
        %v6667 = vpop.f32.mrb[0].mxu0
        %v6668 = vadd.f32 %v4054, %v6667
        %v6669 = vpop.f32.mrb[0].mxu0
        %v6670 = vadd.f32 %v4050, %v6669
        %v6671 = vpop.f32.mrb[0].mxu0
        %v6672 = vadd.f32 %v4054, %v6671
        %6673 = vmatprep.mubr.bf16.mxu0 %v3758
        %6674 = vmatmul.mubr.bf16.gmra.mrb[0].mxu0 %v3757
        %v6675 = vpop.f32.mrb[0].mxu0
        %v6676 = vadd.f32 %v4050, %v6675
        %v6677 = vpop.f32.mrb[0].mxu0
        %v6678 = vadd.f32 %v4054, %v6677
        %v6679 = vpop.f32.mrb[0].mxu0
        %v6680 = vadd.f32 %v4050, %v6679
        %v6681 = vpop.f32.mrb[0].mxu0
        %v6682 = vadd.f32 %v4054, %v6681
        %6683 = vmatprep.mubr.bf16.mxu0 %v3762
        %6684 = vmatmul.mubr.bf16.gmra.mrb[0].mxu0 %v3761
        %v6685 = vpop.f32.mrb[0].mxu0
        %v6686 = vadd.f32 %v4050, %v6685
        %v6687 = vpop.f32.mrb[0].mxu0
        %v6688 = vadd.f32 %v4054, %v6687
        %v6689 = vpop.f32.mrb[0].mxu0
        %v6690 = vadd.f32 %v4050, %v6689
        %v6691 = vpop.f32.mrb[0].mxu0
        %v6692 = vadd.f32 %v4054, %v6691
        %6693 = vdwg.mxu0
        %6694 = vmatprep.subr.bf16.mxu0 %v4966
        %6695 = vmatpush1.bf16.msra.mxu0 %v4965
        %6696 = vmatprep.subr.bf16.mxu0 %v4974
        %6697 = vmatpush1.bf16.msra.mxu0 %v4973
        %6698 = vmatprep.subr.bf16.mxu0 %v4982
        %6699 = vmatpush1.bf16.msra.mxu0 %v4981
        %6700 = vmatprep.subr.bf16.mxu0 %v4990
        %6701 = vmatpush1.bf16.msra.mxu0 %v4989
        %6702 = vmatprep.subr.bf16.mxu0 %v4998
        %6703 = vmatpush1.bf16.msra.mxu0 %v4997
        %6704 = vmatprep.subr.bf16.mxu0 %v5006
        %6705 = vmatpush1.bf16.msra.mxu0 %v5005
        %6706 = vmatprep.subr.bf16.mxu0 %v5014
        %6707 = vmatpush1.bf16.msra.mxu0 %v5013
        %6708 = vmatprep.subr.bf16.mxu0 %v5022
        %6709 = vmatpush1.bf16.msra.mxu0 %v5021
        %6710 = vmatprep.subr.bf16.mxu0 %v5030
        %6711 = vmatpush1.bf16.msra.mxu0 %v5029
        %6712 = vmatprep.subr.bf16.mxu0 %v5038
        %6713 = vmatpush1.bf16.msra.mxu0 %v5037
        %6714 = vmatprep.subr.bf16.mxu0 %v5046
        %6715 = vmatpush1.bf16.msra.mxu0 %v5045
        %6716 = vmatprep.subr.bf16.mxu0 %v5054
        %6717 = vmatpush1.bf16.msra.mxu0 %v5053
        %6718 = vmatprep.subr.bf16.mxu0 %v5062
        %6719 = vmatpush1.bf16.msra.mxu0 %v5061
        %6720 = vmatprep.subr.bf16.mxu0 %v5070
        %6721 = vmatpush1.bf16.msra.mxu0 %v5069
        %6722 = vmatprep.subr.bf16.mxu0 %v5078
        %6723 = vmatpush1.bf16.msra.mxu0 %v5077
        %6724 = vmatprep.subr.bf16.mxu0 %v5086
        %6725 = vmatpush1.bf16.msra.mxu0 %v5085
        %6726 = vmatprep.mubr.bf16.mxu0 %v3704
        %6727 = vmatmul.mubr.bf16.gmra.mrb[0].mxu0 %v3703
        %v6728 = vpop.f32.mrb[0].mxu0
        %v6729 = vadd.f32 %v6536, %v6728
        %v6730 = vpop.f32.mrb[0].mxu0
        %v6731 = vadd.f32 %v6538, %v6730
        %v6732 = vpop.f32.mrb[0].mxu0
        %v6733 = vadd.f32 %v6540, %v6732
        %v6734 = vpop.f32.mrb[0].mxu0
        %v6735 = vadd.f32 %v6542, %v6734
        %6736 = vmatprep.mubr.bf16.mxu0 %v3708
        %6737 = vmatmul.mubr.bf16.gmra.mrb[0].mxu0 %v3707
        %v6738 = vpop.f32.mrb[0].mxu0
        %v6739 = vadd.f32 %v6546, %v6738
        %v6740 = vpop.f32.mrb[0].mxu0
        %v6741 = vadd.f32 %v6548, %v6740
        %v6742 = vpop.f32.mrb[0].mxu0
        %v6743 = vadd.f32 %v6550, %v6742
        %v6744 = vpop.f32.mrb[0].mxu0
        %v6745 = vadd.f32 %v6552, %v6744
        %6746 = vmatprep.mubr.bf16.mxu0 %v3712
        %6747 = vmatmul.mubr.bf16.gmra.mrb[0].mxu0 %v3711
        %v6748 = vpop.f32.mrb[0].mxu0
        %v6749 = vadd.f32 %v6556, %v6748
        %v6750 = vpop.f32.mrb[0].mxu0
        %v6751 = vadd.f32 %v6558, %v6750
        %v6752 = vpop.f32.mrb[0].mxu0
        %v6753 = vadd.f32 %v6560, %v6752
        %v6754 = vpop.f32.mrb[0].mxu0
        %v6755 = vadd.f32 %v6562, %v6754
        %6756 = vmatprep.mubr.bf16.mxu0 %v3716
        %6757 = vmatmul.mubr.bf16.gmra.mrb[0].mxu0 %v3715
        %v6758 = vpop.f32.mrb[0].mxu0
        %v6759 = vadd.f32 %v6566, %v6758
        %v6760 = vpop.f32.mrb[0].mxu0
        %v6761 = vadd.f32 %v6568, %v6760
        %v6762 = vpop.f32.mrb[0].mxu0
        %v6763 = vadd.f32 %v6570, %v6762
        %v6764 = vpop.f32.mrb[0].mxu0
        %v6765 = vadd.f32 %v6572, %v6764
        %6766 = vmatprep.mubr.bf16.mxu0 %v3720
        %6767 = vmatmul.mubr.bf16.gmra.mrb[0].mxu0 %v3719
        %v6768 = vpop.f32.mrb[0].mxu0
        %v6769 = vadd.f32 %v6576, %v6768
        %v6770 = vpop.f32.mrb[0].mxu0
        %v6771 = vadd.f32 %v6578, %v6770
        %v6772 = vpop.f32.mrb[0].mxu0
        %v6773 = vadd.f32 %v6580, %v6772
        %v6774 = vpop.f32.mrb[0].mxu0
        %v6775 = vadd.f32 %v6582, %v6774
        %6776 = vmatprep.mubr.bf16.mxu0 %v3724
        %6777 = vmatmul.mubr.bf16.gmra.mrb[0].mxu0 %v3723
        %v6778 = vpop.f32.mrb[0].mxu0
        %v6779 = vadd.f32 %v6586, %v6778
        %v6780 = vpop.f32.mrb[0].mxu0
        %v6781 = vadd.f32 %v6588, %v6780
        %v6782 = vpop.f32.mrb[0].mxu0
        %v6783 = vadd.f32 %v6590, %v6782
        %v6784 = vpop.f32.mrb[0].mxu0
        %v6785 = vadd.f32 %v6592, %v6784
        %6786 = vmatprep.mubr.bf16.mxu0 %v3728
        %6787 = vmatmul.mubr.bf16.gmra.mrb[0].mxu0 %v3727
        %v6788 = vpop.f32.mrb[0].mxu0
        %v6789 = vadd.f32 %v6596, %v6788
        %v6790 = vpop.f32.mrb[0].mxu0
        %v6791 = vadd.f32 %v6598, %v6790
        %v6792 = vpop.f32.mrb[0].mxu0
        %v6793 = vadd.f32 %v6600, %v6792
        %v6794 = vpop.f32.mrb[0].mxu0
        %v6795 = vadd.f32 %v6602, %v6794
        %6796 = vmatprep.mubr.bf16.mxu0 %v3732
        %6797 = vmatmul.mubr.bf16.gmra.mrb[0].mxu0 %v3731
        %v6798 = vpop.f32.mrb[0].mxu0
        %v6799 = vadd.f32 %v6606, %v6798
        %v6800 = vpop.f32.mrb[0].mxu0
        %v6801 = vadd.f32 %v6608, %v6800
        %v6802 = vpop.f32.mrb[0].mxu0
        %v6803 = vadd.f32 %v6610, %v6802
        %v6804 = vpop.f32.mrb[0].mxu0
        %v6805 = vadd.f32 %v6612, %v6804
        %6806 = vmatprep.mubr.bf16.mxu0 %v3736
        %6807 = vmatmul.mubr.bf16.gmra.mrb[0].mxu0 %v3735
        %v6808 = vpop.f32.mrb[0].mxu0
        %v6809 = vadd.f32 %v6616, %v6808
        %v6810 = vpop.f32.mrb[0].mxu0
        %v6811 = vadd.f32 %v6618, %v6810
        %v6812 = vpop.f32.mrb[0].mxu0
        %v6813 = vadd.f32 %v6620, %v6812
        %v6814 = vpop.f32.mrb[0].mxu0
        %v6815 = vadd.f32 %v6622, %v6814
        %6816 = vmatprep.mubr.bf16.mxu0 %v3740
        %6817 = vmatmul.mubr.bf16.gmra.mrb[0].mxu0 %v3739
        %v6818 = vpop.f32.mrb[0].mxu0
        %v6819 = vadd.f32 %v6626, %v6818
        %v6820 = vpop.f32.mrb[0].mxu0
        %v6821 = vadd.f32 %v6628, %v6820
        %v6822 = vpop.f32.mrb[0].mxu0
        %v6823 = vadd.f32 %v6630, %v6822
        %v6824 = vpop.f32.mrb[0].mxu0
        %v6825 = vadd.f32 %v6632, %v6824
        %6826 = vmatprep.mubr.bf16.mxu0 %v3744
        %6827 = vmatmul.mubr.bf16.gmra.mrb[0].mxu0 %v3743
        %v6828 = vpop.f32.mrb[0].mxu0
        %v6829 = vadd.f32 %v6636, %v6828
        %v6830 = vpop.f32.mrb[0].mxu0
        %v6831 = vadd.f32 %v6638, %v6830
        %v6832 = vpop.f32.mrb[0].mxu0
        %v6833 = vadd.f32 %v6640, %v6832
        %v6834 = vpop.f32.mrb[0].mxu0
        %v6835 = vadd.f32 %v6642, %v6834
        %6836 = vmatprep.mubr.bf16.mxu0 %v3748
        %6837 = vmatmul.mubr.bf16.gmra.mrb[0].mxu0 %v3747
        %v6838 = vpop.f32.mrb[0].mxu0
        %v6839 = vadd.f32 %v6646, %v6838
        %v6840 = vpop.f32.mrb[0].mxu0
        %v6841 = vadd.f32 %v6648, %v6840
        %v6842 = vpop.f32.mrb[0].mxu0
        %v6843 = vadd.f32 %v6650, %v6842
        %v6844 = vpop.f32.mrb[0].mxu0
        %v6845 = vadd.f32 %v6652, %v6844
        %6846 = vmatprep.mubr.bf16.mxu0 %v3752
        %6847 = vmatmul.mubr.bf16.gmra.mrb[0].mxu0 %v3751
        %v6848 = vpop.f32.mrb[0].mxu0
        %v6849 = vadd.f32 %v6656, %v6848
        %v6850 = vpop.f32.mrb[0].mxu0
        %v6851 = vadd.f32 %v6658, %v6850
        %v6852 = vpop.f32.mrb[0].mxu0
        %v6853 = vadd.f32 %v6660, %v6852
        %v6854 = vpop.f32.mrb[0].mxu0
        %v6855 = vadd.f32 %v6662, %v6854
        %6856 = vmatprep.mubr.bf16.mxu0 %v3756
        %6857 = vmatmul.mubr.bf16.gmra.mrb[0].mxu0 %v3755
        %v6858 = vpop.f32.mrb[0].mxu0
        %v6859 = vadd.f32 %v6666, %v6858
        %v6860 = vpop.f32.mrb[0].mxu0
        %v6861 = vadd.f32 %v6668, %v6860
        %v6862 = vpop.f32.mrb[0].mxu0
        %v6863 = vadd.f32 %v6670, %v6862
        %v6864 = vpop.f32.mrb[0].mxu0
        %v6865 = vadd.f32 %v6672, %v6864
        %6866 = vmatprep.mubr.bf16.mxu0 %v3760
        %6867 = vmatmul.mubr.bf16.gmra.mrb[0].mxu0 %v3759
        %v6868 = vpop.f32.mrb[0].mxu0
        %v6869 = vadd.f32 %v6676, %v6868
        %v6870 = vpop.f32.mrb[0].mxu0
        %v6871 = vadd.f32 %v6678, %v6870
        %v6872 = vpop.f32.mrb[0].mxu0
        %v6873 = vadd.f32 %v6680, %v6872
        %v6874 = vpop.f32.mrb[0].mxu0
        %v6875 = vadd.f32 %v6682, %v6874
        %6876 = vmatprep.mubr.bf16.mxu0 %v3764
        %6877 = vmatmul.mubr.bf16.gmra.mrb[0].mxu0 %v3763
        %v6878 = vpop.f32.mrb[0].mxu0
        %v6879 = vadd.f32 %v6686, %v6878
        %v6880 = vpop.f32.mrb[0].mxu0
        %v6881 = vadd.f32 %v6688, %v6880
        %v6882 = vpop.f32.mrb[0].mxu0
        %v6883 = vadd.f32 %v6690, %v6882
        %v6884 = vpop.f32.mrb[0].mxu0
        %v6885 = vadd.f32 %v6692, %v6884
        %6886 = vdwg.mxu0
        %v6887 = vld [vmem:[#allocation8 + $0x1b] sm:$0xff]
        %v6888 = vld [vmem:[#allocation8 + $0x23] sm:$0xff]
        %v6889 = vadd.f32 %v5571, %v5575
        %v6890 = vadd.f32 %v6889, %v5581
        %v6891 = vadd.f32 %v6890, %v5585
        %v6892 = vadd.f32 %v6891, %v5591
        %v6893 = vadd.f32 %v6892, %v5595
        %v6894 = vadd.f32 %v6893, %v5601
        %v6895 = vadd.f32 %v6894, %v5605
        %v6896 = vadd.f32 %v6895, %v5611
        %v6897 = vadd.f32 %v6896, %v5615
        %v6898 = vadd.f32 %v6897, %v5621
        %v6899 = vadd.f32 %v6898, %v5625
        %v6900 = vadd.f32 %v6899, %v5631
        %v6901 = vadd.f32 %v6900, %v5635
        %v6902 = vadd.f32 %v6901, %v5641
        %v6903 = vadd.f32 %v6902, %v5645
        %v6904 = vrot.slane %v6903, 4
        %v6905 = vadd.f32 %v6903, %v6904
        %v6906 = vrot.slane %v6905, 2
        %v6907 = vadd.f32 %v6905, %v6906
        %v6908 = vrot.slane %v6907, 1
        %v6909 = vadd.f32 %v6907, %v6908
        %v6910 = vadd.f32 %v5573, %v5577
        %v6911 = vadd.f32 %v6910, %v5583
        %v6912 = vadd.f32 %v6911, %v5587
        %v6913 = vadd.f32 %v6912, %v5593
        %v6914 = vadd.f32 %v6913, %v5597
        %v6915 = vadd.f32 %v6914, %v5603
        %v6916 = vadd.f32 %v6915, %v5607
        %v6917 = vadd.f32 %v6916, %v5613
        %v6918 = vadd.f32 %v6917, %v5617
        %v6919 = vadd.f32 %v6918, %v5623
        %v6920 = vadd.f32 %v6919, %v5627
        %v6921 = vadd.f32 %v6920, %v5633
        %v6922 = vadd.f32 %v6921, %v5637
        %v6923 = vadd.f32 %v6922, %v5643
        %v6924 = vadd.f32 %v6923, %v5647
        %v6925 = vrot.slane %v6924, 4
        %v6926 = vadd.f32 %v6924, %v6925
        %v6927 = vrot.slane %v6926, 2
        %v6928 = vadd.f32 %v6926, %v6927
        %v6929 = vrot.slane %v6928, 1
        %v6930 = vadd.f32 %v6928, %v6929
        %v6931 = vadd.f32 %v5957, %v5961
        %v6932 = vadd.f32 %v6931, %v5967
        %v6933 = vadd.f32 %v6932, %v5971
        %v6934 = vadd.f32 %v6933, %v5977
        %v6935 = vadd.f32 %v6934, %v5981
        %v6936 = vadd.f32 %v6935, %v5987
        %v6937 = vadd.f32 %v6936, %v5991
        %v6938 = vadd.f32 %v6937, %v5997
        %v6939 = vadd.f32 %v6938, %v6001
        %v6940 = vadd.f32 %v6939, %v6007
        %v6941 = vadd.f32 %v6940, %v6011
        %v6942 = vadd.f32 %v6941, %v6017
        %v6943 = vadd.f32 %v6942, %v6021
        %v6944 = vadd.f32 %v6943, %v6027
        %v6945 = vadd.f32 %v6944, %v6031
        %v6946 = vrot.slane %v6945, 4
        %v6947 = vadd.f32 %v6945, %v6946
        %v6948 = vrot.slane %v6947, 2
        %v6949 = vadd.f32 %v6947, %v6948
        %v6950 = vrot.slane %v6949, 1
        %v6951 = vadd.f32 %v6949, %v6950
        %v6952 = vadd.f32 %v5959, %v5963
        %v6953 = vadd.f32 %v6952, %v5969
        %v6954 = vadd.f32 %v6953, %v5973
        %v6955 = vadd.f32 %v6954, %v5979
        %v6956 = vadd.f32 %v6955, %v5983
        %v6957 = vadd.f32 %v6956, %v5989
        %v6958 = vadd.f32 %v6957, %v5993
        %v6959 = vadd.f32 %v6958, %v5999
        %v6960 = vadd.f32 %v6959, %v6003
        %v6961 = vadd.f32 %v6960, %v6009
        %v6962 = vadd.f32 %v6961, %v6013
        %v6963 = vadd.f32 %v6962, %v6019
        %v6964 = vadd.f32 %v6963, %v6023
        %v6965 = vadd.f32 %v6964, %v6029
        %v6966 = vadd.f32 %v6965, %v6033
        %v6967 = vrot.slane %v6966, 4
        %v6968 = vadd.f32 %v6966, %v6967
        %v6969 = vrot.slane %v6968, 2
        %v6970 = vadd.f32 %v6968, %v6969
        %v6971 = vrot.slane %v6970, 1
        %v6972 = vadd.f32 %v6970, %v6971
        %v6973 = vadd.f32 %v6343, %v6347
        %v6974 = vadd.f32 %v6973, %v6353
        %v6975 = vadd.f32 %v6974, %v6357
        %v6976 = vadd.f32 %v6975, %v6363
        %v6977 = vadd.f32 %v6976, %v6367
        %v6978 = vadd.f32 %v6977, %v6373
        %v6979 = vadd.f32 %v6978, %v6377
        %v6980 = vadd.f32 %v6979, %v6383
        %v6981 = vadd.f32 %v6980, %v6387
        %v6982 = vadd.f32 %v6981, %v6393
        %v6983 = vadd.f32 %v6982, %v6397
        %v6984 = vadd.f32 %v6983, %v6403
        %v6985 = vadd.f32 %v6984, %v6407
        %v6986 = vadd.f32 %v6985, %v6413
        %v6987 = vadd.f32 %v6986, %v6417
        %v6988 = vrot.slane %v6987, 4
        %v6989 = vadd.f32 %v6987, %v6988
        %v6990 = vrot.slane %v6989, 2
        %v6991 = vadd.f32 %v6989, %v6990
        %v6992 = vrot.slane %v6991, 1
        %v6993 = vadd.f32 %v6991, %v6992
        %v6994 = vadd.f32 %v6345, %v6349
        %v6995 = vadd.f32 %v6994, %v6355
        %v6996 = vadd.f32 %v6995, %v6359
        %v6997 = vadd.f32 %v6996, %v6365
        %v6998 = vadd.f32 %v6997, %v6369
        %v6999 = vadd.f32 %v6998, %v6375
        %v7000 = vadd.f32 %v6999, %v6379
        %v7001 = vadd.f32 %v7000, %v6385
        %v7002 = vadd.f32 %v7001, %v6389
        %v7003 = vadd.f32 %v7002, %v6395
        %v7004 = vadd.f32 %v7003, %v6399
        %v7005 = vadd.f32 %v7004, %v6405
        %v7006 = vadd.f32 %v7005, %v6409
        %v7007 = vadd.f32 %v7006, %v6415
        %v7008 = vadd.f32 %v7007, %v6419
        %v7009 = vrot.slane %v7008, 4
        %v7010 = vadd.f32 %v7008, %v7009
        %v7011 = vrot.slane %v7010, 2
        %v7012 = vadd.f32 %v7010, %v7011
        %v7013 = vrot.slane %v7012, 1
        %v7014 = vadd.f32 %v7012, %v7013
        %v7015 = vadd.f32 %v6729, %v6733
        %v7016 = vadd.f32 %v7015, %v6739
        %v7017 = vadd.f32 %v7016, %v6743
        %v7018 = vadd.f32 %v7017, %v6749
        %v7019 = vadd.f32 %v7018, %v6753
        %v7020 = vadd.f32 %v7019, %v6759
        %v7021 = vadd.f32 %v7020, %v6763
        %v7022 = vadd.f32 %v7021, %v6769
        %v7023 = vadd.f32 %v7022, %v6773
        %v7024 = vadd.f32 %v7023, %v6779
        %v7025 = vadd.f32 %v7024, %v6783
        %v7026 = vadd.f32 %v7025, %v6789
        %v7027 = vadd.f32 %v7026, %v6793
        %v7028 = vadd.f32 %v7027, %v6799
        %v7029 = vadd.f32 %v7028, %v6803
        %v7030 = vrot.slane %v7029, 4
        %v7031 = vadd.f32 %v7029, %v7030
        %v7032 = vrot.slane %v7031, 2
        %v7033 = vadd.f32 %v7031, %v7032
        %v7034 = vrot.slane %v7033, 1
        %v7035 = vadd.f32 %v7033, %v7034
        %v7036 = vadd.f32 %v6731, %v6735
        %v7037 = vadd.f32 %v7036, %v6741
        %v7038 = vadd.f32 %v7037, %v6745
        %v7039 = vadd.f32 %v7038, %v6751
        %v7040 = vadd.f32 %v7039, %v6755
        %v7041 = vadd.f32 %v7040, %v6761
        %v7042 = vadd.f32 %v7041, %v6765
        %v7043 = vadd.f32 %v7042, %v6771
        %v7044 = vadd.f32 %v7043, %v6775
        %v7045 = vadd.f32 %v7044, %v6781
        %v7046 = vadd.f32 %v7045, %v6785
        %v7047 = vadd.f32 %v7046, %v6791
        %v7048 = vadd.f32 %v7047, %v6795
        %v7049 = vadd.f32 %v7048, %v6801
        %v7050 = vadd.f32 %v7049, %v6805
        %v7051 = vrot.slane %v7050, 4
        %v7052 = vadd.f32 %v7050, %v7051
        %v7053 = vrot.slane %v7052, 2
        %v7054 = vadd.f32 %v7052, %v7053
        %v7055 = vrot.slane %v7054, 1
        %v7056 = vadd.f32 %v7054, %v7055
        %v7057 = vadd.f32 %v5651, %v5655
        %v7058 = vadd.f32 %v7057, %v5661
        %v7059 = vadd.f32 %v7058, %v5665
        %v7060 = vadd.f32 %v7059, %v5671
        %v7061 = vadd.f32 %v7060, %v5675
        %v7062 = vadd.f32 %v7061, %v5681
        %v7063 = vadd.f32 %v7062, %v5685
        %v7064 = vadd.f32 %v7063, %v5691
        %v7065 = vadd.f32 %v7064, %v5695
        %v7066 = vadd.f32 %v7065, %v5701
        %v7067 = vadd.f32 %v7066, %v5705
        %v7068 = vadd.f32 %v7067, %v5711
        %v7069 = vadd.f32 %v7068, %v5715
        %v7070 = vadd.f32 %v7069, %v5721
        %v7071 = vadd.f32 %v7070, %v5725
        %v7072 = vrot.slane %v7071, 4
        %v7073 = vadd.f32 %v7071, %v7072
        %v7074 = vrot.slane %v7073, 2
        %v7075 = vadd.f32 %v7073, %v7074
        %v7076 = vrot.slane %v7075, 1
        %v7077 = vadd.f32 %v7075, %v7076
        %v7078 = vadd.f32 %v5653, %v5657
        %v7079 = vadd.f32 %v7078, %v5663
        %v7080 = vadd.f32 %v7079, %v5667
        %v7081 = vadd.f32 %v7080, %v5673
        %v7082 = vadd.f32 %v7081, %v5677
        %v7083 = vadd.f32 %v7082, %v5683
        %v7084 = vadd.f32 %v7083, %v5687
        %v7085 = vadd.f32 %v7084, %v5693
        %v7086 = vadd.f32 %v7085, %v5697
        %v7087 = vadd.f32 %v7086, %v5703
        %v7088 = vadd.f32 %v7087, %v5707
        %v7089 = vadd.f32 %v7088, %v5713
        %v7090 = vadd.f32 %v7089, %v5717
        %v7091 = vadd.f32 %v7090, %v5723
        %v7092 = vadd.f32 %v7091, %v5727
        %v7093 = vrot.slane %v7092, 4
        %v7094 = vadd.f32 %v7092, %v7093
        %v7095 = vrot.slane %v7094, 2
        %v7096 = vadd.f32 %v7094, %v7095
        %v7097 = vrot.slane %v7096, 1
        %v7098 = vadd.f32 %v7096, %v7097
        %v7099 = vadd.f32 %v6037, %v6041
        %v7100 = vadd.f32 %v7099, %v6047
        %v7101 = vadd.f32 %v7100, %v6051
        %v7102 = vadd.f32 %v7101, %v6057
        %v7103 = vadd.f32 %v7102, %v6061
        %v7104 = vadd.f32 %v7103, %v6067
        %v7105 = vadd.f32 %v7104, %v6071
        %v7106 = vadd.f32 %v7105, %v6077
        %v7107 = vadd.f32 %v7106, %v6081
        %v7108 = vadd.f32 %v7107, %v6087
        %v7109 = vadd.f32 %v7108, %v6091
        %v7110 = vadd.f32 %v7109, %v6097
        %v7111 = vadd.f32 %v7110, %v6101
        %v7112 = vadd.f32 %v7111, %v6107
        %v7113 = vadd.f32 %v7112, %v6111
        %v7114 = vrot.slane %v7113, 4
        %v7115 = vadd.f32 %v7113, %v7114
        %v7116 = vrot.slane %v7115, 2
        %v7117 = vadd.f32 %v7115, %v7116
        %v7118 = vrot.slane %v7117, 1
        %v7119 = vadd.f32 %v7117, %v7118
        %v7120 = vadd.f32 %v6039, %v6043
        %v7121 = vadd.f32 %v7120, %v6049
        %v7122 = vadd.f32 %v7121, %v6053
        %v7123 = vadd.f32 %v7122, %v6059
        %v7124 = vadd.f32 %v7123, %v6063
        %v7125 = vadd.f32 %v7124, %v6069
        %v7126 = vadd.f32 %v7125, %v6073
        %v7127 = vadd.f32 %v7126, %v6079
        %v7128 = vadd.f32 %v7127, %v6083
        %v7129 = vadd.f32 %v7128, %v6089
        %v7130 = vadd.f32 %v7129, %v6093
        %v7131 = vadd.f32 %v7130, %v6099
        %v7132 = vadd.f32 %v7131, %v6103
        %v7133 = vadd.f32 %v7132, %v6109
        %v7134 = vadd.f32 %v7133, %v6113
        %v7135 = vrot.slane %v7134, 4
        %v7136 = vadd.f32 %v7134, %v7135
        %v7137 = vrot.slane %v7136, 2
        %v7138 = vadd.f32 %v7136, %v7137
        %v7139 = vrot.slane %v7138, 1
        %v7140 = vadd.f32 %v7138, %v7139
        %v7141 = vadd.f32 %v6423, %v6427
        %v7142 = vadd.f32 %v7141, %v6433
        %v7143 = vadd.f32 %v7142, %v6437
        %v7144 = vadd.f32 %v7143, %v6443
        %v7145 = vadd.f32 %v7144, %v6447
        %v7146 = vadd.f32 %v7145, %v6453
        %v7147 = vadd.f32 %v7146, %v6457
        %v7148 = vadd.f32 %v7147, %v6463
        %v7149 = vadd.f32 %v7148, %v6467
        %v7150 = vadd.f32 %v7149, %v6473
        %v7151 = vadd.f32 %v7150, %v6477
        %v7152 = vadd.f32 %v7151, %v6483
        %v7153 = vadd.f32 %v7152, %v6487
        %v7154 = vadd.f32 %v7153, %v6493
        %v7155 = vadd.f32 %v7154, %v6497
        %v7156 = vrot.slane %v7155, 4
        %v7157 = vadd.f32 %v7155, %v7156
        %v7158 = vrot.slane %v7157, 2
        %v7159 = vadd.f32 %v7157, %v7158
        %v7160 = vrot.slane %v7159, 1
        %v7161 = vadd.f32 %v7159, %v7160
        %v7162 = vadd.f32 %v6425, %v6429
        %v7163 = vadd.f32 %v7162, %v6435
        %v7164 = vadd.f32 %v7163, %v6439
        %v7165 = vadd.f32 %v7164, %v6445
        %v7166 = vadd.f32 %v7165, %v6449
        %v7167 = vadd.f32 %v7166, %v6455
        %v7168 = vadd.f32 %v7167, %v6459
        %v7169 = vadd.f32 %v7168, %v6465
        %v7170 = vadd.f32 %v7169, %v6469
        %v7171 = vadd.f32 %v7170, %v6475
        %v7172 = vadd.f32 %v7171, %v6479
        %v7173 = vadd.f32 %v7172, %v6485
        %v7174 = vadd.f32 %v7173, %v6489
        %v7175 = vadd.f32 %v7174, %v6495
        %v7176 = vadd.f32 %v7175, %v6499
        %v7177 = vrot.slane %v7176, 4
        %v7178 = vadd.f32 %v7176, %v7177
        %v7179 = vrot.slane %v7178, 2
        %v7180 = vadd.f32 %v7178, %v7179
        %v7181 = vrot.slane %v7180, 1
        %v7182 = vadd.f32 %v7180, %v7181
        %v7183 = vadd.f32 %v6809, %v6813
        %v7184 = vadd.f32 %v7183, %v6819
        %v7185 = vadd.f32 %v7184, %v6823
        %v7186 = vadd.f32 %v7185, %v6829
        %v7187 = vadd.f32 %v7186, %v6833
        %v7188 = vadd.f32 %v7187, %v6839
        %v7189 = vadd.f32 %v7188, %v6843
        %v7190 = vadd.f32 %v7189, %v6849
        %v7191 = vadd.f32 %v7190, %v6853
        %v7192 = vadd.f32 %v7191, %v6859
        %v7193 = vadd.f32 %v7192, %v6863
        %v7194 = vadd.f32 %v7193, %v6869
        %v7195 = vadd.f32 %v7194, %v6873
        %v7196 = vadd.f32 %v7195, %v6879
        %v7197 = vadd.f32 %v7196, %v6883
        %v7198 = vrot.slane %v7197, 4
        %v7199 = vadd.f32 %v7197, %v7198
        %v7200 = vrot.slane %v7199, 2
        %v7201 = vadd.f32 %v7199, %v7200
        %v7202 = vrot.slane %v7201, 1
        %v7203 = vadd.f32 %v7201, %v7202
        %v7204 = vadd.f32 %v6811, %v6815
        %v7205 = vadd.f32 %v7204, %v6821
        %v7206 = vadd.f32 %v7205, %v6825
        %v7207 = vadd.f32 %v7206, %v6831
        %v7208 = vadd.f32 %v7207, %v6835
        %v7209 = vadd.f32 %v7208, %v6841
        %v7210 = vadd.f32 %v7209, %v6845
        %v7211 = vadd.f32 %v7210, %v6851
        %v7212 = vadd.f32 %v7211, %v6855
        %v7213 = vadd.f32 %v7212, %v6861
        %v7214 = vadd.f32 %v7213, %v6865
        %v7215 = vadd.f32 %v7214, %v6871
        %v7216 = vadd.f32 %v7215, %v6875
        %v7217 = vadd.f32 %v7216, %v6881
        %v7218 = vadd.f32 %v7217, %v6885
        %v7219 = vrot.slane %v7218, 4
        %v7220 = vadd.f32 %v7218, %v7219
        %v7221 = vrot.slane %v7220, 2
        %v7222 = vadd.f32 %v7220, %v7221
        %v7223 = vrot.slane %v7222, 1
        %v7224 = vadd.f32 %v7222, %v7223
        %v7225 = vmul.f32 %v6909, %v1086
        %v7226 = vmul.f32 %v6930, %v1086
        %v7227 = vmul.f32 %v6951, %v1086
        %v7228 = vmul.f32 %v6972, %v1086
        %v7229 = vmul.f32 %v6993, %v1086
        %v7230 = vmul.f32 %v7014, %v1086
        %v7231 = vmul.f32 %v7035, %v1086
        %v7232 = vmul.f32 %v7056, %v1086
        %v7233 = vmul.f32 %v7077, %v1086
        %v7234 = vmul.f32 %v7098, %v1086
        %v7235 = vmul.f32 %v7119, %v1086
        %v7236 = vmul.f32 %v7140, %v1086
        %v7237 = vmul.f32 %v7161, %v1086
        %v7238 = vmul.f32 %v7182, %v1086
        %v7239 = vmul.f32 %v7203, %v1086
        %v7240 = vmul.f32 %v7224, %v1086
        %v7241 = vmul.f32 %v5571, %v5571
        %v7242 = vmul.f32 %v5573, %v5573
        %v7243 = vmul.f32 %v5957, %v5957
        %v7244 = vmul.f32 %v5959, %v5959
        %v7245 = vmul.f32 %v6343, %v6343
        %v7246 = vmul.f32 %v6345, %v6345
        %v7247 = vmul.f32 %v6729, %v6729
        %v7248 = vmul.f32 %v6731, %v6731
        %v7249 = vmul.f32 %v5575, %v5575
        %v7250 = vmul.f32 %v5577, %v5577
        %v7251 = vmul.f32 %v5961, %v5961
        %v7252 = vmul.f32 %v5963, %v5963
        %v7253 = vmul.f32 %v6347, %v6347
        %v7254 = vmul.f32 %v6349, %v6349
        %v7255 = vmul.f32 %v6733, %v6733
        %v7256 = vmul.f32 %v6735, %v6735
        %v7257 = vmul.f32 %v5581, %v5581
        %v7258 = vmul.f32 %v5583, %v5583
        %v7259 = vmul.f32 %v5967, %v5967
        %v7260 = vmul.f32 %v5969, %v5969
        %v7261 = vmul.f32 %v6353, %v6353
        %v7262 = vmul.f32 %v6355, %v6355
        %v7263 = vmul.f32 %v6739, %v6739
        %v7264 = vmul.f32 %v6741, %v6741
        %v7265 = vmul.f32 %v5585, %v5585
        %v7266 = vmul.f32 %v5587, %v5587
        %v7267 = vmul.f32 %v5971, %v5971
        %v7268 = vmul.f32 %v5973, %v5973
        %v7269 = vmul.f32 %v6357, %v6357
        %v7270 = vmul.f32 %v6359, %v6359
        %v7271 = vmul.f32 %v6743, %v6743
        %v7272 = vmul.f32 %v6745, %v6745
        %v7273 = vmul.f32 %v5591, %v5591
        %v7274 = vmul.f32 %v5593, %v5593
        %v7275 = vmul.f32 %v5977, %v5977
        %v7276 = vmul.f32 %v5979, %v5979
        %v7277 = vmul.f32 %v6363, %v6363
        %v7278 = vmul.f32 %v6365, %v6365
        %v7279 = vmul.f32 %v6749, %v6749
        %v7280 = vmul.f32 %v6751, %v6751
        %v7281 = vmul.f32 %v5595, %v5595
        %v7282 = vmul.f32 %v5597, %v5597
        %v7283 = vmul.f32 %v5981, %v5981
        %v7284 = vmul.f32 %v5983, %v5983
        %v7285 = vmul.f32 %v6367, %v6367
        %v7286 = vmul.f32 %v6369, %v6369
        %v7287 = vmul.f32 %v6753, %v6753
        %v7288 = vmul.f32 %v6755, %v6755
        %v7289 = vmul.f32 %v5601, %v5601
        %v7290 = vmul.f32 %v5603, %v5603
        %v7291 = vmul.f32 %v5987, %v5987
        %v7292 = vmul.f32 %v5989, %v5989
        %v7293 = vmul.f32 %v6373, %v6373
        %v7294 = vmul.f32 %v6375, %v6375
        %v7295 = vmul.f32 %v6759, %v6759
        %v7296 = vmul.f32 %v6761, %v6761
        %v7297 = vmul.f32 %v5605, %v5605
        %v7298 = vmul.f32 %v5607, %v5607
        %v7299 = vmul.f32 %v5991, %v5991
        %v7300 = vmul.f32 %v5993, %v5993
        %v7301 = vmul.f32 %v6377, %v6377
        %v7302 = vmul.f32 %v6379, %v6379
        %v7303 = vmul.f32 %v6763, %v6763
        %v7304 = vmul.f32 %v6765, %v6765
        %v7305 = vmul.f32 %v5611, %v5611
        %v7306 = vmul.f32 %v5613, %v5613
        %v7307 = vmul.f32 %v5997, %v5997
        %v7308 = vmul.f32 %v5999, %v5999
        %v7309 = vmul.f32 %v6383, %v6383
        %v7310 = vmul.f32 %v6385, %v6385
        %v7311 = vmul.f32 %v6769, %v6769
        %v7312 = vmul.f32 %v6771, %v6771
        %v7313 = vmul.f32 %v5615, %v5615
        %v7314 = vmul.f32 %v5617, %v5617
        %v7315 = vmul.f32 %v6001, %v6001
        %v7316 = vmul.f32 %v6003, %v6003
        %v7317 = vmul.f32 %v6387, %v6387
        %v7318 = vmul.f32 %v6389, %v6389
        %v7319 = vmul.f32 %v6773, %v6773
        %v7320 = vmul.f32 %v6775, %v6775
        %v7321 = vmul.f32 %v5621, %v5621
        %v7322 = vmul.f32 %v5623, %v5623
        %v7323 = vmul.f32 %v6007, %v6007
        %v7324 = vmul.f32 %v6009, %v6009
        %v7325 = vmul.f32 %v6393, %v6393
        %v7326 = vmul.f32 %v6395, %v6395
        %v7327 = vmul.f32 %v6779, %v6779
        %v7328 = vmul.f32 %v6781, %v6781
        %v7329 = vmul.f32 %v5625, %v5625
        %v7330 = vmul.f32 %v5627, %v5627
        %v7331 = vmul.f32 %v6011, %v6011
        %v7332 = vmul.f32 %v6013, %v6013
        %v7333 = vmul.f32 %v6397, %v6397
        %v7334 = vmul.f32 %v6399, %v6399
        %v7335 = vmul.f32 %v6783, %v6783
        %v7336 = vmul.f32 %v6785, %v6785
        %v7337 = vmul.f32 %v5631, %v5631
        %v7338 = vmul.f32 %v5633, %v5633
        %v7339 = vmul.f32 %v6017, %v6017
        %v7340 = vmul.f32 %v6019, %v6019
        %v7341 = vmul.f32 %v6403, %v6403
        %v7342 = vmul.f32 %v6405, %v6405
        %v7343 = vmul.f32 %v6789, %v6789
        %v7344 = vmul.f32 %v6791, %v6791
        %v7345 = vmul.f32 %v5635, %v5635
        %v7346 = vmul.f32 %v5637, %v5637
        %v7347 = vmul.f32 %v6021, %v6021
        %v7348 = vmul.f32 %v6023, %v6023
        %v7349 = vmul.f32 %v6407, %v6407
        %v7350 = vmul.f32 %v6409, %v6409
        %v7351 = vmul.f32 %v6793, %v6793
        %v7352 = vmul.f32 %v6795, %v6795
        %v7353 = vmul.f32 %v5641, %v5641
        %v7354 = vmul.f32 %v5643, %v5643
        %v7355 = vmul.f32 %v6027, %v6027
        %v7356 = vmul.f32 %v6029, %v6029
        %v7357 = vmul.f32 %v6413, %v6413
        %v7358 = vmul.f32 %v6415, %v6415
        %v7359 = vmul.f32 %v6799, %v6799
        %v7360 = vmul.f32 %v6801, %v6801
        %v7361 = vmul.f32 %v5645, %v5645
        %v7362 = vmul.f32 %v5647, %v5647
        %v7363 = vmul.f32 %v6031, %v6031
        %v7364 = vmul.f32 %v6033, %v6033
        %v7365 = vmul.f32 %v6417, %v6417
        %v7366 = vmul.f32 %v6419, %v6419
        %v7367 = vmul.f32 %v6803, %v6803
        %v7368 = vmul.f32 %v6805, %v6805
        %v7369 = vmul.f32 %v5651, %v5651
        %v7370 = vmul.f32 %v5653, %v5653
        %v7371 = vmul.f32 %v6037, %v6037
        %v7372 = vmul.f32 %v6039, %v6039
        %v7373 = vmul.f32 %v6423, %v6423
        %v7374 = vmul.f32 %v6425, %v6425
        %v7375 = vmul.f32 %v6809, %v6809
        %v7376 = vmul.f32 %v6811, %v6811
        %v7377 = vmul.f32 %v5655, %v5655
        %v7378 = vmul.f32 %v5657, %v5657
        %v7379 = vmul.f32 %v6041, %v6041
        %v7380 = vmul.f32 %v6043, %v6043
        %v7381 = vmul.f32 %v6427, %v6427
        %v7382 = vmul.f32 %v6429, %v6429
        %v7383 = vmul.f32 %v6813, %v6813
        %v7384 = vmul.f32 %v6815, %v6815
        %v7385 = vmul.f32 %v5661, %v5661
        %v7386 = vmul.f32 %v5663, %v5663
        %v7387 = vmul.f32 %v6047, %v6047
        %v7388 = vmul.f32 %v6049, %v6049
        %v7389 = vmul.f32 %v6433, %v6433
        %v7390 = vmul.f32 %v6435, %v6435
        %v7391 = vmul.f32 %v6819, %v6819
        %v7392 = vmul.f32 %v6821, %v6821
        %v7393 = vmul.f32 %v5665, %v5665
        %v7394 = vmul.f32 %v5667, %v5667
        %v7395 = vmul.f32 %v6051, %v6051
        %v7396 = vmul.f32 %v6053, %v6053
        %v7397 = vmul.f32 %v6437, %v6437
        %v7398 = vmul.f32 %v6439, %v6439
        %v7399 = vmul.f32 %v6823, %v6823
        %v7400 = vmul.f32 %v6825, %v6825
        %v7401 = vmul.f32 %v5671, %v5671
        %v7402 = vmul.f32 %v5673, %v5673
        %v7403 = vmul.f32 %v6057, %v6057
        %v7404 = vmul.f32 %v6059, %v6059
        %v7405 = vmul.f32 %v6443, %v6443
        %v7406 = vmul.f32 %v6445, %v6445
        %v7407 = vmul.f32 %v6829, %v6829
        %v7408 = vmul.f32 %v6831, %v6831
        %v7409 = vmul.f32 %v5675, %v5675
        %v7410 = vmul.f32 %v5677, %v5677
        %v7411 = vmul.f32 %v6061, %v6061
        %v7412 = vmul.f32 %v6063, %v6063
        %v7413 = vmul.f32 %v6447, %v6447
        %v7414 = vmul.f32 %v6449, %v6449
        %v7415 = vmul.f32 %v6833, %v6833
        %v7416 = vmul.f32 %v6835, %v6835
        %v7417 = vmul.f32 %v5681, %v5681
        %v7418 = vmul.f32 %v5683, %v5683
        %v7419 = vmul.f32 %v6067, %v6067
        %v7420 = vmul.f32 %v6069, %v6069
        %v7421 = vmul.f32 %v6453, %v6453
        %v7422 = vmul.f32 %v6455, %v6455
        %v7423 = vmul.f32 %v6839, %v6839
        %v7424 = vmul.f32 %v6841, %v6841
        %v7425 = vmul.f32 %v5685, %v5685
        %v7426 = vmul.f32 %v5687, %v5687
        %v7427 = vmul.f32 %v6071, %v6071
        %v7428 = vmul.f32 %v6073, %v6073
        %v7429 = vmul.f32 %v6457, %v6457
        %v7430 = vmul.f32 %v6459, %v6459
        %v7431 = vmul.f32 %v6843, %v6843
        %v7432 = vmul.f32 %v6845, %v6845
        %v7433 = vmul.f32 %v5691, %v5691
        %v7434 = vmul.f32 %v5693, %v5693
        %v7435 = vmul.f32 %v6077, %v6077
        %v7436 = vmul.f32 %v6079, %v6079
        %v7437 = vmul.f32 %v6463, %v6463
        %v7438 = vmul.f32 %v6465, %v6465
        %v7439 = vmul.f32 %v6849, %v6849
        %v7440 = vmul.f32 %v6851, %v6851
        %v7441 = vmul.f32 %v5695, %v5695
        %v7442 = vmul.f32 %v5697, %v5697
        %v7443 = vmul.f32 %v6081, %v6081
        %v7444 = vmul.f32 %v6083, %v6083
        %v7445 = vmul.f32 %v6467, %v6467
        %v7446 = vmul.f32 %v6469, %v6469
        %v7447 = vmul.f32 %v6853, %v6853
        %v7448 = vmul.f32 %v6855, %v6855
        %v7449 = vmul.f32 %v5701, %v5701
        %v7450 = vmul.f32 %v5703, %v5703
        %v7451 = vmul.f32 %v6087, %v6087
        %v7452 = vmul.f32 %v6089, %v6089
        %v7453 = vmul.f32 %v6473, %v6473
        %v7454 = vmul.f32 %v6475, %v6475
        %v7455 = vmul.f32 %v6859, %v6859
        %v7456 = vmul.f32 %v6861, %v6861
        %v7457 = vmul.f32 %v5705, %v5705
        %v7458 = vmul.f32 %v5707, %v5707
        %v7459 = vmul.f32 %v6091, %v6091
        %v7460 = vmul.f32 %v6093, %v6093
        %v7461 = vmul.f32 %v6477, %v6477
        %v7462 = vmul.f32 %v6479, %v6479
        %v7463 = vmul.f32 %v6863, %v6863
        %v7464 = vmul.f32 %v6865, %v6865
        %v7465 = vmul.f32 %v5711, %v5711
        %v7466 = vmul.f32 %v5713, %v5713
        %v7467 = vmul.f32 %v6097, %v6097
        %v7468 = vmul.f32 %v6099, %v6099
        %v7469 = vmul.f32 %v6483, %v6483
        %v7470 = vmul.f32 %v6485, %v6485
        %v7471 = vmul.f32 %v6869, %v6869
        %v7472 = vmul.f32 %v6871, %v6871
        %v7473 = vmul.f32 %v5715, %v5715
        %v7474 = vmul.f32 %v5717, %v5717
        %v7475 = vmul.f32 %v6101, %v6101
        %v7476 = vmul.f32 %v6103, %v6103
        %v7477 = vmul.f32 %v6487, %v6487
        %v7478 = vmul.f32 %v6489, %v6489
        %v7479 = vmul.f32 %v6873, %v6873
        %v7480 = vmul.f32 %v6875, %v6875
        %v7481 = vmul.f32 %v5721, %v5721
        %v7482 = vmul.f32 %v5723, %v5723
        %v7483 = vmul.f32 %v6107, %v6107
        %v7484 = vmul.f32 %v6109, %v6109
        %v7485 = vmul.f32 %v6493, %v6493
        %v7486 = vmul.f32 %v6495, %v6495
        %v7487 = vmul.f32 %v6879, %v6879
        %v7488 = vmul.f32 %v6881, %v6881
        %v7489 = vmul.f32 %v5725, %v5725
        %v7490 = vmul.f32 %v5727, %v5727
        %v7491 = vmul.f32 %v6111, %v6111
        %v7492 = vmul.f32 %v6113, %v6113
        %v7493 = vmul.f32 %v6497, %v6497
        %v7494 = vmul.f32 %v6499, %v6499
        %v7495 = vmul.f32 %v6883, %v6883
        %v7496 = vmul.f32 %v6885, %v6885
        %v7497 = vadd.f32 %v7241, %v7249
        %v7498 = vadd.f32 %v7497, %v7257
        %v7499 = vadd.f32 %v7498, %v7265
        %v7500 = vadd.f32 %v7499, %v7273
        %v7501 = vadd.f32 %v7500, %v7281
        %v7502 = vadd.f32 %v7501, %v7289
        %v7503 = vadd.f32 %v7502, %v7297
        %v7504 = vadd.f32 %v7503, %v7305
        %v7505 = vadd.f32 %v7504, %v7313
        %v7506 = vadd.f32 %v7505, %v7321
        %v7507 = vadd.f32 %v7506, %v7329
        %v7508 = vadd.f32 %v7507, %v7337
        %v7509 = vadd.f32 %v7508, %v7345
        %v7510 = vadd.f32 %v7509, %v7353
        %v7511 = vadd.f32 %v7510, %v7361
        %v7512 = vrot.slane %v7511, 4
        %v7513 = vadd.f32 %v7511, %v7512
        %v7514 = vrot.slane %v7513, 2
        %v7515 = vadd.f32 %v7513, %v7514
        %v7516 = vrot.slane %v7515, 1
        %v7517 = vadd.f32 %v7515, %v7516
        %v7518 = vadd.f32 %v7242, %v7250
        %v7519 = vadd.f32 %v7518, %v7258
        %v7520 = vadd.f32 %v7519, %v7266
        %v7521 = vadd.f32 %v7520, %v7274
        %v7522 = vadd.f32 %v7521, %v7282
        %v7523 = vadd.f32 %v7522, %v7290
        %v7524 = vadd.f32 %v7523, %v7298
        %v7525 = vadd.f32 %v7524, %v7306
        %v7526 = vadd.f32 %v7525, %v7314
        %v7527 = vadd.f32 %v7526, %v7322
        %v7528 = vadd.f32 %v7527, %v7330
        %v7529 = vadd.f32 %v7528, %v7338
        %v7530 = vadd.f32 %v7529, %v7346
        %v7531 = vadd.f32 %v7530, %v7354
        %v7532 = vadd.f32 %v7531, %v7362
        %v7533 = vrot.slane %v7532, 4
        %v7534 = vadd.f32 %v7532, %v7533
        %v7535 = vrot.slane %v7534, 2
        %v7536 = vadd.f32 %v7534, %v7535
        %v7537 = vrot.slane %v7536, 1
        %v7538 = vadd.f32 %v7536, %v7537
        %v7539 = vadd.f32 %v7243, %v7251
        %v7540 = vadd.f32 %v7539, %v7259
        %v7541 = vadd.f32 %v7540, %v7267
        %v7542 = vadd.f32 %v7541, %v7275
        %v7543 = vadd.f32 %v7542, %v7283
        %v7544 = vadd.f32 %v7543, %v7291
        %v7545 = vadd.f32 %v7544, %v7299
        %v7546 = vadd.f32 %v7545, %v7307
        %v7547 = vadd.f32 %v7546, %v7315
        %v7548 = vadd.f32 %v7547, %v7323
        %v7549 = vadd.f32 %v7548, %v7331
        %v7550 = vadd.f32 %v7549, %v7339
        %v7551 = vadd.f32 %v7550, %v7347
        %v7552 = vadd.f32 %v7551, %v7355
        %v7553 = vadd.f32 %v7552, %v7363
        %v7554 = vrot.slane %v7553, 4
        %v7555 = vadd.f32 %v7553, %v7554
        %v7556 = vrot.slane %v7555, 2
        %v7557 = vadd.f32 %v7555, %v7556
        %v7558 = vrot.slane %v7557, 1
        %v7559 = vadd.f32 %v7557, %v7558
        %v7560 = vadd.f32 %v7244, %v7252
        %v7561 = vadd.f32 %v7560, %v7260
        %v7562 = vadd.f32 %v7561, %v7268
        %v7563 = vadd.f32 %v7562, %v7276
        %v7564 = vadd.f32 %v7563, %v7284
        %v7565 = vadd.f32 %v7564, %v7292
        %v7566 = vadd.f32 %v7565, %v7300
        %v7567 = vadd.f32 %v7566, %v7308
        %v7568 = vadd.f32 %v7567, %v7316
        %v7569 = vadd.f32 %v7568, %v7324
        %v7570 = vadd.f32 %v7569, %v7332
        %v7571 = vadd.f32 %v7570, %v7340
        %v7572 = vadd.f32 %v7571, %v7348
        %v7573 = vadd.f32 %v7572, %v7356
        %v7574 = vadd.f32 %v7573, %v7364
        %v7575 = vrot.slane %v7574, 4
        %v7576 = vadd.f32 %v7574, %v7575
        %v7577 = vrot.slane %v7576, 2
        %v7578 = vadd.f32 %v7576, %v7577
        %v7579 = vrot.slane %v7578, 1
        %v7580 = vadd.f32 %v7578, %v7579
        %v7581 = vadd.f32 %v7245, %v7253
        %v7582 = vadd.f32 %v7581, %v7261
        %v7583 = vadd.f32 %v7582, %v7269
        %v7584 = vadd.f32 %v7583, %v7277
        %v7585 = vadd.f32 %v7584, %v7285
        %v7586 = vadd.f32 %v7585, %v7293
        %v7587 = vadd.f32 %v7586, %v7301
        %v7588 = vadd.f32 %v7587, %v7309
        %v7589 = vadd.f32 %v7588, %v7317
        %v7590 = vadd.f32 %v7589, %v7325
        %v7591 = vadd.f32 %v7590, %v7333
        %v7592 = vadd.f32 %v7591, %v7341
        %v7593 = vadd.f32 %v7592, %v7349
        %v7594 = vadd.f32 %v7593, %v7357
        %v7595 = vadd.f32 %v7594, %v7365
        %v7596 = vrot.slane %v7595, 4
        %v7597 = vadd.f32 %v7595, %v7596
        %v7598 = vrot.slane %v7597, 2
        %v7599 = vadd.f32 %v7597, %v7598
        %v7600 = vrot.slane %v7599, 1
        %v7601 = vadd.f32 %v7599, %v7600
        %v7602 = vadd.f32 %v7246, %v7254
        %v7603 = vadd.f32 %v7602, %v7262
        %v7604 = vadd.f32 %v7603, %v7270
        %v7605 = vadd.f32 %v7604, %v7278
        %v7606 = vadd.f32 %v7605, %v7286
        %v7607 = vadd.f32 %v7606, %v7294
        %v7608 = vadd.f32 %v7607, %v7302
        %v7609 = vadd.f32 %v7608, %v7310
        %v7610 = vadd.f32 %v7609, %v7318
        %v7611 = vadd.f32 %v7610, %v7326
        %v7612 = vadd.f32 %v7611, %v7334
        %v7613 = vadd.f32 %v7612, %v7342
        %v7614 = vadd.f32 %v7613, %v7350
        %v7615 = vadd.f32 %v7614, %v7358
        %v7616 = vadd.f32 %v7615, %v7366
        %v7617 = vrot.slane %v7616, 4
        %v7618 = vadd.f32 %v7616, %v7617
        %v7619 = vrot.slane %v7618, 2
        %v7620 = vadd.f32 %v7618, %v7619
        %v7621 = vrot.slane %v7620, 1
        %v7622 = vadd.f32 %v7620, %v7621
        %v7623 = vadd.f32 %v7247, %v7255
        %v7624 = vadd.f32 %v7623, %v7263
        %v7625 = vadd.f32 %v7624, %v7271
        %v7626 = vadd.f32 %v7625, %v7279
        %v7627 = vadd.f32 %v7626, %v7287
        %v7628 = vadd.f32 %v7627, %v7295
        %v7629 = vadd.f32 %v7628, %v7303
        %v7630 = vadd.f32 %v7629, %v7311
        %v7631 = vadd.f32 %v7630, %v7319
        %v7632 = vadd.f32 %v7631, %v7327
        %v7633 = vadd.f32 %v7632, %v7335
        %v7634 = vadd.f32 %v7633, %v7343
        %v7635 = vadd.f32 %v7634, %v7351
        %v7636 = vadd.f32 %v7635, %v7359
        %v7637 = vadd.f32 %v7636, %v7367
        %v7638 = vrot.slane %v7637, 4
        %v7639 = vadd.f32 %v7637, %v7638
        %v7640 = vrot.slane %v7639, 2
        %v7641 = vadd.f32 %v7639, %v7640
        %v7642 = vrot.slane %v7641, 1
        %v7643 = vadd.f32 %v7641, %v7642
        %v7644 = vadd.f32 %v7248, %v7256
        %v7645 = vadd.f32 %v7644, %v7264
        %v7646 = vadd.f32 %v7645, %v7272
        %v7647 = vadd.f32 %v7646, %v7280
        %v7648 = vadd.f32 %v7647, %v7288
        %v7649 = vadd.f32 %v7648, %v7296
        %v7650 = vadd.f32 %v7649, %v7304
        %v7651 = vadd.f32 %v7650, %v7312
        %v7652 = vadd.f32 %v7651, %v7320
        %v7653 = vadd.f32 %v7652, %v7328
        %v7654 = vadd.f32 %v7653, %v7336
        %v7655 = vadd.f32 %v7654, %v7344
        %v7656 = vadd.f32 %v7655, %v7352
        %v7657 = vadd.f32 %v7656, %v7360
        %v7658 = vadd.f32 %v7657, %v7368
        %v7659 = vrot.slane %v7658, 4
        %v7660 = vadd.f32 %v7658, %v7659
        %v7661 = vrot.slane %v7660, 2
        %v7662 = vadd.f32 %v7660, %v7661
        %v7663 = vrot.slane %v7662, 1
        %v7664 = vadd.f32 %v7662, %v7663
        %v7665 = vadd.f32 %v7369, %v7377
        %v7666 = vadd.f32 %v7665, %v7385
        %v7667 = vadd.f32 %v7666, %v7393
        %v7668 = vadd.f32 %v7667, %v7401
        %v7669 = vadd.f32 %v7668, %v7409
        %v7670 = vadd.f32 %v7669, %v7417
        %v7671 = vadd.f32 %v7670, %v7425
        %v7672 = vadd.f32 %v7671, %v7433
        %v7673 = vadd.f32 %v7672, %v7441
        %v7674 = vadd.f32 %v7673, %v7449
        %v7675 = vadd.f32 %v7674, %v7457
        %v7676 = vadd.f32 %v7675, %v7465
        %v7677 = vadd.f32 %v7676, %v7473
        %v7678 = vadd.f32 %v7677, %v7481
        %v7679 = vadd.f32 %v7678, %v7489
        %v7680 = vrot.slane %v7679, 4
        %v7681 = vadd.f32 %v7679, %v7680
        %v7682 = vrot.slane %v7681, 2
        %v7683 = vadd.f32 %v7681, %v7682
        %v7684 = vrot.slane %v7683, 1
        %v7685 = vadd.f32 %v7683, %v7684
        %v7686 = vadd.f32 %v7370, %v7378
        %v7687 = vadd.f32 %v7686, %v7386
        %v7688 = vadd.f32 %v7687, %v7394
        %v7689 = vadd.f32 %v7688, %v7402
        %v7690 = vadd.f32 %v7689, %v7410
        %v7691 = vadd.f32 %v7690, %v7418
        %v7692 = vadd.f32 %v7691, %v7426
        %v7693 = vadd.f32 %v7692, %v7434
        %v7694 = vadd.f32 %v7693, %v7442
        %v7695 = vadd.f32 %v7694, %v7450
        %v7696 = vadd.f32 %v7695, %v7458
        %v7697 = vadd.f32 %v7696, %v7466
        %v7698 = vadd.f32 %v7697, %v7474
        %v7699 = vadd.f32 %v7698, %v7482
        %v7700 = vadd.f32 %v7699, %v7490
        %v7701 = vrot.slane %v7700, 4
        %v7702 = vadd.f32 %v7700, %v7701
        %v7703 = vrot.slane %v7702, 2
        %v7704 = vadd.f32 %v7702, %v7703
        %v7705 = vrot.slane %v7704, 1
        %v7706 = vadd.f32 %v7704, %v7705
        %v7707 = vadd.f32 %v7371, %v7379
        %v7708 = vadd.f32 %v7707, %v7387
        %v7709 = vadd.f32 %v7708, %v7395
        %v7710 = vadd.f32 %v7709, %v7403
        %v7711 = vadd.f32 %v7710, %v7411
        %v7712 = vadd.f32 %v7711, %v7419
        %v7713 = vadd.f32 %v7712, %v7427
        %v7714 = vadd.f32 %v7713, %v7435
        %v7715 = vadd.f32 %v7714, %v7443
        %v7716 = vadd.f32 %v7715, %v7451
        %v7717 = vadd.f32 %v7716, %v7459
        %v7718 = vadd.f32 %v7717, %v7467
        %v7719 = vadd.f32 %v7718, %v7475
        %v7720 = vadd.f32 %v7719, %v7483
        %v7721 = vadd.f32 %v7720, %v7491
        %v7722 = vrot.slane %v7721, 4
        %v7723 = vadd.f32 %v7721, %v7722
        %v7724 = vrot.slane %v7723, 2
        %v7725 = vadd.f32 %v7723, %v7724
        %v7726 = vrot.slane %v7725, 1
        %v7727 = vadd.f32 %v7725, %v7726
        %v7728 = vadd.f32 %v7372, %v7380
        %v7729 = vadd.f32 %v7728, %v7388
        %v7730 = vadd.f32 %v7729, %v7396
        %v7731 = vadd.f32 %v7730, %v7404
        %v7732 = vadd.f32 %v7731, %v7412
        %v7733 = vadd.f32 %v7732, %v7420
        %v7734 = vadd.f32 %v7733, %v7428
        %v7735 = vadd.f32 %v7734, %v7436
        %v7736 = vadd.f32 %v7735, %v7444
        %v7737 = vadd.f32 %v7736, %v7452
        %v7738 = vadd.f32 %v7737, %v7460
        %v7739 = vadd.f32 %v7738, %v7468
        %v7740 = vadd.f32 %v7739, %v7476
        %v7741 = vadd.f32 %v7740, %v7484
        %v7742 = vadd.f32 %v7741, %v7492
        %v7743 = vrot.slane %v7742, 4
        %v7744 = vadd.f32 %v7742, %v7743
        %v7745 = vrot.slane %v7744, 2
        %v7746 = vadd.f32 %v7744, %v7745
        %v7747 = vrot.slane %v7746, 1
        %v7748 = vadd.f32 %v7746, %v7747
        %v7749 = vadd.f32 %v7373, %v7381
        %v7750 = vadd.f32 %v7749, %v7389
        %v7751 = vadd.f32 %v7750, %v7397
        %v7752 = vadd.f32 %v7751, %v7405
        %v7753 = vadd.f32 %v7752, %v7413
        %v7754 = vadd.f32 %v7753, %v7421
        %v7755 = vadd.f32 %v7754, %v7429
        %v7756 = vadd.f32 %v7755, %v7437
        %v7757 = vadd.f32 %v7756, %v7445
        %v7758 = vadd.f32 %v7757, %v7453
        %v7759 = vadd.f32 %v7758, %v7461
        %v7760 = vadd.f32 %v7759, %v7469
        %v7761 = vadd.f32 %v7760, %v7477
        %v7762 = vadd.f32 %v7761, %v7485
        %v7763 = vadd.f32 %v7762, %v7493
        %v7764 = vrot.slane %v7763, 4
        %v7765 = vadd.f32 %v7763, %v7764
        %v7766 = vrot.slane %v7765, 2
        %v7767 = vadd.f32 %v7765, %v7766
        %v7768 = vrot.slane %v7767, 1
        %v7769 = vadd.f32 %v7767, %v7768
        %v7770 = vadd.f32 %v7374, %v7382
        %v7771 = vadd.f32 %v7770, %v7390
        %v7772 = vadd.f32 %v7771, %v7398
        %v7773 = vadd.f32 %v7772, %v7406
        %v7774 = vadd.f32 %v7773, %v7414
        %v7775 = vadd.f32 %v7774, %v7422
        %v7776 = vadd.f32 %v7775, %v7430
        %v7777 = vadd.f32 %v7776, %v7438
        %v7778 = vadd.f32 %v7777, %v7446
        %v7779 = vadd.f32 %v7778, %v7454
        %v7780 = vadd.f32 %v7779, %v7462
        %v7781 = vadd.f32 %v7780, %v7470
        %v7782 = vadd.f32 %v7781, %v7478
        %v7783 = vadd.f32 %v7782, %v7486
        %v7784 = vadd.f32 %v7783, %v7494
        %v7785 = vrot.slane %v7784, 4
        %v7786 = vadd.f32 %v7784, %v7785
        %v7787 = vrot.slane %v7786, 2
        %v7788 = vadd.f32 %v7786, %v7787
        %v7789 = vrot.slane %v7788, 1
        %v7790 = vadd.f32 %v7788, %v7789
        %v7791 = vadd.f32 %v7375, %v7383
        %v7792 = vadd.f32 %v7791, %v7391
        %v7793 = vadd.f32 %v7792, %v7399
        %v7794 = vadd.f32 %v7793, %v7407
        %v7795 = vadd.f32 %v7794, %v7415
        %v7796 = vadd.f32 %v7795, %v7423
        %v7797 = vadd.f32 %v7796, %v7431
        %v7798 = vadd.f32 %v7797, %v7439
        %v7799 = vadd.f32 %v7798, %v7447
        %v7800 = vadd.f32 %v7799, %v7455
        %v7801 = vadd.f32 %v7800, %v7463
        %v7802 = vadd.f32 %v7801, %v7471
        %v7803 = vadd.f32 %v7802, %v7479
        %v7804 = vadd.f32 %v7803, %v7487
        %v7805 = vadd.f32 %v7804, %v7495
        %v7806 = vrot.slane %v7805, 4
        %v7807 = vadd.f32 %v7805, %v7806
        %v7808 = vrot.slane %v7807, 2
        %v7809 = vadd.f32 %v7807, %v7808
        %v7810 = vrot.slane %v7809, 1
        %v7811 = vadd.f32 %v7809, %v7810
        %v7812 = vadd.f32 %v7376, %v7384
        %v7813 = vadd.f32 %v7812, %v7392
        %v7814 = vadd.f32 %v7813, %v7400
        %v7815 = vadd.f32 %v7814, %v7408
        %v7816 = vadd.f32 %v7815, %v7416
        %v7817 = vadd.f32 %v7816, %v7424
        %v7818 = vadd.f32 %v7817, %v7432
        %v7819 = vadd.f32 %v7818, %v7440
        %v7820 = vadd.f32 %v7819, %v7448
        %v7821 = vadd.f32 %v7820, %v7456
        %v7822 = vadd.f32 %v7821, %v7464
        %v7823 = vadd.f32 %v7822, %v7472
        %v7824 = vadd.f32 %v7823, %v7480
        %v7825 = vadd.f32 %v7824, %v7488
        %v7826 = vadd.f32 %v7825, %v7496
        %v7827 = vrot.slane %v7826, 4
        %v7828 = vadd.f32 %v7826, %v7827
        %v7829 = vrot.slane %v7828, 2
        %v7830 = vadd.f32 %v7828, %v7829
        %v7831 = vrot.slane %v7830, 1
        %v7832 = vadd.f32 %v7830, %v7831
        %v7833 = vmul.f32 %v7517, %v1086
        %v7834 = vmul.f32 %v7538, %v1086
        %v7835 = vmul.f32 %v7559, %v1086
        %v7836 = vmul.f32 %v7580, %v1086
        %v7837 = vmul.f32 %v7601, %v1086
        %v7838 = vmul.f32 %v7622, %v1086
        %v7839 = vmul.f32 %v7643, %v1086
        %v7840 = vmul.f32 %v7664, %v1086
        %v7841 = vmul.f32 %v7685, %v1086
        %v7842 = vmul.f32 %v7706, %v1086
        %v7843 = vmul.f32 %v7727, %v1086
        %v7844 = vmul.f32 %v7748, %v1086
        %v7845 = vmul.f32 %v7769, %v1086
        %v7846 = vmul.f32 %v7790, %v1086
        %v7847 = vmul.f32 %v7811, %v1086
        %v7848 = vmul.f32 %v7832, %v1086
        %v7849 = vmul.f32 %v7225, %v7225
        %v7850 = vmul.f32 %v7226, %v7226
        %v7851 = vmul.f32 %v7227, %v7227
        %v7852 = vmul.f32 %v7228, %v7228
        %v7853 = vmul.f32 %v7229, %v7229
        %v7854 = vmul.f32 %v7230, %v7230
        %v7855 = vmul.f32 %v7231, %v7231
        %v7856 = vmul.f32 %v7232, %v7232
        %v7857 = vmul.f32 %v7233, %v7233
        %v7858 = vmul.f32 %v7234, %v7234
        %v7859 = vmul.f32 %v7235, %v7235
        %v7860 = vmul.f32 %v7236, %v7236
        %v7861 = vmul.f32 %v7237, %v7237
        %v7862 = vmul.f32 %v7238, %v7238
        %v7863 = vmul.f32 %v7239, %v7239
        %v7864 = vmul.f32 %v7240, %v7240
        %v7865 = vsub.f32 %v7833, %v7849
        %v7866 = vsub.f32 %v7834, %v7850
        %v7867 = vsub.f32 %v7835, %v7851
        %v7868 = vsub.f32 %v7836, %v7852
        %v7869 = vsub.f32 %v7837, %v7853
        %v7870 = vsub.f32 %v7838, %v7854
        %v7871 = vsub.f32 %v7839, %v7855
        %v7872 = vsub.f32 %v7840, %v7856
        %v7873 = vsub.f32 %v7841, %v7857
        %v7874 = vsub.f32 %v7842, %v7858
        %v7875 = vsub.f32 %v7843, %v7859
        %v7876 = vsub.f32 %v7844, %v7860
        %v7877 = vsub.f32 %v7845, %v7861
        %v7878 = vsub.f32 %v7846, %v7862
        %v7879 = vsub.f32 %v7847, %v7863
        %v7880 = vsub.f32 %v7848, %v7864
        %v7881 = vadd.f32 %v7865, 0.8
        %v7882 = vadd.f32 %v7866, 0.8
        %v7883 = vadd.f32 %v7867, 0.8
        %v7884 = vadd.f32 %v7868, 0.8
        %v7885 = vadd.f32 %v7869, 0.8
        %v7886 = vadd.f32 %v7870, 0.8
        %v7887 = vadd.f32 %v7871, 0.8
        %v7888 = vadd.f32 %v7872, 0.8
        %v7889 = vadd.f32 %v7873, 0.8
        %v7890 = vadd.f32 %v7874, 0.8
        %v7891 = vadd.f32 %v7875, 0.8
        %v7892 = vadd.f32 %v7876, 0.8
        %v7893 = vadd.f32 %v7877, 0.8
        %v7894 = vadd.f32 %v7878, 0.8
        %v7895 = vadd.f32 %v7879, 0.8
        %v7896 = vadd.f32 %v7880, 0.8
        %v7897 = vrsqrt.pop %v7881
        %v7898 = vrsqrt.pop %v7882
        %v7899 = vrsqrt.pop %v7883
        %v7900 = vrsqrt.pop %v7884
        %v7901 = vrsqrt.pop %v7885
        %v7902 = vrsqrt.pop %v7886
        %v7903 = vrsqrt.pop %v7887
        %v7904 = vrsqrt.pop %v7888
        %v7905 = vrsqrt.pop %v7889
        %v7906 = vrsqrt.pop %v7890
        %v7907 = vrsqrt.pop %v7891
        %v7908 = vrsqrt.pop %v7892
        %v7909 = vrsqrt.pop %v7893
        %v7910 = vrsqrt.pop %v7894
        %v7911 = vrsqrt.pop %v7895
        %v7912 = vrsqrt.pop %v7896
        %v7929 = vcombine.low %v7897, %v7898
        %v7930 = vcombine.low %v7899, %v7900
        %v7931 = vcombine.low %v7901, %v7902
        %v7932 = vcombine.low %v7903, %v7904
        %v7934 = vunpack.c.l.s4 1966171168
        %v7935 = vunpack.c.0.s8 %v7934
        %v7936 = vlaneseq
        %v7937 = vshrl.u32 %v7936, 7
        %v7938 = vsub.s32 %v7935, %v7937
        %v7939 = vrot.slane %v7929, %v7938
        %v7941 = vunpack.c.l.s4 1966171168
        %v7942 = vunpack.c.0.s8 %v7941
        %v7943 = vlaneseq
        %v7944 = vshrl.u32 %v7943, 7
        %v7945 = vsub.s32 %v7942, %v7944
        %v7946 = vrot.slane %v7930, %v7945
        %v7948 = vunpack.c.l.s4 1966171168
        %v7949 = vunpack.c.0.s8 %v7948
        %v7950 = vlaneseq
        %v7951 = vshrl.u32 %v7950, 7
        %v7952 = vsub.s32 %v7949, %v7951
        %v7953 = vrot.slane %v7931, %v7952
        %v7955 = vunpack.c.l.s4 1966171168
        %v7956 = vunpack.c.0.s8 %v7955
        %v7957 = vlaneseq
        %v7958 = vshrl.u32 %v7957, 7
        %v7959 = vsub.s32 %v7956, %v7958
        %v7960 = vrot.slane %v7932, %v7959
        %v7961 = vcombine.low %v7939, %v7946
        %v7962 = vcombine.low %v7953, %v7960
        %v7964 = vunpack.c.l.s4 1966171168
        %v7965 = vunpack.c.0.s8 %v7964
        %v7966 = vlaneseq
        %v7967 = vshrl.u32 %v7966, 7
        %v7968 = vsub.s32 %v7965, %v7967
        %v7969 = vrot.slane %v7961, %v7968
        %v7971 = vunpack.c.l.s4 1966171168
        %v7972 = vunpack.c.0.s8 %v7971
        %v7973 = vlaneseq
        %v7974 = vshrl.u32 %v7973, 7
        %v7975 = vsub.s32 %v7972, %v7974
        %v7976 = vrot.slane %v7962, %v7975
        %v7977 = vcombine.low %v7969, %v7976
        %v7978 = vcombine.low %v7905, %v7906
        %v7979 = vcombine.low %v7907, %v7908
        %v7980 = vcombine.low %v7909, %v7910
        %v7981 = vcombine.low %v7911, %v7912
        %v7983 = vunpack.c.l.s4 1966171168
        %v7984 = vunpack.c.0.s8 %v7983
        %v7985 = vlaneseq
        %v7986 = vshrl.u32 %v7985, 7
        %v7987 = vsub.s32 %v7984, %v7986
        %v7988 = vrot.slane %v7978, %v7987
        %v7990 = vunpack.c.l.s4 1966171168
        %v7991 = vunpack.c.0.s8 %v7990
        %v7992 = vlaneseq
        %v7993 = vshrl.u32 %v7992, 7
        %v7994 = vsub.s32 %v7991, %v7993
        %v7995 = vrot.slane %v7979, %v7994
        %v7997 = vunpack.c.l.s4 1966171168
        %v7998 = vunpack.c.0.s8 %v7997
        %v7999 = vlaneseq
        %v8000 = vshrl.u32 %v7999, 7
        %v8001 = vsub.s32 %v7998, %v8000
        %v8002 = vrot.slane %v7980, %v8001
        %v8004 = vunpack.c.l.s4 1966171168
        %v8005 = vunpack.c.0.s8 %v8004
        %v8006 = vlaneseq
        %v8007 = vshrl.u32 %v8006, 7
        %v8008 = vsub.s32 %v8005, %v8007
        %v8009 = vrot.slane %v7981, %v8008
        %v8010 = vcombine.low %v7988, %v7995
        %v8011 = vcombine.low %v8002, %v8009
        %v8013 = vunpack.c.l.s4 1966171168
        %v8014 = vunpack.c.0.s8 %v8013
        %v8015 = vlaneseq
        %v8016 = vshrl.u32 %v8015, 7
        %v8017 = vsub.s32 %v8014, %v8016
        %v8018 = vrot.slane %v8010, %v8017
        %v8020 = vunpack.c.l.s4 1966171168
        %v8021 = vunpack.c.0.s8 %v8020
        %v8022 = vlaneseq
        %v8023 = vshrl.u32 %v8022, 7
        %v8024 = vsub.s32 %v8021, %v8023
        %v8025 = vrot.slane %v8011, %v8024
        %v8026 = vcombine.low %v8018, %v8025
        %v8029 = vmul.f32 %v6887, %v7977
        %v8030 = vmul.f32 %v6887, %v8026
        %v8033 = vlaneseq
        %v8034 = vshrl.u32 %v8033, 7
        %v8035 = vsub.s32 0, %v8034
        %v8036 = vrot.slane %v8029, %v8035
        %v8037 = vlaneseq
        %v8038 = vshrl.u32 %v8037, 7
        %v8039 = vsub.s32 1, %v8038
        %v8040 = vrot.slane %v8029, %v8039
        %v8041 = vlaneseq
        %v8042 = vshrl.u32 %v8041, 7
        %v8043 = vsub.s32 2, %v8042
        %v8044 = vrot.slane %v8029, %v8043
        %v8045 = vlaneseq
        %v8046 = vshrl.u32 %v8045, 7
        %v8047 = vsub.s32 3, %v8046
        %v8048 = vrot.slane %v8029, %v8047
        %v8049 = vlaneseq
        %v8050 = vshrl.u32 %v8049, 7
        %v8051 = vsub.s32 4, %v8050
        %v8052 = vrot.slane %v8029, %v8051
        %v8053 = vlaneseq
        %v8054 = vshrl.u32 %v8053, 7
        %v8055 = vsub.s32 5, %v8054
        %v8056 = vrot.slane %v8029, %v8055
        %v8057 = vlaneseq
        %v8058 = vshrl.u32 %v8057, 7
        %v8059 = vsub.s32 6, %v8058
        %v8060 = vrot.slane %v8029, %v8059
        %v8061 = vlaneseq
        %v8062 = vshrl.u32 %v8061, 7
        %v8063 = vsub.s32 7, %v8062
        %v8064 = vrot.slane %v8029, %v8063
        %v8065 = vlaneseq
        %v8066 = vshrl.u32 %v8065, 7
        %v8067 = vsub.s32 0, %v8066
        %v8068 = vrot.slane %v8030, %v8067
        %v8069 = vlaneseq
        %v8070 = vshrl.u32 %v8069, 7
        %v8071 = vsub.s32 1, %v8070
        %v8072 = vrot.slane %v8030, %v8071
        %v8073 = vlaneseq
        %v8074 = vshrl.u32 %v8073, 7
        %v8075 = vsub.s32 2, %v8074
        %v8076 = vrot.slane %v8030, %v8075
        %v8077 = vlaneseq
        %v8078 = vshrl.u32 %v8077, 7
        %v8079 = vsub.s32 3, %v8078
        %v8080 = vrot.slane %v8030, %v8079
        %v8081 = vlaneseq
        %v8082 = vshrl.u32 %v8081, 7
        %v8083 = vsub.s32 4, %v8082
        %v8084 = vrot.slane %v8030, %v8083
        %v8085 = vlaneseq
        %v8086 = vshrl.u32 %v8085, 7
        %v8087 = vsub.s32 5, %v8086
        %v8088 = vrot.slane %v8030, %v8087
        %v8089 = vlaneseq
        %v8090 = vshrl.u32 %v8089, 7
        %v8091 = vsub.s32 6, %v8090
        %v8092 = vrot.slane %v8030, %v8091
        %v8093 = vlaneseq
        %v8094 = vshrl.u32 %v8093, 7
        %v8095 = vsub.s32 7, %v8094
        %v8096 = vrot.slane %v8030, %v8095
        %v8113 = vmul.f32 %v7225, %v8036
        %v8114 = vmul.f32 %v7226, %v8040
        %v8115 = vmul.f32 %v7227, %v8044
        %v8116 = vmul.f32 %v7228, %v8048
        %v8117 = vmul.f32 %v7229, %v8052
        %v8118 = vmul.f32 %v7230, %v8056
        %v8119 = vmul.f32 %v7231, %v8060
        %v8120 = vmul.f32 %v7232, %v8064
        %v8121 = vmul.f32 %v7233, %v8068
        %v8122 = vmul.f32 %v7234, %v8072
        %v8123 = vmul.f32 %v7235, %v8076
        %v8124 = vmul.f32 %v7236, %v8080
        %v8125 = vmul.f32 %v7237, %v8084
        %v8126 = vmul.f32 %v7238, %v8088
        %v8127 = vmul.f32 %v7239, %v8092
        %v8128 = vmul.f32 %v7240, %v8096
        %v8145 = vcombine.low %v8113, %v8114
        %v8146 = vcombine.low %v8115, %v8116
        %v8147 = vcombine.low %v8117, %v8118
        %v8148 = vcombine.low %v8119, %v8120
        %v8150 = vunpack.c.l.s4 1966171168
        %v8151 = vunpack.c.0.s8 %v8150
        %v8152 = vlaneseq
        %v8153 = vshrl.u32 %v8152, 7
        %v8154 = vsub.s32 %v8151, %v8153
        %v8155 = vrot.slane %v8145, %v8154
        %v8157 = vunpack.c.l.s4 1966171168
        %v8158 = vunpack.c.0.s8 %v8157
        %v8159 = vlaneseq
        %v8160 = vshrl.u32 %v8159, 7
        %v8161 = vsub.s32 %v8158, %v8160
        %v8162 = vrot.slane %v8146, %v8161
        %v8164 = vunpack.c.l.s4 1966171168
        %v8165 = vunpack.c.0.s8 %v8164
        %v8166 = vlaneseq
        %v8167 = vshrl.u32 %v8166, 7
        %v8168 = vsub.s32 %v8165, %v8167
        %v8169 = vrot.slane %v8147, %v8168
        %v8171 = vunpack.c.l.s4 1966171168
        %v8172 = vunpack.c.0.s8 %v8171
        %v8173 = vlaneseq
        %v8174 = vshrl.u32 %v8173, 7
        %v8175 = vsub.s32 %v8172, %v8174
        %v8176 = vrot.slane %v8148, %v8175
        %v8177 = vcombine.low %v8155, %v8162
        %v8178 = vcombine.low %v8169, %v8176
        %v8180 = vunpack.c.l.s4 1966171168
        %v8181 = vunpack.c.0.s8 %v8180
        %v8182 = vlaneseq
        %v8183 = vshrl.u32 %v8182, 7
        %v8184 = vsub.s32 %v8181, %v8183
        %v8185 = vrot.slane %v8177, %v8184
        %v8187 = vunpack.c.l.s4 1966171168
        %v8188 = vunpack.c.0.s8 %v8187
        %v8189 = vlaneseq
        %v8190 = vshrl.u32 %v8189, 7
        %v8191 = vsub.s32 %v8188, %v8190
        %v8192 = vrot.slane %v8178, %v8191
        %v8193 = vcombine.low %v8185, %v8192
        %v8194 = vcombine.low %v8121, %v8122
        %v8195 = vcombine.low %v8123, %v8124
        %v8196 = vcombine.low %v8125, %v8126
        %v8197 = vcombine.low %v8127, %v8128
        %v8199 = vunpack.c.l.s4 1966171168
        %v8200 = vunpack.c.0.s8 %v8199
        %v8201 = vlaneseq
        %v8202 = vshrl.u32 %v8201, 7
        %v8203 = vsub.s32 %v8200, %v8202
        %v8204 = vrot.slane %v8194, %v8203
        %v8206 = vunpack.c.l.s4 1966171168
        %v8207 = vunpack.c.0.s8 %v8206
        %v8208 = vlaneseq
        %v8209 = vshrl.u32 %v8208, 7
        %v8210 = vsub.s32 %v8207, %v8209
        %v8211 = vrot.slane %v8195, %v8210
        %v8213 = vunpack.c.l.s4 1966171168
        %v8214 = vunpack.c.0.s8 %v8213
        %v8215 = vlaneseq
        %v8216 = vshrl.u32 %v8215, 7
        %v8217 = vsub.s32 %v8214, %v8216
        %v8218 = vrot.slane %v8196, %v8217
        %v8220 = vunpack.c.l.s4 1966171168
        %v8221 = vunpack.c.0.s8 %v8220
        %v8222 = vlaneseq
        %v8223 = vshrl.u32 %v8222, 7
        %v8224 = vsub.s32 %v8221, %v8223
        %v8225 = vrot.slane %v8197, %v8224
        %v8226 = vcombine.low %v8204, %v8211
        %v8227 = vcombine.low %v8218, %v8225
        %v8229 = vunpack.c.l.s4 1966171168
        %v8230 = vunpack.c.0.s8 %v8229
        %v8231 = vlaneseq
        %v8232 = vshrl.u32 %v8231, 7
        %v8233 = vsub.s32 %v8230, %v8232
        %v8234 = vrot.slane %v8226, %v8233
        %v8236 = vunpack.c.l.s4 1966171168
        %v8237 = vunpack.c.0.s8 %v8236
        %v8238 = vlaneseq
        %v8239 = vshrl.u32 %v8238, 7
        %v8240 = vsub.s32 %v8237, %v8239
        %v8241 = vrot.slane %v8227, %v8240
        %v8242 = vcombine.low %v8234, %v8241
        %v8245 = vsub.f32 %v6888, %v8193
        %v8246 = vsub.f32 %v6888, %v8242
        %v8247 = vmul.f32 %v5571, %v8036
        %v8248 = vmul.f32 %v5573, %v8040
        %v8249 = vmul.f32 %v5957, %v8044
        %v8250 = vmul.f32 %v5959, %v8048
        %v8251 = vmul.f32 %v6343, %v8052
        %v8252 = vmul.f32 %v6345, %v8056
        %v8253 = vmul.f32 %v6729, %v8060
        %v8254 = vmul.f32 %v6731, %v8064
        %v8255 = vmul.f32 %v5575, %v8036
        %v8256 = vmul.f32 %v5577, %v8040
        %v8257 = vmul.f32 %v5961, %v8044
        %v8258 = vmul.f32 %v5963, %v8048
        %v8259 = vmul.f32 %v6347, %v8052
        %v8260 = vmul.f32 %v6349, %v8056
        %v8261 = vmul.f32 %v6733, %v8060
        %v8262 = vmul.f32 %v6735, %v8064
        %v8263 = vmul.f32 %v5581, %v8036
        %v8264 = vmul.f32 %v5583, %v8040
        %v8265 = vmul.f32 %v5967, %v8044
        %v8266 = vmul.f32 %v5969, %v8048
        %v8267 = vmul.f32 %v6353, %v8052
        %v8268 = vmul.f32 %v6355, %v8056
        %v8269 = vmul.f32 %v6739, %v8060
        %v8270 = vmul.f32 %v6741, %v8064
        %v8271 = vmul.f32 %v5585, %v8036
        %v8272 = vmul.f32 %v5587, %v8040
        %v8273 = vmul.f32 %v5971, %v8044
        %v8274 = vmul.f32 %v5973, %v8048
        %v8275 = vmul.f32 %v6357, %v8052
        %v8276 = vmul.f32 %v6359, %v8056
        %v8277 = vmul.f32 %v6743, %v8060
        %v8278 = vmul.f32 %v6745, %v8064
        %v8279 = vmul.f32 %v5591, %v8036
        %v8280 = vmul.f32 %v5593, %v8040
        %v8281 = vmul.f32 %v5977, %v8044
        %v8282 = vmul.f32 %v5979, %v8048
        %v8283 = vmul.f32 %v6363, %v8052
        %v8284 = vmul.f32 %v6365, %v8056
        %v8285 = vmul.f32 %v6749, %v8060
        %v8286 = vmul.f32 %v6751, %v8064
        %v8287 = vmul.f32 %v5595, %v8036
        %v8288 = vmul.f32 %v5597, %v8040
        %v8289 = vmul.f32 %v5981, %v8044
        %v8290 = vmul.f32 %v5983, %v8048
        %v8291 = vmul.f32 %v6367, %v8052
        %v8292 = vmul.f32 %v6369, %v8056
        %v8293 = vmul.f32 %v6753, %v8060
        %v8294 = vmul.f32 %v6755, %v8064
        %v8295 = vmul.f32 %v5601, %v8036
        %v8296 = vmul.f32 %v5603, %v8040
        %v8297 = vmul.f32 %v5987, %v8044
        %v8298 = vmul.f32 %v5989, %v8048
        %v8299 = vmul.f32 %v6373, %v8052
        %v8300 = vmul.f32 %v6375, %v8056
        %v8301 = vmul.f32 %v6759, %v8060
        %v8302 = vmul.f32 %v6761, %v8064
        %v8303 = vmul.f32 %v5605, %v8036
        %v8304 = vmul.f32 %v5607, %v8040
        %v8305 = vmul.f32 %v5991, %v8044
        %v8306 = vmul.f32 %v5993, %v8048
        %v8307 = vmul.f32 %v6377, %v8052
        %v8308 = vmul.f32 %v6379, %v8056
        %v8309 = vmul.f32 %v6763, %v8060
        %v8310 = vmul.f32 %v6765, %v8064
        %v8311 = vmul.f32 %v5611, %v8036
        %v8312 = vmul.f32 %v5613, %v8040
        %v8313 = vmul.f32 %v5997, %v8044
        %v8314 = vmul.f32 %v5999, %v8048
        %v8315 = vmul.f32 %v6383, %v8052
        %v8316 = vmul.f32 %v6385, %v8056
        %v8317 = vmul.f32 %v6769, %v8060
        %v8318 = vmul.f32 %v6771, %v8064
        %v8319 = vmul.f32 %v5615, %v8036
        %v8320 = vmul.f32 %v5617, %v8040
        %v8321 = vmul.f32 %v6001, %v8044
        %v8322 = vmul.f32 %v6003, %v8048
        %v8323 = vmul.f32 %v6387, %v8052
        %v8324 = vmul.f32 %v6389, %v8056
        %v8325 = vmul.f32 %v6773, %v8060
        %v8326 = vmul.f32 %v6775, %v8064
        %v8327 = vmul.f32 %v5621, %v8036
        %v8328 = vmul.f32 %v5623, %v8040
        %v8329 = vmul.f32 %v6007, %v8044
        %v8330 = vmul.f32 %v6009, %v8048
        %v8331 = vmul.f32 %v6393, %v8052
        %v8332 = vmul.f32 %v6395, %v8056
        %v8333 = vmul.f32 %v6779, %v8060
        %v8334 = vmul.f32 %v6781, %v8064
        %v8335 = vmul.f32 %v5625, %v8036
        %v8336 = vmul.f32 %v5627, %v8040
        %v8337 = vmul.f32 %v6011, %v8044
        %v8338 = vmul.f32 %v6013, %v8048
        %v8339 = vmul.f32 %v6397, %v8052
        %v8340 = vmul.f32 %v6399, %v8056
        %v8341 = vmul.f32 %v6783, %v8060
        %v8342 = vmul.f32 %v6785, %v8064
        %v8343 = vmul.f32 %v5631, %v8036
        %v8344 = vmul.f32 %v5633, %v8040
        %v8345 = vmul.f32 %v6017, %v8044
        %v8346 = vmul.f32 %v6019, %v8048
        %v8347 = vmul.f32 %v6403, %v8052
        %v8348 = vmul.f32 %v6405, %v8056
        %v8349 = vmul.f32 %v6789, %v8060
        %v8350 = vmul.f32 %v6791, %v8064
        %v8351 = vmul.f32 %v5635, %v8036
        %v8352 = vmul.f32 %v5637, %v8040
        %v8353 = vmul.f32 %v6021, %v8044
        %v8354 = vmul.f32 %v6023, %v8048
        %v8355 = vmul.f32 %v6407, %v8052
        %v8356 = vmul.f32 %v6409, %v8056
        %v8357 = vmul.f32 %v6793, %v8060
        %v8358 = vmul.f32 %v6795, %v8064
        %v8359 = vmul.f32 %v5641, %v8036
        %v8360 = vmul.f32 %v5643, %v8040
        %v8361 = vmul.f32 %v6027, %v8044
        %v8362 = vmul.f32 %v6029, %v8048
        %v8363 = vmul.f32 %v6413, %v8052
        %v8364 = vmul.f32 %v6415, %v8056
        %v8365 = vmul.f32 %v6799, %v8060
        %v8366 = vmul.f32 %v6801, %v8064
        %v8367 = vmul.f32 %v5645, %v8036
        %v8368 = vmul.f32 %v5647, %v8040
        %v8369 = vmul.f32 %v6031, %v8044
        %v8370 = vmul.f32 %v6033, %v8048
        %v8371 = vmul.f32 %v6417, %v8052
        %v8372 = vmul.f32 %v6419, %v8056
        %v8373 = vmul.f32 %v6803, %v8060
        %v8374 = vmul.f32 %v6805, %v8064
        %v8375 = vmul.f32 %v5651, %v8068
        %v8376 = vmul.f32 %v5653, %v8072
        %v8377 = vmul.f32 %v6037, %v8076
        %v8378 = vmul.f32 %v6039, %v8080
        %v8379 = vmul.f32 %v6423, %v8084
        %v8380 = vmul.f32 %v6425, %v8088
        %v8381 = vmul.f32 %v6809, %v8092
        %v8382 = vmul.f32 %v6811, %v8096
        %v8383 = vmul.f32 %v5655, %v8068
        %v8384 = vmul.f32 %v5657, %v8072
        %v8385 = vmul.f32 %v6041, %v8076
        %v8386 = vmul.f32 %v6043, %v8080
        %v8387 = vmul.f32 %v6427, %v8084
        %v8388 = vmul.f32 %v6429, %v8088
        %v8389 = vmul.f32 %v6813, %v8092
        %v8390 = vmul.f32 %v6815, %v8096
        %v8391 = vmul.f32 %v5661, %v8068
        %v8392 = vmul.f32 %v5663, %v8072
        %v8393 = vmul.f32 %v6047, %v8076
        %v8394 = vmul.f32 %v6049, %v8080
        %v8395 = vmul.f32 %v6433, %v8084
        %v8396 = vmul.f32 %v6435, %v8088
        %v8397 = vmul.f32 %v6819, %v8092
        %v8398 = vmul.f32 %v6821, %v8096
        %v8399 = vmul.f32 %v5665, %v8068
        %v8400 = vmul.f32 %v5667, %v8072
        %v8401 = vmul.f32 %v6051, %v8076
        %v8402 = vmul.f32 %v6053, %v8080
        %v8403 = vmul.f32 %v6437, %v8084
        %v8404 = vmul.f32 %v6439, %v8088
        %v8405 = vmul.f32 %v6823, %v8092
        %v8406 = vmul.f32 %v6825, %v8096
        %v8407 = vmul.f32 %v5671, %v8068
        %v8408 = vmul.f32 %v5673, %v8072
        %v8409 = vmul.f32 %v6057, %v8076
        %v8410 = vmul.f32 %v6059, %v8080
        %v8411 = vmul.f32 %v6443, %v8084
        %v8412 = vmul.f32 %v6445, %v8088
        %v8413 = vmul.f32 %v6829, %v8092
        %v8414 = vmul.f32 %v6831, %v8096
        %v8415 = vmul.f32 %v5675, %v8068
        %v8416 = vmul.f32 %v5677, %v8072
        %v8417 = vmul.f32 %v6061, %v8076
        %v8418 = vmul.f32 %v6063, %v8080
        %v8419 = vmul.f32 %v6447, %v8084
        %v8420 = vmul.f32 %v6449, %v8088
        %v8421 = vmul.f32 %v6833, %v8092
        %v8422 = vmul.f32 %v6835, %v8096
        %v8423 = vmul.f32 %v5681, %v8068
        %v8424 = vmul.f32 %v5683, %v8072
        %v8425 = vmul.f32 %v6067, %v8076
        %v8426 = vmul.f32 %v6069, %v8080
        %v8427 = vmul.f32 %v6453, %v8084
        %v8428 = vmul.f32 %v6455, %v8088
        %v8429 = vmul.f32 %v6839, %v8092
        %v8430 = vmul.f32 %v6841, %v8096
        %v8431 = vmul.f32 %v5685, %v8068
        %v8432 = vmul.f32 %v5687, %v8072
        %v8433 = vmul.f32 %v6071, %v8076
        %v8434 = vmul.f32 %v6073, %v8080
        %v8435 = vmul.f32 %v6457, %v8084
        %v8436 = vmul.f32 %v6459, %v8088
        %v8437 = vmul.f32 %v6843, %v8092
        %v8438 = vmul.f32 %v6845, %v8096
        %v8439 = vmul.f32 %v5691, %v8068
        %v8440 = vmul.f32 %v5693, %v8072
        %v8441 = vmul.f32 %v6077, %v8076
        %v8442 = vmul.f32 %v6079, %v8080
        %v8443 = vmul.f32 %v6463, %v8084
        %v8444 = vmul.f32 %v6465, %v8088
        %v8445 = vmul.f32 %v6849, %v8092
        %v8446 = vmul.f32 %v6851, %v8096
        %v8447 = vmul.f32 %v5695, %v8068
        %v8448 = vmul.f32 %v5697, %v8072
        %v8449 = vmul.f32 %v6081, %v8076
        %v8450 = vmul.f32 %v6083, %v8080
        %v8451 = vmul.f32 %v6467, %v8084
        %v8452 = vmul.f32 %v6469, %v8088
        %v8453 = vmul.f32 %v6853, %v8092
        %v8454 = vmul.f32 %v6855, %v8096
        %v8455 = vmul.f32 %v5701, %v8068
        %v8456 = vmul.f32 %v5703, %v8072
        %v8457 = vmul.f32 %v6087, %v8076
        %v8458 = vmul.f32 %v6089, %v8080
        %v8459 = vmul.f32 %v6473, %v8084
        %v8460 = vmul.f32 %v6475, %v8088
        %v8461 = vmul.f32 %v6859, %v8092
        %v8462 = vmul.f32 %v6861, %v8096
        %v8463 = vmul.f32 %v5705, %v8068
        %v8464 = vmul.f32 %v5707, %v8072
        %v8465 = vmul.f32 %v6091, %v8076
        %v8466 = vmul.f32 %v6093, %v8080
        %v8467 = vmul.f32 %v6477, %v8084
        %v8468 = vmul.f32 %v6479, %v8088
        %v8469 = vmul.f32 %v6863, %v8092
        %v8470 = vmul.f32 %v6865, %v8096
        %v8471 = vmul.f32 %v5711, %v8068
        %v8472 = vmul.f32 %v5713, %v8072
        %v8473 = vmul.f32 %v6097, %v8076
        %v8474 = vmul.f32 %v6099, %v8080
        %v8475 = vmul.f32 %v6483, %v8084
        %v8476 = vmul.f32 %v6485, %v8088
        %v8477 = vmul.f32 %v6869, %v8092
        %v8478 = vmul.f32 %v6871, %v8096
        %v8479 = vmul.f32 %v5715, %v8068
        %v8480 = vmul.f32 %v5717, %v8072
        %v8481 = vmul.f32 %v6101, %v8076
        %v8482 = vmul.f32 %v6103, %v8080
        %v8483 = vmul.f32 %v6487, %v8084
        %v8484 = vmul.f32 %v6489, %v8088
        %v8485 = vmul.f32 %v6873, %v8092
        %v8486 = vmul.f32 %v6875, %v8096
        %v8487 = vmul.f32 %v5721, %v8068
        %v8488 = vmul.f32 %v5723, %v8072
        %v8489 = vmul.f32 %v6107, %v8076
        %v8490 = vmul.f32 %v6109, %v8080
        %v8491 = vmul.f32 %v6493, %v8084
        %v8492 = vmul.f32 %v6495, %v8088
        %v8493 = vmul.f32 %v6879, %v8092
        %v8494 = vmul.f32 %v6881, %v8096
        %v8495 = vmul.f32 %v5725, %v8068
        %v8496 = vmul.f32 %v5727, %v8072
        %v8497 = vmul.f32 %v6111, %v8076
        %v8498 = vmul.f32 %v6113, %v8080
        %v8499 = vmul.f32 %v6497, %v8084
        %v8500 = vmul.f32 %v6499, %v8088
        %v8501 = vmul.f32 %v6883, %v8092
        %v8502 = vmul.f32 %v6885, %v8096
        %v8505 = vlaneseq
        %v8506 = vshrl.u32 %v8505, 7
        %v8507 = vsub.s32 0, %v8506
        %v8508 = vrot.slane %v8245, %v8507
        %v8509 = vlaneseq
        %v8510 = vshrl.u32 %v8509, 7
        %v8511 = vsub.s32 1, %v8510
        %v8512 = vrot.slane %v8245, %v8511
        %v8513 = vlaneseq
        %v8514 = vshrl.u32 %v8513, 7
        %v8515 = vsub.s32 2, %v8514
        %v8516 = vrot.slane %v8245, %v8515
        %v8517 = vlaneseq
        %v8518 = vshrl.u32 %v8517, 7
        %v8519 = vsub.s32 3, %v8518
        %v8520 = vrot.slane %v8245, %v8519
        %v8521 = vlaneseq
        %v8522 = vshrl.u32 %v8521, 7
        %v8523 = vsub.s32 4, %v8522
        %v8524 = vrot.slane %v8245, %v8523
        %v8525 = vlaneseq
        %v8526 = vshrl.u32 %v8525, 7
        %v8527 = vsub.s32 5, %v8526
        %v8528 = vrot.slane %v8245, %v8527
        %v8529 = vlaneseq
        %v8530 = vshrl.u32 %v8529, 7
        %v8531 = vsub.s32 6, %v8530
        %v8532 = vrot.slane %v8245, %v8531
        %v8533 = vlaneseq
        %v8534 = vshrl.u32 %v8533, 7
        %v8535 = vsub.s32 7, %v8534
        %v8536 = vrot.slane %v8245, %v8535
        %v8537 = vlaneseq
        %v8538 = vshrl.u32 %v8537, 7
        %v8539 = vsub.s32 0, %v8538
        %v8540 = vrot.slane %v8246, %v8539
        %v8541 = vlaneseq
        %v8542 = vshrl.u32 %v8541, 7
        %v8543 = vsub.s32 1, %v8542
        %v8544 = vrot.slane %v8246, %v8543
        %v8545 = vlaneseq
        %v8546 = vshrl.u32 %v8545, 7
        %v8547 = vsub.s32 2, %v8546
        %v8548 = vrot.slane %v8246, %v8547
        %v8549 = vlaneseq
        %v8550 = vshrl.u32 %v8549, 7
        %v8551 = vsub.s32 3, %v8550
        %v8552 = vrot.slane %v8246, %v8551
        %v8553 = vlaneseq
        %v8554 = vshrl.u32 %v8553, 7
        %v8555 = vsub.s32 4, %v8554
        %v8556 = vrot.slane %v8246, %v8555
        %v8557 = vlaneseq
        %v8558 = vshrl.u32 %v8557, 7
        %v8559 = vsub.s32 5, %v8558
        %v8560 = vrot.slane %v8246, %v8559
        %v8561 = vlaneseq
        %v8562 = vshrl.u32 %v8561, 7
        %v8563 = vsub.s32 6, %v8562
        %v8564 = vrot.slane %v8246, %v8563
        %v8565 = vlaneseq
        %v8566 = vshrl.u32 %v8565, 7
        %v8567 = vsub.s32 7, %v8566
        %v8568 = vrot.slane %v8246, %v8567
        %v8585 = vadd.f32 %v8247, %v8508
        %v8586 = vadd.f32 %v8248, %v8512
        %v8587 = vadd.f32 %v8249, %v8516
        %v8588 = vadd.f32 %v8250, %v8520
        %v8589 = vadd.f32 %v8251, %v8524
        %v8590 = vadd.f32 %v8252, %v8528
        %v8591 = vadd.f32 %v8253, %v8532
        %v8592 = vadd.f32 %v8254, %v8536
        %v8593 = vadd.f32 %v8255, %v8508
        %v8594 = vadd.f32 %v8256, %v8512
        %v8595 = vadd.f32 %v8257, %v8516
        %v8596 = vadd.f32 %v8258, %v8520
        %v8597 = vadd.f32 %v8259, %v8524
        %v8598 = vadd.f32 %v8260, %v8528
        %v8599 = vadd.f32 %v8261, %v8532
        %v8600 = vadd.f32 %v8262, %v8536
        %v8601 = vadd.f32 %v8263, %v8508
        %v8602 = vadd.f32 %v8264, %v8512
        %v8603 = vadd.f32 %v8265, %v8516
        %v8604 = vadd.f32 %v8266, %v8520
        %v8605 = vadd.f32 %v8267, %v8524
        %v8606 = vadd.f32 %v8268, %v8528
        %v8607 = vadd.f32 %v8269, %v8532
        %v8608 = vadd.f32 %v8270, %v8536
        %v8609 = vadd.f32 %v8271, %v8508
        %v8610 = vadd.f32 %v8272, %v8512
        %v8611 = vadd.f32 %v8273, %v8516
        %v8612 = vadd.f32 %v8274, %v8520
        %v8613 = vadd.f32 %v8275, %v8524
        %v8614 = vadd.f32 %v8276, %v8528
        %v8615 = vadd.f32 %v8277, %v8532
        %v8616 = vadd.f32 %v8278, %v8536
        %v8617 = vadd.f32 %v8279, %v8508
        %v8618 = vadd.f32 %v8280, %v8512
        %v8619 = vadd.f32 %v8281, %v8516
        %v8620 = vadd.f32 %v8282, %v8520
        %v8621 = vadd.f32 %v8283, %v8524
        %v8622 = vadd.f32 %v8284, %v8528
        %v8623 = vadd.f32 %v8285, %v8532
        %v8624 = vadd.f32 %v8286, %v8536
        %v8625 = vadd.f32 %v8287, %v8508
        %v8626 = vadd.f32 %v8288, %v8512
        %v8627 = vadd.f32 %v8289, %v8516
        %v8628 = vadd.f32 %v8290, %v8520
        %v8629 = vadd.f32 %v8291, %v8524
        %v8630 = vadd.f32 %v8292, %v8528
        %v8631 = vadd.f32 %v8293, %v8532
        %v8632 = vadd.f32 %v8294, %v8536
        %v8633 = vadd.f32 %v8295, %v8508
        %v8634 = vadd.f32 %v8296, %v8512
        %v8635 = vadd.f32 %v8297, %v8516
        %v8636 = vadd.f32 %v8298, %v8520
        %v8637 = vadd.f32 %v8299, %v8524
        %v8638 = vadd.f32 %v8300, %v8528
        %v8639 = vadd.f32 %v8301, %v8532
        %v8640 = vadd.f32 %v8302, %v8536
        %v8641 = vadd.f32 %v8303, %v8508
        %v8642 = vadd.f32 %v8304, %v8512
        %v8643 = vadd.f32 %v8305, %v8516
        %v8644 = vadd.f32 %v8306, %v8520
        %v8645 = vadd.f32 %v8307, %v8524
        %v8646 = vadd.f32 %v8308, %v8528
        %v8647 = vadd.f32 %v8309, %v8532
        %v8648 = vadd.f32 %v8310, %v8536
        %v8649 = vadd.f32 %v8311, %v8508
        %v8650 = vadd.f32 %v8312, %v8512
        %v8651 = vadd.f32 %v8313, %v8516
        %v8652 = vadd.f32 %v8314, %v8520
        %v8653 = vadd.f32 %v8315, %v8524
        %v8654 = vadd.f32 %v8316, %v8528
        %v8655 = vadd.f32 %v8317, %v8532
        %v8656 = vadd.f32 %v8318, %v8536
        %v8657 = vadd.f32 %v8319, %v8508
        %v8658 = vadd.f32 %v8320, %v8512
        %v8659 = vadd.f32 %v8321, %v8516
        %v8660 = vadd.f32 %v8322, %v8520
        %v8661 = vadd.f32 %v8323, %v8524
        %v8662 = vadd.f32 %v8324, %v8528
        %v8663 = vadd.f32 %v8325, %v8532
        %v8664 = vadd.f32 %v8326, %v8536
        %v8665 = vadd.f32 %v8327, %v8508
        %v8666 = vadd.f32 %v8328, %v8512
        %v8667 = vadd.f32 %v8329, %v8516
        %v8668 = vadd.f32 %v8330, %v8520
        %v8669 = vadd.f32 %v8331, %v8524
        %v8670 = vadd.f32 %v8332, %v8528
        %v8671 = vadd.f32 %v8333, %v8532
        %v8672 = vadd.f32 %v8334, %v8536
        %v8673 = vadd.f32 %v8335, %v8508
        %v8674 = vadd.f32 %v8336, %v8512
        %v8675 = vadd.f32 %v8337, %v8516
        %v8676 = vadd.f32 %v8338, %v8520
        %v8677 = vadd.f32 %v8339, %v8524
        %v8678 = vadd.f32 %v8340, %v8528
        %v8679 = vadd.f32 %v8341, %v8532
        %v8680 = vadd.f32 %v8342, %v8536
        %v8681 = vadd.f32 %v8343, %v8508
        %v8682 = vadd.f32 %v8344, %v8512
        %v8683 = vadd.f32 %v8345, %v8516
        %v8684 = vadd.f32 %v8346, %v8520
        %v8685 = vadd.f32 %v8347, %v8524
        %v8686 = vadd.f32 %v8348, %v8528
        %v8687 = vadd.f32 %v8349, %v8532
        %v8688 = vadd.f32 %v8350, %v8536
        %v8689 = vadd.f32 %v8351, %v8508
        %v8690 = vadd.f32 %v8352, %v8512
        %v8691 = vadd.f32 %v8353, %v8516
        %v8692 = vadd.f32 %v8354, %v8520
        %v8693 = vadd.f32 %v8355, %v8524
        %v8694 = vadd.f32 %v8356, %v8528
        %v8695 = vadd.f32 %v8357, %v8532
        %v8696 = vadd.f32 %v8358, %v8536
        %v8697 = vadd.f32 %v8359, %v8508
        %v8698 = vadd.f32 %v8360, %v8512
        %v8699 = vadd.f32 %v8361, %v8516
        %v8700 = vadd.f32 %v8362, %v8520
        %v8701 = vadd.f32 %v8363, %v8524
        %v8702 = vadd.f32 %v8364, %v8528
        %v8703 = vadd.f32 %v8365, %v8532
        %v8704 = vadd.f32 %v8366, %v8536
        %v8705 = vadd.f32 %v8367, %v8508
        %v8706 = vadd.f32 %v8368, %v8512
        %v8707 = vadd.f32 %v8369, %v8516
        %v8708 = vadd.f32 %v8370, %v8520
        %v8709 = vadd.f32 %v8371, %v8524
        %v8710 = vadd.f32 %v8372, %v8528
        %v8711 = vadd.f32 %v8373, %v8532
        %v8712 = vadd.f32 %v8374, %v8536
        %v8713 = vadd.f32 %v8375, %v8540
        %v8714 = vadd.f32 %v8376, %v8544
        %v8715 = vadd.f32 %v8377, %v8548
        %v8716 = vadd.f32 %v8378, %v8552
        %v8717 = vadd.f32 %v8379, %v8556
        %v8718 = vadd.f32 %v8380, %v8560
        %v8719 = vadd.f32 %v8381, %v8564
        %v8720 = vadd.f32 %v8382, %v8568
        %v8721 = vadd.f32 %v8383, %v8540
        %v8722 = vadd.f32 %v8384, %v8544
        %v8723 = vadd.f32 %v8385, %v8548
        %v8724 = vadd.f32 %v8386, %v8552
        %v8725 = vadd.f32 %v8387, %v8556
        %v8726 = vadd.f32 %v8388, %v8560
        %v8727 = vadd.f32 %v8389, %v8564
        %v8728 = vadd.f32 %v8390, %v8568
        %v8729 = vadd.f32 %v8391, %v8540
        %v8730 = vadd.f32 %v8392, %v8544
        %v8731 = vadd.f32 %v8393, %v8548
        %v8732 = vadd.f32 %v8394, %v8552
        %v8733 = vadd.f32 %v8395, %v8556
        %v8734 = vadd.f32 %v8396, %v8560
        %v8735 = vadd.f32 %v8397, %v8564
        %v8736 = vadd.f32 %v8398, %v8568
        %v8737 = vadd.f32 %v8399, %v8540
        %v8738 = vadd.f32 %v8400, %v8544
        %v8739 = vadd.f32 %v8401, %v8548
        %v8740 = vadd.f32 %v8402, %v8552
        %v8741 = vadd.f32 %v8403, %v8556
        %v8742 = vadd.f32 %v8404, %v8560
        %v8743 = vadd.f32 %v8405, %v8564
        %v8744 = vadd.f32 %v8406, %v8568
        %v8745 = vadd.f32 %v8407, %v8540
        %v8746 = vadd.f32 %v8408, %v8544
        %v8747 = vadd.f32 %v8409, %v8548
        %v8748 = vadd.f32 %v8410, %v8552
        %v8749 = vadd.f32 %v8411, %v8556
        %v8750 = vadd.f32 %v8412, %v8560
        %v8751 = vadd.f32 %v8413, %v8564
        %v8752 = vadd.f32 %v8414, %v8568
        %v8753 = vadd.f32 %v8415, %v8540
        %v8754 = vadd.f32 %v8416, %v8544
        %v8755 = vadd.f32 %v8417, %v8548
        %v8756 = vadd.f32 %v8418, %v8552
        %v8757 = vadd.f32 %v8419, %v8556
        %v8758 = vadd.f32 %v8420, %v8560
        %v8759 = vadd.f32 %v8421, %v8564
        %v8760 = vadd.f32 %v8422, %v8568
        %v8761 = vadd.f32 %v8423, %v8540
        %v8762 = vadd.f32 %v8424, %v8544
        %v8763 = vadd.f32 %v8425, %v8548
        %v8764 = vadd.f32 %v8426, %v8552
        %v8765 = vadd.f32 %v8427, %v8556
        %v8766 = vadd.f32 %v8428, %v8560
        %v8767 = vadd.f32 %v8429, %v8564
        %v8768 = vadd.f32 %v8430, %v8568
        %v8769 = vadd.f32 %v8431, %v8540
        %v8770 = vadd.f32 %v8432, %v8544
        %v8771 = vadd.f32 %v8433, %v8548
        %v8772 = vadd.f32 %v8434, %v8552
        %v8773 = vadd.f32 %v8435, %v8556
        %v8774 = vadd.f32 %v8436, %v8560
        %v8775 = vadd.f32 %v8437, %v8564
        %v8776 = vadd.f32 %v8438, %v8568
        %v8777 = vadd.f32 %v8439, %v8540
        %v8778 = vadd.f32 %v8440, %v8544
        %v8779 = vadd.f32 %v8441, %v8548
        %v8780 = vadd.f32 %v8442, %v8552
        %v8781 = vadd.f32 %v8443, %v8556
        %v8782 = vadd.f32 %v8444, %v8560
        %v8783 = vadd.f32 %v8445, %v8564
        %v8784 = vadd.f32 %v8446, %v8568
        %v8785 = vadd.f32 %v8447, %v8540
        %v8786 = vadd.f32 %v8448, %v8544
        %v8787 = vadd.f32 %v8449, %v8548
        %v8788 = vadd.f32 %v8450, %v8552
        %v8789 = vadd.f32 %v8451, %v8556
        %v8790 = vadd.f32 %v8452, %v8560
        %v8791 = vadd.f32 %v8453, %v8564
        %v8792 = vadd.f32 %v8454, %v8568
        %v8793 = vadd.f32 %v8455, %v8540
        %v8794 = vadd.f32 %v8456, %v8544
        %v8795 = vadd.f32 %v8457, %v8548
        %v8796 = vadd.f32 %v8458, %v8552
        %v8797 = vadd.f32 %v8459, %v8556
        %v8798 = vadd.f32 %v8460, %v8560
        %v8799 = vadd.f32 %v8461, %v8564
        %v8800 = vadd.f32 %v8462, %v8568
        %v8801 = vadd.f32 %v8463, %v8540
        %v8802 = vadd.f32 %v8464, %v8544
        %v8803 = vadd.f32 %v8465, %v8548
        %v8804 = vadd.f32 %v8466, %v8552
        %v8805 = vadd.f32 %v8467, %v8556
        %v8806 = vadd.f32 %v8468, %v8560
        %v8807 = vadd.f32 %v8469, %v8564
        %v8808 = vadd.f32 %v8470, %v8568
        %v8809 = vadd.f32 %v8471, %v8540
        %v8810 = vadd.f32 %v8472, %v8544
        %v8811 = vadd.f32 %v8473, %v8548
        %v8812 = vadd.f32 %v8474, %v8552
        %v8813 = vadd.f32 %v8475, %v8556
        %v8814 = vadd.f32 %v8476, %v8560
        %v8815 = vadd.f32 %v8477, %v8564
        %v8816 = vadd.f32 %v8478, %v8568
        %v8817 = vadd.f32 %v8479, %v8540
        %v8818 = vadd.f32 %v8480, %v8544
        %v8819 = vadd.f32 %v8481, %v8548
        %v8820 = vadd.f32 %v8482, %v8552
        %v8821 = vadd.f32 %v8483, %v8556
        %v8822 = vadd.f32 %v8484, %v8560
        %v8823 = vadd.f32 %v8485, %v8564
        %v8824 = vadd.f32 %v8486, %v8568
        %v8825 = vadd.f32 %v8487, %v8540
        %v8826 = vadd.f32 %v8488, %v8544
        %v8827 = vadd.f32 %v8489, %v8548
        %v8828 = vadd.f32 %v8490, %v8552
        %v8829 = vadd.f32 %v8491, %v8556
        %v8830 = vadd.f32 %v8492, %v8560
        %v8831 = vadd.f32 %v8493, %v8564
        %v8832 = vadd.f32 %v8494, %v8568
        %v8833 = vadd.f32 %v8495, %v8540
        %v8834 = vadd.f32 %v8496, %v8544
        %v8835 = vadd.f32 %v8497, %v8548
        %v8836 = vadd.f32 %v8498, %v8552
        %v8837 = vadd.f32 %v8499, %v8556
        %v8838 = vadd.f32 %v8500, %v8560
        %v8839 = vadd.f32 %v8501, %v8564
        %v8840 = vadd.f32 %v8502, %v8568
        %v8841 = vmul.f32 %v8585, 0.1
        %v8842 = vmul.f32 %v8586, 0.1
        %v8843 = vmul.f32 %v8587, 0.1
        %v8844 = vmul.f32 %v8588, 0.1
        %v8845 = vmul.f32 %v8589, 0.1
        %v8846 = vmul.f32 %v8590, 0.1
        %v8847 = vmul.f32 %v8591, 0.1
        %v8848 = vmul.f32 %v8592, 0.1
        %v8849 = vmul.f32 %v8593, 0.1
        %v8850 = vmul.f32 %v8594, 0.1
        %v8851 = vmul.f32 %v8595, 0.1
        %v8852 = vmul.f32 %v8596, 0.1
        %v8853 = vmul.f32 %v8597, 0.1
        %v8854 = vmul.f32 %v8598, 0.1
        %v8855 = vmul.f32 %v8599, 0.1
        %v8856 = vmul.f32 %v8600, 0.1
        %v8857 = vmul.f32 %v8601, 0.1
        %v8858 = vmul.f32 %v8602, 0.1
        %v8859 = vmul.f32 %v8603, 0.1
        %v8860 = vmul.f32 %v8604, 0.1
        %v8861 = vmul.f32 %v8605, 0.1
        %v8862 = vmul.f32 %v8606, 0.1
        %v8863 = vmul.f32 %v8607, 0.1
        %v8864 = vmul.f32 %v8608, 0.1
        %v8865 = vmul.f32 %v8609, 0.1
        %v8866 = vmul.f32 %v8610, 0.1
        %v8867 = vmul.f32 %v8611, 0.1
        %v8868 = vmul.f32 %v8612, 0.1
        %v8869 = vmul.f32 %v8613, 0.1
        %v8870 = vmul.f32 %v8614, 0.1
        %v8871 = vmul.f32 %v8615, 0.1
        %v8872 = vmul.f32 %v8616, 0.1
        %v8873 = vmul.f32 %v8617, 0.1
        %v8874 = vmul.f32 %v8618, 0.1
        %v8875 = vmul.f32 %v8619, 0.1
        %v8876 = vmul.f32 %v8620, 0.1
        %v8877 = vmul.f32 %v8621, 0.1
        %v8878 = vmul.f32 %v8622, 0.1
        %v8879 = vmul.f32 %v8623, 0.1
        %v8880 = vmul.f32 %v8624, 0.1
        %v8881 = vmul.f32 %v8625, 0.1
        %v8882 = vmul.f32 %v8626, 0.1
        %v8883 = vmul.f32 %v8627, 0.1
        %v8884 = vmul.f32 %v8628, 0.1
        %v8885 = vmul.f32 %v8629, 0.1
        %v8886 = vmul.f32 %v8630, 0.1
        %v8887 = vmul.f32 %v8631, 0.1
        %v8888 = vmul.f32 %v8632, 0.1
        %v8889 = vmul.f32 %v8633, 0.1
        %v8890 = vmul.f32 %v8634, 0.1
        %v8891 = vmul.f32 %v8635, 0.1
        %v8892 = vmul.f32 %v8636, 0.1
        %v8893 = vmul.f32 %v8637, 0.1
        %v8894 = vmul.f32 %v8638, 0.1
        %v8895 = vmul.f32 %v8639, 0.1
        %v8896 = vmul.f32 %v8640, 0.1
        %v8897 = vmul.f32 %v8641, 0.1
        %v8898 = vmul.f32 %v8642, 0.1
        %v8899 = vmul.f32 %v8643, 0.1
        %v8900 = vmul.f32 %v8644, 0.1
        %v8901 = vmul.f32 %v8645, 0.1
        %v8902 = vmul.f32 %v8646, 0.1
        %v8903 = vmul.f32 %v8647, 0.1
        %v8904 = vmul.f32 %v8648, 0.1
        %v8905 = vmul.f32 %v8649, 0.1
        %v8906 = vmul.f32 %v8650, 0.1
        %v8907 = vmul.f32 %v8651, 0.1
        %v8908 = vmul.f32 %v8652, 0.1
        %v8909 = vmul.f32 %v8653, 0.1
        %v8910 = vmul.f32 %v8654, 0.1
        %v8911 = vmul.f32 %v8655, 0.1
        %v8912 = vmul.f32 %v8656, 0.1
        %v8913 = vmul.f32 %v8657, 0.1
        %v8914 = vmul.f32 %v8658, 0.1
        %v8915 = vmul.f32 %v8659, 0.1
        %v8916 = vmul.f32 %v8660, 0.1
        %v8917 = vmul.f32 %v8661, 0.1
        %v8918 = vmul.f32 %v8662, 0.1
        %v8919 = vmul.f32 %v8663, 0.1
        %v8920 = vmul.f32 %v8664, 0.1
        %v8921 = vmul.f32 %v8665, 0.1
        %v8922 = vmul.f32 %v8666, 0.1
        %v8923 = vmul.f32 %v8667, 0.1
        %v8924 = vmul.f32 %v8668, 0.1
        %v8925 = vmul.f32 %v8669, 0.1
        %v8926 = vmul.f32 %v8670, 0.1
        %v8927 = vmul.f32 %v8671, 0.1
        %v8928 = vmul.f32 %v8672, 0.1
        %v8929 = vmul.f32 %v8673, 0.1
        %v8930 = vmul.f32 %v8674, 0.1
        %v8931 = vmul.f32 %v8675, 0.1
        %v8932 = vmul.f32 %v8676, 0.1
        %v8933 = vmul.f32 %v8677, 0.1
        %v8934 = vmul.f32 %v8678, 0.1
        %v8935 = vmul.f32 %v8679, 0.1
        %v8936 = vmul.f32 %v8680, 0.1
        %v8937 = vmul.f32 %v8681, 0.1
        %v8938 = vmul.f32 %v8682, 0.1
        %v8939 = vmul.f32 %v8683, 0.1
        %v8940 = vmul.f32 %v8684, 0.1
        %v8941 = vmul.f32 %v8685, 0.1
        %v8942 = vmul.f32 %v8686, 0.1
        %v8943 = vmul.f32 %v8687, 0.1
        %v8944 = vmul.f32 %v8688, 0.1
        %v8945 = vmul.f32 %v8689, 0.1
        %v8946 = vmul.f32 %v8690, 0.1
        %v8947 = vmul.f32 %v8691, 0.1
        %v8948 = vmul.f32 %v8692, 0.1
        %v8949 = vmul.f32 %v8693, 0.1
        %v8950 = vmul.f32 %v8694, 0.1
        %v8951 = vmul.f32 %v8695, 0.1
        %v8952 = vmul.f32 %v8696, 0.1
        %v8953 = vmul.f32 %v8697, 0.1
        %v8954 = vmul.f32 %v8698, 0.1
        %v8955 = vmul.f32 %v8699, 0.1
        %v8956 = vmul.f32 %v8700, 0.1
        %v8957 = vmul.f32 %v8701, 0.1
        %v8958 = vmul.f32 %v8702, 0.1
        %v8959 = vmul.f32 %v8703, 0.1
        %v8960 = vmul.f32 %v8704, 0.1
        %v8961 = vmul.f32 %v8705, 0.1
        %v8962 = vmul.f32 %v8706, 0.1
        %v8963 = vmul.f32 %v8707, 0.1
        %v8964 = vmul.f32 %v8708, 0.1
        %v8965 = vmul.f32 %v8709, 0.1
        %v8966 = vmul.f32 %v8710, 0.1
        %v8967 = vmul.f32 %v8711, 0.1
        %v8968 = vmul.f32 %v8712, 0.1
        %v8969 = vmul.f32 %v8713, 0.1
        %v8970 = vmul.f32 %v8714, 0.1
        %v8971 = vmul.f32 %v8715, 0.1
        %v8972 = vmul.f32 %v8716, 0.1
        %v8973 = vmul.f32 %v8717, 0.1
        %v8974 = vmul.f32 %v8718, 0.1
        %v8975 = vmul.f32 %v8719, 0.1
        %v8976 = vmul.f32 %v8720, 0.1
        %v8977 = vmul.f32 %v8721, 0.1
        %v8978 = vmul.f32 %v8722, 0.1
        %v8979 = vmul.f32 %v8723, 0.1
        %v8980 = vmul.f32 %v8724, 0.1
        %v8981 = vmul.f32 %v8725, 0.1
        %v8982 = vmul.f32 %v8726, 0.1
        %v8983 = vmul.f32 %v8727, 0.1
        %v8984 = vmul.f32 %v8728, 0.1
        %v8985 = vmul.f32 %v8729, 0.1
        %v8986 = vmul.f32 %v8730, 0.1
        %v8987 = vmul.f32 %v8731, 0.1
        %v8988 = vmul.f32 %v8732, 0.1
        %v8989 = vmul.f32 %v8733, 0.1
        %v8990 = vmul.f32 %v8734, 0.1
        %v8991 = vmul.f32 %v8735, 0.1
        %v8992 = vmul.f32 %v8736, 0.1
        %v8993 = vmul.f32 %v8737, 0.1
        %v8994 = vmul.f32 %v8738, 0.1
        %v8995 = vmul.f32 %v8739, 0.1
        %v8996 = vmul.f32 %v8740, 0.1
        %v8997 = vmul.f32 %v8741, 0.1
        %v8998 = vmul.f32 %v8742, 0.1
        %v8999 = vmul.f32 %v8743, 0.1
        %v9000 = vmul.f32 %v8744, 0.1
        %v9001 = vmul.f32 %v8745, 0.1
        %v9002 = vmul.f32 %v8746, 0.1
        %v9003 = vmul.f32 %v8747, 0.1
        %v9004 = vmul.f32 %v8748, 0.1
        %v9005 = vmul.f32 %v8749, 0.1
        %v9006 = vmul.f32 %v8750, 0.1
        %v9007 = vmul.f32 %v8751, 0.1
        %v9008 = vmul.f32 %v8752, 0.1
        %v9009 = vmul.f32 %v8753, 0.1
        %v9010 = vmul.f32 %v8754, 0.1
        %v9011 = vmul.f32 %v8755, 0.1
        %v9012 = vmul.f32 %v8756, 0.1
        %v9013 = vmul.f32 %v8757, 0.1
        %v9014 = vmul.f32 %v8758, 0.1
        %v9015 = vmul.f32 %v8759, 0.1
        %v9016 = vmul.f32 %v8760, 0.1
        %v9017 = vmul.f32 %v8761, 0.1
        %v9018 = vmul.f32 %v8762, 0.1
        %v9019 = vmul.f32 %v8763, 0.1
        %v9020 = vmul.f32 %v8764, 0.1
        %v9021 = vmul.f32 %v8765, 0.1
        %v9022 = vmul.f32 %v8766, 0.1
        %v9023 = vmul.f32 %v8767, 0.1
        %v9024 = vmul.f32 %v8768, 0.1
        %v9025 = vmul.f32 %v8769, 0.1
        %v9026 = vmul.f32 %v8770, 0.1
        %v9027 = vmul.f32 %v8771, 0.1
        %v9028 = vmul.f32 %v8772, 0.1
        %v9029 = vmul.f32 %v8773, 0.1
        %v9030 = vmul.f32 %v8774, 0.1
        %v9031 = vmul.f32 %v8775, 0.1
        %v9032 = vmul.f32 %v8776, 0.1
        %v9033 = vmul.f32 %v8777, 0.1
        %v9034 = vmul.f32 %v8778, 0.1
        %v9035 = vmul.f32 %v8779, 0.1
        %v9036 = vmul.f32 %v8780, 0.1
        %v9037 = vmul.f32 %v8781, 0.1
        %v9038 = vmul.f32 %v8782, 0.1
        %v9039 = vmul.f32 %v8783, 0.1
        %v9040 = vmul.f32 %v8784, 0.1
        %v9041 = vmul.f32 %v8785, 0.1
        %v9042 = vmul.f32 %v8786, 0.1
        %v9043 = vmul.f32 %v8787, 0.1
        %v9044 = vmul.f32 %v8788, 0.1
        %v9045 = vmul.f32 %v8789, 0.1
        %v9046 = vmul.f32 %v8790, 0.1
        %v9047 = vmul.f32 %v8791, 0.1
        %v9048 = vmul.f32 %v8792, 0.1
        %v9049 = vmul.f32 %v8793, 0.1
        %v9050 = vmul.f32 %v8794, 0.1
        %v9051 = vmul.f32 %v8795, 0.1
        %v9052 = vmul.f32 %v8796, 0.1
        %v9053 = vmul.f32 %v8797, 0.1
        %v9054 = vmul.f32 %v8798, 0.1
        %v9055 = vmul.f32 %v8799, 0.1
        %v9056 = vmul.f32 %v8800, 0.1
        %v9057 = vmul.f32 %v8801, 0.1
        %v9058 = vmul.f32 %v8802, 0.1
        %v9059 = vmul.f32 %v8803, 0.1
        %v9060 = vmul.f32 %v8804, 0.1
        %v9061 = vmul.f32 %v8805, 0.1
        %v9062 = vmul.f32 %v8806, 0.1
        %v9063 = vmul.f32 %v8807, 0.1
        %v9064 = vmul.f32 %v8808, 0.1
        %v9065 = vmul.f32 %v8809, 0.1
        %v9066 = vmul.f32 %v8810, 0.1
        %v9067 = vmul.f32 %v8811, 0.1
        %v9068 = vmul.f32 %v8812, 0.1
        %v9069 = vmul.f32 %v8813, 0.1
        %v9070 = vmul.f32 %v8814, 0.1
        %v9071 = vmul.f32 %v8815, 0.1
        %v9072 = vmul.f32 %v8816, 0.1
        %v9073 = vmul.f32 %v8817, 0.1
        %v9074 = vmul.f32 %v8818, 0.1
        %v9075 = vmul.f32 %v8819, 0.1
        %v9076 = vmul.f32 %v8820, 0.1
        %v9077 = vmul.f32 %v8821, 0.1
        %v9078 = vmul.f32 %v8822, 0.1
        %v9079 = vmul.f32 %v8823, 0.1
        %v9080 = vmul.f32 %v8824, 0.1
        %v9081 = vmul.f32 %v8825, 0.1
        %v9082 = vmul.f32 %v8826, 0.1
        %v9083 = vmul.f32 %v8827, 0.1
        %v9084 = vmul.f32 %v8828, 0.1
        %v9085 = vmul.f32 %v8829, 0.1
        %v9086 = vmul.f32 %v8830, 0.1
        %v9087 = vmul.f32 %v8831, 0.1
        %v9088 = vmul.f32 %v8832, 0.1
        %v9089 = vmul.f32 %v8833, 0.1
        %v9090 = vmul.f32 %v8834, 0.1
        %v9091 = vmul.f32 %v8835, 0.1
        %v9092 = vmul.f32 %v8836, 0.1
        %v9093 = vmul.f32 %v8837, 0.1
        %v9094 = vmul.f32 %v8838, 0.1
        %v9095 = vmul.f32 %v8839, 0.1
        %v9096 = vmul.f32 %v8840, 0.1
        %v9097 = vmax.f32 %v8585, %v8841
        %v9098 = vmax.f32 %v8586, %v8842
        %v9099 = vmax.f32 %v8587, %v8843
        %v9100 = vmax.f32 %v8588, %v8844
        %v9101 = vmax.f32 %v8589, %v8845
        %v9102 = vmax.f32 %v8590, %v8846
        %v9103 = vmax.f32 %v8591, %v8847
        %v9104 = vmax.f32 %v8592, %v8848
        %v9105 = vmax.f32 %v8593, %v8849
        %v9106 = vmax.f32 %v8594, %v8850
        %v9107 = vmax.f32 %v8595, %v8851
        %v9108 = vmax.f32 %v8596, %v8852
        %v9109 = vmax.f32 %v8597, %v8853
        %v9110 = vmax.f32 %v8598, %v8854
        %v9111 = vmax.f32 %v8599, %v8855
        %v9112 = vmax.f32 %v8600, %v8856
        %v9113 = vmax.f32 %v8601, %v8857
        %v9114 = vmax.f32 %v8602, %v8858
        %v9115 = vmax.f32 %v8603, %v8859
        %v9116 = vmax.f32 %v8604, %v8860
        %v9117 = vmax.f32 %v8605, %v8861
        %v9118 = vmax.f32 %v8606, %v8862
        %v9119 = vmax.f32 %v8607, %v8863
        %v9120 = vmax.f32 %v8608, %v8864
        %v9121 = vmax.f32 %v8609, %v8865
        %v9122 = vmax.f32 %v8610, %v8866
        %v9123 = vmax.f32 %v8611, %v8867
        %v9124 = vmax.f32 %v8612, %v8868
        %v9125 = vmax.f32 %v8613, %v8869
        %v9126 = vmax.f32 %v8614, %v8870
        %v9127 = vmax.f32 %v8615, %v8871
        %v9128 = vmax.f32 %v8616, %v8872
        %v9129 = vmax.f32 %v8617, %v8873
        %v9130 = vmax.f32 %v8618, %v8874
        %v9131 = vmax.f32 %v8619, %v8875
        %v9132 = vmax.f32 %v8620, %v8876
        %v9133 = vmax.f32 %v8621, %v8877
        %v9134 = vmax.f32 %v8622, %v8878
        %v9135 = vmax.f32 %v8623, %v8879
        %v9136 = vmax.f32 %v8624, %v8880
        %v9137 = vmax.f32 %v8625, %v8881
        %v9138 = vmax.f32 %v8626, %v8882
        %v9139 = vmax.f32 %v8627, %v8883
        %v9140 = vmax.f32 %v8628, %v8884
        %v9141 = vmax.f32 %v8629, %v8885
        %v9142 = vmax.f32 %v8630, %v8886
        %v9143 = vmax.f32 %v8631, %v8887
        %v9144 = vmax.f32 %v8632, %v8888
        %v9145 = vmax.f32 %v8633, %v8889
        %v9146 = vmax.f32 %v8634, %v8890
        %v9147 = vmax.f32 %v8635, %v8891
        %v9148 = vmax.f32 %v8636, %v8892
        %v9149 = vmax.f32 %v8637, %v8893
        %v9150 = vmax.f32 %v8638, %v8894
        %v9151 = vmax.f32 %v8639, %v8895
        %v9152 = vmax.f32 %v8640, %v8896
        %v9153 = vmax.f32 %v8641, %v8897
        %v9154 = vmax.f32 %v8642, %v8898
        %v9155 = vmax.f32 %v8643, %v8899
        %v9156 = vmax.f32 %v8644, %v8900
        %v9157 = vmax.f32 %v8645, %v8901
        %v9158 = vmax.f32 %v8646, %v8902
        %v9159 = vmax.f32 %v8647, %v8903
        %v9160 = vmax.f32 %v8648, %v8904
        %v9161 = vmax.f32 %v8649, %v8905
        %v9162 = vmax.f32 %v8650, %v8906
        %v9163 = vmax.f32 %v8651, %v8907
        %v9164 = vmax.f32 %v8652, %v8908
        %v9165 = vmax.f32 %v8653, %v8909
        %v9166 = vmax.f32 %v8654, %v8910
        %v9167 = vmax.f32 %v8655, %v8911
        %v9168 = vmax.f32 %v8656, %v8912
        %v9169 = vmax.f32 %v8657, %v8913
        %v9170 = vmax.f32 %v8658, %v8914
        %v9171 = vmax.f32 %v8659, %v8915
        %v9172 = vmax.f32 %v8660, %v8916
        %v9173 = vmax.f32 %v8661, %v8917
        %v9174 = vmax.f32 %v8662, %v8918
        %v9175 = vmax.f32 %v8663, %v8919
        %v9176 = vmax.f32 %v8664, %v8920
        %v9177 = vmax.f32 %v8665, %v8921
        %v9178 = vmax.f32 %v8666, %v8922
        %v9179 = vmax.f32 %v8667, %v8923
        %v9180 = vmax.f32 %v8668, %v8924
        %v9181 = vmax.f32 %v8669, %v8925
        %v9182 = vmax.f32 %v8670, %v8926
        %v9183 = vmax.f32 %v8671, %v8927
        %v9184 = vmax.f32 %v8672, %v8928
        %v9185 = vmax.f32 %v8673, %v8929
        %v9186 = vmax.f32 %v8674, %v8930
        %v9187 = vmax.f32 %v8675, %v8931
        %v9188 = vmax.f32 %v8676, %v8932
        %v9189 = vmax.f32 %v8677, %v8933
        %v9190 = vmax.f32 %v8678, %v8934
        %v9191 = vmax.f32 %v8679, %v8935
        %v9192 = vmax.f32 %v8680, %v8936
        %v9193 = vmax.f32 %v8681, %v8937
        %v9194 = vmax.f32 %v8682, %v8938
        %v9195 = vmax.f32 %v8683, %v8939
        %v9196 = vmax.f32 %v8684, %v8940
        %v9197 = vmax.f32 %v8685, %v8941
        %v9198 = vmax.f32 %v8686, %v8942
        %v9199 = vmax.f32 %v8687, %v8943
        %v9200 = vmax.f32 %v8688, %v8944
        %v9201 = vmax.f32 %v8689, %v8945
        %v9202 = vmax.f32 %v8690, %v8946
        %v9203 = vmax.f32 %v8691, %v8947
        %v9204 = vmax.f32 %v8692, %v8948
        %v9205 = vmax.f32 %v8693, %v8949
        %v9206 = vmax.f32 %v8694, %v8950
        %v9207 = vmax.f32 %v8695, %v8951
        %v9208 = vmax.f32 %v8696, %v8952
        %v9209 = vmax.f32 %v8697, %v8953
        %v9210 = vmax.f32 %v8698, %v8954
        %v9211 = vmax.f32 %v8699, %v8955
        %v9212 = vmax.f32 %v8700, %v8956
        %v9213 = vmax.f32 %v8701, %v8957
        %v9214 = vmax.f32 %v8702, %v8958
        %v9215 = vmax.f32 %v8703, %v8959
        %v9216 = vmax.f32 %v8704, %v8960
        %v9217 = vmax.f32 %v8705, %v8961
        %v9218 = vmax.f32 %v8706, %v8962
        %v9219 = vmax.f32 %v8707, %v8963
        %v9220 = vmax.f32 %v8708, %v8964
        %v9221 = vmax.f32 %v8709, %v8965
        %v9222 = vmax.f32 %v8710, %v8966
        %v9223 = vmax.f32 %v8711, %v8967
        %v9224 = vmax.f32 %v8712, %v8968
        %v9225 = vmax.f32 %v8713, %v8969
        %v9226 = vmax.f32 %v8714, %v8970
        %v9227 = vmax.f32 %v8715, %v8971
        %v9228 = vmax.f32 %v8716, %v8972
        %v9229 = vmax.f32 %v8717, %v8973
        %v9230 = vmax.f32 %v8718, %v8974
        %v9231 = vmax.f32 %v8719, %v8975
        %v9232 = vmax.f32 %v8720, %v8976
        %v9233 = vmax.f32 %v8721, %v8977
        %v9234 = vmax.f32 %v8722, %v8978
        %v9235 = vmax.f32 %v8723, %v8979
        %v9236 = vmax.f32 %v8724, %v8980
        %v9237 = vmax.f32 %v8725, %v8981
        %v9238 = vmax.f32 %v8726, %v8982
        %v9239 = vmax.f32 %v8727, %v8983
        %v9240 = vmax.f32 %v8728, %v8984
        %v9241 = vmax.f32 %v8729, %v8985
        %v9242 = vmax.f32 %v8730, %v8986
        %v9243 = vmax.f32 %v8731, %v8987
        %v9244 = vmax.f32 %v8732, %v8988
        %v9245 = vmax.f32 %v8733, %v8989
        %v9246 = vmax.f32 %v8734, %v8990
        %v9247 = vmax.f32 %v8735, %v8991
        %v9248 = vmax.f32 %v8736, %v8992
        %v9249 = vmax.f32 %v8737, %v8993
        %v9250 = vmax.f32 %v8738, %v8994
        %v9251 = vmax.f32 %v8739, %v8995
        %v9252 = vmax.f32 %v8740, %v8996
        %v9253 = vmax.f32 %v8741, %v8997
        %v9254 = vmax.f32 %v8742, %v8998
        %v9255 = vmax.f32 %v8743, %v8999
        %v9256 = vmax.f32 %v8744, %v9000
        %v9257 = vmax.f32 %v8745, %v9001
        %v9258 = vmax.f32 %v8746, %v9002
        %v9259 = vmax.f32 %v8747, %v9003
        %v9260 = vmax.f32 %v8748, %v9004
        %v9261 = vmax.f32 %v8749, %v9005
        %v9262 = vmax.f32 %v8750, %v9006
        %v9263 = vmax.f32 %v8751, %v9007
        %v9264 = vmax.f32 %v8752, %v9008
        %v9265 = vmax.f32 %v8753, %v9009
        %v9266 = vmax.f32 %v8754, %v9010
        %v9267 = vmax.f32 %v8755, %v9011
        %v9268 = vmax.f32 %v8756, %v9012
        %v9269 = vmax.f32 %v8757, %v9013
        %v9270 = vmax.f32 %v8758, %v9014
        %v9271 = vmax.f32 %v8759, %v9015
        %v9272 = vmax.f32 %v8760, %v9016
        %v9273 = vmax.f32 %v8761, %v9017
        %v9274 = vmax.f32 %v8762, %v9018
        %v9275 = vmax.f32 %v8763, %v9019
        %v9276 = vmax.f32 %v8764, %v9020
        %v9277 = vmax.f32 %v8765, %v9021
        %v9278 = vmax.f32 %v8766, %v9022
        %v9279 = vmax.f32 %v8767, %v9023
        %v9280 = vmax.f32 %v8768, %v9024
        %v9281 = vmax.f32 %v8769, %v9025
        %v9282 = vmax.f32 %v8770, %v9026
        %v9283 = vmax.f32 %v8771, %v9027
        %v9284 = vmax.f32 %v8772, %v9028
        %v9285 = vmax.f32 %v8773, %v9029
        %v9286 = vmax.f32 %v8774, %v9030
        %v9287 = vmax.f32 %v8775, %v9031
        %v9288 = vmax.f32 %v8776, %v9032
        %v9289 = vmax.f32 %v8777, %v9033
        %v9290 = vmax.f32 %v8778, %v9034
        %v9291 = vmax.f32 %v8779, %v9035
        %v9292 = vmax.f32 %v8780, %v9036
        %v9293 = vmax.f32 %v8781, %v9037
        %v9294 = vmax.f32 %v8782, %v9038
        %v9295 = vmax.f32 %v8783, %v9039
        %v9296 = vmax.f32 %v8784, %v9040
        %v9297 = vmax.f32 %v8785, %v9041
        %v9298 = vmax.f32 %v8786, %v9042
        %v9299 = vmax.f32 %v8787, %v9043
        %v9300 = vmax.f32 %v8788, %v9044
        %v9301 = vmax.f32 %v8789, %v9045
        %v9302 = vmax.f32 %v8790, %v9046
        %v9303 = vmax.f32 %v8791, %v9047
        %v9304 = vmax.f32 %v8792, %v9048
        %v9305 = vmax.f32 %v8793, %v9049
        %v9306 = vmax.f32 %v8794, %v9050
        %v9307 = vmax.f32 %v8795, %v9051
        %v9308 = vmax.f32 %v8796, %v9052
        %v9309 = vmax.f32 %v8797, %v9053
        %v9310 = vmax.f32 %v8798, %v9054
        %v9311 = vmax.f32 %v8799, %v9055
        %v9312 = vmax.f32 %v8800, %v9056
        %v9313 = vmax.f32 %v8801, %v9057
        %v9314 = vmax.f32 %v8802, %v9058
        %v9315 = vmax.f32 %v8803, %v9059
        %v9316 = vmax.f32 %v8804, %v9060
        %v9317 = vmax.f32 %v8805, %v9061
        %v9318 = vmax.f32 %v8806, %v9062
        %v9319 = vmax.f32 %v8807, %v9063
        %v9320 = vmax.f32 %v8808, %v9064
        %v9321 = vmax.f32 %v8809, %v9065
        %v9322 = vmax.f32 %v8810, %v9066
        %v9323 = vmax.f32 %v8811, %v9067
        %v9324 = vmax.f32 %v8812, %v9068
        %v9325 = vmax.f32 %v8813, %v9069
        %v9326 = vmax.f32 %v8814, %v9070
        %v9327 = vmax.f32 %v8815, %v9071
        %v9328 = vmax.f32 %v8816, %v9072
        %v9329 = vmax.f32 %v8817, %v9073
        %v9330 = vmax.f32 %v8818, %v9074
        %v9331 = vmax.f32 %v8819, %v9075
        %v9332 = vmax.f32 %v8820, %v9076
        %v9333 = vmax.f32 %v8821, %v9077
        %v9334 = vmax.f32 %v8822, %v9078
        %v9335 = vmax.f32 %v8823, %v9079
        %v9336 = vmax.f32 %v8824, %v9080
        %v9337 = vmax.f32 %v8825, %v9081
        %v9338 = vmax.f32 %v8826, %v9082
        %v9339 = vmax.f32 %v8827, %v9083
        %v9340 = vmax.f32 %v8828, %v9084
        %v9341 = vmax.f32 %v8829, %v9085
        %v9342 = vmax.f32 %v8830, %v9086
        %v9343 = vmax.f32 %v8831, %v9087
        %v9344 = vmax.f32 %v8832, %v9088
        %v9345 = vmax.f32 %v8833, %v9089
        %v9346 = vmax.f32 %v8834, %v9090
        %v9347 = vmax.f32 %v8835, %v9091
        %v9348 = vmax.f32 %v8836, %v9092
        %v9349 = vmax.f32 %v8837, %v9093
        %v9350 = vmax.f32 %v8838, %v9094
        %v9351 = vmax.f32 %v8839, %v9095
        %v9352 = vmax.f32 %v8840, %v9096
        %v9353 = vpack.c.bf16 %v9105, %v9097
        %v9354 = vpack.c.bf16 %v9106, %v9098
        %v9355 = vpack.c.bf16 %v9107, %v9099
        %v9356 = vpack.c.bf16 %v9108, %v9100
        %v9357 = vpack.c.bf16 %v9109, %v9101
        %v9358 = vpack.c.bf16 %v9110, %v9102
        %v9359 = vpack.c.bf16 %v9111, %v9103
        %v9360 = vpack.c.bf16 %v9112, %v9104
        %v9361 = vpack.c.bf16 %v9121, %v9113
        %v9362 = vpack.c.bf16 %v9122, %v9114
        %v9363 = vpack.c.bf16 %v9123, %v9115
        %v9364 = vpack.c.bf16 %v9124, %v9116
        %v9365 = vpack.c.bf16 %v9125, %v9117
        %v9366 = vpack.c.bf16 %v9126, %v9118
        %v9367 = vpack.c.bf16 %v9127, %v9119
        %v9368 = vpack.c.bf16 %v9128, %v9120
        %v9369 = vpack.c.bf16 %v9137, %v9129
        %v9370 = vpack.c.bf16 %v9138, %v9130
        %v9371 = vpack.c.bf16 %v9139, %v9131
        %v9372 = vpack.c.bf16 %v9140, %v9132
        %v9373 = vpack.c.bf16 %v9141, %v9133
        %v9374 = vpack.c.bf16 %v9142, %v9134
        %v9375 = vpack.c.bf16 %v9143, %v9135
        %v9376 = vpack.c.bf16 %v9144, %v9136
        %v9377 = vpack.c.bf16 %v9153, %v9145
        %v9378 = vpack.c.bf16 %v9154, %v9146
        %v9379 = vpack.c.bf16 %v9155, %v9147
        %v9380 = vpack.c.bf16 %v9156, %v9148
        %v9381 = vpack.c.bf16 %v9157, %v9149
        %v9382 = vpack.c.bf16 %v9158, %v9150
        %v9383 = vpack.c.bf16 %v9159, %v9151
        %v9384 = vpack.c.bf16 %v9160, %v9152
        %v9385 = vpack.c.bf16 %v9169, %v9161
        %v9386 = vpack.c.bf16 %v9170, %v9162
        %v9387 = vpack.c.bf16 %v9171, %v9163
        %v9388 = vpack.c.bf16 %v9172, %v9164
        %v9389 = vpack.c.bf16 %v9173, %v9165
        %v9390 = vpack.c.bf16 %v9174, %v9166
        %v9391 = vpack.c.bf16 %v9175, %v9167
        %v9392 = vpack.c.bf16 %v9176, %v9168
        %v9393 = vpack.c.bf16 %v9185, %v9177
        %v9394 = vpack.c.bf16 %v9186, %v9178
        %v9395 = vpack.c.bf16 %v9187, %v9179
        %v9396 = vpack.c.bf16 %v9188, %v9180
        %v9397 = vpack.c.bf16 %v9189, %v9181
        %v9398 = vpack.c.bf16 %v9190, %v9182
        %v9399 = vpack.c.bf16 %v9191, %v9183
        %v9400 = vpack.c.bf16 %v9192, %v9184
        %v9401 = vpack.c.bf16 %v9201, %v9193
        %v9402 = vpack.c.bf16 %v9202, %v9194
        %v9403 = vpack.c.bf16 %v9203, %v9195
        %v9404 = vpack.c.bf16 %v9204, %v9196
        %v9405 = vpack.c.bf16 %v9205, %v9197
        %v9406 = vpack.c.bf16 %v9206, %v9198
        %v9407 = vpack.c.bf16 %v9207, %v9199
        %v9408 = vpack.c.bf16 %v9208, %v9200
        %v9409 = vpack.c.bf16 %v9217, %v9209
        %v9410 = vpack.c.bf16 %v9218, %v9210
        %v9411 = vpack.c.bf16 %v9219, %v9211
        %v9412 = vpack.c.bf16 %v9220, %v9212
        %v9413 = vpack.c.bf16 %v9221, %v9213
        %v9414 = vpack.c.bf16 %v9222, %v9214
        %v9415 = vpack.c.bf16 %v9223, %v9215
        %v9416 = vpack.c.bf16 %v9224, %v9216
        %v9417 = vpack.c.bf16 %v9233, %v9225
        %v9418 = vpack.c.bf16 %v9234, %v9226
        %v9419 = vpack.c.bf16 %v9235, %v9227
        %v9420 = vpack.c.bf16 %v9236, %v9228
        %v9421 = vpack.c.bf16 %v9237, %v9229
        %v9422 = vpack.c.bf16 %v9238, %v9230
        %v9423 = vpack.c.bf16 %v9239, %v9231
        %v9424 = vpack.c.bf16 %v9240, %v9232
        %v9425 = vpack.c.bf16 %v9249, %v9241
        %v9426 = vpack.c.bf16 %v9250, %v9242
        %v9427 = vpack.c.bf16 %v9251, %v9243
        %v9428 = vpack.c.bf16 %v9252, %v9244
        %v9429 = vpack.c.bf16 %v9253, %v9245
        %v9430 = vpack.c.bf16 %v9254, %v9246
        %v9431 = vpack.c.bf16 %v9255, %v9247
        %v9432 = vpack.c.bf16 %v9256, %v9248
        %v9433 = vpack.c.bf16 %v9265, %v9257
        %v9434 = vpack.c.bf16 %v9266, %v9258
        %v9435 = vpack.c.bf16 %v9267, %v9259
        %v9436 = vpack.c.bf16 %v9268, %v9260
        %v9437 = vpack.c.bf16 %v9269, %v9261
        %v9438 = vpack.c.bf16 %v9270, %v9262
        %v9439 = vpack.c.bf16 %v9271, %v9263
        %v9440 = vpack.c.bf16 %v9272, %v9264
        %v9441 = vpack.c.bf16 %v9281, %v9273
        %v9442 = vpack.c.bf16 %v9282, %v9274
        %v9443 = vpack.c.bf16 %v9283, %v9275
        %v9444 = vpack.c.bf16 %v9284, %v9276
        %v9445 = vpack.c.bf16 %v9285, %v9277
        %v9446 = vpack.c.bf16 %v9286, %v9278
        %v9447 = vpack.c.bf16 %v9287, %v9279
        %v9448 = vpack.c.bf16 %v9288, %v9280
        %v9449 = vpack.c.bf16 %v9297, %v9289
        %v9450 = vpack.c.bf16 %v9298, %v9290
        %v9451 = vpack.c.bf16 %v9299, %v9291
        %v9452 = vpack.c.bf16 %v9300, %v9292
        %v9453 = vpack.c.bf16 %v9301, %v9293
        %v9454 = vpack.c.bf16 %v9302, %v9294
        %v9455 = vpack.c.bf16 %v9303, %v9295
        %v9456 = vpack.c.bf16 %v9304, %v9296
        %v9457 = vpack.c.bf16 %v9313, %v9305
        %v9458 = vpack.c.bf16 %v9314, %v9306
        %v9459 = vpack.c.bf16 %v9315, %v9307
        %v9460 = vpack.c.bf16 %v9316, %v9308
        %v9461 = vpack.c.bf16 %v9317, %v9309
        %v9462 = vpack.c.bf16 %v9318, %v9310
        %v9463 = vpack.c.bf16 %v9319, %v9311
        %v9464 = vpack.c.bf16 %v9320, %v9312
        %v9465 = vpack.c.bf16 %v9329, %v9321
        %v9466 = vpack.c.bf16 %v9330, %v9322
        %v9467 = vpack.c.bf16 %v9331, %v9323
        %v9468 = vpack.c.bf16 %v9332, %v9324
        %v9469 = vpack.c.bf16 %v9333, %v9325
        %v9470 = vpack.c.bf16 %v9334, %v9326
        %v9471 = vpack.c.bf16 %v9335, %v9327
        %v9472 = vpack.c.bf16 %v9336, %v9328
        %v9473 = vpack.c.bf16 %v9345, %v9337
        %v9474 = vpack.c.bf16 %v9346, %v9338
        %v9475 = vpack.c.bf16 %v9347, %v9339
        %v9476 = vpack.c.bf16 %v9348, %v9340
        %v9477 = vpack.c.bf16 %v9349, %v9341
        %v9478 = vpack.c.bf16 %v9350, %v9342
        %v9479 = vpack.c.bf16 %v9351, %v9343
        %v9480 = vpack.c.bf16 %v9352, %v9344
        %v9481 = vld [vmem:[#allocation7] sm:$0xf]
        %v9482 = vld [vmem:[#allocation7 + $0x4] sm:$0xf]
        %v9483 = vld [vmem:[#allocation7 + $0x8] sm:$0xf]
        %v9484 = vld [vmem:[#allocation7 + $0xc] sm:$0xf]
        %v9485 = vld [vmem:[#allocation7 + $0x10] sm:$0xf]
        %v9486 = vld [vmem:[#allocation7 + $0x14] sm:$0xf]
        %v9487 = vld [vmem:[#allocation7 + $0x18] sm:$0xf]
        %v9488 = vld [vmem:[#allocation7 + $0x1c] sm:$0xf]
        %v9489 = vld [vmem:[#allocation7 + $0x20] sm:$0xf]
        %v9490 = vld [vmem:[#allocation7 + $0x24] sm:$0xf]
        %v9491 = vld [vmem:[#allocation7 + $0x28] sm:$0xf]
        %v9492 = vld [vmem:[#allocation7 + $0x2c] sm:$0xf]
        %v9493 = vld [vmem:[#allocation7 + $0x30] sm:$0xf]
        %v9494 = vld [vmem:[#allocation7 + $0x34] sm:$0xf]
        %v9495 = vld [vmem:[#allocation7 + $0x38] sm:$0xf]
        %v9496 = vld [vmem:[#allocation7 + $0x3c] sm:$0xf]
        %v9497 = vld [vmem:[#allocation7 + $0x40] sm:$0xf]
        %v9498 = vld [vmem:[#allocation7 + $0x44] sm:$0xf]
        %v9499 = vld [vmem:[#allocation7 + $0x48] sm:$0xf]
        %v9500 = vld [vmem:[#allocation7 + $0x4c] sm:$0xf]
        %v9501 = vld [vmem:[#allocation7 + $0x50] sm:$0xf]
        %v9502 = vld [vmem:[#allocation7 + $0x54] sm:$0xf]
        %v9503 = vld [vmem:[#allocation7 + $0x58] sm:$0xf]
        %v9504 = vld [vmem:[#allocation7 + $0x5c] sm:$0xf]
        %v9505 = vld [vmem:[#allocation7 + $0x60] sm:$0xf]
        %v9506 = vld [vmem:[#allocation7 + $0x64] sm:$0xf]
        %v9507 = vld [vmem:[#allocation7 + $0x68] sm:$0xf]
        %v9508 = vld [vmem:[#allocation7 + $0x6c] sm:$0xf]
        %v9509 = vld [vmem:[#allocation7 + $0x70] sm:$0xf]
        %v9510 = vld [vmem:[#allocation7 + $0x74] sm:$0xf]
        %v9511 = vld [vmem:[#allocation7 + $0x78] sm:$0xf]
        %v9512 = vld [vmem:[#allocation7 + $0x7c] sm:$0xf]
        %v9513 = vld [vmem:[#allocation7 + $0x80] sm:$0xf]
        %v9514 = vld [vmem:[#allocation7 + $0x84] sm:$0xf]
        %v9515 = vld [vmem:[#allocation7 + $0x88] sm:$0xf]
        %v9516 = vld [vmem:[#allocation7 + $0x8c] sm:$0xf]
        %v9517 = vld [vmem:[#allocation7 + $0x90] sm:$0xf]
        %v9518 = vld [vmem:[#allocation7 + $0x94] sm:$0xf]
        %v9519 = vld [vmem:[#allocation7 + $0x98] sm:$0xf]
        %v9520 = vld [vmem:[#allocation7 + $0x9c] sm:$0xf]
        %v9521 = vld [vmem:[#allocation7 + $0xa0] sm:$0xf]
        %v9522 = vld [vmem:[#allocation7 + $0xa4] sm:$0xf]
        %v9523 = vld [vmem:[#allocation7 + $0xa8] sm:$0xf]
        %v9524 = vld [vmem:[#allocation7 + $0xac] sm:$0xf]
        %v9525 = vld [vmem:[#allocation7 + $0xb0] sm:$0xf]
        %v9526 = vld [vmem:[#allocation7 + $0xb4] sm:$0xf]
        %v9527 = vld [vmem:[#allocation7 + $0xb8] sm:$0xf]
        %v9528 = vld [vmem:[#allocation7 + $0xbc] sm:$0xf]
        %v9529 = vld [vmem:[#allocation7 + $0xc0] sm:$0xf]
        %v9530 = vld [vmem:[#allocation7 + $0xc4] sm:$0xf]
        %v9531 = vld [vmem:[#allocation7 + $0xc8] sm:$0xf]
        %v9532 = vld [vmem:[#allocation7 + $0xcc] sm:$0xf]
        %v9533 = vld [vmem:[#allocation7 + $0xd0] sm:$0xf]
        %v9534 = vld [vmem:[#allocation7 + $0xd4] sm:$0xf]
        %v9535 = vld [vmem:[#allocation7 + $0xd8] sm:$0xf]
        %v9536 = vld [vmem:[#allocation7 + $0xdc] sm:$0xf]
        %v9537 = vld [vmem:[#allocation7 + $0xe0] sm:$0xf]
        %v9538 = vld [vmem:[#allocation7 + $0xe4] sm:$0xf]
        %v9539 = vld [vmem:[#allocation7 + $0xe8] sm:$0xf]
        %v9540 = vld [vmem:[#allocation7 + $0xec] sm:$0xf]
        %v9541 = vld [vmem:[#allocation7 + $0xf0] sm:$0xf]
        %v9542 = vld [vmem:[#allocation7 + $0xf4] sm:$0xf]
        %v9543 = vld [vmem:[#allocation7 + $0xf8] sm:$0xf]
        %v9544 = vld [vmem:[#allocation7 + $0xfc] sm:$0xf]
        %v9545 = vld [vmem:[#allocation7 + $0x100] sm:$0xf]
        %v9546 = vld [vmem:[#allocation7 + $0x104] sm:$0xf]
        %v9547 = vld [vmem:[#allocation7 + $0x108] sm:$0xf]
        %v9548 = vld [vmem:[#allocation7 + $0x10c] sm:$0xf]
        %v9549 = vld [vmem:[#allocation7 + $0x110] sm:$0xf]
        %v9550 = vld [vmem:[#allocation7 + $0x114] sm:$0xf]
        %v9551 = vld [vmem:[#allocation7 + $0x118] sm:$0xf]
        %v9552 = vld [vmem:[#allocation7 + $0x11c] sm:$0xf]
        %v9553 = vld [vmem:[#allocation7 + $0x120] sm:$0xf]
        %v9554 = vld [vmem:[#allocation7 + $0x124] sm:$0xf]
        %v9555 = vld [vmem:[#allocation7 + $0x128] sm:$0xf]
        %v9556 = vld [vmem:[#allocation7 + $0x12c] sm:$0xf]
        %v9557 = vld [vmem:[#allocation7 + $0x130] sm:$0xf]
        %v9558 = vld [vmem:[#allocation7 + $0x134] sm:$0xf]
        %v9559 = vld [vmem:[#allocation7 + $0x138] sm:$0xf]
        %v9560 = vld [vmem:[#allocation7 + $0x13c] sm:$0xf]
        %v9561 = vld [vmem:[#allocation7 + $0x140] sm:$0xf]
        %v9562 = vld [vmem:[#allocation7 + $0x144] sm:$0xf]
        %v9563 = vld [vmem:[#allocation7 + $0x148] sm:$0xf]
        %v9564 = vld [vmem:[#allocation7 + $0x14c] sm:$0xf]
        %v9565 = vld [vmem:[#allocation7 + $0x150] sm:$0xf]
        %v9566 = vld [vmem:[#allocation7 + $0x154] sm:$0xf]
        %v9567 = vld [vmem:[#allocation7 + $0x158] sm:$0xf]
        %v9568 = vld [vmem:[#allocation7 + $0x15c] sm:$0xf]
        %v9569 = vld [vmem:[#allocation7 + $0x160] sm:$0xf]
        %v9570 = vld [vmem:[#allocation7 + $0x164] sm:$0xf]
        %v9571 = vld [vmem:[#allocation7 + $0x168] sm:$0xf]
        %v9572 = vld [vmem:[#allocation7 + $0x16c] sm:$0xf]
        %v9573 = vld [vmem:[#allocation7 + $0x170] sm:$0xf]
        %v9574 = vld [vmem:[#allocation7 + $0x174] sm:$0xf]
        %v9575 = vld [vmem:[#allocation7 + $0x178] sm:$0xf]
        %v9576 = vld [vmem:[#allocation7 + $0x17c] sm:$0xf]
        %v9577 = vld [vmem:[#allocation7 + $0x180] sm:$0xf]
        %v9578 = vld [vmem:[#allocation7 + $0x184] sm:$0xf]
        %v9579 = vld [vmem:[#allocation7 + $0x188] sm:$0xf]
        %v9580 = vld [vmem:[#allocation7 + $0x18c] sm:$0xf]
        %v9581 = vld [vmem:[#allocation7 + $0x190] sm:$0xf]
        %v9582 = vld [vmem:[#allocation7 + $0x194] sm:$0xf]
        %v9583 = vld [vmem:[#allocation7 + $0x198] sm:$0xf]
        %v9584 = vld [vmem:[#allocation7 + $0x19c] sm:$0xf]
        %v9585 = vld [vmem:[#allocation7 + $0x1a0] sm:$0xf]
        %v9586 = vld [vmem:[#allocation7 + $0x1a4] sm:$0xf]
        %v9587 = vld [vmem:[#allocation7 + $0x1a8] sm:$0xf]
        %v9588 = vld [vmem:[#allocation7 + $0x1ac] sm:$0xf]
        %v9589 = vld [vmem:[#allocation7 + $0x1b0] sm:$0xf]
        %v9590 = vld [vmem:[#allocation7 + $0x1b4] sm:$0xf]
        %v9591 = vld [vmem:[#allocation7 + $0x1b8] sm:$0xf]
        %v9592 = vld [vmem:[#allocation7 + $0x1bc] sm:$0xf]
        %v9593 = vld [vmem:[#allocation7 + $0x1c0] sm:$0xf]
        %v9594 = vld [vmem:[#allocation7 + $0x1c4] sm:$0xf]
        %v9595 = vld [vmem:[#allocation7 + $0x1c8] sm:$0xf]
        %v9596 = vld [vmem:[#allocation7 + $0x1cc] sm:$0xf]
        %v9597 = vld [vmem:[#allocation7 + $0x1d0] sm:$0xf]
        %v9598 = vld [vmem:[#allocation7 + $0x1d4] sm:$0xf]
        %v9599 = vld [vmem:[#allocation7 + $0x1d8] sm:$0xf]
        %v9600 = vld [vmem:[#allocation7 + $0x1dc] sm:$0xf]
        %v9601 = vld [vmem:[#allocation7 + $0x1e0] sm:$0xf]
        %v9602 = vld [vmem:[#allocation7 + $0x1e4] sm:$0xf]
        %v9603 = vld [vmem:[#allocation7 + $0x1e8] sm:$0xf]
        %v9604 = vld [vmem:[#allocation7 + $0x1ec] sm:$0xf]
        %v9605 = vld [vmem:[#allocation7 + $0x1f0] sm:$0xf]
        %v9606 = vld [vmem:[#allocation7 + $0x1f4] sm:$0xf]
        %v9607 = vld [vmem:[#allocation7 + $0x1f8] sm:$0xf]
        %v9608 = vld [vmem:[#allocation7 + $0x1fc] sm:$0xf]
        %v9609 = vld [vmem:[#allocation8 + $0x2b] sm:$0x1]
        %v9611 = vlaneseq
        %v9612 = vshrl.u32 %v9611, 7
        %v9613 = vsub.s32 0, %v9612
        %v9614 = vrot.slane %v9609, %v9613
        %v9744 = vunpack.c.l.b16 %v9481
        %v9745 = vunpack.c.l.b16 %v9482
        %v9746 = vunpack.c.l.b16 %v9483
        %v9747 = vunpack.c.l.b16 %v9484
        %v9748 = vunpack.c.l.b16 %v9485
        %v9749 = vunpack.c.l.b16 %v9486
        %v9750 = vunpack.c.l.b16 %v9487
        %v9751 = vunpack.c.l.b16 %v9488
        %v9752 = vunpack.c.l.b16 %v9489
        %v9753 = vunpack.c.l.b16 %v9490
        %v9754 = vunpack.c.l.b16 %v9491
        %v9755 = vunpack.c.l.b16 %v9492
        %v9756 = vunpack.c.l.b16 %v9493
        %v9757 = vunpack.c.l.b16 %v9494
        %v9758 = vunpack.c.l.b16 %v9495
        %v9759 = vunpack.c.l.b16 %v9496
        %v9760 = vunpack.c.l.b16 %v9497
        %v9761 = vunpack.c.l.b16 %v9498
        %v9762 = vunpack.c.l.b16 %v9499
        %v9763 = vunpack.c.l.b16 %v9500
        %v9764 = vunpack.c.l.b16 %v9501
        %v9765 = vunpack.c.l.b16 %v9502
        %v9766 = vunpack.c.l.b16 %v9503
        %v9767 = vunpack.c.l.b16 %v9504
        %v9768 = vunpack.c.l.b16 %v9505
        %v9769 = vunpack.c.l.b16 %v9506
        %v9770 = vunpack.c.l.b16 %v9507
        %v9771 = vunpack.c.l.b16 %v9508
        %v9772 = vunpack.c.l.b16 %v9509
        %v9773 = vunpack.c.l.b16 %v9510
        %v9774 = vunpack.c.l.b16 %v9511
        %v9775 = vunpack.c.l.b16 %v9512
        %v9776 = vunpack.c.l.b16 %v9513
        %v9777 = vunpack.c.l.b16 %v9514
        %v9778 = vunpack.c.l.b16 %v9515
        %v9779 = vunpack.c.l.b16 %v9516
        %v9780 = vunpack.c.l.b16 %v9517
        %v9781 = vunpack.c.l.b16 %v9518
        %v9782 = vunpack.c.l.b16 %v9519
        %v9783 = vunpack.c.l.b16 %v9520
        %v9784 = vunpack.c.l.b16 %v9521
        %v9785 = vunpack.c.l.b16 %v9522
        %v9786 = vunpack.c.l.b16 %v9523
        %v9787 = vunpack.c.l.b16 %v9524
        %v9788 = vunpack.c.l.b16 %v9525
        %v9789 = vunpack.c.l.b16 %v9526
        %v9790 = vunpack.c.l.b16 %v9527
        %v9791 = vunpack.c.l.b16 %v9528
        %v9792 = vunpack.c.l.b16 %v9529
        %v9793 = vunpack.c.l.b16 %v9530
        %v9794 = vunpack.c.l.b16 %v9531
        %v9795 = vunpack.c.l.b16 %v9532
        %v9796 = vunpack.c.l.b16 %v9533
        %v9797 = vunpack.c.l.b16 %v9534
        %v9798 = vunpack.c.l.b16 %v9535
        %v9799 = vunpack.c.l.b16 %v9536
        %v9800 = vunpack.c.l.b16 %v9537
        %v9801 = vunpack.c.l.b16 %v9538
        %v9802 = vunpack.c.l.b16 %v9539
        %v9803 = vunpack.c.l.b16 %v9540
        %v9804 = vunpack.c.l.b16 %v9541
        %v9805 = vunpack.c.l.b16 %v9542
        %v9806 = vunpack.c.l.b16 %v9543
        %v9807 = vunpack.c.l.b16 %v9544
        %v9808 = vunpack.c.l.b16 %v9545
        %v9809 = vunpack.c.l.b16 %v9546
        %v9810 = vunpack.c.l.b16 %v9547
        %v9811 = vunpack.c.l.b16 %v9548
        %v9812 = vunpack.c.l.b16 %v9549
        %v9813 = vunpack.c.l.b16 %v9550
        %v9814 = vunpack.c.l.b16 %v9551
        %v9815 = vunpack.c.l.b16 %v9552
        %v9816 = vunpack.c.l.b16 %v9553
        %v9817 = vunpack.c.l.b16 %v9554
        %v9818 = vunpack.c.l.b16 %v9555
        %v9819 = vunpack.c.l.b16 %v9556
        %v9820 = vunpack.c.l.b16 %v9557
        %v9821 = vunpack.c.l.b16 %v9558
        %v9822 = vunpack.c.l.b16 %v9559
        %v9823 = vunpack.c.l.b16 %v9560
        %v9824 = vunpack.c.l.b16 %v9561
        %v9825 = vunpack.c.l.b16 %v9562
        %v9826 = vunpack.c.l.b16 %v9563
        %v9827 = vunpack.c.l.b16 %v9564
        %v9828 = vunpack.c.l.b16 %v9565
        %v9829 = vunpack.c.l.b16 %v9566
        %v9830 = vunpack.c.l.b16 %v9567
        %v9831 = vunpack.c.l.b16 %v9568
        %v9832 = vunpack.c.l.b16 %v9569
        %v9833 = vunpack.c.l.b16 %v9570
        %v9834 = vunpack.c.l.b16 %v9571
        %v9835 = vunpack.c.l.b16 %v9572
        %v9836 = vunpack.c.l.b16 %v9573
        %v9837 = vunpack.c.l.b16 %v9574
        %v9838 = vunpack.c.l.b16 %v9575
        %v9839 = vunpack.c.l.b16 %v9576
        %v9840 = vunpack.c.l.b16 %v9577
        %v9841 = vunpack.c.l.b16 %v9578
        %v9842 = vunpack.c.l.b16 %v9579
        %v9843 = vunpack.c.l.b16 %v9580
        %v9844 = vunpack.c.l.b16 %v9581
        %v9845 = vunpack.c.l.b16 %v9582
        %v9846 = vunpack.c.l.b16 %v9583
        %v9847 = vunpack.c.l.b16 %v9584
        %v9848 = vunpack.c.l.b16 %v9585
        %v9849 = vunpack.c.l.b16 %v9586
        %v9850 = vunpack.c.l.b16 %v9587
        %v9851 = vunpack.c.l.b16 %v9588
        %v9852 = vunpack.c.l.b16 %v9589
        %v9853 = vunpack.c.l.b16 %v9590
        %v9854 = vunpack.c.l.b16 %v9591
        %v9855 = vunpack.c.l.b16 %v9592
        %v9856 = vunpack.c.l.b16 %v9593
        %v9857 = vunpack.c.l.b16 %v9594
        %v9858 = vunpack.c.l.b16 %v9595
        %v9859 = vunpack.c.l.b16 %v9596
        %v9860 = vunpack.c.l.b16 %v9597
        %v9861 = vunpack.c.l.b16 %v9598
        %v9862 = vunpack.c.l.b16 %v9599
        %v9863 = vunpack.c.l.b16 %v9600
        %v9864 = vunpack.c.l.b16 %v9601
        %v9865 = vunpack.c.l.b16 %v9602
        %v9866 = vunpack.c.l.b16 %v9603
        %v9867 = vunpack.c.l.b16 %v9604
        %v9868 = vunpack.c.l.b16 %v9605
        %v9869 = vunpack.c.l.b16 %v9606
        %v9870 = vunpack.c.l.b16 %v9607
        %v9871 = vunpack.c.l.b16 %v9608
        %v9872 = vpack.c.b16 %v9745, %v9744
        %v9873 = vpack.c.b16 %v9747, %v9746
        %v9874 = vpack.c.b16 %v9749, %v9748
        %v9875 = vpack.c.b16 %v9751, %v9750
        %v9876 = vpack.c.b16 %v9753, %v9752
        %v9877 = vpack.c.b16 %v9755, %v9754
        %v9878 = vpack.c.b16 %v9757, %v9756
        %v9879 = vpack.c.b16 %v9759, %v9758
        %v9880 = vpack.c.b16 %v9761, %v9760
        %v9881 = vpack.c.b16 %v9763, %v9762
        %v9882 = vpack.c.b16 %v9765, %v9764
        %v9883 = vpack.c.b16 %v9767, %v9766
        %v9884 = vpack.c.b16 %v9769, %v9768
        %v9885 = vpack.c.b16 %v9771, %v9770
        %v9886 = vpack.c.b16 %v9773, %v9772
        %v9887 = vpack.c.b16 %v9775, %v9774
        %v9888 = vpack.c.b16 %v9777, %v9776
        %v9889 = vpack.c.b16 %v9779, %v9778
        %v9890 = vpack.c.b16 %v9781, %v9780
        %v9891 = vpack.c.b16 %v9783, %v9782
        %v9892 = vpack.c.b16 %v9785, %v9784
        %v9893 = vpack.c.b16 %v9787, %v9786
        %v9894 = vpack.c.b16 %v9789, %v9788
        %v9895 = vpack.c.b16 %v9791, %v9790
        %v9896 = vpack.c.b16 %v9793, %v9792
        %v9897 = vpack.c.b16 %v9795, %v9794
        %v9898 = vpack.c.b16 %v9797, %v9796
        %v9899 = vpack.c.b16 %v9799, %v9798
        %v9900 = vpack.c.b16 %v9801, %v9800
        %v9901 = vpack.c.b16 %v9803, %v9802
        %v9902 = vpack.c.b16 %v9805, %v9804
        %v9903 = vpack.c.b16 %v9807, %v9806
        %v9904 = vpack.c.b16 %v9809, %v9808
        %v9905 = vpack.c.b16 %v9811, %v9810
        %v9906 = vpack.c.b16 %v9813, %v9812
        %v9907 = vpack.c.b16 %v9815, %v9814
        %v9908 = vpack.c.b16 %v9817, %v9816
        %v9909 = vpack.c.b16 %v9819, %v9818
        %v9910 = vpack.c.b16 %v9821, %v9820
        %v9911 = vpack.c.b16 %v9823, %v9822
        %v9912 = vpack.c.b16 %v9825, %v9824
        %v9913 = vpack.c.b16 %v9827, %v9826
        %v9914 = vpack.c.b16 %v9829, %v9828
        %v9915 = vpack.c.b16 %v9831, %v9830
        %v9916 = vpack.c.b16 %v9833, %v9832
        %v9917 = vpack.c.b16 %v9835, %v9834
        %v9918 = vpack.c.b16 %v9837, %v9836
        %v9919 = vpack.c.b16 %v9839, %v9838
        %v9920 = vpack.c.b16 %v9841, %v9840
        %v9921 = vpack.c.b16 %v9843, %v9842
        %v9922 = vpack.c.b16 %v9845, %v9844
        %v9923 = vpack.c.b16 %v9847, %v9846
        %v9924 = vpack.c.b16 %v9849, %v9848
        %v9925 = vpack.c.b16 %v9851, %v9850
        %v9926 = vpack.c.b16 %v9853, %v9852
        %v9927 = vpack.c.b16 %v9855, %v9854
        %v9928 = vpack.c.b16 %v9857, %v9856
        %v9929 = vpack.c.b16 %v9859, %v9858
        %v9930 = vpack.c.b16 %v9861, %v9860
        %v9931 = vpack.c.b16 %v9863, %v9862
        %v9932 = vpack.c.b16 %v9865, %v9864
        %v9933 = vpack.c.b16 %v9867, %v9866
        %v9934 = vpack.c.b16 %v9869, %v9868
        %v9935 = vpack.c.b16 %v9871, %v9870
        %10000 = vmatprep.subr.bf16.mxu0 0
        %10001 = vmatpush1.bf16.msra.mxu0 %v9872
        %10002 = vmatprep.subr.bf16.mxu0 0
        %10003 = vmatpush1.bf16.msra.mxu0 %v9873
        %10004 = vmatprep.subr.bf16.mxu0 0
        %10005 = vmatpush1.bf16.msra.mxu0 %v9874
        %10006 = vmatprep.subr.bf16.mxu0 0
        %10007 = vmatpush1.bf16.msra.mxu0 %v9875
        %10008 = vmatprep.subr.bf16.mxu0 0
        %10009 = vmatpush1.bf16.msra.mxu0 %v9876
        %10010 = vmatprep.subr.bf16.mxu0 0
        %10011 = vmatpush1.bf16.msra.mxu0 %v9877
        %10012 = vmatprep.subr.bf16.mxu0 0
        %10013 = vmatpush1.bf16.msra.mxu0 %v9878
        %10014 = vmatprep.subr.bf16.mxu0 0
        %10015 = vmatpush1.bf16.msra.mxu0 %v9879
        %10016 = vmatprep.subr.bf16.mxu0 0
        %10017 = vmatpush1.bf16.msra.mxu0 %v9880
        %10018 = vmatprep.subr.bf16.mxu0 0
        %10019 = vmatpush1.bf16.msra.mxu0 %v9881
        %10020 = vmatprep.subr.bf16.mxu0 0
        %10021 = vmatpush1.bf16.msra.mxu0 %v9882
        %10022 = vmatprep.subr.bf16.mxu0 0
        %10023 = vmatpush1.bf16.msra.mxu0 %v9883
        %10024 = vmatprep.subr.bf16.mxu0 0
        %10025 = vmatpush1.bf16.msra.mxu0 %v9884
        %10026 = vmatprep.subr.bf16.mxu0 0
        %10027 = vmatpush1.bf16.msra.mxu0 %v9885
        %10028 = vmatprep.subr.bf16.mxu0 0
        %10029 = vmatpush1.bf16.msra.mxu0 %v9886
        %10030 = vmatprep.subr.bf16.mxu0 0
        %10031 = vmatpush1.bf16.msra.mxu0 %v9887
        %10032 = vmatprep.mubr.bf16.mxu0 %v9354
        %10033 = vmatmul.mubr.bf16.gmra.mrb[0].mxu0 %v9353
        %v10034 = vpop.f32.mrb[0].mxu0
        %v10035 = vadd.f32 %v9614, %v10034
        %v10036 = vpop.f32.mrb[0].mxu0
        %v10037 = vpop.f32.mrb[0].mxu0
        %v10038 = vadd.f32 %v9614, %v10037
        %v10039 = vpop.f32.mrb[0].mxu0
        %10040 = vmatprep.mubr.bf16.mxu0 %v9362
        %10041 = vmatmul.mubr.bf16.gmra.mrb[0].mxu0 %v9361
        %v10042 = vpop.f32.mrb[0].mxu0
        %v10043 = vadd.f32 %v9614, %v10042
        %v10044 = vpop.f32.mrb[0].mxu0
        %v10045 = vpop.f32.mrb[0].mxu0
        %v10046 = vadd.f32 %v9614, %v10045
        %v10047 = vpop.f32.mrb[0].mxu0
        %10048 = vmatprep.mubr.bf16.mxu0 %v9370
        %10049 = vmatmul.mubr.bf16.gmra.mrb[0].mxu0 %v9369
        %v10050 = vpop.f32.mrb[0].mxu0
        %v10051 = vadd.f32 %v9614, %v10050
        %v10052 = vpop.f32.mrb[0].mxu0
        %v10053 = vpop.f32.mrb[0].mxu0
        %v10054 = vadd.f32 %v9614, %v10053
        %v10055 = vpop.f32.mrb[0].mxu0
        %10056 = vmatprep.mubr.bf16.mxu0 %v9378
        %10057 = vmatmul.mubr.bf16.gmra.mrb[0].mxu0 %v9377
        %v10058 = vpop.f32.mrb[0].mxu0
        %v10059 = vadd.f32 %v9614, %v10058
        %v10060 = vpop.f32.mrb[0].mxu0
        %v10061 = vpop.f32.mrb[0].mxu0
        %v10062 = vadd.f32 %v9614, %v10061
        %v10063 = vpop.f32.mrb[0].mxu0
        %10064 = vmatprep.mubr.bf16.mxu0 %v9386
        %10065 = vmatmul.mubr.bf16.gmra.mrb[0].mxu0 %v9385
        %v10066 = vpop.f32.mrb[0].mxu0
        %v10067 = vadd.f32 %v9614, %v10066
        %v10068 = vpop.f32.mrb[0].mxu0
        %v10069 = vpop.f32.mrb[0].mxu0
        %v10070 = vadd.f32 %v9614, %v10069
        %v10071 = vpop.f32.mrb[0].mxu0
        %10072 = vmatprep.mubr.bf16.mxu0 %v9394
        %10073 = vmatmul.mubr.bf16.gmra.mrb[0].mxu0 %v9393
        %v10074 = vpop.f32.mrb[0].mxu0
        %v10075 = vadd.f32 %v9614, %v10074
        %v10076 = vpop.f32.mrb[0].mxu0
        %v10077 = vpop.f32.mrb[0].mxu0
        %v10078 = vadd.f32 %v9614, %v10077
        %v10079 = vpop.f32.mrb[0].mxu0
        %10080 = vmatprep.mubr.bf16.mxu0 %v9402
        %10081 = vmatmul.mubr.bf16.gmra.mrb[0].mxu0 %v9401
        %v10082 = vpop.f32.mrb[0].mxu0
        %v10083 = vadd.f32 %v9614, %v10082
        %v10084 = vpop.f32.mrb[0].mxu0
        %v10085 = vpop.f32.mrb[0].mxu0
        %v10086 = vadd.f32 %v9614, %v10085
        %v10087 = vpop.f32.mrb[0].mxu0
        %10088 = vmatprep.mubr.bf16.mxu0 %v9410
        %10089 = vmatmul.mubr.bf16.gmra.mrb[0].mxu0 %v9409
        %v10090 = vpop.f32.mrb[0].mxu0
        %v10091 = vadd.f32 %v9614, %v10090
        %v10092 = vpop.f32.mrb[0].mxu0
        %v10093 = vpop.f32.mrb[0].mxu0
        %v10094 = vadd.f32 %v9614, %v10093
        %v10095 = vpop.f32.mrb[0].mxu0
        %10096 = vmatprep.mubr.bf16.mxu0 %v9418
        %10097 = vmatmul.mubr.bf16.gmra.mrb[0].mxu0 %v9417
        %v10098 = vpop.f32.mrb[0].mxu0
        %v10099 = vadd.f32 %v9614, %v10098
        %v10100 = vpop.f32.mrb[0].mxu0
        %v10101 = vpop.f32.mrb[0].mxu0
        %v10102 = vadd.f32 %v9614, %v10101
        %v10103 = vpop.f32.mrb[0].mxu0
        %10104 = vmatprep.mubr.bf16.mxu0 %v9426
        %10105 = vmatmul.mubr.bf16.gmra.mrb[0].mxu0 %v9425
        %v10106 = vpop.f32.mrb[0].mxu0
        %v10107 = vadd.f32 %v9614, %v10106
        %v10108 = vpop.f32.mrb[0].mxu0
        %v10109 = vpop.f32.mrb[0].mxu0
        %v10110 = vadd.f32 %v9614, %v10109
        %v10111 = vpop.f32.mrb[0].mxu0
        %10112 = vmatprep.mubr.bf16.mxu0 %v9434
        %10113 = vmatmul.mubr.bf16.gmra.mrb[0].mxu0 %v9433
        %v10114 = vpop.f32.mrb[0].mxu0
        %v10115 = vadd.f32 %v9614, %v10114
        %v10116 = vpop.f32.mrb[0].mxu0
        %v10117 = vpop.f32.mrb[0].mxu0
        %v10118 = vadd.f32 %v9614, %v10117
        %v10119 = vpop.f32.mrb[0].mxu0
        %10120 = vmatprep.mubr.bf16.mxu0 %v9442
        %10121 = vmatmul.mubr.bf16.gmra.mrb[0].mxu0 %v9441
        %v10122 = vpop.f32.mrb[0].mxu0
        %v10123 = vadd.f32 %v9614, %v10122
        %v10124 = vpop.f32.mrb[0].mxu0
        %v10125 = vpop.f32.mrb[0].mxu0
        %v10126 = vadd.f32 %v9614, %v10125
        %v10127 = vpop.f32.mrb[0].mxu0
        %10128 = vmatprep.mubr.bf16.mxu0 %v9450
        %10129 = vmatmul.mubr.bf16.gmra.mrb[0].mxu0 %v9449
        %v10130 = vpop.f32.mrb[0].mxu0
        %v10131 = vadd.f32 %v9614, %v10130
        %v10132 = vpop.f32.mrb[0].mxu0
        %v10133 = vpop.f32.mrb[0].mxu0
        %v10134 = vadd.f32 %v9614, %v10133
        %v10135 = vpop.f32.mrb[0].mxu0
        %10136 = vmatprep.mubr.bf16.mxu0 %v9458
        %10137 = vmatmul.mubr.bf16.gmra.mrb[0].mxu0 %v9457
        %v10138 = vpop.f32.mrb[0].mxu0
        %v10139 = vadd.f32 %v9614, %v10138
        %v10140 = vpop.f32.mrb[0].mxu0
        %v10141 = vpop.f32.mrb[0].mxu0
        %v10142 = vadd.f32 %v9614, %v10141
        %v10143 = vpop.f32.mrb[0].mxu0
        %10144 = vmatprep.mubr.bf16.mxu0 %v9466
        %10145 = vmatmul.mubr.bf16.gmra.mrb[0].mxu0 %v9465
        %v10146 = vpop.f32.mrb[0].mxu0
        %v10147 = vadd.f32 %v9614, %v10146
        %v10148 = vpop.f32.mrb[0].mxu0
        %v10149 = vpop.f32.mrb[0].mxu0
        %v10150 = vadd.f32 %v9614, %v10149
        %v10151 = vpop.f32.mrb[0].mxu0
        %10152 = vmatprep.mubr.bf16.mxu0 %v9474
        %10153 = vmatmul.mubr.bf16.gmra.mrb[0].mxu0 %v9473
        %v10154 = vpop.f32.mrb[0].mxu0
        %v10155 = vadd.f32 %v9614, %v10154
        %v10156 = vpop.f32.mrb[0].mxu0
        %v10157 = vpop.f32.mrb[0].mxu0
        %v10158 = vadd.f32 %v9614, %v10157
        %v10159 = vpop.f32.mrb[0].mxu0
        %10160 = vdwg.mxu0
        %10161 = vmatprep.subr.bf16.mxu0 0
        %10162 = vmatpush1.bf16.msra.mxu0 %v9888
        %10163 = vmatprep.subr.bf16.mxu0 0
        %10164 = vmatpush1.bf16.msra.mxu0 %v9889
        %10165 = vmatprep.subr.bf16.mxu0 0
        %10166 = vmatpush1.bf16.msra.mxu0 %v9890
        %10167 = vmatprep.subr.bf16.mxu0 0
        %10168 = vmatpush1.bf16.msra.mxu0 %v9891
        %10169 = vmatprep.subr.bf16.mxu0 0
        %10170 = vmatpush1.bf16.msra.mxu0 %v9892
        %10171 = vmatprep.subr.bf16.mxu0 0
        %10172 = vmatpush1.bf16.msra.mxu0 %v9893
        %10173 = vmatprep.subr.bf16.mxu0 0
        %10174 = vmatpush1.bf16.msra.mxu0 %v9894
        %10175 = vmatprep.subr.bf16.mxu0 0
        %10176 = vmatpush1.bf16.msra.mxu0 %v9895
        %10177 = vmatprep.subr.bf16.mxu0 0
        %10178 = vmatpush1.bf16.msra.mxu0 %v9896
        %10179 = vmatprep.subr.bf16.mxu0 0
        %10180 = vmatpush1.bf16.msra.mxu0 %v9897
        %10181 = vmatprep.subr.bf16.mxu0 0
        %10182 = vmatpush1.bf16.msra.mxu0 %v9898
        %10183 = vmatprep.subr.bf16.mxu0 0
        %10184 = vmatpush1.bf16.msra.mxu0 %v9899
        %10185 = vmatprep.subr.bf16.mxu0 0
        %10186 = vmatpush1.bf16.msra.mxu0 %v9900
        %10187 = vmatprep.subr.bf16.mxu0 0
        %10188 = vmatpush1.bf16.msra.mxu0 %v9901
        %10189 = vmatprep.subr.bf16.mxu0 0
        %10190 = vmatpush1.bf16.msra.mxu0 %v9902
        %10191 = vmatprep.subr.bf16.mxu0 0
        %10192 = vmatpush1.bf16.msra.mxu0 %v9903
        %10193 = vmatprep.mubr.bf16.mxu0 %v9356
        %10194 = vmatmul.mubr.bf16.gmra.mrb[0].mxu0 %v9355
        %v10195 = vpop.f32.mrb[0].mxu0
        %v10196 = vadd.f32 %v10035, %v10195
        %v10197 = vpop.f32.mrb[0].mxu0
        %v10198 = vpop.f32.mrb[0].mxu0
        %v10199 = vadd.f32 %v10038, %v10198
        %v10200 = vpop.f32.mrb[0].mxu0
        %10201 = vmatprep.mubr.bf16.mxu0 %v9364
        %10202 = vmatmul.mubr.bf16.gmra.mrb[0].mxu0 %v9363
        %v10203 = vpop.f32.mrb[0].mxu0
        %v10204 = vadd.f32 %v10043, %v10203
        %v10205 = vpop.f32.mrb[0].mxu0
        %v10206 = vpop.f32.mrb[0].mxu0
        %v10207 = vadd.f32 %v10046, %v10206
        %v10208 = vpop.f32.mrb[0].mxu0
        %10209 = vmatprep.mubr.bf16.mxu0 %v9372
        %10210 = vmatmul.mubr.bf16.gmra.mrb[0].mxu0 %v9371
        %v10211 = vpop.f32.mrb[0].mxu0
        %v10212 = vadd.f32 %v10051, %v10211
        %v10213 = vpop.f32.mrb[0].mxu0
        %v10214 = vpop.f32.mrb[0].mxu0
        %v10215 = vadd.f32 %v10054, %v10214
        %v10216 = vpop.f32.mrb[0].mxu0
        %10217 = vmatprep.mubr.bf16.mxu0 %v9380
        %10218 = vmatmul.mubr.bf16.gmra.mrb[0].mxu0 %v9379
        %v10219 = vpop.f32.mrb[0].mxu0
        %v10220 = vadd.f32 %v10059, %v10219
        %v10221 = vpop.f32.mrb[0].mxu0
        %v10222 = vpop.f32.mrb[0].mxu0
        %v10223 = vadd.f32 %v10062, %v10222
        %v10224 = vpop.f32.mrb[0].mxu0
        %10225 = vmatprep.mubr.bf16.mxu0 %v9388
        %10226 = vmatmul.mubr.bf16.gmra.mrb[0].mxu0 %v9387
        %v10227 = vpop.f32.mrb[0].mxu0
        %v10228 = vadd.f32 %v10067, %v10227
        %v10229 = vpop.f32.mrb[0].mxu0
        %v10230 = vpop.f32.mrb[0].mxu0
        %v10231 = vadd.f32 %v10070, %v10230
        %v10232 = vpop.f32.mrb[0].mxu0
        %10233 = vmatprep.mubr.bf16.mxu0 %v9396
        %10234 = vmatmul.mubr.bf16.gmra.mrb[0].mxu0 %v9395
        %v10235 = vpop.f32.mrb[0].mxu0
        %v10236 = vadd.f32 %v10075, %v10235
        %v10237 = vpop.f32.mrb[0].mxu0
        %v10238 = vpop.f32.mrb[0].mxu0
        %v10239 = vadd.f32 %v10078, %v10238
        %v10240 = vpop.f32.mrb[0].mxu0
        %10241 = vmatprep.mubr.bf16.mxu0 %v9404
        %10242 = vmatmul.mubr.bf16.gmra.mrb[0].mxu0 %v9403
        %v10243 = vpop.f32.mrb[0].mxu0
        %v10244 = vadd.f32 %v10083, %v10243
        %v10245 = vpop.f32.mrb[0].mxu0
        %v10246 = vpop.f32.mrb[0].mxu0
        %v10247 = vadd.f32 %v10086, %v10246
        %v10248 = vpop.f32.mrb[0].mxu0
        %10249 = vmatprep.mubr.bf16.mxu0 %v9412
        %10250 = vmatmul.mubr.bf16.gmra.mrb[0].mxu0 %v9411
        %v10251 = vpop.f32.mrb[0].mxu0
        %v10252 = vadd.f32 %v10091, %v10251
        %v10253 = vpop.f32.mrb[0].mxu0
        %v10254 = vpop.f32.mrb[0].mxu0
        %v10255 = vadd.f32 %v10094, %v10254
        %v10256 = vpop.f32.mrb[0].mxu0
        %10257 = vmatprep.mubr.bf16.mxu0 %v9420
        %10258 = vmatmul.mubr.bf16.gmra.mrb[0].mxu0 %v9419
        %v10259 = vpop.f32.mrb[0].mxu0
        %v10260 = vadd.f32 %v10099, %v10259
        %v10261 = vpop.f32.mrb[0].mxu0
        %v10262 = vpop.f32.mrb[0].mxu0
        %v10263 = vadd.f32 %v10102, %v10262
        %v10264 = vpop.f32.mrb[0].mxu0
        %10265 = vmatprep.mubr.bf16.mxu0 %v9428
        %10266 = vmatmul.mubr.bf16.gmra.mrb[0].mxu0 %v9427
        %v10267 = vpop.f32.mrb[0].mxu0
        %v10268 = vadd.f32 %v10107, %v10267
        %v10269 = vpop.f32.mrb[0].mxu0
        %v10270 = vpop.f32.mrb[0].mxu0
        %v10271 = vadd.f32 %v10110, %v10270
        %v10272 = vpop.f32.mrb[0].mxu0
        %10273 = vmatprep.mubr.bf16.mxu0 %v9436
        %10274 = vmatmul.mubr.bf16.gmra.mrb[0].mxu0 %v9435
        %v10275 = vpop.f32.mrb[0].mxu0
        %v10276 = vadd.f32 %v10115, %v10275
        %v10277 = vpop.f32.mrb[0].mxu0
        %v10278 = vpop.f32.mrb[0].mxu0
        %v10279 = vadd.f32 %v10118, %v10278
        %v10280 = vpop.f32.mrb[0].mxu0
        %10281 = vmatprep.mubr.bf16.mxu0 %v9444
        %10282 = vmatmul.mubr.bf16.gmra.mrb[0].mxu0 %v9443
        %v10283 = vpop.f32.mrb[0].mxu0
        %v10284 = vadd.f32 %v10123, %v10283
        %v10285 = vpop.f32.mrb[0].mxu0
        %v10286 = vpop.f32.mrb[0].mxu0
        %v10287 = vadd.f32 %v10126, %v10286
        %v10288 = vpop.f32.mrb[0].mxu0
        %10289 = vmatprep.mubr.bf16.mxu0 %v9452
        %10290 = vmatmul.mubr.bf16.gmra.mrb[0].mxu0 %v9451
        %v10291 = vpop.f32.mrb[0].mxu0
        %v10292 = vadd.f32 %v10131, %v10291
        %v10293 = vpop.f32.mrb[0].mxu0
        %v10294 = vpop.f32.mrb[0].mxu0
        %v10295 = vadd.f32 %v10134, %v10294
        %v10296 = vpop.f32.mrb[0].mxu0
        %10297 = vmatprep.mubr.bf16.mxu0 %v9460
        %10298 = vmatmul.mubr.bf16.gmra.mrb[0].mxu0 %v9459
        %v10299 = vpop.f32.mrb[0].mxu0
        %v10300 = vadd.f32 %v10139, %v10299
        %v10301 = vpop.f32.mrb[0].mxu0
        %v10302 = vpop.f32.mrb[0].mxu0
        %v10303 = vadd.f32 %v10142, %v10302
        %v10304 = vpop.f32.mrb[0].mxu0
        %10305 = vmatprep.mubr.bf16.mxu0 %v9468
        %10306 = vmatmul.mubr.bf16.gmra.mrb[0].mxu0 %v9467
        %v10307 = vpop.f32.mrb[0].mxu0
        %v10308 = vadd.f32 %v10147, %v10307
        %v10309 = vpop.f32.mrb[0].mxu0
        %v10310 = vpop.f32.mrb[0].mxu0
        %v10311 = vadd.f32 %v10150, %v10310
        %v10312 = vpop.f32.mrb[0].mxu0
        %10313 = vmatprep.mubr.bf16.mxu0 %v9476
        %10314 = vmatmul.mubr.bf16.gmra.mrb[0].mxu0 %v9475
        %v10315 = vpop.f32.mrb[0].mxu0
        %v10316 = vadd.f32 %v10155, %v10315
        %v10317 = vpop.f32.mrb[0].mxu0
        %v10318 = vpop.f32.mrb[0].mxu0
        %v10319 = vadd.f32 %v10158, %v10318
        %v10320 = vpop.f32.mrb[0].mxu0
        %10321 = vdwg.mxu0
        %10322 = vmatprep.subr.bf16.mxu0 0
        %10323 = vmatpush1.bf16.msra.mxu0 %v9904
        %10324 = vmatprep.subr.bf16.mxu0 0
        %10325 = vmatpush1.bf16.msra.mxu0 %v9905
        %10326 = vmatprep.subr.bf16.mxu0 0
        %10327 = vmatpush1.bf16.msra.mxu0 %v9906
        %10328 = vmatprep.subr.bf16.mxu0 0
        %10329 = vmatpush1.bf16.msra.mxu0 %v9907
        %10330 = vmatprep.subr.bf16.mxu0 0
        %10331 = vmatpush1.bf16.msra.mxu0 %v9908
        %10332 = vmatprep.subr.bf16.mxu0 0
        %10333 = vmatpush1.bf16.msra.mxu0 %v9909
        %10334 = vmatprep.subr.bf16.mxu0 0
        %10335 = vmatpush1.bf16.msra.mxu0 %v9910
        %10336 = vmatprep.subr.bf16.mxu0 0
        %10337 = vmatpush1.bf16.msra.mxu0 %v9911
        %10338 = vmatprep.subr.bf16.mxu0 0
        %10339 = vmatpush1.bf16.msra.mxu0 %v9912
        %10340 = vmatprep.subr.bf16.mxu0 0
        %10341 = vmatpush1.bf16.msra.mxu0 %v9913
        %10342 = vmatprep.subr.bf16.mxu0 0
        %10343 = vmatpush1.bf16.msra.mxu0 %v9914
        %10344 = vmatprep.subr.bf16.mxu0 0
        %10345 = vmatpush1.bf16.msra.mxu0 %v9915
        %10346 = vmatprep.subr.bf16.mxu0 0
        %10347 = vmatpush1.bf16.msra.mxu0 %v9916
        %10348 = vmatprep.subr.bf16.mxu0 0
        %10349 = vmatpush1.bf16.msra.mxu0 %v9917
        %10350 = vmatprep.subr.bf16.mxu0 0
        %10351 = vmatpush1.bf16.msra.mxu0 %v9918
        %10352 = vmatprep.subr.bf16.mxu0 0
        %10353 = vmatpush1.bf16.msra.mxu0 %v9919
        %10354 = vmatprep.mubr.bf16.mxu0 %v9358
        %10355 = vmatmul.mubr.bf16.gmra.mrb[0].mxu0 %v9357
        %v10356 = vpop.f32.mrb[0].mxu0
        %v10357 = vadd.f32 %v10196, %v10356
        %v10358 = vpop.f32.mrb[0].mxu0
        %v10359 = vpop.f32.mrb[0].mxu0
        %v10360 = vadd.f32 %v10199, %v10359
        %v10361 = vpop.f32.mrb[0].mxu0
        %10362 = vmatprep.mubr.bf16.mxu0 %v9366
        %10363 = vmatmul.mubr.bf16.gmra.mrb[0].mxu0 %v9365
        %v10364 = vpop.f32.mrb[0].mxu0
        %v10365 = vadd.f32 %v10204, %v10364
        %v10366 = vpop.f32.mrb[0].mxu0
        %v10367 = vpop.f32.mrb[0].mxu0
        %v10368 = vadd.f32 %v10207, %v10367
        %v10369 = vpop.f32.mrb[0].mxu0
        %10370 = vmatprep.mubr.bf16.mxu0 %v9374
        %10371 = vmatmul.mubr.bf16.gmra.mrb[0].mxu0 %v9373
        %v10372 = vpop.f32.mrb[0].mxu0
        %v10373 = vadd.f32 %v10212, %v10372
        %v10374 = vpop.f32.mrb[0].mxu0
        %v10375 = vpop.f32.mrb[0].mxu0
        %v10376 = vadd.f32 %v10215, %v10375
        %v10377 = vpop.f32.mrb[0].mxu0
        %10378 = vmatprep.mubr.bf16.mxu0 %v9382
        %10379 = vmatmul.mubr.bf16.gmra.mrb[0].mxu0 %v9381
        %v10380 = vpop.f32.mrb[0].mxu0
        %v10381 = vadd.f32 %v10220, %v10380
        %v10382 = vpop.f32.mrb[0].mxu0
        %v10383 = vpop.f32.mrb[0].mxu0
        %v10384 = vadd.f32 %v10223, %v10383
        %v10385 = vpop.f32.mrb[0].mxu0
        %10386 = vmatprep.mubr.bf16.mxu0 %v9390
        %10387 = vmatmul.mubr.bf16.gmra.mrb[0].mxu0 %v9389
        %v10388 = vpop.f32.mrb[0].mxu0
        %v10389 = vadd.f32 %v10228, %v10388
        %v10390 = vpop.f32.mrb[0].mxu0
        %v10391 = vpop.f32.mrb[0].mxu0
        %v10392 = vadd.f32 %v10231, %v10391
        %v10393 = vpop.f32.mrb[0].mxu0
        %10394 = vmatprep.mubr.bf16.mxu0 %v9398
        %10395 = vmatmul.mubr.bf16.gmra.mrb[0].mxu0 %v9397
        %v10396 = vpop.f32.mrb[0].mxu0
        %v10397 = vadd.f32 %v10236, %v10396
        %v10398 = vpop.f32.mrb[0].mxu0
        %v10399 = vpop.f32.mrb[0].mxu0
        %v10400 = vadd.f32 %v10239, %v10399
        %v10401 = vpop.f32.mrb[0].mxu0
        %10402 = vmatprep.mubr.bf16.mxu0 %v9406
        %10403 = vmatmul.mubr.bf16.gmra.mrb[0].mxu0 %v9405
        %v10404 = vpop.f32.mrb[0].mxu0
        %v10405 = vadd.f32 %v10244, %v10404
        %v10406 = vpop.f32.mrb[0].mxu0
        %v10407 = vpop.f32.mrb[0].mxu0
        %v10408 = vadd.f32 %v10247, %v10407
        %v10409 = vpop.f32.mrb[0].mxu0
        %10410 = vmatprep.mubr.bf16.mxu0 %v9414
        %10411 = vmatmul.mubr.bf16.gmra.mrb[0].mxu0 %v9413
        %v10412 = vpop.f32.mrb[0].mxu0
        %v10413 = vadd.f32 %v10252, %v10412
        %v10414 = vpop.f32.mrb[0].mxu0
        %v10415 = vpop.f32.mrb[0].mxu0
        %v10416 = vadd.f32 %v10255, %v10415
        %v10417 = vpop.f32.mrb[0].mxu0
        %10418 = vmatprep.mubr.bf16.mxu0 %v9422
        %10419 = vmatmul.mubr.bf16.gmra.mrb[0].mxu0 %v9421
        %v10420 = vpop.f32.mrb[0].mxu0
        %v10421 = vadd.f32 %v10260, %v10420
        %v10422 = vpop.f32.mrb[0].mxu0
        %v10423 = vpop.f32.mrb[0].mxu0
        %v10424 = vadd.f32 %v10263, %v10423
        %v10425 = vpop.f32.mrb[0].mxu0
        %10426 = vmatprep.mubr.bf16.mxu0 %v9430
        %10427 = vmatmul.mubr.bf16.gmra.mrb[0].mxu0 %v9429
        %v10428 = vpop.f32.mrb[0].mxu0
        %v10429 = vadd.f32 %v10268, %v10428
        %v10430 = vpop.f32.mrb[0].mxu0
        %v10431 = vpop.f32.mrb[0].mxu0
        %v10432 = vadd.f32 %v10271, %v10431
        %v10433 = vpop.f32.mrb[0].mxu0
        %10434 = vmatprep.mubr.bf16.mxu0 %v9438
        %10435 = vmatmul.mubr.bf16.gmra.mrb[0].mxu0 %v9437
        %v10436 = vpop.f32.mrb[0].mxu0
        %v10437 = vadd.f32 %v10276, %v10436
        %v10438 = vpop.f32.mrb[0].mxu0
        %v10439 = vpop.f32.mrb[0].mxu0
        %v10440 = vadd.f32 %v10279, %v10439
        %v10441 = vpop.f32.mrb[0].mxu0
        %10442 = vmatprep.mubr.bf16.mxu0 %v9446
        %10443 = vmatmul.mubr.bf16.gmra.mrb[0].mxu0 %v9445
        %v10444 = vpop.f32.mrb[0].mxu0
        %v10445 = vadd.f32 %v10284, %v10444
        %v10446 = vpop.f32.mrb[0].mxu0
        %v10447 = vpop.f32.mrb[0].mxu0
        %v10448 = vadd.f32 %v10287, %v10447
        %v10449 = vpop.f32.mrb[0].mxu0
        %10450 = vmatprep.mubr.bf16.mxu0 %v9454
        %10451 = vmatmul.mubr.bf16.gmra.mrb[0].mxu0 %v9453
        %v10452 = vpop.f32.mrb[0].mxu0
        %v10453 = vadd.f32 %v10292, %v10452
        %v10454 = vpop.f32.mrb[0].mxu0
        %v10455 = vpop.f32.mrb[0].mxu0
        %v10456 = vadd.f32 %v10295, %v10455
        %v10457 = vpop.f32.mrb[0].mxu0
        %10458 = vmatprep.mubr.bf16.mxu0 %v9462
        %10459 = vmatmul.mubr.bf16.gmra.mrb[0].mxu0 %v9461
        %v10460 = vpop.f32.mrb[0].mxu0
        %v10461 = vadd.f32 %v10300, %v10460
        %v10462 = vpop.f32.mrb[0].mxu0
        %v10463 = vpop.f32.mrb[0].mxu0
        %v10464 = vadd.f32 %v10303, %v10463
        %v10465 = vpop.f32.mrb[0].mxu0
        %10466 = vmatprep.mubr.bf16.mxu0 %v9470
        %10467 = vmatmul.mubr.bf16.gmra.mrb[0].mxu0 %v9469
        %v10468 = vpop.f32.mrb[0].mxu0
        %v10469 = vadd.f32 %v10308, %v10468
        %v10470 = vpop.f32.mrb[0].mxu0
        %v10471 = vpop.f32.mrb[0].mxu0
        %v10472 = vadd.f32 %v10311, %v10471
        %v10473 = vpop.f32.mrb[0].mxu0
        %10474 = vmatprep.mubr.bf16.mxu0 %v9478
        %10475 = vmatmul.mubr.bf16.gmra.mrb[0].mxu0 %v9477
        %v10476 = vpop.f32.mrb[0].mxu0
        %v10477 = vadd.f32 %v10316, %v10476
        %v10478 = vpop.f32.mrb[0].mxu0
        %v10479 = vpop.f32.mrb[0].mxu0
        %v10480 = vadd.f32 %v10319, %v10479
        %v10481 = vpop.f32.mrb[0].mxu0
        %10482 = vdwg.mxu0
        %10483 = vmatprep.subr.bf16.mxu0 0
        %10484 = vmatpush1.bf16.msra.mxu0 %v9920
        %10485 = vmatprep.subr.bf16.mxu0 0
        %10486 = vmatpush1.bf16.msra.mxu0 %v9921
        %10487 = vmatprep.subr.bf16.mxu0 0
        %10488 = vmatpush1.bf16.msra.mxu0 %v9922
        %10489 = vmatprep.subr.bf16.mxu0 0
        %10490 = vmatpush1.bf16.msra.mxu0 %v9923
        %10491 = vmatprep.subr.bf16.mxu0 0
        %10492 = vmatpush1.bf16.msra.mxu0 %v9924
        %10493 = vmatprep.subr.bf16.mxu0 0
        %10494 = vmatpush1.bf16.msra.mxu0 %v9925
        %10495 = vmatprep.subr.bf16.mxu0 0
        %10496 = vmatpush1.bf16.msra.mxu0 %v9926
        %10497 = vmatprep.subr.bf16.mxu0 0
        %10498 = vmatpush1.bf16.msra.mxu0 %v9927
        %10499 = vmatprep.subr.bf16.mxu0 0
        %10500 = vmatpush1.bf16.msra.mxu0 %v9928
        %10501 = vmatprep.subr.bf16.mxu0 0
        %10502 = vmatpush1.bf16.msra.mxu0 %v9929
        %10503 = vmatprep.subr.bf16.mxu0 0
        %10504 = vmatpush1.bf16.msra.mxu0 %v9930
        %10505 = vmatprep.subr.bf16.mxu0 0
        %10506 = vmatpush1.bf16.msra.mxu0 %v9931
        %10507 = vmatprep.subr.bf16.mxu0 0
        %10508 = vmatpush1.bf16.msra.mxu0 %v9932
        %10509 = vmatprep.subr.bf16.mxu0 0
        %10510 = vmatpush1.bf16.msra.mxu0 %v9933
        %10511 = vmatprep.subr.bf16.mxu0 0
        %10512 = vmatpush1.bf16.msra.mxu0 %v9934
        %10513 = vmatprep.subr.bf16.mxu0 0
        %10514 = vmatpush1.bf16.msra.mxu0 %v9935
        %10515 = vmatprep.mubr.bf16.mxu0 %v9360
        %10516 = vmatmul.mubr.bf16.gmra.mrb[0].mxu0 %v9359
        %v10517 = vpop.f32.mrb[0].mxu0
        %v10518 = vadd.f32 %v10357, %v10517
        %v10519 = vpop.f32.mrb[0].mxu0
        %v10520 = vpop.f32.mrb[0].mxu0
        %v10521 = vadd.f32 %v10360, %v10520
        %v10522 = vpop.f32.mrb[0].mxu0
        %10523 = vmatprep.mubr.bf16.mxu0 %v9368
        %10524 = vmatmul.mubr.bf16.gmra.mrb[0].mxu0 %v9367
        %v10525 = vpop.f32.mrb[0].mxu0
        %v10526 = vadd.f32 %v10365, %v10525
        %v10527 = vpop.f32.mrb[0].mxu0
        %v10528 = vpop.f32.mrb[0].mxu0
        %v10529 = vadd.f32 %v10368, %v10528
        %v10530 = vpop.f32.mrb[0].mxu0
        %10531 = vmatprep.mubr.bf16.mxu0 %v9376
        %10532 = vmatmul.mubr.bf16.gmra.mrb[0].mxu0 %v9375
        %v10533 = vpop.f32.mrb[0].mxu0
        %v10534 = vadd.f32 %v10373, %v10533
        %v10535 = vpop.f32.mrb[0].mxu0
        %v10536 = vpop.f32.mrb[0].mxu0
        %v10537 = vadd.f32 %v10376, %v10536
        %v10538 = vpop.f32.mrb[0].mxu0
        %10539 = vmatprep.mubr.bf16.mxu0 %v9384
        %10540 = vmatmul.mubr.bf16.gmra.mrb[0].mxu0 %v9383
        %v10541 = vpop.f32.mrb[0].mxu0
        %v10542 = vadd.f32 %v10381, %v10541
        %v10543 = vpop.f32.mrb[0].mxu0
        %v10544 = vpop.f32.mrb[0].mxu0
        %v10545 = vadd.f32 %v10384, %v10544
        %v10546 = vpop.f32.mrb[0].mxu0
        %10547 = vmatprep.mubr.bf16.mxu0 %v9392
        %10548 = vmatmul.mubr.bf16.gmra.mrb[0].mxu0 %v9391
        %v10549 = vpop.f32.mrb[0].mxu0
        %v10550 = vadd.f32 %v10389, %v10549
        %v10551 = vpop.f32.mrb[0].mxu0
        %v10552 = vpop.f32.mrb[0].mxu0
        %v10553 = vadd.f32 %v10392, %v10552
        %v10554 = vpop.f32.mrb[0].mxu0
        %10555 = vmatprep.mubr.bf16.mxu0 %v9400
        %10556 = vmatmul.mubr.bf16.gmra.mrb[0].mxu0 %v9399
        %v10557 = vpop.f32.mrb[0].mxu0
        %v10558 = vadd.f32 %v10397, %v10557
        %v10559 = vpop.f32.mrb[0].mxu0
        %v10560 = vpop.f32.mrb[0].mxu0
        %v10561 = vadd.f32 %v10400, %v10560
        %v10562 = vpop.f32.mrb[0].mxu0
        %10563 = vmatprep.mubr.bf16.mxu0 %v9408
        %10564 = vmatmul.mubr.bf16.gmra.mrb[0].mxu0 %v9407
        %v10565 = vpop.f32.mrb[0].mxu0
        %v10566 = vadd.f32 %v10405, %v10565
        %v10567 = vpop.f32.mrb[0].mxu0
        %v10568 = vpop.f32.mrb[0].mxu0
        %v10569 = vadd.f32 %v10408, %v10568
        %v10570 = vpop.f32.mrb[0].mxu0
        %10571 = vmatprep.mubr.bf16.mxu0 %v9416
        %10572 = vmatmul.mubr.bf16.gmra.mrb[0].mxu0 %v9415
        %v10573 = vpop.f32.mrb[0].mxu0
        %v10574 = vadd.f32 %v10413, %v10573
        %v10575 = vpop.f32.mrb[0].mxu0
        %v10576 = vpop.f32.mrb[0].mxu0
        %v10577 = vadd.f32 %v10416, %v10576
        %v10578 = vpop.f32.mrb[0].mxu0
        %10579 = vmatprep.mubr.bf16.mxu0 %v9424
        %10580 = vmatmul.mubr.bf16.gmra.mrb[0].mxu0 %v9423
        %v10581 = vpop.f32.mrb[0].mxu0
        %v10582 = vadd.f32 %v10421, %v10581
        %v10583 = vpop.f32.mrb[0].mxu0
        %v10584 = vpop.f32.mrb[0].mxu0
        %v10585 = vadd.f32 %v10424, %v10584
        %v10586 = vpop.f32.mrb[0].mxu0
        %10587 = vmatprep.mubr.bf16.mxu0 %v9432
        %10588 = vmatmul.mubr.bf16.gmra.mrb[0].mxu0 %v9431
        %v10589 = vpop.f32.mrb[0].mxu0
        %v10590 = vadd.f32 %v10429, %v10589
        %v10591 = vpop.f32.mrb[0].mxu0
        %v10592 = vpop.f32.mrb[0].mxu0
        %v10593 = vadd.f32 %v10432, %v10592
        %v10594 = vpop.f32.mrb[0].mxu0
        %10595 = vmatprep.mubr.bf16.mxu0 %v9440
        %10596 = vmatmul.mubr.bf16.gmra.mrb[0].mxu0 %v9439
        %v10597 = vpop.f32.mrb[0].mxu0
        %v10598 = vadd.f32 %v10437, %v10597
        %v10599 = vpop.f32.mrb[0].mxu0
        %v10600 = vpop.f32.mrb[0].mxu0
        %v10601 = vadd.f32 %v10440, %v10600
        %v10602 = vpop.f32.mrb[0].mxu0
        %10603 = vmatprep.mubr.bf16.mxu0 %v9448
        %10604 = vmatmul.mubr.bf16.gmra.mrb[0].mxu0 %v9447
        %v10605 = vpop.f32.mrb[0].mxu0
        %v10606 = vadd.f32 %v10445, %v10605
        %v10607 = vpop.f32.mrb[0].mxu0
        %v10608 = vpop.f32.mrb[0].mxu0
        %v10609 = vadd.f32 %v10448, %v10608
        %v10610 = vpop.f32.mrb[0].mxu0
        %10611 = vmatprep.mubr.bf16.mxu0 %v9456
        %10612 = vmatmul.mubr.bf16.gmra.mrb[0].mxu0 %v9455
        %v10613 = vpop.f32.mrb[0].mxu0
        %v10614 = vadd.f32 %v10453, %v10613
        %v10615 = vpop.f32.mrb[0].mxu0
        %v10616 = vpop.f32.mrb[0].mxu0
        %v10617 = vadd.f32 %v10456, %v10616
        %v10618 = vpop.f32.mrb[0].mxu0
        %10619 = vmatprep.mubr.bf16.mxu0 %v9464
        %10620 = vmatmul.mubr.bf16.gmra.mrb[0].mxu0 %v9463
        %v10621 = vpop.f32.mrb[0].mxu0
        %v10622 = vadd.f32 %v10461, %v10621
        %v10623 = vpop.f32.mrb[0].mxu0
        %v10624 = vpop.f32.mrb[0].mxu0
        %v10625 = vadd.f32 %v10464, %v10624
        %v10626 = vpop.f32.mrb[0].mxu0
        %10627 = vmatprep.mubr.bf16.mxu0 %v9472
        %10628 = vmatmul.mubr.bf16.gmra.mrb[0].mxu0 %v9471
        %v10629 = vpop.f32.mrb[0].mxu0
        %v10630 = vadd.f32 %v10469, %v10629
        %v10631 = vpop.f32.mrb[0].mxu0
        %v10632 = vpop.f32.mrb[0].mxu0
        %v10633 = vadd.f32 %v10472, %v10632
        %v10634 = vpop.f32.mrb[0].mxu0
        %10635 = vmatprep.mubr.bf16.mxu0 %v9480
        %10636 = vmatmul.mubr.bf16.gmra.mrb[0].mxu0 %v9479
        %v10637 = vpop.f32.mrb[0].mxu0
        %v10638 = vadd.f32 %v10477, %v10637
        %v10639 = vpop.f32.mrb[0].mxu0
        %v10640 = vpop.f32.mrb[0].mxu0
        %v10641 = vadd.f32 %v10480, %v10640
        %v10642 = vpop.f32.mrb[0].mxu0
        %10643 = vdwg.mxu0
        %v10644 = vtanh.pop %v10518
        %v10645 = vtanh.pop %v10521
        %v10646 = vtanh.pop %v10526
        %v10647 = vtanh.pop %v10529
        %v10648 = vtanh.pop %v10534
        %v10649 = vtanh.pop %v10537
        %v10650 = vtanh.pop %v10542
        %v10651 = vtanh.pop %v10545
        %v10652 = vtanh.pop %v10550
        %v10653 = vtanh.pop %v10553
        %v10654 = vtanh.pop %v10558
        %v10655 = vtanh.pop %v10561
        %v10656 = vtanh.pop %v10566
        %v10657 = vtanh.pop %v10569
        %v10658 = vtanh.pop %v10574
        %v10659 = vtanh.pop %v10577
        %v10660 = vtanh.pop %v10582
        %v10661 = vtanh.pop %v10585
        %v10662 = vtanh.pop %v10590
        %v10663 = vtanh.pop %v10593
        %v10664 = vtanh.pop %v10598
        %v10665 = vtanh.pop %v10601
        %v10666 = vtanh.pop %v10606
        %v10667 = vtanh.pop %v10609
        %v10668 = vtanh.pop %v10614
        %v10669 = vtanh.pop %v10617
        %v10670 = vtanh.pop %v10622
        %v10671 = vtanh.pop %v10625
        %v10672 = vtanh.pop %v10630
        %v10673 = vtanh.pop %v10633
        %v10674 = vtanh.pop %v10638
        %v10675 = vtanh.pop %v10641
        %10676 = vst [vmem:[%s329] sm:$0xff] %v10644
        %10677 = vst [vmem:[%s329 + $0x8] sm:$0xff] %v10645
        %10678 = vst [vmem:[%s329 + $0x10] sm:$0xff] %v10646
        %10679 = vst [vmem:[%s329 + $0x18] sm:$0xff] %v10647
        %10680 = vst [vmem:[%s329 + $0x20] sm:$0xff] %v10648
        %10681 = vst [vmem:[%s329 + $0x28] sm:$0xff] %v10649
        %10682 = vst [vmem:[%s329 + $0x30] sm:$0xff] %v10650
        %10683 = vst [vmem:[%s329 + $0x38] sm:$0xff] %v10651
        %10684 = vst [vmem:[%s329 + $0x40] sm:$0xff] %v10652
        %10685 = vst [vmem:[%s329 + $0x48] sm:$0xff] %v10653
        %10686 = vst [vmem:[%s329 + $0x50] sm:$0xff] %v10654
        %10687 = vst [vmem:[%s329 + $0x58] sm:$0xff] %v10655
        %10688 = vst [vmem:[%s329 + $0x60] sm:$0xff] %v10656
        %10689 = vst [vmem:[%s329 + $0x68] sm:$0xff] %v10657
        %10690 = vst [vmem:[%s329 + $0x70] sm:$0xff] %v10658
        %10691 = vst [vmem:[%s329 + $0x78] sm:$0xff] %v10659
        %10692 = vst [vmem:[%s329 + $0x80] sm:$0xff] %v10660
        %10693 = vst [vmem:[%s329 + $0x88] sm:$0xff] %v10661
        %10694 = vst [vmem:[%s329 + $0x90] sm:$0xff] %v10662
        %10695 = vst [vmem:[%s329 + $0x98] sm:$0xff] %v10663
        %10696 = vst [vmem:[%s329 + $0xa0] sm:$0xff] %v10664
        %10697 = vst [vmem:[%s329 + $0xa8] sm:$0xff] %v10665
        %10698 = vst [vmem:[%s329 + $0xb0] sm:$0xff] %v10666
        %10699 = vst [vmem:[%s329 + $0xb8] sm:$0xff] %v10667
        %10700 = vst [vmem:[%s329 + $0xc0] sm:$0xff] %v10668
        %10701 = vst [vmem:[%s329 + $0xc8] sm:$0xff] %v10669
        %10702 = vst [vmem:[%s329 + $0xd0] sm:$0xff] %v10670
        %10703 = vst [vmem:[%s329 + $0xd8] sm:$0xff] %v10671
        %10704 = vst [vmem:[%s329 + $0xe0] sm:$0xff] %v10672
        %10705 = vst [vmem:[%s329 + $0xe8] sm:$0xff] %v10673
        %10706 = vst [vmem:[%s329 + $0xf0] sm:$0xff] %v10674
        %10707 = vst [vmem:[%s329 + $0xf8] sm:$0xff] %v10675
        %s10708 = sand.u32 %s184, 1
        %s10709 = scalar_lea.sflag [#allocation4], %s10708
        %s10710 = sand.u32 %s184, 1
        %s10711 = smul.addr %s10710, 256
        %s10712 = scalar_lea.vmem [#allocation10], %s10711
        // Predicated region
        $region65: #{tpu_custom_call.1} parent=47 // pred_check
          %p10713 = pneg %p194
        $region66: #{tpu_custom_call.1} parent=47 // pred_check_branch
          %10715 = sbr.rel (%p10713) target = $region68
        $region67: #{tpu_custom_call.1} parent=47 // pred_region
          %s10716 = smul.u32 32, %s24
          %s10718 = ssub.s32 4096, 4096
          %10719 = vsyncadd %s10709, %s10718
          %s10720 = smul.addr %s10716, 128
          %s10721 = scalar_lea.hbm %s7, %s10720
          %s10722 = sshll.u32 %s10712, 4
          %s10723 = int_to_ptr.vmem [resolvable:$true] %s10722
          %10728 = dma.vmem_to_hbm [thread:$0]  %s10723, 4096, %s10721, %s10709, 128, 128, 8
        $region68: #{tpu_custom_call.1} parent=47 // pred_fallthru
          _
      $region48: #{tpu_custom_call.1} parent=5 // pred_fallthru
        _
      %p10729 = scmp.le.s32.totalorder 2, %s19
      // Predicated region
      $region69: #{tpu_custom_call.1} parent=5 // pred_check
        %p10730 = pneg %p10729
      $region70: #{tpu_custom_call.1} parent=5 // pred_check_branch
        %10732 = sbr.rel (%p10730) target = $region72
      $region71: #{tpu_custom_call.1} parent=5 // pred_region
        %s10733 = ssub.s32 %s19, 2
        // Predicated region
        $region73: #{tpu_custom_call.1} parent=71 // pred_check
          %p10734 = pneg %p200
        $region74: #{tpu_custom_call.1} parent=71 // pred_check_branch
          %10736 = sbr.rel (%p10734) target = $region76
        $region75: #{tpu_custom_call.1} parent=71 // pred_region
          %s10737 = sand.u32 %s185, 1
          %s10738 = scalar_lea.sflag [#allocation4], %s10737
          %s10739 = sand.u32 %s185, 1
          %s10740 = smul.addr %s10739, 256
          %s10741 = scalar_lea.vmem [#allocation10], %s10740
          %10742 = dma.done %s10738, 4096
        $region76: #{tpu_custom_call.1} parent=71 // pred_fallthru
          _
      $region72: #{tpu_custom_call.1} parent=5 // pred_fallthru
        _
    $region6: #{tpu_custom_call.1} parent=1 // loop_footer
      %s23 = sadd.s32 1, %s19
    $region7: #{tpu_custom_call.1} parent=1 // loop_footer_branch
      %18 = sbr.rel target = $region3
    $region8: #{tpu_custom_call.1} parent=1 // loop_exit
      _
    %10743 = vsyncpa [#allocation3], 1
    %s10744 = scalar_lea.sflag [#allocation3], 1
    %10745 = vsyncpa %s10744, 1
    %10746 = vsyncpa [#allocation6], 1
    %10747 = vsyncpa [#allocation9], 1
    %10748 = vsyncpa [#allocation4], 1
    %s10749 = scalar_lea.sflag [#allocation4], 1
    %10750 = vsyncpa %s10749, 1

</llo_original>
